<compile_context>
chip_gen: v5e
topology: v5e:2x2
jax: 0.10.0
libtpu: 0.0.40
codegen_flags: <defaults>
</compile_context>

<pallas_src>
import numpy as np
import jax
import jax.numpy as jnp
from jax import lax
from jax.experimental import pallas as pl
from jax.experimental.pallas import tpu as pltpu

WINDOW_SIZE = 11
SIGMA = 1.5
PAD = WINDOW_SIZE // 2
C1 = 0.01 ** 2
C2 = 0.03 ** 2


def _gaussian_1d(window_size, sigma):
    g = np.exp(-((np.arange(window_size) - window_size // 2) ** 2) / (2.0 * sigma ** 2))
    return (g / g.sum()).astype(np.float32)


# Deterministic "window" parameter: same normalized 1-D Gaussian as
# create_window(11, C) in the PyTorch module (2-D window = outer(g, g)).
_G1D = _gaussian_1d(WINDOW_SIZE, SIGMA)


def _band_matrix(n):
    """(n, n) truncated-band matrix M with M[i, k] = g[k - i + PAD] (0 outside
    the band).  (M @ x) is exactly the zero-padded 1-D Gaussian filter along
    the leading axis of x, matching F.conv2d(..., padding=PAD)."""
    idx = np.arange(n)
    d = idx[None, :] - idx[:, None] + PAD            # k - i + PAD
    valid = (d >= 0) & (d < WINDOW_SIZE)
    m = np.where(valid, _G1D[np.clip(d, 0, WINDOW_SIZE - 1)], 0.0)
    return m.astype(np.float32)


def _ssim_block_kernel(gv_ref, gh_ref, x1_ref, x2_ref, o_ref):
    # gv_ref: (H, H) vertical band matrix,  gh_ref: (W, W) horizontal band matrix
    # x1_ref / x2_ref: (TBC, H, W) blocks of planes
    # o_ref: (1, 1, 1) partial sum of the SSIM map over this block
    x1 = x1_ref[...]
    x2 = x2_ref[...]
    tbc, H, W = x1.shape
    P = 5 * tbc

    # Fuse the 5 filter inputs into one slab so both filter passes are single
    # batched MXU matmuls instead of 5 independent filters.
    stacked = jnp.concatenate([x1, x2, x1 * x1, x2 * x2, x1 * x2], axis=0)  # (P,H,W)

    gh_b = jnp.broadcast_to(gh_ref[...], (P, W, W))   # Gh[w, k] = g[k - w + PAD]
    gv_b = jnp.broadcast_to(gv_ref[...], (P, H, H))   # Gv[i, k] = g[k - i + PAD]

    # Horizontal pass: t[p, i, w] = sum_k stacked[p, i, k] * Gh[w, k]
    t = jnp.einsum('pik,pwk->piw', stacked, gh_b,
                   preferred_element_type=jnp.float32,
                   precision=lax.Precision.HIGHEST)
    # Vertical pass:   f[p, i, w] = sum_k Gv[i, k] * t[p, k, w]
    f = jnp.einsum('pik,pkw->piw', gv_b, t,
                   preferred_element_type=jnp.float32,
                   precision=lax.Precision.HIGHEST)

    mu1 = f[0 * tbc:1 * tbc]
    mu2 = f[1 * tbc:2 * tbc]
    e11 = f[2 * tbc:3 * tbc]
    e22 = f[3 * tbc:4 * tbc]
    e12 = f[4 * tbc:5 * tbc]

    mu1_sq = mu1 * mu1
    mu2_sq = mu2 * mu2
    mu1_mu2 = mu1 * mu2
    sigma1_sq = e11 - mu1_sq
    sigma2_sq = e22 - mu2_sq
    sigma12 = e12 - mu1_mu2

    ssim_map = ((2.0 * mu1_mu2 + C1) * (2.0 * sigma12 + C2)) / (
        (mu1_sq + mu2_sq + C1) * (sigma1_sq + sigma2_sq + C2))

    o_ref[...] = jnp.sum(ssim_map, axis=(0, 1, 2), keepdims=True)


def _choose_tbc(n, h, w, vmem_budget_bytes=18 * 1024 * 1024):
    """Largest divisor of n (planes per grid step) fitting a conservative VMEM
    budget; also keep >= 2 grid steps when possible so v7x's 2 TensorCores both
    get work (no-op on v5e/v6e)."""
    # rough f32 bytes per plane inside the kernel: double-buffered inputs,
    # stacked/filtered slabs, broadcast band matrices, SSIM intermediates.
    per_plane = 4 * (27 * h * w + 5 * h * h + 5 * w * w)
    cap = max(1, int(vmem_budget_bytes // max(per_plane, 1)))
    cap = min(cap, n)
    if n >= 2:
        cap = min(cap, max(1, n // 2))
    for t in range(cap, 0, -1):
        if n % t == 0:
            return t
    return 1


def ssim_loss(img1, img2):
    """1 - SSIM(img1, img2) with window_size=11, size_average=True (NCHW)."""
    B, C, H, W = img1.shape
    N = B * C
    x1 = img1.astype(jnp.float32).reshape(N, H, W)
    x2 = img2.astype(jnp.float32).reshape(N, H, W)
    gv = jnp.asarray(_band_matrix(H))
    gh = jnp.asarray(_band_matrix(W))

    tbc = _choose_tbc(N, H, W)
    grid = N // tbc

    partial_sums = pl.pallas_call(
        _ssim_block_kernel,
        out_shape=jax.ShapeDtypeStruct((grid, 1, 1), jnp.float32),
        grid=(grid,),
        in_specs=[
            pl.BlockSpec((H, H), lambda i: (0, 0)),
            pl.BlockSpec((W, W), lambda i: (0, 0)),
            pl.BlockSpec((tbc, H, W), lambda i: (i, 0, 0)),
            pl.BlockSpec((tbc, H, W), lambda i: (i, 0, 0)),
        ],
        out_specs=pl.BlockSpec((1, 1, 1), lambda i: (i, 0, 0)),
        compiler_params=pltpu.CompilerParams(
            dimension_semantics=("parallel",),
            vmem_limit_bytes=32 * 1024 * 1024,
        ),
    )(gv, gh, x1, x2)

    ssim_mean = jnp.sum(partial_sums) / (N * H * W)
    return 1.0 - ssim_mean


def ssim_loss_ref(img1, img2):
    """Pure-JAX reference mirroring the PyTorch _ssim with F.conv2d."""
    g = jnp.asarray(_G1D)
    w2d = jnp.outer(g, g)
    Cc = img1.shape[1]
    w = jnp.broadcast_to(w2d, (Cc, 1, WINDOW_SIZE, WINDOW_SIZE))

    def conv(x):
        return jax.lax.conv_general_dilated(
            x, w, window_strides=(1, 1), padding=[(PAD, PAD), (PAD, PAD)],
            feature_group_count=Cc, dimension_numbers=("NCHW", "OIHW", "NCHW"),
            precision=lax.Precision.HIGHEST)

    mu1, mu2 = conv(img1), conv(img2)
    mu1_sq, mu2_sq, mu1_mu2 = mu1 * mu1, mu2 * mu2, mu1 * mu2
    s1 = conv(img1 * img1) - mu1_sq
    s2 = conv(img2 * img2) - mu2_sq
    s12 = conv(img1 * img2) - mu1_mu2
    m = ((2 * mu1_mu2 + C1) * (2 * s12 + C2)) / ((mu1_sq + mu2_sq + C1) * (s1 + s2 + C2))
    return 1.0 - m.mean()


if __name__ == "__main__":
    key = jax.random.PRNGKey(0)
    k1, k2 = jax.random.split(key)
    B, C, H, W = 2, 4, 16, 16
    img1 = jax.random.uniform(k1, (B, C, H, W), dtype=jnp.float32)
    img2 = jax.random.uniform(k2, (B, C, H, W), dtype=jnp.float32)

    loss = jax.block_until_ready(ssim_loss(img1, img2))
    ref = jax.block_until_ready(ssim_loss_ref(img1, img2))
    assert jnp.allclose(loss, ref, atol=1e-5, rtol=1e-5), (loss, ref)
    print("KERNEL_OK")
</pallas_src>

<mosaic_0001>
module attributes {stable_mosaic.version = 11 : i64} {
  func.func @_ssim_block_kernel(%arg0: i32, %arg1: memref<16x16xf32, #tpu.memory_space<vmem>>, %arg2: memref<16x16xf32, #tpu.memory_space<vmem>>, %arg3: memref<4x16x16xf32, #tpu.memory_space<vmem>>, %arg4: memref<4x16x16xf32, #tpu.memory_space<vmem>>, %arg5: memref<1x1x1xf32, #tpu.memory_space<vmem>>) attributes {dimension_semantics = [#tpu.dimension_semantics<parallel>], iteration_bounds = array<i64: 2>, scalar_prefetch = 0 : i64, scratch_operands = 0 : i64, tpu.core_type = #tpu.core_type<tc>, window_params = [{pipeline_mode = #tpu.pipeline_mode<synchronous>, transform_indices = @transform_0, window_bounds = array<i64: 16, 16>}, {pipeline_mode = #tpu.pipeline_mode<synchronous>, transform_indices = @transform_1, window_bounds = array<i64: 16, 16>}, {transform_indices = @transform_2, window_bounds = array<i64: 4, 16, 16>}, {transform_indices = @transform_3, window_bounds = array<i64: 4, 16, 16>}, {transform_indices = @transform_4, window_bounds = array<i64: 1, 1, 1>}]} {
    %c0 = arith.constant 0 : index
    %c0_0 = arith.constant 0 : index
    %c0_1 = arith.constant 0 : index
    %0 = vector.load %arg3[%c0, %c0_0, %c0_1] : memref<4x16x16xf32, #tpu.memory_space<vmem>>, vector<4x16x16xf32>
    %c0_2 = arith.constant 0 : index
    %c0_3 = arith.constant 0 : index
    %c0_4 = arith.constant 0 : index
    %1 = vector.load %arg4[%c0_2, %c0_3, %c0_4] : memref<4x16x16xf32, #tpu.memory_space<vmem>>, vector<4x16x16xf32>
    %2 = arith.mulf %0, %0 : vector<4x16x16xf32>
    %3 = arith.mulf %1, %1 : vector<4x16x16xf32>
    %4 = arith.mulf %0, %1 : vector<4x16x16xf32>
    %5 = tpu.concatenate %0, %1, %2, %3, %4 in 0 : vector<4x16x16xf32>, vector<4x16x16xf32>, vector<4x16x16xf32>, vector<4x16x16xf32>, vector<4x16x16xf32> -> vector<20x16x16xf32>
    %c0_5 = arith.constant 0 : index
    %c0_6 = arith.constant 0 : index
    %6 = vector.load %arg2[%c0_5, %c0_6] : memref<16x16xf32, #tpu.memory_space<vmem>>, vector<16x16xf32>
    %7 = vector.shape_cast %6 : vector<16x16xf32> to vector<1x16x16xf32>
    %8 = vector.broadcast %7 : vector<1x16x16xf32> to vector<20x16x16xf32>
    %c0_7 = arith.constant 0 : index
    %c0_8 = arith.constant 0 : index
    %9 = vector.load %arg1[%c0_7, %c0_8] : memref<16x16xf32, #tpu.memory_space<vmem>>, vector<16x16xf32>
    %10 = vector.shape_cast %9 : vector<16x16xf32> to vector<1x16x16xf32>
    %11 = vector.broadcast %10 : vector<1x16x16xf32> to vector<20x16x16xf32>
    "tpu.trace_start"() <{level = 10 : i32, message = "pik,pwk->piw"}> : () -> ()
    %cst = arith.constant dense<0.000000e+00> : vector<20x16x16xf32>
    %12 = tpu.matmul %5, %8, %cst {dimension_numbers = #tpu.dot_dimension_numbers<[2], [2], [1], [1], [0, 0, 0, 1, 1, 1], [0], [0]>, precision = #tpu.contract_precision<fp32>} : vector<20x16x16xf32>, vector<20x16x16xf32>, vector<20x16x16xf32> -> vector<20x16x16xf32>
    "tpu.trace_stop"() : () -> ()
    "tpu.trace_start"() <{level = 10 : i32, message = "pik,pkw->piw"}> : () -> ()
    %cst_9 = arith.constant dense<0.000000e+00> : vector<20x16x16xf32>
    %13 = tpu.matmul %11, %12, %cst_9 {dimension_numbers = #tpu.dot_dimension_numbers<[2], [1], [1], [2], [0, 0, 0, 1, 1, 2], [0], [0]>, precision = #tpu.contract_precision<fp32>} : vector<20x16x16xf32>, vector<20x16x16xf32>, vector<20x16x16xf32> -> vector<20x16x16xf32>
    "tpu.trace_stop"() : () -> ()
    %14 = vector.extract_strided_slice %13 {offsets = [0, 0, 0], sizes = [4, 16, 16], strides = [1, 1, 1]} : vector<20x16x16xf32> to vector<4x16x16xf32>
    %15 = vector.extract_strided_slice %13 {offsets = [4, 0, 0], sizes = [4, 16, 16], strides = [1, 1, 1]} : vector<20x16x16xf32> to vector<4x16x16xf32>
    %16 = vector.extract_strided_slice %13 {offsets = [8, 0, 0], sizes = [4, 16, 16], strides = [1, 1, 1]} : vector<20x16x16xf32> to vector<4x16x16xf32>
    %17 = vector.extract_strided_slice %13 {offsets = [12, 0, 0], sizes = [4, 16, 16], strides = [1, 1, 1]} : vector<20x16x16xf32> to vector<4x16x16xf32>
    %18 = vector.extract_strided_slice %13 {offsets = [16, 0, 0], sizes = [4, 16, 16], strides = [1, 1, 1]} : vector<20x16x16xf32> to vector<4x16x16xf32>
    %19 = arith.mulf %14, %14 : vector<4x16x16xf32>
    %20 = arith.mulf %15, %15 : vector<4x16x16xf32>
    %21 = arith.mulf %14, %15 : vector<4x16x16xf32>
    %22 = arith.subf %16, %19 : vector<4x16x16xf32>
    %23 = arith.subf %17, %20 : vector<4x16x16xf32>
    %24 = arith.subf %18, %21 : vector<4x16x16xf32>
    %cst_10 = arith.constant 2.000000e+00 : f32
    %25 = vector.broadcast %cst_10 : f32 to vector<4x16x16xf32>
    %26 = arith.mulf %25, %21 : vector<4x16x16xf32>
    %cst_11 = arith.constant 9.99999974E-5 : f32
    %27 = vector.broadcast %cst_11 : f32 to vector<4x16x16xf32>
    %28 = arith.addf %26, %27 : vector<4x16x16xf32>
    %cst_12 = arith.constant 2.000000e+00 : f32
    %29 = vector.broadcast %cst_12 : f32 to vector<4x16x16xf32>
    %30 = arith.mulf %29, %24 : vector<4x16x16xf32>
    %cst_13 = arith.constant 8.99999984E-4 : f32
    %31 = vector.broadcast %cst_13 : f32 to vector<4x16x16xf32>
    %32 = arith.addf %30, %31 : vector<4x16x16xf32>
    %33 = arith.mulf %28, %32 : vector<4x16x16xf32>
    %34 = arith.addf %19, %20 : vector<4x16x16xf32>
    %cst_14 = arith.constant 9.99999974E-5 : f32
    %35 = vector.broadcast %cst_14 : f32 to vector<4x16x16xf32>
    %36 = arith.addf %34, %35 : vector<4x16x16xf32>
    %37 = arith.addf %22, %23 : vector<4x16x16xf32>
    %cst_15 = arith.constant 8.99999984E-4 : f32
    %38 = vector.broadcast %cst_15 : f32 to vector<4x16x16xf32>
    %39 = arith.addf %37, %38 : vector<4x16x16xf32>
    %40 = arith.mulf %36, %39 : vector<4x16x16xf32>
    %41 = arith.divf %33, %40 : vector<4x16x16xf32>
    %42 = vector.shape_cast %41 : vector<4x16x16xf32> to vector<1x4x16x16xf32>
    %cst_16 = arith.constant dense<0.000000e+00> : vector<1xf32>
    %43 = vector.multi_reduction <add>, %42, %cst_16 [1, 2, 3] : vector<1x4x16x16xf32> to vector<1xf32>
    %44 = vector.shape_cast %43 : vector<1xf32> to vector<1x1x1x1xf32>
    %45 = vector.extract %44[0, 0, 0, 0] : f32 from vector<1x1x1x1xf32>
    %46 = vector.broadcast %45 : f32 to vector<1x1x1xf32>
    %c0_17 = arith.constant 0 : index
    %c0_18 = arith.constant 0 : index
    %c0_19 = arith.constant 0 : index
    %47 = vector.load %arg5[%c0_17, %c0_18, %c0_19] : memref<1x1x1xf32, #tpu.memory_space<vmem>>, vector<1x1x1xf32>
    tpu.vector_store %arg5[%c0_17, %c0_18, %c0_19], %46 {strides = array<i32>} : memref<1x1x1xf32, #tpu.memory_space<vmem>>, vector<1x1x1xf32>,
    return
  }
  func.func @transform_0(%arg0: i32) -> (i32, i32) {
    %c0_i32 = arith.constant 0 : i32
    %c0_i32_0 = arith.constant 0 : i32
    %c0_i32_1 = arith.constant 0 : i32
    return %c0_i32, %c0_i32_0 : i32, i32
  }
  func.func @transform_1(%arg0: i32) -> (i32, i32) {
    %c0_i32 = arith.constant 0 : i32
    %c0_i32_0 = arith.constant 0 : i32
    %c0_i32_1 = arith.constant 0 : i32
    return %c0_i32, %c0_i32_0 : i32, i32
  }
  func.func @transform_2(%arg0: i32) -> (i32, i32, i32) {
    %c0_i32 = arith.constant 0 : i32
    %c0_i32_0 = arith.constant 0 : i32
    %c0_i32_1 = arith.constant 0 : i32
    return %arg0, %c0_i32, %c0_i32_0 : i32, i32, i32
  }
  func.func @transform_3(%arg0: i32) -> (i32, i32, i32) {
    %c0_i32 = arith.constant 0 : i32
    %c0_i32_0 = arith.constant 0 : i32
    %c0_i32_1 = arith.constant 0 : i32
    return %arg0, %c0_i32, %c0_i32_0 : i32, i32, i32
  }
  func.func @transform_4(%arg0: i32) -> (i32, i32, i32) {
    %c0_i32 = arith.constant 0 : i32
    %c0_i32_0 = arith.constant 0 : i32
    %c0_i32_1 = arith.constant 0 : i32
    return %arg0, %c0_i32, %c0_i32_0 : i32, i32, i32
  }
}

</mosaic_0001>

<llo_original>
// kernel: tpu_custom_call.1
$region0: #{tpu_custom_call.1}
  #allocation0 [shape = 'u32[]', space=smem, size = 0x4, offset = 0x4, fixed_abs, tag = 'smem constant byte address 0x4 - core index']
  #allocation1 [shape = 'u32[72,128]{1,0:T(1,128)}', space=vmem, size = 0x9000, scoped, tag = 'internal scratch']
  %s0 = inlined_call_operand.hbm [shape: f32[16,16], index: 0, kind: input, shape index: {}]
  %s1 = inlined_call_operand.hbm [shape: f32[16,16], index: 1, kind: input, shape index: {}]
  %s2 = inlined_call_operand.hbm [shape: f32[8,16,16], index: 2, kind: input, shape index: {}]
  %s3 = inlined_call_operand.hbm [shape: f32[8,16,16], index: 3, kind: input, shape index: {}]
  %s4 = inlined_call_operand.vmem [shape: f32[2,1,1], index: 4, kind: output, shape index: {}]
  %s5 = sld [smem:[#allocation0]]
  $region65: #{tpu_custom_call.1} parent=0
    _
  %s7 = ssub.s32 1, %s5
  %s8 = scalar_select 0, %s7, %s5
  $region1: #{tpu_custom_call.1} parent=0
    #allocation2 [shape = 'u8[8192]{0}', space=vmem, size = 0x2000, scoped, tag = 'input window, operand 0, single buffered']
    #allocation3 [shape = 's32[2]{0}', space=sflag, size = 0x8, scoped, tag = 'scoped memory for tpu_custom_call.1']
    #allocation4 [shape = 'u8[8192]{0}', space=vmem, size = 0x2000, scoped, tag = 'input window, operand 1, single buffered']
    #allocation5 [shape = 's32[1]{0}', space=sflag, size = 0x4, scoped, tag = 'scoped memory for tpu_custom_call.1']
    #allocation6 [shape = 'u8[65536]{0}', space=vmem, size = 0x10000, scoped, tag = 'input window, operand 2']
    #allocation7 [shape = 'u8[65536]{0}', space=vmem, size = 0x10000, scoped, tag = 'input window, operand 3']
    %9 = vsyncpa [#allocation3], 0
    %10 = vsyncpa [#allocation5], 0
    loop: start=0, step=1, limit=4
    $region2: #{tpu_custom_call.1} parent=1 // loop_pre_header
      _
    $region3: #{tpu_custom_call.1} parent=1 // loop_header
      %s12 = sphi 0, %s16
      %p13 = scmp.ge.s32.totalorder %s12, 4
      %s20 = sphi 0, %s20
      %s22 = sphi 0, %s20
      %s23 = sphi 0, %s22
      %s37 = sphi 0, %s23
      %s41 = sphi 0, %s41
      %s43 = sphi 0, %s41
      %s44 = sphi 0, %s43
      %s58 = sphi 0, %s44
      %s64 = sphi 0, %s66
      %s67 = sphi 0, %s64
      %s68 = sphi 0, %s67
      %s84 = sphi 0, %s68
      %s90 = sphi 0, %s92
      %s93 = sphi 0, %s90
      %s94 = sphi 0, %s93
      %s110 = sphi 0, %s94
      %s116 = sphi 0, %s118
      %s119 = sphi 0, %s116
      %s120 = sphi 0, %s119
      %s136 = sphi 0, %s120
    $region4: #{tpu_custom_call.1} parent=1 // loop_header_branch
      %15 = sbr.rel (%p13) target = $region8
    $region5: #{tpu_custom_call.1} parent=1 // loop_body
      %s17 = ssub.s32 %s12, 1
      %s18 = ssub.s32 %s12, 2
      %s19 = sadd.s32 %s12, 1
      %s21 = sadd.s32 %s20, 1
      %p24 = scmp.eq.s32.totalorder %s12, 1
      %p25 = scmp.ne.s32.totalorder %s20, %s22
      %p26 = scmp.eq.s32.totalorder %s12, 0
      %p27 = por %p25, %p26
      %p28 = scmp.ne.s32.totalorder %s20, %s22
      %p29 = scmp.eq.s32.totalorder %s17, 1
      %p30 = por %p28, %p29
      %p31 = scmp.ne.s32.totalorder %s22, %s23
      %p32 = scmp.eq.s32.totalorder %s17, 0
      %p33 = por %p31, %p32
      %p34 = scmp.ne.s32.totalorder %s22, %s23
      %p35 = scmp.eq.s32.totalorder %s18, 1
      %p36 = por %p34, %p35
      %p38 = scmp.ne.s32.totalorder %s23, %s37
      %p39 = scmp.eq.s32.totalorder %s18, 0
      %p40 = por %p38, %p39
      %s42 = sadd.s32 %s41, 1
      %p45 = scmp.eq.s32.totalorder %s12, 1
      %p46 = scmp.ne.s32.totalorder %s41, %s43
      %p47 = scmp.eq.s32.totalorder %s12, 0
      %p48 = por %p46, %p47
      %p49 = scmp.ne.s32.totalorder %s41, %s43
      %p50 = scmp.eq.s32.totalorder %s17, 1
      %p51 = por %p49, %p50
      %p52 = scmp.ne.s32.totalorder %s43, %s44
      %p53 = scmp.eq.s32.totalorder %s17, 0
      %p54 = por %p52, %p53
      %p55 = scmp.ne.s32.totalorder %s43, %s44
      %p56 = scmp.eq.s32.totalorder %s18, 1
      %p57 = por %p55, %p56
      %p59 = scmp.ne.s32.totalorder %s44, %s58
      %p60 = scmp.eq.s32.totalorder %s18, 0
      %p61 = por %p59, %p60
      %s62 = ssub.s32 %s12, %s19
      %p63 = scmp.eq.s32.totalorder %s62, 0
      %s65 = sadd.s32 %s64, 1
      %s66 = scalar_select %p63, %s64, %s65
      %p69 = pneg %p63
      %p70 = scmp.eq.s32.totalorder %s12, 1
      %p71 = por %p69, %p70
      %p72 = scmp.ne.s32.totalorder %s64, %s67
      %p73 = scmp.eq.s32.totalorder %s12, 0
      %p74 = por %p72, %p73
      %p75 = scmp.ne.s32.totalorder %s64, %s67
      %p76 = scmp.eq.s32.totalorder %s17, 1
      %p77 = por %p75, %p76
      %p78 = scmp.ne.s32.totalorder %s67, %s68
      %p79 = scmp.eq.s32.totalorder %s17, 0
      %p80 = por %p78, %p79
      %p81 = scmp.ne.s32.totalorder %s67, %s68
      %p82 = scmp.eq.s32.totalorder %s18, 1
      %p83 = por %p81, %p82
      %p85 = scmp.ne.s32.totalorder %s68, %s84
      %p86 = scmp.eq.s32.totalorder %s18, 0
      %p87 = por %p85, %p86
      %s88 = ssub.s32 %s12, %s19
      %p89 = scmp.eq.s32.totalorder %s88, 0
      %s91 = sadd.s32 %s90, 1
      %s92 = scalar_select %p89, %s90, %s91
      %p95 = pneg %p89
      %p96 = scmp.eq.s32.totalorder %s12, 1
      %p97 = por %p95, %p96
      %p98 = scmp.ne.s32.totalorder %s90, %s93
      %p99 = scmp.eq.s32.totalorder %s12, 0
      %p100 = por %p98, %p99
      %p101 = scmp.ne.s32.totalorder %s90, %s93
      %p102 = scmp.eq.s32.totalorder %s17, 1
      %p103 = por %p101, %p102
      %p104 = scmp.ne.s32.totalorder %s93, %s94
      %p105 = scmp.eq.s32.totalorder %s17, 0
      %p106 = por %p104, %p105
      %p107 = scmp.ne.s32.totalorder %s93, %s94
      %p108 = scmp.eq.s32.totalorder %s18, 1
      %p109 = por %p107, %p108
      %p111 = scmp.ne.s32.totalorder %s94, %s110
      %p112 = scmp.eq.s32.totalorder %s18, 0
      %p113 = por %p111, %p112
      %s114 = ssub.s32 %s12, %s19
      %p115 = scmp.eq.s32.totalorder %s114, 0
      %s117 = sadd.s32 %s116, 1
      %s118 = scalar_select %p115, %s116, %s117
      %p121 = pneg %p115
      %p122 = scmp.eq.s32.totalorder %s12, 1
      %p123 = por %p121, %p122
      %p124 = scmp.ne.s32.totalorder %s116, %s119
      %p125 = scmp.eq.s32.totalorder %s12, 0
      %p126 = por %p124, %p125
      %p127 = scmp.ne.s32.totalorder %s116, %s119
      %p128 = scmp.eq.s32.totalorder %s17, 1
      %p129 = por %p127, %p128
      %p130 = scmp.ne.s32.totalorder %s119, %s120
      %p131 = scmp.eq.s32.totalorder %s17, 0
      %p132 = por %p130, %p131
      %p133 = scmp.ne.s32.totalorder %s119, %s120
      %p134 = scmp.eq.s32.totalorder %s18, 1
      %p135 = por %p133, %p134
      %p137 = scmp.ne.s32.totalorder %s120, %s136
      %p138 = scmp.eq.s32.totalorder %s18, 0
      %p139 = por %p137, %p138
      %p140 = scmp.le.s32.totalorder 1, %s12
      %p141 = scmp.lt.s32.totalorder %s12, 3
      %p142 = pnand %p140, %p141
      %p143 = pneg %p142
      // Predicated region
      $region9: #{tpu_custom_call.1} parent=5 // pred_check
        _
      $region10: #{tpu_custom_call.1} parent=5 // pred_check_branch
        %145 = sbr.rel (%p142) target = $region12
      $region11: #{tpu_custom_call.1} parent=5 // pred_region
        %s146 = ssub.s32 %s12, 1
        // Predicated region
        $region13: #{tpu_custom_call.1} parent=11 // pred_check
          %p147 = pneg %p33
        $region14: #{tpu_custom_call.1} parent=11 // pred_check_branch
          %149 = sbr.rel (%p147) target = $region16
        $region15: #{tpu_custom_call.1} parent=11 // pred_region
          %151 = vsyncadd [#allocation3], 0
          %s152 = sshll.u32 %s0, 4
          %s153 = int_to_ptr.hbm [resolvable:$true] %s152
          %s154 = sshll.u32 [#allocation2], 4
          %s155 = int_to_ptr.vmem [resolvable:$true] %s154
          %160 = dma.hbm_to_vmem [thread:$0]  %s153, 256, %s155, [#allocation3], 128, 128, 8
        $region16: #{tpu_custom_call.1} parent=11 // pred_fallthru
          _
        // Predicated region
        $region17: #{tpu_custom_call.1} parent=11 // pred_check
          %p161 = pneg %p54
        $region18: #{tpu_custom_call.1} parent=11 // pred_check_branch
          %163 = sbr.rel (%p161) target = $region20
        $region19: #{tpu_custom_call.1} parent=11 // pred_region
          %165 = vsyncadd [#allocation5], 0
          %s166 = sshll.u32 %s1, 4
          %s167 = int_to_ptr.hbm [resolvable:$true] %s166
          %s168 = sshll.u32 [#allocation4], 4
          %s169 = int_to_ptr.vmem [resolvable:$true] %s168
          %174 = dma.hbm_to_vmem [thread:$0]  %s167, 256, %s169, [#allocation5], 128, 128, 8
        $region20: #{tpu_custom_call.1} parent=11 // pred_fallthru
          _
      $region12: #{tpu_custom_call.1} parent=5 // pred_fallthru
        _
      %p175 = scmp.lt.s32.totalorder %s12, 2
      // Predicated region
      $region21: #{tpu_custom_call.1} parent=5 // pred_check
        %p176 = pneg %p175
      $region22: #{tpu_custom_call.1} parent=5 // pred_check_branch
        %178 = sbr.rel (%p176) target = $region24
      $region23: #{tpu_custom_call.1} parent=5 // pred_region
        // Predicated region
        $region25: #{tpu_custom_call.1} parent=23 // pred_check
          %p179 = pneg %p74
        $region26: #{tpu_custom_call.1} parent=23 // pred_check_branch
          %181 = sbr.rel (%p179) target = $region28
        $region27: #{tpu_custom_call.1} parent=23 // pred_region
          %s182 = sand.u32 %s12, 1
          %s183 = scalar_lea.sflag [#allocation3], %s182
          %s184 = sand.u32 %s64, 1
          %s185 = smul.addr %s184, 64
          %s186 = scalar_lea.vmem [#allocation6], %s185
          %s187 = smul.u32 4, %s12
          %189 = vsyncadd %s183, 0
          %s190 = smul.addr %s187, 2
          %s191 = smul.addr %s190, 8
          %s192 = scalar_lea.hbm %s2, %s191
          %s193 = sshll.u32 %s192, 4
          %s194 = int_to_ptr.hbm [resolvable:$true] %s193
          %s195 = sshll.u32 %s186, 4
          %s196 = int_to_ptr.vmem [resolvable:$true] %s195
          %201 = dma.hbm_to_vmem [thread:$0]  %s194, 1024, %s196, %s183, 128, 128, 8
        $region28: #{tpu_custom_call.1} parent=23 // pred_fallthru
          _
        // Predicated region
        $region29: #{tpu_custom_call.1} parent=23 // pred_check
          %p202 = pneg %p100
        $region30: #{tpu_custom_call.1} parent=23 // pred_check_branch
          %204 = sbr.rel (%p202) target = $region32
        $region31: #{tpu_custom_call.1} parent=23 // pred_region
          %s205 = sand.u32 %s12, 1
          %s206 = scalar_lea.sflag [#allocation3], %s205
          %s207 = sand.u32 %s90, 1
          %s208 = smul.addr %s207, 64
          %s209 = scalar_lea.vmem [#allocation7], %s208
          %s210 = smul.u32 4, %s12
          %212 = vsyncadd %s206, 0
          %s213 = smul.addr %s210, 2
          %s214 = smul.addr %s213, 8
          %s215 = scalar_lea.hbm %s3, %s214
          %s216 = sshll.u32 %s215, 4
          %s217 = int_to_ptr.hbm [resolvable:$true] %s216
          %s218 = sshll.u32 %s209, 4
          %s219 = int_to_ptr.vmem [resolvable:$true] %s218
          %224 = dma.hbm_to_vmem [thread:$0]  %s217, 1024, %s219, %s206, 128, 128, 8
        $region32: #{tpu_custom_call.1} parent=23 // pred_fallthru
          _
      $region24: #{tpu_custom_call.1} parent=5 // pred_fallthru
        _
      %p225 = scmp.le.s32.totalorder 1, %s12
      %p226 = scmp.lt.s32.totalorder %s12, 3
      %p227 = pnand %p225, %p226
      %p228 = pneg %p227
      // Predicated region
      $region33: #{tpu_custom_call.1} parent=5 // pred_check
        _
      $region34: #{tpu_custom_call.1} parent=5 // pred_check_branch
        %230 = sbr.rel (%p227) target = $region36
      $region35: #{tpu_custom_call.1} parent=5 // pred_region
        %s231 = ssub.s32 %s12, 1
        // Predicated region
        $region37: #{tpu_custom_call.1} parent=35 // pred_check
          %p232 = pneg %p33
        $region38: #{tpu_custom_call.1} parent=35 // pred_check_branch
          %234 = sbr.rel (%p232) target = $region40
        $region39: #{tpu_custom_call.1} parent=35 // pred_region
          %236 = dma.done [#allocation3], 256
        $region40: #{tpu_custom_call.1} parent=35 // pred_fallthru
          _
        // Predicated region
        $region41: #{tpu_custom_call.1} parent=35 // pred_check
          %p237 = pneg %p54
        $region42: #{tpu_custom_call.1} parent=35 // pred_check_branch
          %239 = sbr.rel (%p237) target = $region44
        $region43: #{tpu_custom_call.1} parent=35 // pred_region
          %241 = dma.done [#allocation5], 256
        $region44: #{tpu_custom_call.1} parent=35 // pred_fallthru
          _
        %s242 = sand.u32 %s17, 1
        %s243 = scalar_lea.sflag [#allocation3], %s242
        %s244 = sand.u32 %s67, 1
        %s245 = smul.addr %s244, 64
        %s246 = scalar_lea.vmem [#allocation6], %s245
        // Predicated region
        $region45: #{tpu_custom_call.1} parent=35 // pred_check
          %p247 = pneg %p80
        $region46: #{tpu_custom_call.1} parent=35 // pred_check_branch
          %249 = sbr.rel (%p247) target = $region48
        $region47: #{tpu_custom_call.1} parent=35 // pred_region
          %251 = dma.done %s243, 1024
        $region48: #{tpu_custom_call.1} parent=35 // pred_fallthru
          _
        %s252 = sand.u32 %s17, 1
        %s253 = scalar_lea.sflag [#allocation3], %s252
        %s254 = sand.u32 %s93, 1
        %s255 = smul.addr %s254, 64
        %s256 = scalar_lea.vmem [#allocation7], %s255
        // Predicated region
        $region49: #{tpu_custom_call.1} parent=35 // pred_check
          %p257 = pneg %p106
        $region50: #{tpu_custom_call.1} parent=35 // pred_check_branch
          %259 = sbr.rel (%p257) target = $region52
        $region51: #{tpu_custom_call.1} parent=35 // pred_region
          %261 = dma.done %s253, 1024
        $region52: #{tpu_custom_call.1} parent=35 // pred_fallthru
          _
        %p262 = pneg %p33
        %p263 = pneg %p30
        %p264 = pneg %p54
        %p265 = pneg %p51
        %s266 = sand.u32 %s17, 1
        %s267 = scalar_lea.sflag [#allocation3], %s266
        %s268 = sand.u32 %s67, 1
        %s269 = smul.addr %s268, 64
        %s270 = scalar_lea.vmem [#allocation6], %s269
        %p271 = pneg %p80
        %p272 = pneg %p77
        %s273 = sand.u32 %s17, 1
        %s274 = scalar_lea.sflag [#allocation3], %s273
        %s275 = sand.u32 %s93, 1
        %s276 = smul.addr %s275, 64
        %s277 = scalar_lea.vmem [#allocation7], %s276
        %p278 = pneg %p106
        %p279 = pneg %p103
        %p280 = pneg %p132
        %p281 = pneg %p129
        %p282 = scmp.lt.s32.totalorder %s17, 1
        %s283 = scalar_select %p282, %s17, 1
        %s284 = scalar_lea.vmem %s4, %s283
        %s285 = smul.u32 4, %s17
        %s286 = smul.u32 4, %s17
        %p287 = scmp.lt.s32.totalorder %s17, 1
        %s288 = scalar_select %p287, %s17, 1
        %s289 = scalar_lea.vmem %s4, %s288
        %v290 = vld [vmem:[%s246] sm:$0xff]
        %v291 = vld [vmem:[%s246 + $0x8] sm:$0xff]
        %v292 = vld [vmem:[%s246 + $0x10] sm:$0xff]
        %v293 = vld [vmem:[%s246 + $0x18] sm:$0xff]
        %v294 = vld [vmem:[%s246 + $0x20] sm:$0xff]
        %v295 = vld [vmem:[%s246 + $0x28] sm:$0xff]
        %v296 = vld [vmem:[%s246 + $0x30] sm:$0xff]
        %v297 = vld [vmem:[%s246 + $0x38] sm:$0xff]
        %v298 = vld [vmem:[%s256] sm:$0xff]
        %v299 = vld [vmem:[%s256 + $0x8] sm:$0xff]
        %v300 = vld [vmem:[%s256 + $0x10] sm:$0xff]
        %v301 = vld [vmem:[%s256 + $0x18] sm:$0xff]
        %v302 = vld [vmem:[%s256 + $0x20] sm:$0xff]
        %v303 = vld [vmem:[%s256 + $0x28] sm:$0xff]
        %v304 = vld [vmem:[%s256 + $0x30] sm:$0xff]
        %v305 = vld [vmem:[%s256 + $0x38] sm:$0xff]
        %v306 = vmul.f32 %v290, %v290
        %v307 = vmul.f32 %v291, %v291
        %v308 = vmul.f32 %v292, %v292
        %v309 = vmul.f32 %v293, %v293
        %v310 = vmul.f32 %v294, %v294
        %v311 = vmul.f32 %v295, %v295
        %v312 = vmul.f32 %v296, %v296
        %v313 = vmul.f32 %v297, %v297
        %v314 = vmul.f32 %v298, %v298
        %v315 = vmul.f32 %v299, %v299
        %v316 = vmul.f32 %v300, %v300
        %v317 = vmul.f32 %v301, %v301
        %v318 = vmul.f32 %v302, %v302
        %v319 = vmul.f32 %v303, %v303
        %v320 = vmul.f32 %v304, %v304
        %v321 = vmul.f32 %v305, %v305
        %v322 = vmul.f32 %v290, %v298
        %v323 = vmul.f32 %v291, %v299
        %v324 = vmul.f32 %v292, %v300
        %v325 = vmul.f32 %v293, %v301
        %v326 = vmul.f32 %v294, %v302
        %v327 = vmul.f32 %v295, %v303
        %v328 = vmul.f32 %v296, %v304
        %v329 = vmul.f32 %v297, %v305
        %v330 = vld [vmem:[#allocation4] sm:$0xff]
        %v331 = vld [vmem:[#allocation4 + $0x8] sm:$0xff]
        %v332 = vld [vmem:[#allocation2] sm:$0xff]
        %v333 = vld [vmem:[#allocation2 + $0x8] sm:$0xff]
        %vm334 = vcmask 130048
        %v336 = vsel %vm334, %v290, 0
        %v339 = vsel %vm334, %v291, 0
        %v342 = vsel %vm334, %v330, 0
        %v345 = vsel %vm334, %v331, 0
        %347 = vmatpush.xpose.msra.mxu0 0.0
        %348 = vmatpush.xpose.msra.mxu0 0.0
        %349 = vmatpush.xpose.msra.mxu0 0.0
        %350 = vmatpush.xpose.msra.mxu0 0.0
        %351 = vmatpush.xpose.msra.mxu0 0.0
        %352 = vmatpush.xpose.msra.mxu0 0.0
        %353 = vmatpush.xpose.msra.mxu0 0.0
        %354 = vmatpush.xpose.msra.mxu0 0.0
        %355 = vmatpush.xpose.msra.mxu0 0.0
        %356 = vmatpush.xpose.msra.mxu0 0.0
        %357 = vmatpush.xpose.msra.mxu0 0.0
        %358 = vmatpush.xpose.msra.mxu0 0.0
        %359 = vmatpush.xpose.msra.mxu0 0.0
        %360 = vmatpush.xpose.msra.mxu0 0.0
        %v361 = vand.u32 %v345, 4294901760
        %362 = vmatpush.xpose.msra.mxu0 %v361
        %v363 = vand.u32 %v342, 4294901760
        %364 = vmatpush.xpose.msra.mxu0 %v363
        %v365 = vand.u32 %v336, 4294901760
        %v366 = vsub.f32 %v336, %v365
        %v367 = vand.u32 %v366, 4294901760
        %v368 = vsub.f32 %v366, %v367
        %v369 = vand.u32 %v368, 4294901760
        %370 = vmatmul.f32.gmra.mxu0 %v369
        %v371 = vpop.f32.mrf.mxu0
        %v372 = vadd.f32 0.0, %v371
        %v373 = vand.u32 %v339, 4294901760
        %v374 = vsub.f32 %v339, %v373
        %v375 = vand.u32 %v374, 4294901760
        %v376 = vsub.f32 %v374, %v375
        %v377 = vand.u32 %v376, 4294901760
        %378 = vmatmul.f32.gmra.mxu0 %v377
        %v379 = vpop.f32.mrf.mxu0
        %v380 = vadd.f32 0.0, %v379
        %381 = vdwg.mxu0
        %382 = vmatpush.xpose.msra.mxu0 0.0
        %383 = vmatpush.xpose.msra.mxu0 0.0
        %384 = vmatpush.xpose.msra.mxu0 0.0
        %385 = vmatpush.xpose.msra.mxu0 0.0
        %386 = vmatpush.xpose.msra.mxu0 0.0
        %387 = vmatpush.xpose.msra.mxu0 0.0
        %388 = vmatpush.xpose.msra.mxu0 0.0
        %389 = vmatpush.xpose.msra.mxu0 0.0
        %390 = vmatpush.xpose.msra.mxu0 0.0
        %391 = vmatpush.xpose.msra.mxu0 0.0
        %392 = vmatpush.xpose.msra.mxu0 0.0
        %393 = vmatpush.xpose.msra.mxu0 0.0
        %394 = vmatpush.xpose.msra.mxu0 0.0
        %395 = vmatpush.xpose.msra.mxu0 0.0
        %v396 = vand.u32 %v345, 4294901760
        %v397 = vsub.f32 %v345, %v396
        %v398 = vand.u32 %v397, 4294901760
        %v399 = vsub.f32 %v397, %v398
        %v400 = vand.u32 %v399, 4294901760
        %401 = vmatpush.xpose.msra.mxu0 %v400
        %v402 = vand.u32 %v342, 4294901760
        %v403 = vsub.f32 %v342, %v402
        %v404 = vand.u32 %v403, 4294901760
        %v405 = vsub.f32 %v403, %v404
        %v406 = vand.u32 %v405, 4294901760
        %407 = vmatpush.xpose.msra.mxu0 %v406
        %v408 = vand.u32 %v336, 4294901760
        %409 = vmatmul.f32.gmra.mxu0 %v408
        %v410 = vpop.f32.mrf.mxu0
        %v411 = vadd.f32 %v372, %v410
        %v412 = vand.u32 %v339, 4294901760
        %413 = vmatmul.f32.gmra.mxu0 %v412
        %v414 = vpop.f32.mrf.mxu0
        %v415 = vadd.f32 %v380, %v414
        %416 = vdwg.mxu0
        %417 = vmatpush.xpose.msra.mxu0 0.0
        %418 = vmatpush.xpose.msra.mxu0 0.0
        %419 = vmatpush.xpose.msra.mxu0 0.0
        %420 = vmatpush.xpose.msra.mxu0 0.0
        %421 = vmatpush.xpose.msra.mxu0 0.0
        %422 = vmatpush.xpose.msra.mxu0 0.0
        %423 = vmatpush.xpose.msra.mxu0 0.0
        %424 = vmatpush.xpose.msra.mxu0 0.0
        %425 = vmatpush.xpose.msra.mxu0 0.0
        %426 = vmatpush.xpose.msra.mxu0 0.0
        %427 = vmatpush.xpose.msra.mxu0 0.0
        %428 = vmatpush.xpose.msra.mxu0 0.0
        %429 = vmatpush.xpose.msra.mxu0 0.0
        %430 = vmatpush.xpose.msra.mxu0 0.0
        %v431 = vand.u32 %v345, 4294901760
        %v432 = vsub.f32 %v345, %v431
        %433 = vmatpush.xpose.msra.mxu0 %v432
        %v434 = vand.u32 %v342, 4294901760
        %v435 = vsub.f32 %v342, %v434
        %436 = vmatpush.xpose.msra.mxu0 %v435
        %v437 = vand.u32 %v336, 4294901760
        %v438 = vsub.f32 %v336, %v437
        %439 = vmatmul.f32.gmra.mxu0 %v438
        %v440 = vpop.f32.mrf.mxu0
        %v441 = vadd.f32 %v411, %v440
        %v442 = vand.u32 %v339, 4294901760
        %v443 = vsub.f32 %v339, %v442
        %444 = vmatmul.f32.gmra.mxu0 %v443
        %v445 = vpop.f32.mrf.mxu0
        %v446 = vadd.f32 %v415, %v445
        %447 = vdwg.mxu0
        %448 = vmatpush.xpose.msra.mxu0 0.0
        %449 = vmatpush.xpose.msra.mxu0 0.0
        %450 = vmatpush.xpose.msra.mxu0 0.0
        %451 = vmatpush.xpose.msra.mxu0 0.0
        %452 = vmatpush.xpose.msra.mxu0 0.0
        %453 = vmatpush.xpose.msra.mxu0 0.0
        %454 = vmatpush.xpose.msra.mxu0 0.0
        %455 = vmatpush.xpose.msra.mxu0 0.0
        %456 = vmatpush.xpose.msra.mxu0 0.0
        %457 = vmatpush.xpose.msra.mxu0 0.0
        %458 = vmatpush.xpose.msra.mxu0 0.0
        %459 = vmatpush.xpose.msra.mxu0 0.0
        %460 = vmatpush.xpose.msra.mxu0 0.0
        %461 = vmatpush.xpose.msra.mxu0 0.0
        %v462 = vand.u32 %v345, 4294901760
        %463 = vmatpush.xpose.msra.mxu0 %v462
        %v464 = vand.u32 %v342, 4294901760
        %465 = vmatpush.xpose.msra.mxu0 %v464
        %v466 = vand.u32 %v336, 4294901760
        %v467 = vsub.f32 %v336, %v466
        %v468 = vand.u32 %v467, 4294901760
        %469 = vmatmul.f32.gmra.mxu0 %v468
        %v470 = vpop.f32.mrf.mxu0
        %v471 = vadd.f32 %v441, %v470
        %v472 = vand.u32 %v339, 4294901760
        %v473 = vsub.f32 %v339, %v472
        %v474 = vand.u32 %v473, 4294901760
        %475 = vmatmul.f32.gmra.mxu0 %v474
        %v476 = vpop.f32.mrf.mxu0
        %v477 = vadd.f32 %v446, %v476
        %478 = vdwg.mxu0
        %479 = vmatpush.xpose.msra.mxu0 0.0
        %480 = vmatpush.xpose.msra.mxu0 0.0
        %481 = vmatpush.xpose.msra.mxu0 0.0
        %482 = vmatpush.xpose.msra.mxu0 0.0
        %483 = vmatpush.xpose.msra.mxu0 0.0
        %484 = vmatpush.xpose.msra.mxu0 0.0
        %485 = vmatpush.xpose.msra.mxu0 0.0
        %486 = vmatpush.xpose.msra.mxu0 0.0
        %487 = vmatpush.xpose.msra.mxu0 0.0
        %488 = vmatpush.xpose.msra.mxu0 0.0
        %489 = vmatpush.xpose.msra.mxu0 0.0
        %490 = vmatpush.xpose.msra.mxu0 0.0
        %491 = vmatpush.xpose.msra.mxu0 0.0
        %492 = vmatpush.xpose.msra.mxu0 0.0
        %v493 = vand.u32 %v345, 4294901760
        %v494 = vsub.f32 %v345, %v493
        %v495 = vand.u32 %v494, 4294901760
        %496 = vmatpush.xpose.msra.mxu0 %v495
        %v497 = vand.u32 %v342, 4294901760
        %v498 = vsub.f32 %v342, %v497
        %v499 = vand.u32 %v498, 4294901760
        %500 = vmatpush.xpose.msra.mxu0 %v499
        %v501 = vand.u32 %v336, 4294901760
        %502 = vmatmul.f32.gmra.mxu0 %v501
        %v503 = vpop.f32.mrf.mxu0
        %v504 = vadd.f32 %v471, %v503
        %v505 = vand.u32 %v339, 4294901760
        %506 = vmatmul.f32.gmra.mxu0 %v505
        %v507 = vpop.f32.mrf.mxu0
        %v508 = vadd.f32 %v477, %v507
        %509 = vdwg.mxu0
        %510 = vmatpush.xpose.msra.mxu0 0.0
        %511 = vmatpush.xpose.msra.mxu0 0.0
        %512 = vmatpush.xpose.msra.mxu0 0.0
        %513 = vmatpush.xpose.msra.mxu0 0.0
        %514 = vmatpush.xpose.msra.mxu0 0.0
        %515 = vmatpush.xpose.msra.mxu0 0.0
        %516 = vmatpush.xpose.msra.mxu0 0.0
        %517 = vmatpush.xpose.msra.mxu0 0.0
        %518 = vmatpush.xpose.msra.mxu0 0.0
        %519 = vmatpush.xpose.msra.mxu0 0.0
        %520 = vmatpush.xpose.msra.mxu0 0.0
        %521 = vmatpush.xpose.msra.mxu0 0.0
        %522 = vmatpush.xpose.msra.mxu0 0.0
        %523 = vmatpush.xpose.msra.mxu0 0.0
        %v524 = vand.u32 %v345, 4294901760
        %525 = vmatpush.xpose.msra.mxu0 %v524
        %v526 = vand.u32 %v342, 4294901760
        %527 = vmatpush.xpose.msra.mxu0 %v526
        %v528 = vand.u32 %v336, 4294901760
        %529 = vmatmul.f32.gmra.mxu0 %v528
        %v530 = vpop.f32.mrf.mxu0
        %v531 = vadd.f32 %v504, %v530
        %v532 = vand.u32 %v339, 4294901760
        %533 = vmatmul.f32.gmra.mxu0 %v532
        %v534 = vpop.f32.mrf.mxu0
        %v535 = vadd.f32 %v508, %v534
        %536 = vdwg.mxu0
        %v538 = vsel %vm334, %v292, 0
        %v541 = vsel %vm334, %v293, 0
        %543 = vmatpush.xpose.msra.mxu0 0.0
        %544 = vmatpush.xpose.msra.mxu0 0.0
        %545 = vmatpush.xpose.msra.mxu0 0.0
        %546 = vmatpush.xpose.msra.mxu0 0.0
        %547 = vmatpush.xpose.msra.mxu0 0.0
        %548 = vmatpush.xpose.msra.mxu0 0.0
        %549 = vmatpush.xpose.msra.mxu0 0.0
        %550 = vmatpush.xpose.msra.mxu0 0.0
        %551 = vmatpush.xpose.msra.mxu0 0.0
        %552 = vmatpush.xpose.msra.mxu0 0.0
        %553 = vmatpush.xpose.msra.mxu0 0.0
        %554 = vmatpush.xpose.msra.mxu0 0.0
        %555 = vmatpush.xpose.msra.mxu0 0.0
        %556 = vmatpush.xpose.msra.mxu0 0.0
        %v557 = vand.u32 %v345, 4294901760
        %558 = vmatpush.xpose.msra.mxu0 %v557
        %v559 = vand.u32 %v342, 4294901760
        %560 = vmatpush.xpose.msra.mxu0 %v559
        %v561 = vand.u32 %v538, 4294901760
        %v562 = vsub.f32 %v538, %v561
        %v563 = vand.u32 %v562, 4294901760
        %v564 = vsub.f32 %v562, %v563
        %v565 = vand.u32 %v564, 4294901760
        %566 = vmatmul.f32.gmra.mxu0 %v565
        %v567 = vpop.f32.mrf.mxu0
        %v568 = vadd.f32 0.0, %v567
        %v569 = vand.u32 %v541, 4294901760
        %v570 = vsub.f32 %v541, %v569
        %v571 = vand.u32 %v570, 4294901760
        %v572 = vsub.f32 %v570, %v571
        %v573 = vand.u32 %v572, 4294901760
        %574 = vmatmul.f32.gmra.mxu0 %v573
        %v575 = vpop.f32.mrf.mxu0
        %v576 = vadd.f32 0.0, %v575
        %577 = vdwg.mxu0
        %578 = vmatpush.xpose.msra.mxu0 0.0
        %579 = vmatpush.xpose.msra.mxu0 0.0
        %580 = vmatpush.xpose.msra.mxu0 0.0
        %581 = vmatpush.xpose.msra.mxu0 0.0
        %582 = vmatpush.xpose.msra.mxu0 0.0
        %583 = vmatpush.xpose.msra.mxu0 0.0
        %584 = vmatpush.xpose.msra.mxu0 0.0
        %585 = vmatpush.xpose.msra.mxu0 0.0
        %586 = vmatpush.xpose.msra.mxu0 0.0
        %587 = vmatpush.xpose.msra.mxu0 0.0
        %588 = vmatpush.xpose.msra.mxu0 0.0
        %589 = vmatpush.xpose.msra.mxu0 0.0
        %590 = vmatpush.xpose.msra.mxu0 0.0
        %591 = vmatpush.xpose.msra.mxu0 0.0
        %v592 = vand.u32 %v345, 4294901760
        %v593 = vsub.f32 %v345, %v592
        %v594 = vand.u32 %v593, 4294901760
        %v595 = vsub.f32 %v593, %v594
        %v596 = vand.u32 %v595, 4294901760
        %597 = vmatpush.xpose.msra.mxu0 %v596
        %v598 = vand.u32 %v342, 4294901760
        %v599 = vsub.f32 %v342, %v598
        %v600 = vand.u32 %v599, 4294901760
        %v601 = vsub.f32 %v599, %v600
        %v602 = vand.u32 %v601, 4294901760
        %603 = vmatpush.xpose.msra.mxu0 %v602
        %v604 = vand.u32 %v538, 4294901760
        %605 = vmatmul.f32.gmra.mxu0 %v604
        %v606 = vpop.f32.mrf.mxu0
        %v607 = vadd.f32 %v568, %v606
        %v608 = vand.u32 %v541, 4294901760
        %609 = vmatmul.f32.gmra.mxu0 %v608
        %v610 = vpop.f32.mrf.mxu0
        %v611 = vadd.f32 %v576, %v610
        %612 = vdwg.mxu0
        %613 = vmatpush.xpose.msra.mxu0 0.0
        %614 = vmatpush.xpose.msra.mxu0 0.0
        %615 = vmatpush.xpose.msra.mxu0 0.0
        %616 = vmatpush.xpose.msra.mxu0 0.0
        %617 = vmatpush.xpose.msra.mxu0 0.0
        %618 = vmatpush.xpose.msra.mxu0 0.0
        %619 = vmatpush.xpose.msra.mxu0 0.0
        %620 = vmatpush.xpose.msra.mxu0 0.0
        %621 = vmatpush.xpose.msra.mxu0 0.0
        %622 = vmatpush.xpose.msra.mxu0 0.0
        %623 = vmatpush.xpose.msra.mxu0 0.0
        %624 = vmatpush.xpose.msra.mxu0 0.0
        %625 = vmatpush.xpose.msra.mxu0 0.0
        %626 = vmatpush.xpose.msra.mxu0 0.0
        %v627 = vand.u32 %v345, 4294901760
        %v628 = vsub.f32 %v345, %v627
        %629 = vmatpush.xpose.msra.mxu0 %v628
        %v630 = vand.u32 %v342, 4294901760
        %v631 = vsub.f32 %v342, %v630
        %632 = vmatpush.xpose.msra.mxu0 %v631
        %v633 = vand.u32 %v538, 4294901760
        %v634 = vsub.f32 %v538, %v633
        %635 = vmatmul.f32.gmra.mxu0 %v634
        %v636 = vpop.f32.mrf.mxu0
        %v637 = vadd.f32 %v607, %v636
        %v638 = vand.u32 %v541, 4294901760
        %v639 = vsub.f32 %v541, %v638
        %640 = vmatmul.f32.gmra.mxu0 %v639
        %v641 = vpop.f32.mrf.mxu0
        %v642 = vadd.f32 %v611, %v641
        %643 = vdwg.mxu0
        %644 = vmatpush.xpose.msra.mxu0 0.0
        %645 = vmatpush.xpose.msra.mxu0 0.0
        %646 = vmatpush.xpose.msra.mxu0 0.0
        %647 = vmatpush.xpose.msra.mxu0 0.0
        %648 = vmatpush.xpose.msra.mxu0 0.0
        %649 = vmatpush.xpose.msra.mxu0 0.0
        %650 = vmatpush.xpose.msra.mxu0 0.0
        %651 = vmatpush.xpose.msra.mxu0 0.0
        %652 = vmatpush.xpose.msra.mxu0 0.0
        %653 = vmatpush.xpose.msra.mxu0 0.0
        %654 = vmatpush.xpose.msra.mxu0 0.0
        %655 = vmatpush.xpose.msra.mxu0 0.0
        %656 = vmatpush.xpose.msra.mxu0 0.0
        %657 = vmatpush.xpose.msra.mxu0 0.0
        %v658 = vand.u32 %v345, 4294901760
        %659 = vmatpush.xpose.msra.mxu0 %v658
        %v660 = vand.u32 %v342, 4294901760
        %661 = vmatpush.xpose.msra.mxu0 %v660
        %v662 = vand.u32 %v538, 4294901760
        %v663 = vsub.f32 %v538, %v662
        %v664 = vand.u32 %v663, 4294901760
        %665 = vmatmul.f32.gmra.mxu0 %v664
        %v666 = vpop.f32.mrf.mxu0
        %v667 = vadd.f32 %v637, %v666
        %v668 = vand.u32 %v541, 4294901760
        %v669 = vsub.f32 %v541, %v668
        %v670 = vand.u32 %v669, 4294901760
        %671 = vmatmul.f32.gmra.mxu0 %v670
        %v672 = vpop.f32.mrf.mxu0
        %v673 = vadd.f32 %v642, %v672
        %674 = vdwg.mxu0
        %675 = vmatpush.xpose.msra.mxu0 0.0
        %676 = vmatpush.xpose.msra.mxu0 0.0
        %677 = vmatpush.xpose.msra.mxu0 0.0
        %678 = vmatpush.xpose.msra.mxu0 0.0
        %679 = vmatpush.xpose.msra.mxu0 0.0
        %680 = vmatpush.xpose.msra.mxu0 0.0
        %681 = vmatpush.xpose.msra.mxu0 0.0
        %682 = vmatpush.xpose.msra.mxu0 0.0
        %683 = vmatpush.xpose.msra.mxu0 0.0
        %684 = vmatpush.xpose.msra.mxu0 0.0
        %685 = vmatpush.xpose.msra.mxu0 0.0
        %686 = vmatpush.xpose.msra.mxu0 0.0
        %687 = vmatpush.xpose.msra.mxu0 0.0
        %688 = vmatpush.xpose.msra.mxu0 0.0
        %v689 = vand.u32 %v345, 4294901760
        %v690 = vsub.f32 %v345, %v689
        %v691 = vand.u32 %v690, 4294901760
        %692 = vmatpush.xpose.msra.mxu0 %v691
        %v693 = vand.u32 %v342, 4294901760
        %v694 = vsub.f32 %v342, %v693
        %v695 = vand.u32 %v694, 4294901760
        %696 = vmatpush.xpose.msra.mxu0 %v695
        %v697 = vand.u32 %v538, 4294901760
        %698 = vmatmul.f32.gmra.mxu0 %v697
        %v699 = vpop.f32.mrf.mxu0
        %v700 = vadd.f32 %v667, %v699
        %v701 = vand.u32 %v541, 4294901760
        %702 = vmatmul.f32.gmra.mxu0 %v701
        %v703 = vpop.f32.mrf.mxu0
        %v704 = vadd.f32 %v673, %v703
        %705 = vdwg.mxu0
        %706 = vmatpush.xpose.msra.mxu0 0.0
        %707 = vmatpush.xpose.msra.mxu0 0.0
        %708 = vmatpush.xpose.msra.mxu0 0.0
        %709 = vmatpush.xpose.msra.mxu0 0.0
        %710 = vmatpush.xpose.msra.mxu0 0.0
        %711 = vmatpush.xpose.msra.mxu0 0.0
        %712 = vmatpush.xpose.msra.mxu0 0.0
        %713 = vmatpush.xpose.msra.mxu0 0.0
        %714 = vmatpush.xpose.msra.mxu0 0.0
        %715 = vmatpush.xpose.msra.mxu0 0.0
        %716 = vmatpush.xpose.msra.mxu0 0.0
        %717 = vmatpush.xpose.msra.mxu0 0.0
        %718 = vmatpush.xpose.msra.mxu0 0.0
        %719 = vmatpush.xpose.msra.mxu0 0.0
        %v720 = vand.u32 %v345, 4294901760
        %721 = vmatpush.xpose.msra.mxu0 %v720
        %v722 = vand.u32 %v342, 4294901760
        %723 = vmatpush.xpose.msra.mxu0 %v722
        %v724 = vand.u32 %v538, 4294901760
        %725 = vmatmul.f32.gmra.mxu0 %v724
        %v726 = vpop.f32.mrf.mxu0
        %v727 = vadd.f32 %v700, %v726
        %v728 = vand.u32 %v541, 4294901760
        %729 = vmatmul.f32.gmra.mxu0 %v728
        %v730 = vpop.f32.mrf.mxu0
        %v731 = vadd.f32 %v704, %v730
        %732 = vdwg.mxu0
        %v734 = vsel %vm334, %v294, 0
        %v737 = vsel %vm334, %v295, 0
        %739 = vmatpush.xpose.msra.mxu0 0.0
        %740 = vmatpush.xpose.msra.mxu0 0.0
        %741 = vmatpush.xpose.msra.mxu0 0.0
        %742 = vmatpush.xpose.msra.mxu0 0.0
        %743 = vmatpush.xpose.msra.mxu0 0.0
        %744 = vmatpush.xpose.msra.mxu0 0.0
        %745 = vmatpush.xpose.msra.mxu0 0.0
        %746 = vmatpush.xpose.msra.mxu0 0.0
        %747 = vmatpush.xpose.msra.mxu0 0.0
        %748 = vmatpush.xpose.msra.mxu0 0.0
        %749 = vmatpush.xpose.msra.mxu0 0.0
        %750 = vmatpush.xpose.msra.mxu0 0.0
        %751 = vmatpush.xpose.msra.mxu0 0.0
        %752 = vmatpush.xpose.msra.mxu0 0.0
        %v753 = vand.u32 %v345, 4294901760
        %754 = vmatpush.xpose.msra.mxu0 %v753
        %v755 = vand.u32 %v342, 4294901760
        %756 = vmatpush.xpose.msra.mxu0 %v755
        %v757 = vand.u32 %v734, 4294901760
        %v758 = vsub.f32 %v734, %v757
        %v759 = vand.u32 %v758, 4294901760
        %v760 = vsub.f32 %v758, %v759
        %v761 = vand.u32 %v760, 4294901760
        %762 = vmatmul.f32.gmra.mxu0 %v761
        %v763 = vpop.f32.mrf.mxu0
        %v764 = vadd.f32 0.0, %v763
        %v765 = vand.u32 %v737, 4294901760
        %v766 = vsub.f32 %v737, %v765
        %v767 = vand.u32 %v766, 4294901760
        %v768 = vsub.f32 %v766, %v767
        %v769 = vand.u32 %v768, 4294901760
        %770 = vmatmul.f32.gmra.mxu0 %v769
        %v771 = vpop.f32.mrf.mxu0
        %v772 = vadd.f32 0.0, %v771
        %773 = vdwg.mxu0
        %774 = vmatpush.xpose.msra.mxu0 0.0
        %775 = vmatpush.xpose.msra.mxu0 0.0
        %776 = vmatpush.xpose.msra.mxu0 0.0
        %777 = vmatpush.xpose.msra.mxu0 0.0
        %778 = vmatpush.xpose.msra.mxu0 0.0
        %779 = vmatpush.xpose.msra.mxu0 0.0
        %780 = vmatpush.xpose.msra.mxu0 0.0
        %781 = vmatpush.xpose.msra.mxu0 0.0
        %782 = vmatpush.xpose.msra.mxu0 0.0
        %783 = vmatpush.xpose.msra.mxu0 0.0
        %784 = vmatpush.xpose.msra.mxu0 0.0
        %785 = vmatpush.xpose.msra.mxu0 0.0
        %786 = vmatpush.xpose.msra.mxu0 0.0
        %787 = vmatpush.xpose.msra.mxu0 0.0
        %v788 = vand.u32 %v345, 4294901760
        %v789 = vsub.f32 %v345, %v788
        %v790 = vand.u32 %v789, 4294901760
        %v791 = vsub.f32 %v789, %v790
        %v792 = vand.u32 %v791, 4294901760
        %793 = vmatpush.xpose.msra.mxu0 %v792
        %v794 = vand.u32 %v342, 4294901760
        %v795 = vsub.f32 %v342, %v794
        %v796 = vand.u32 %v795, 4294901760
        %v797 = vsub.f32 %v795, %v796
        %v798 = vand.u32 %v797, 4294901760
        %799 = vmatpush.xpose.msra.mxu0 %v798
        %v800 = vand.u32 %v734, 4294901760
        %801 = vmatmul.f32.gmra.mxu0 %v800
        %v802 = vpop.f32.mrf.mxu0
        %v803 = vadd.f32 %v764, %v802
        %v804 = vand.u32 %v737, 4294901760
        %805 = vmatmul.f32.gmra.mxu0 %v804
        %v806 = vpop.f32.mrf.mxu0
        %v807 = vadd.f32 %v772, %v806
        %808 = vdwg.mxu0
        %809 = vmatpush.xpose.msra.mxu0 0.0
        %810 = vmatpush.xpose.msra.mxu0 0.0
        %811 = vmatpush.xpose.msra.mxu0 0.0
        %812 = vmatpush.xpose.msra.mxu0 0.0
        %813 = vmatpush.xpose.msra.mxu0 0.0
        %814 = vmatpush.xpose.msra.mxu0 0.0
        %815 = vmatpush.xpose.msra.mxu0 0.0
        %816 = vmatpush.xpose.msra.mxu0 0.0
        %817 = vmatpush.xpose.msra.mxu0 0.0
        %818 = vmatpush.xpose.msra.mxu0 0.0
        %819 = vmatpush.xpose.msra.mxu0 0.0
        %820 = vmatpush.xpose.msra.mxu0 0.0
        %821 = vmatpush.xpose.msra.mxu0 0.0
        %822 = vmatpush.xpose.msra.mxu0 0.0
        %v823 = vand.u32 %v345, 4294901760
        %v824 = vsub.f32 %v345, %v823
        %825 = vmatpush.xpose.msra.mxu0 %v824
        %v826 = vand.u32 %v342, 4294901760
        %v827 = vsub.f32 %v342, %v826
        %828 = vmatpush.xpose.msra.mxu0 %v827
        %v829 = vand.u32 %v734, 4294901760
        %v830 = vsub.f32 %v734, %v829
        %831 = vmatmul.f32.gmra.mxu0 %v830
        %v832 = vpop.f32.mrf.mxu0
        %v833 = vadd.f32 %v803, %v832
        %v834 = vand.u32 %v737, 4294901760
        %v835 = vsub.f32 %v737, %v834
        %836 = vmatmul.f32.gmra.mxu0 %v835
        %v837 = vpop.f32.mrf.mxu0
        %v838 = vadd.f32 %v807, %v837
        %839 = vdwg.mxu0
        %840 = vmatpush.xpose.msra.mxu0 0.0
        %841 = vmatpush.xpose.msra.mxu0 0.0
        %842 = vmatpush.xpose.msra.mxu0 0.0
        %843 = vmatpush.xpose.msra.mxu0 0.0
        %844 = vmatpush.xpose.msra.mxu0 0.0
        %845 = vmatpush.xpose.msra.mxu0 0.0
        %846 = vmatpush.xpose.msra.mxu0 0.0
        %847 = vmatpush.xpose.msra.mxu0 0.0
        %848 = vmatpush.xpose.msra.mxu0 0.0
        %849 = vmatpush.xpose.msra.mxu0 0.0
        %850 = vmatpush.xpose.msra.mxu0 0.0
        %851 = vmatpush.xpose.msra.mxu0 0.0
        %852 = vmatpush.xpose.msra.mxu0 0.0
        %853 = vmatpush.xpose.msra.mxu0 0.0
        %v854 = vand.u32 %v345, 4294901760
        %855 = vmatpush.xpose.msra.mxu0 %v854
        %v856 = vand.u32 %v342, 4294901760
        %857 = vmatpush.xpose.msra.mxu0 %v856
        %v858 = vand.u32 %v734, 4294901760
        %v859 = vsub.f32 %v734, %v858
        %v860 = vand.u32 %v859, 4294901760
        %861 = vmatmul.f32.gmra.mxu0 %v860
        %v862 = vpop.f32.mrf.mxu0
        %v863 = vadd.f32 %v833, %v862
        %v864 = vand.u32 %v737, 4294901760
        %v865 = vsub.f32 %v737, %v864
        %v866 = vand.u32 %v865, 4294901760
        %867 = vmatmul.f32.gmra.mxu0 %v866
        %v868 = vpop.f32.mrf.mxu0
        %v869 = vadd.f32 %v838, %v868
        %870 = vdwg.mxu0
        %871 = vmatpush.xpose.msra.mxu0 0.0
        %872 = vmatpush.xpose.msra.mxu0 0.0
        %873 = vmatpush.xpose.msra.mxu0 0.0
        %874 = vmatpush.xpose.msra.mxu0 0.0
        %875 = vmatpush.xpose.msra.mxu0 0.0
        %876 = vmatpush.xpose.msra.mxu0 0.0
        %877 = vmatpush.xpose.msra.mxu0 0.0
        %878 = vmatpush.xpose.msra.mxu0 0.0
        %879 = vmatpush.xpose.msra.mxu0 0.0
        %880 = vmatpush.xpose.msra.mxu0 0.0
        %881 = vmatpush.xpose.msra.mxu0 0.0
        %882 = vmatpush.xpose.msra.mxu0 0.0
        %883 = vmatpush.xpose.msra.mxu0 0.0
        %884 = vmatpush.xpose.msra.mxu0 0.0
        %v885 = vand.u32 %v345, 4294901760
        %v886 = vsub.f32 %v345, %v885
        %v887 = vand.u32 %v886, 4294901760
        %888 = vmatpush.xpose.msra.mxu0 %v887
        %v889 = vand.u32 %v342, 4294901760
        %v890 = vsub.f32 %v342, %v889
        %v891 = vand.u32 %v890, 4294901760
        %892 = vmatpush.xpose.msra.mxu0 %v891
        %v893 = vand.u32 %v734, 4294901760
        %894 = vmatmul.f32.gmra.mxu0 %v893
        %v895 = vpop.f32.mrf.mxu0
        %v896 = vadd.f32 %v863, %v895
        %v897 = vand.u32 %v737, 4294901760
        %898 = vmatmul.f32.gmra.mxu0 %v897
        %v899 = vpop.f32.mrf.mxu0
        %v900 = vadd.f32 %v869, %v899
        %901 = vdwg.mxu0
        %902 = vmatpush.xpose.msra.mxu0 0.0
        %903 = vmatpush.xpose.msra.mxu0 0.0
        %904 = vmatpush.xpose.msra.mxu0 0.0
        %905 = vmatpush.xpose.msra.mxu0 0.0
        %906 = vmatpush.xpose.msra.mxu0 0.0
        %907 = vmatpush.xpose.msra.mxu0 0.0
        %908 = vmatpush.xpose.msra.mxu0 0.0
        %909 = vmatpush.xpose.msra.mxu0 0.0
        %910 = vmatpush.xpose.msra.mxu0 0.0
        %911 = vmatpush.xpose.msra.mxu0 0.0
        %912 = vmatpush.xpose.msra.mxu0 0.0
        %913 = vmatpush.xpose.msra.mxu0 0.0
        %914 = vmatpush.xpose.msra.mxu0 0.0
        %915 = vmatpush.xpose.msra.mxu0 0.0
        %v916 = vand.u32 %v345, 4294901760
        %917 = vmatpush.xpose.msra.mxu0 %v916
        %v918 = vand.u32 %v342, 4294901760
        %919 = vmatpush.xpose.msra.mxu0 %v918
        %v920 = vand.u32 %v734, 4294901760
        %921 = vmatmul.f32.gmra.mxu0 %v920
        %v922 = vpop.f32.mrf.mxu0
        %v923 = vadd.f32 %v896, %v922
        %v924 = vand.u32 %v737, 4294901760
        %925 = vmatmul.f32.gmra.mxu0 %v924
        %v926 = vpop.f32.mrf.mxu0
        %v927 = vadd.f32 %v900, %v926
        %928 = vdwg.mxu0
        %v930 = vsel %vm334, %v296, 0
        %v933 = vsel %vm334, %v297, 0
        %935 = vmatpush.xpose.msra.mxu0 0.0
        %936 = vmatpush.xpose.msra.mxu0 0.0
        %937 = vmatpush.xpose.msra.mxu0 0.0
        %938 = vmatpush.xpose.msra.mxu0 0.0
        %939 = vmatpush.xpose.msra.mxu0 0.0
        %940 = vmatpush.xpose.msra.mxu0 0.0
        %941 = vmatpush.xpose.msra.mxu0 0.0
        %942 = vmatpush.xpose.msra.mxu0 0.0
        %943 = vmatpush.xpose.msra.mxu0 0.0
        %944 = vmatpush.xpose.msra.mxu0 0.0
        %945 = vmatpush.xpose.msra.mxu0 0.0
        %946 = vmatpush.xpose.msra.mxu0 0.0
        %947 = vmatpush.xpose.msra.mxu0 0.0
        %948 = vmatpush.xpose.msra.mxu0 0.0
        %v949 = vand.u32 %v345, 4294901760
        %950 = vmatpush.xpose.msra.mxu0 %v949
        %v951 = vand.u32 %v342, 4294901760
        %952 = vmatpush.xpose.msra.mxu0 %v951
        %v953 = vand.u32 %v930, 4294901760
        %v954 = vsub.f32 %v930, %v953
        %v955 = vand.u32 %v954, 4294901760
        %v956 = vsub.f32 %v954, %v955
        %v957 = vand.u32 %v956, 4294901760
        %958 = vmatmul.f32.gmra.mxu0 %v957
        %v959 = vpop.f32.mrf.mxu0
        %v960 = vadd.f32 0.0, %v959
        %v961 = vand.u32 %v933, 4294901760
        %v962 = vsub.f32 %v933, %v961
        %v963 = vand.u32 %v962, 4294901760
        %v964 = vsub.f32 %v962, %v963
        %v965 = vand.u32 %v964, 4294901760
        %966 = vmatmul.f32.gmra.mxu0 %v965
        %v967 = vpop.f32.mrf.mxu0
        %v968 = vadd.f32 0.0, %v967
        %969 = vdwg.mxu0
        %970 = vmatpush.xpose.msra.mxu0 0.0
        %971 = vmatpush.xpose.msra.mxu0 0.0
        %972 = vmatpush.xpose.msra.mxu0 0.0
        %973 = vmatpush.xpose.msra.mxu0 0.0
        %974 = vmatpush.xpose.msra.mxu0 0.0
        %975 = vmatpush.xpose.msra.mxu0 0.0
        %976 = vmatpush.xpose.msra.mxu0 0.0
        %977 = vmatpush.xpose.msra.mxu0 0.0
        %978 = vmatpush.xpose.msra.mxu0 0.0
        %979 = vmatpush.xpose.msra.mxu0 0.0
        %980 = vmatpush.xpose.msra.mxu0 0.0
        %981 = vmatpush.xpose.msra.mxu0 0.0
        %982 = vmatpush.xpose.msra.mxu0 0.0
        %983 = vmatpush.xpose.msra.mxu0 0.0
        %v984 = vand.u32 %v345, 4294901760
        %v985 = vsub.f32 %v345, %v984
        %v986 = vand.u32 %v985, 4294901760
        %v987 = vsub.f32 %v985, %v986
        %v988 = vand.u32 %v987, 4294901760
        %989 = vmatpush.xpose.msra.mxu0 %v988
        %v990 = vand.u32 %v342, 4294901760
        %v991 = vsub.f32 %v342, %v990
        %v992 = vand.u32 %v991, 4294901760
        %v993 = vsub.f32 %v991, %v992
        %v994 = vand.u32 %v993, 4294901760
        %995 = vmatpush.xpose.msra.mxu0 %v994
        %v996 = vand.u32 %v930, 4294901760
        %997 = vmatmul.f32.gmra.mxu0 %v996
        %v998 = vpop.f32.mrf.mxu0
        %v999 = vadd.f32 %v960, %v998
        %v1000 = vand.u32 %v933, 4294901760
        %1001 = vmatmul.f32.gmra.mxu0 %v1000
        %v1002 = vpop.f32.mrf.mxu0
        %v1003 = vadd.f32 %v968, %v1002
        %1004 = vdwg.mxu0
        %1005 = vmatpush.xpose.msra.mxu0 0.0
        %1006 = vmatpush.xpose.msra.mxu0 0.0
        %1007 = vmatpush.xpose.msra.mxu0 0.0
        %1008 = vmatpush.xpose.msra.mxu0 0.0
        %1009 = vmatpush.xpose.msra.mxu0 0.0
        %1010 = vmatpush.xpose.msra.mxu0 0.0
        %1011 = vmatpush.xpose.msra.mxu0 0.0
        %1012 = vmatpush.xpose.msra.mxu0 0.0
        %1013 = vmatpush.xpose.msra.mxu0 0.0
        %1014 = vmatpush.xpose.msra.mxu0 0.0
        %1015 = vmatpush.xpose.msra.mxu0 0.0
        %1016 = vmatpush.xpose.msra.mxu0 0.0
        %1017 = vmatpush.xpose.msra.mxu0 0.0
        %1018 = vmatpush.xpose.msra.mxu0 0.0
        %v1019 = vand.u32 %v345, 4294901760
        %v1020 = vsub.f32 %v345, %v1019
        %1021 = vmatpush.xpose.msra.mxu0 %v1020
        %v1022 = vand.u32 %v342, 4294901760
        %v1023 = vsub.f32 %v342, %v1022
        %1024 = vmatpush.xpose.msra.mxu0 %v1023
        %v1025 = vand.u32 %v930, 4294901760
        %v1026 = vsub.f32 %v930, %v1025
        %1027 = vmatmul.f32.gmra.mxu0 %v1026
        %v1028 = vpop.f32.mrf.mxu0
        %v1029 = vadd.f32 %v999, %v1028
        %v1030 = vand.u32 %v933, 4294901760
        %v1031 = vsub.f32 %v933, %v1030
        %1032 = vmatmul.f32.gmra.mxu0 %v1031
        %v1033 = vpop.f32.mrf.mxu0
        %v1034 = vadd.f32 %v1003, %v1033
        %1035 = vdwg.mxu0
        %1036 = vmatpush.xpose.msra.mxu0 0.0
        %1037 = vmatpush.xpose.msra.mxu0 0.0
        %1038 = vmatpush.xpose.msra.mxu0 0.0
        %1039 = vmatpush.xpose.msra.mxu0 0.0
        %1040 = vmatpush.xpose.msra.mxu0 0.0
        %1041 = vmatpush.xpose.msra.mxu0 0.0
        %1042 = vmatpush.xpose.msra.mxu0 0.0
        %1043 = vmatpush.xpose.msra.mxu0 0.0
        %1044 = vmatpush.xpose.msra.mxu0 0.0
        %1045 = vmatpush.xpose.msra.mxu0 0.0
        %1046 = vmatpush.xpose.msra.mxu0 0.0
        %1047 = vmatpush.xpose.msra.mxu0 0.0
        %1048 = vmatpush.xpose.msra.mxu0 0.0
        %1049 = vmatpush.xpose.msra.mxu0 0.0
        %v1050 = vand.u32 %v345, 4294901760
        %1051 = vmatpush.xpose.msra.mxu0 %v1050
        %v1052 = vand.u32 %v342, 4294901760
        %1053 = vmatpush.xpose.msra.mxu0 %v1052
        %v1054 = vand.u32 %v930, 4294901760
        %v1055 = vsub.f32 %v930, %v1054
        %v1056 = vand.u32 %v1055, 4294901760
        %1057 = vmatmul.f32.gmra.mxu0 %v1056
        %v1058 = vpop.f32.mrf.mxu0
        %v1059 = vadd.f32 %v1029, %v1058
        %v1060 = vand.u32 %v933, 4294901760
        %v1061 = vsub.f32 %v933, %v1060
        %v1062 = vand.u32 %v1061, 4294901760
        %1063 = vmatmul.f32.gmra.mxu0 %v1062
        %v1064 = vpop.f32.mrf.mxu0
        %v1065 = vadd.f32 %v1034, %v1064
        %1066 = vdwg.mxu0
        %1067 = vmatpush.xpose.msra.mxu0 0.0
        %1068 = vmatpush.xpose.msra.mxu0 0.0
        %1069 = vmatpush.xpose.msra.mxu0 0.0
        %1070 = vmatpush.xpose.msra.mxu0 0.0
        %1071 = vmatpush.xpose.msra.mxu0 0.0
        %1072 = vmatpush.xpose.msra.mxu0 0.0
        %1073 = vmatpush.xpose.msra.mxu0 0.0
        %1074 = vmatpush.xpose.msra.mxu0 0.0
        %1075 = vmatpush.xpose.msra.mxu0 0.0
        %1076 = vmatpush.xpose.msra.mxu0 0.0
        %1077 = vmatpush.xpose.msra.mxu0 0.0
        %1078 = vmatpush.xpose.msra.mxu0 0.0
        %1079 = vmatpush.xpose.msra.mxu0 0.0
        %1080 = vmatpush.xpose.msra.mxu0 0.0
        %v1081 = vand.u32 %v345, 4294901760
        %v1082 = vsub.f32 %v345, %v1081
        %v1083 = vand.u32 %v1082, 4294901760
        %1084 = vmatpush.xpose.msra.mxu0 %v1083
        %v1085 = vand.u32 %v342, 4294901760
        %v1086 = vsub.f32 %v342, %v1085
        %v1087 = vand.u32 %v1086, 4294901760
        %1088 = vmatpush.xpose.msra.mxu0 %v1087
        %v1089 = vand.u32 %v930, 4294901760
        %1090 = vmatmul.f32.gmra.mxu0 %v1089
        %v1091 = vpop.f32.mrf.mxu0
        %v1092 = vadd.f32 %v1059, %v1091
        %v1093 = vand.u32 %v933, 4294901760
        %1094 = vmatmul.f32.gmra.mxu0 %v1093
        %v1095 = vpop.f32.mrf.mxu0
        %v1096 = vadd.f32 %v1065, %v1095
        %1097 = vdwg.mxu0
        %1098 = vmatpush.xpose.msra.mxu0 0.0
        %1099 = vmatpush.xpose.msra.mxu0 0.0
        %1100 = vmatpush.xpose.msra.mxu0 0.0
        %1101 = vmatpush.xpose.msra.mxu0 0.0
        %1102 = vmatpush.xpose.msra.mxu0 0.0
        %1103 = vmatpush.xpose.msra.mxu0 0.0
        %1104 = vmatpush.xpose.msra.mxu0 0.0
        %1105 = vmatpush.xpose.msra.mxu0 0.0
        %1106 = vmatpush.xpose.msra.mxu0 0.0
        %1107 = vmatpush.xpose.msra.mxu0 0.0
        %1108 = vmatpush.xpose.msra.mxu0 0.0
        %1109 = vmatpush.xpose.msra.mxu0 0.0
        %1110 = vmatpush.xpose.msra.mxu0 0.0
        %1111 = vmatpush.xpose.msra.mxu0 0.0
        %v1112 = vand.u32 %v345, 4294901760
        %1113 = vmatpush.xpose.msra.mxu0 %v1112
        %v1114 = vand.u32 %v342, 4294901760
        %1115 = vmatpush.xpose.msra.mxu0 %v1114
        %v1116 = vand.u32 %v930, 4294901760
        %1117 = vmatmul.f32.gmra.mxu0 %v1116
        %v1118 = vpop.f32.mrf.mxu0
        %v1119 = vadd.f32 %v1092, %v1118
        %v1120 = vand.u32 %v933, 4294901760
        %1121 = vmatmul.f32.gmra.mxu0 %v1120
        %v1122 = vpop.f32.mrf.mxu0
        %v1123 = vadd.f32 %v1096, %v1122
        %1124 = vdwg.mxu0
        %v1126 = vsel %vm334, %v298, 0
        %v1129 = vsel %vm334, %v299, 0
        %1131 = vmatpush.xpose.msra.mxu0 0.0
        %1132 = vmatpush.xpose.msra.mxu0 0.0
        %1133 = vmatpush.xpose.msra.mxu0 0.0
        %1134 = vmatpush.xpose.msra.mxu0 0.0
        %1135 = vmatpush.xpose.msra.mxu0 0.0
        %1136 = vmatpush.xpose.msra.mxu0 0.0
        %1137 = vmatpush.xpose.msra.mxu0 0.0
        %1138 = vmatpush.xpose.msra.mxu0 0.0
        %1139 = vmatpush.xpose.msra.mxu0 0.0
        %1140 = vmatpush.xpose.msra.mxu0 0.0
        %1141 = vmatpush.xpose.msra.mxu0 0.0
        %1142 = vmatpush.xpose.msra.mxu0 0.0
        %1143 = vmatpush.xpose.msra.mxu0 0.0
        %1144 = vmatpush.xpose.msra.mxu0 0.0
        %v1145 = vand.u32 %v345, 4294901760
        %1146 = vmatpush.xpose.msra.mxu0 %v1145
        %v1147 = vand.u32 %v342, 4294901760
        %1148 = vmatpush.xpose.msra.mxu0 %v1147
        %v1149 = vand.u32 %v1126, 4294901760
        %v1150 = vsub.f32 %v1126, %v1149
        %v1151 = vand.u32 %v1150, 4294901760
        %v1152 = vsub.f32 %v1150, %v1151
        %v1153 = vand.u32 %v1152, 4294901760
        %1154 = vmatmul.f32.gmra.mxu0 %v1153
        %v1155 = vpop.f32.mrf.mxu0
        %v1156 = vadd.f32 0.0, %v1155
        %v1157 = vand.u32 %v1129, 4294901760
        %v1158 = vsub.f32 %v1129, %v1157
        %v1159 = vand.u32 %v1158, 4294901760
        %v1160 = vsub.f32 %v1158, %v1159
        %v1161 = vand.u32 %v1160, 4294901760
        %1162 = vmatmul.f32.gmra.mxu0 %v1161
        %v1163 = vpop.f32.mrf.mxu0
        %v1164 = vadd.f32 0.0, %v1163
        %1165 = vdwg.mxu0
        %1166 = vmatpush.xpose.msra.mxu0 0.0
        %1167 = vmatpush.xpose.msra.mxu0 0.0
        %1168 = vmatpush.xpose.msra.mxu0 0.0
        %1169 = vmatpush.xpose.msra.mxu0 0.0
        %1170 = vmatpush.xpose.msra.mxu0 0.0
        %1171 = vmatpush.xpose.msra.mxu0 0.0
        %1172 = vmatpush.xpose.msra.mxu0 0.0
        %1173 = vmatpush.xpose.msra.mxu0 0.0
        %1174 = vmatpush.xpose.msra.mxu0 0.0
        %1175 = vmatpush.xpose.msra.mxu0 0.0
        %1176 = vmatpush.xpose.msra.mxu0 0.0
        %1177 = vmatpush.xpose.msra.mxu0 0.0
        %1178 = vmatpush.xpose.msra.mxu0 0.0
        %1179 = vmatpush.xpose.msra.mxu0 0.0
        %v1180 = vand.u32 %v345, 4294901760
        %v1181 = vsub.f32 %v345, %v1180
        %v1182 = vand.u32 %v1181, 4294901760
        %v1183 = vsub.f32 %v1181, %v1182
        %v1184 = vand.u32 %v1183, 4294901760
        %1185 = vmatpush.xpose.msra.mxu0 %v1184
        %v1186 = vand.u32 %v342, 4294901760
        %v1187 = vsub.f32 %v342, %v1186
        %v1188 = vand.u32 %v1187, 4294901760
        %v1189 = vsub.f32 %v1187, %v1188
        %v1190 = vand.u32 %v1189, 4294901760
        %1191 = vmatpush.xpose.msra.mxu0 %v1190
        %v1192 = vand.u32 %v1126, 4294901760
        %1193 = vmatmul.f32.gmra.mxu0 %v1192
        %v1194 = vpop.f32.mrf.mxu0
        %v1195 = vadd.f32 %v1156, %v1194
        %v1196 = vand.u32 %v1129, 4294901760
        %1197 = vmatmul.f32.gmra.mxu0 %v1196
        %v1198 = vpop.f32.mrf.mxu0
        %v1199 = vadd.f32 %v1164, %v1198
        %1200 = vdwg.mxu0
        %1201 = vmatpush.xpose.msra.mxu0 0.0
        %1202 = vmatpush.xpose.msra.mxu0 0.0
        %1203 = vmatpush.xpose.msra.mxu0 0.0
        %1204 = vmatpush.xpose.msra.mxu0 0.0
        %1205 = vmatpush.xpose.msra.mxu0 0.0
        %1206 = vmatpush.xpose.msra.mxu0 0.0
        %1207 = vmatpush.xpose.msra.mxu0 0.0
        %1208 = vmatpush.xpose.msra.mxu0 0.0
        %1209 = vmatpush.xpose.msra.mxu0 0.0
        %1210 = vmatpush.xpose.msra.mxu0 0.0
        %1211 = vmatpush.xpose.msra.mxu0 0.0
        %1212 = vmatpush.xpose.msra.mxu0 0.0
        %1213 = vmatpush.xpose.msra.mxu0 0.0
        %1214 = vmatpush.xpose.msra.mxu0 0.0
        %v1215 = vand.u32 %v345, 4294901760
        %v1216 = vsub.f32 %v345, %v1215
        %1217 = vmatpush.xpose.msra.mxu0 %v1216
        %v1218 = vand.u32 %v342, 4294901760
        %v1219 = vsub.f32 %v342, %v1218
        %1220 = vmatpush.xpose.msra.mxu0 %v1219
        %v1221 = vand.u32 %v1126, 4294901760
        %v1222 = vsub.f32 %v1126, %v1221
        %1223 = vmatmul.f32.gmra.mxu0 %v1222
        %v1224 = vpop.f32.mrf.mxu0
        %v1225 = vadd.f32 %v1195, %v1224
        %v1226 = vand.u32 %v1129, 4294901760
        %v1227 = vsub.f32 %v1129, %v1226
        %1228 = vmatmul.f32.gmra.mxu0 %v1227
        %v1229 = vpop.f32.mrf.mxu0
        %v1230 = vadd.f32 %v1199, %v1229
        %1231 = vdwg.mxu0
        %1232 = vmatpush.xpose.msra.mxu0 0.0
        %1233 = vmatpush.xpose.msra.mxu0 0.0
        %1234 = vmatpush.xpose.msra.mxu0 0.0
        %1235 = vmatpush.xpose.msra.mxu0 0.0
        %1236 = vmatpush.xpose.msra.mxu0 0.0
        %1237 = vmatpush.xpose.msra.mxu0 0.0
        %1238 = vmatpush.xpose.msra.mxu0 0.0
        %1239 = vmatpush.xpose.msra.mxu0 0.0
        %1240 = vmatpush.xpose.msra.mxu0 0.0
        %1241 = vmatpush.xpose.msra.mxu0 0.0
        %1242 = vmatpush.xpose.msra.mxu0 0.0
        %1243 = vmatpush.xpose.msra.mxu0 0.0
        %1244 = vmatpush.xpose.msra.mxu0 0.0
        %1245 = vmatpush.xpose.msra.mxu0 0.0
        %v1246 = vand.u32 %v345, 4294901760
        %1247 = vmatpush.xpose.msra.mxu0 %v1246
        %v1248 = vand.u32 %v342, 4294901760
        %1249 = vmatpush.xpose.msra.mxu0 %v1248
        %v1250 = vand.u32 %v1126, 4294901760
        %v1251 = vsub.f32 %v1126, %v1250
        %v1252 = vand.u32 %v1251, 4294901760
        %1253 = vmatmul.f32.gmra.mxu0 %v1252
        %v1254 = vpop.f32.mrf.mxu0
        %v1255 = vadd.f32 %v1225, %v1254
        %v1256 = vand.u32 %v1129, 4294901760
        %v1257 = vsub.f32 %v1129, %v1256
        %v1258 = vand.u32 %v1257, 4294901760
        %1259 = vmatmul.f32.gmra.mxu0 %v1258
        %v1260 = vpop.f32.mrf.mxu0
        %v1261 = vadd.f32 %v1230, %v1260
        %1262 = vdwg.mxu0
        %1263 = vmatpush.xpose.msra.mxu0 0.0
        %1264 = vmatpush.xpose.msra.mxu0 0.0
        %1265 = vmatpush.xpose.msra.mxu0 0.0
        %1266 = vmatpush.xpose.msra.mxu0 0.0
        %1267 = vmatpush.xpose.msra.mxu0 0.0
        %1268 = vmatpush.xpose.msra.mxu0 0.0
        %1269 = vmatpush.xpose.msra.mxu0 0.0
        %1270 = vmatpush.xpose.msra.mxu0 0.0
        %1271 = vmatpush.xpose.msra.mxu0 0.0
        %1272 = vmatpush.xpose.msra.mxu0 0.0
        %1273 = vmatpush.xpose.msra.mxu0 0.0
        %1274 = vmatpush.xpose.msra.mxu0 0.0
        %1275 = vmatpush.xpose.msra.mxu0 0.0
        %1276 = vmatpush.xpose.msra.mxu0 0.0
        %v1277 = vand.u32 %v345, 4294901760
        %v1278 = vsub.f32 %v345, %v1277
        %v1279 = vand.u32 %v1278, 4294901760
        %1280 = vmatpush.xpose.msra.mxu0 %v1279
        %v1281 = vand.u32 %v342, 4294901760
        %v1282 = vsub.f32 %v342, %v1281
        %v1283 = vand.u32 %v1282, 4294901760
        %1284 = vmatpush.xpose.msra.mxu0 %v1283
        %v1285 = vand.u32 %v1126, 4294901760
        %1286 = vmatmul.f32.gmra.mxu0 %v1285
        %v1287 = vpop.f32.mrf.mxu0
        %v1288 = vadd.f32 %v1255, %v1287
        %v1289 = vand.u32 %v1129, 4294901760
        %1290 = vmatmul.f32.gmra.mxu0 %v1289
        %v1291 = vpop.f32.mrf.mxu0
        %v1292 = vadd.f32 %v1261, %v1291
        %1293 = vdwg.mxu0
        %1294 = vmatpush.xpose.msra.mxu0 0.0
        %1295 = vmatpush.xpose.msra.mxu0 0.0
        %1296 = vmatpush.xpose.msra.mxu0 0.0
        %1297 = vmatpush.xpose.msra.mxu0 0.0
        %1298 = vmatpush.xpose.msra.mxu0 0.0
        %1299 = vmatpush.xpose.msra.mxu0 0.0
        %1300 = vmatpush.xpose.msra.mxu0 0.0
        %1301 = vmatpush.xpose.msra.mxu0 0.0
        %1302 = vmatpush.xpose.msra.mxu0 0.0
        %1303 = vmatpush.xpose.msra.mxu0 0.0
        %1304 = vmatpush.xpose.msra.mxu0 0.0
        %1305 = vmatpush.xpose.msra.mxu0 0.0
        %1306 = vmatpush.xpose.msra.mxu0 0.0
        %1307 = vmatpush.xpose.msra.mxu0 0.0
        %v1308 = vand.u32 %v345, 4294901760
        %1309 = vmatpush.xpose.msra.mxu0 %v1308
        %v1310 = vand.u32 %v342, 4294901760
        %1311 = vmatpush.xpose.msra.mxu0 %v1310
        %v1312 = vand.u32 %v1126, 4294901760
        %1313 = vmatmul.f32.gmra.mxu0 %v1312
        %v1314 = vpop.f32.mrf.mxu0
        %v1315 = vadd.f32 %v1288, %v1314
        %v1316 = vand.u32 %v1129, 4294901760
        %1317 = vmatmul.f32.gmra.mxu0 %v1316
        %v1318 = vpop.f32.mrf.mxu0
        %v1319 = vadd.f32 %v1292, %v1318
        %1320 = vdwg.mxu0
        %v1322 = vsel %vm334, %v300, 0
        %v1325 = vsel %vm334, %v301, 0
        %1327 = vmatpush.xpose.msra.mxu0 0.0
        %1328 = vmatpush.xpose.msra.mxu0 0.0
        %1329 = vmatpush.xpose.msra.mxu0 0.0
        %1330 = vmatpush.xpose.msra.mxu0 0.0
        %1331 = vmatpush.xpose.msra.mxu0 0.0
        %1332 = vmatpush.xpose.msra.mxu0 0.0
        %1333 = vmatpush.xpose.msra.mxu0 0.0
        %1334 = vmatpush.xpose.msra.mxu0 0.0
        %1335 = vmatpush.xpose.msra.mxu0 0.0
        %1336 = vmatpush.xpose.msra.mxu0 0.0
        %1337 = vmatpush.xpose.msra.mxu0 0.0
        %1338 = vmatpush.xpose.msra.mxu0 0.0
        %1339 = vmatpush.xpose.msra.mxu0 0.0
        %1340 = vmatpush.xpose.msra.mxu0 0.0
        %v1341 = vand.u32 %v345, 4294901760
        %1342 = vmatpush.xpose.msra.mxu0 %v1341
        %v1343 = vand.u32 %v342, 4294901760
        %1344 = vmatpush.xpose.msra.mxu0 %v1343
        %v1345 = vand.u32 %v1322, 4294901760
        %v1346 = vsub.f32 %v1322, %v1345
        %v1347 = vand.u32 %v1346, 4294901760
        %v1348 = vsub.f32 %v1346, %v1347
        %v1349 = vand.u32 %v1348, 4294901760
        %1350 = vmatmul.f32.gmra.mxu0 %v1349
        %v1351 = vpop.f32.mrf.mxu0
        %v1352 = vadd.f32 0.0, %v1351
        %v1353 = vand.u32 %v1325, 4294901760
        %v1354 = vsub.f32 %v1325, %v1353
        %v1355 = vand.u32 %v1354, 4294901760
        %v1356 = vsub.f32 %v1354, %v1355
        %v1357 = vand.u32 %v1356, 4294901760
        %1358 = vmatmul.f32.gmra.mxu0 %v1357
        %v1359 = vpop.f32.mrf.mxu0
        %v1360 = vadd.f32 0.0, %v1359
        %1361 = vdwg.mxu0
        %1362 = vmatpush.xpose.msra.mxu0 0.0
        %1363 = vmatpush.xpose.msra.mxu0 0.0
        %1364 = vmatpush.xpose.msra.mxu0 0.0
        %1365 = vmatpush.xpose.msra.mxu0 0.0
        %1366 = vmatpush.xpose.msra.mxu0 0.0
        %1367 = vmatpush.xpose.msra.mxu0 0.0
        %1368 = vmatpush.xpose.msra.mxu0 0.0
        %1369 = vmatpush.xpose.msra.mxu0 0.0
        %1370 = vmatpush.xpose.msra.mxu0 0.0
        %1371 = vmatpush.xpose.msra.mxu0 0.0
        %1372 = vmatpush.xpose.msra.mxu0 0.0
        %1373 = vmatpush.xpose.msra.mxu0 0.0
        %1374 = vmatpush.xpose.msra.mxu0 0.0
        %1375 = vmatpush.xpose.msra.mxu0 0.0
        %v1376 = vand.u32 %v345, 4294901760
        %v1377 = vsub.f32 %v345, %v1376
        %v1378 = vand.u32 %v1377, 4294901760
        %v1379 = vsub.f32 %v1377, %v1378
        %v1380 = vand.u32 %v1379, 4294901760
        %1381 = vmatpush.xpose.msra.mxu0 %v1380
        %v1382 = vand.u32 %v342, 4294901760
        %v1383 = vsub.f32 %v342, %v1382
        %v1384 = vand.u32 %v1383, 4294901760
        %v1385 = vsub.f32 %v1383, %v1384
        %v1386 = vand.u32 %v1385, 4294901760
        %1387 = vmatpush.xpose.msra.mxu0 %v1386
        %v1388 = vand.u32 %v1322, 4294901760
        %1389 = vmatmul.f32.gmra.mxu0 %v1388
        %v1390 = vpop.f32.mrf.mxu0
        %v1391 = vadd.f32 %v1352, %v1390
        %v1392 = vand.u32 %v1325, 4294901760
        %1393 = vmatmul.f32.gmra.mxu0 %v1392
        %v1394 = vpop.f32.mrf.mxu0
        %v1395 = vadd.f32 %v1360, %v1394
        %1396 = vdwg.mxu0
        %1397 = vmatpush.xpose.msra.mxu0 0.0
        %1398 = vmatpush.xpose.msra.mxu0 0.0
        %1399 = vmatpush.xpose.msra.mxu0 0.0
        %1400 = vmatpush.xpose.msra.mxu0 0.0
        %1401 = vmatpush.xpose.msra.mxu0 0.0
        %1402 = vmatpush.xpose.msra.mxu0 0.0
        %1403 = vmatpush.xpose.msra.mxu0 0.0
        %1404 = vmatpush.xpose.msra.mxu0 0.0
        %1405 = vmatpush.xpose.msra.mxu0 0.0
        %1406 = vmatpush.xpose.msra.mxu0 0.0
        %1407 = vmatpush.xpose.msra.mxu0 0.0
        %1408 = vmatpush.xpose.msra.mxu0 0.0
        %1409 = vmatpush.xpose.msra.mxu0 0.0
        %1410 = vmatpush.xpose.msra.mxu0 0.0
        %v1411 = vand.u32 %v345, 4294901760
        %v1412 = vsub.f32 %v345, %v1411
        %1413 = vmatpush.xpose.msra.mxu0 %v1412
        %v1414 = vand.u32 %v342, 4294901760
        %v1415 = vsub.f32 %v342, %v1414
        %1416 = vmatpush.xpose.msra.mxu0 %v1415
        %v1417 = vand.u32 %v1322, 4294901760
        %v1418 = vsub.f32 %v1322, %v1417
        %1419 = vmatmul.f32.gmra.mxu0 %v1418
        %v1420 = vpop.f32.mrf.mxu0
        %v1421 = vadd.f32 %v1391, %v1420
        %v1422 = vand.u32 %v1325, 4294901760
        %v1423 = vsub.f32 %v1325, %v1422
        %1424 = vmatmul.f32.gmra.mxu0 %v1423
        %v1425 = vpop.f32.mrf.mxu0
        %v1426 = vadd.f32 %v1395, %v1425
        %1427 = vdwg.mxu0
        %1428 = vmatpush.xpose.msra.mxu0 0.0
        %1429 = vmatpush.xpose.msra.mxu0 0.0
        %1430 = vmatpush.xpose.msra.mxu0 0.0
        %1431 = vmatpush.xpose.msra.mxu0 0.0
        %1432 = vmatpush.xpose.msra.mxu0 0.0
        %1433 = vmatpush.xpose.msra.mxu0 0.0
        %1434 = vmatpush.xpose.msra.mxu0 0.0
        %1435 = vmatpush.xpose.msra.mxu0 0.0
        %1436 = vmatpush.xpose.msra.mxu0 0.0
        %1437 = vmatpush.xpose.msra.mxu0 0.0
        %1438 = vmatpush.xpose.msra.mxu0 0.0
        %1439 = vmatpush.xpose.msra.mxu0 0.0
        %1440 = vmatpush.xpose.msra.mxu0 0.0
        %1441 = vmatpush.xpose.msra.mxu0 0.0
        %v1442 = vand.u32 %v345, 4294901760
        %1443 = vmatpush.xpose.msra.mxu0 %v1442
        %v1444 = vand.u32 %v342, 4294901760
        %1445 = vmatpush.xpose.msra.mxu0 %v1444
        %v1446 = vand.u32 %v1322, 4294901760
        %v1447 = vsub.f32 %v1322, %v1446
        %v1448 = vand.u32 %v1447, 4294901760
        %1449 = vmatmul.f32.gmra.mxu0 %v1448
        %v1450 = vpop.f32.mrf.mxu0
        %v1451 = vadd.f32 %v1421, %v1450
        %v1452 = vand.u32 %v1325, 4294901760
        %v1453 = vsub.f32 %v1325, %v1452
        %v1454 = vand.u32 %v1453, 4294901760
        %1455 = vmatmul.f32.gmra.mxu0 %v1454
        %v1456 = vpop.f32.mrf.mxu0
        %v1457 = vadd.f32 %v1426, %v1456
        %1458 = vdwg.mxu0
        %1459 = vmatpush.xpose.msra.mxu0 0.0
        %1460 = vmatpush.xpose.msra.mxu0 0.0
        %1461 = vmatpush.xpose.msra.mxu0 0.0
        %1462 = vmatpush.xpose.msra.mxu0 0.0
        %1463 = vmatpush.xpose.msra.mxu0 0.0
        %1464 = vmatpush.xpose.msra.mxu0 0.0
        %1465 = vmatpush.xpose.msra.mxu0 0.0
        %1466 = vmatpush.xpose.msra.mxu0 0.0
        %1467 = vmatpush.xpose.msra.mxu0 0.0
        %1468 = vmatpush.xpose.msra.mxu0 0.0
        %1469 = vmatpush.xpose.msra.mxu0 0.0
        %1470 = vmatpush.xpose.msra.mxu0 0.0
        %1471 = vmatpush.xpose.msra.mxu0 0.0
        %1472 = vmatpush.xpose.msra.mxu0 0.0
        %v1473 = vand.u32 %v345, 4294901760
        %v1474 = vsub.f32 %v345, %v1473
        %v1475 = vand.u32 %v1474, 4294901760
        %1476 = vmatpush.xpose.msra.mxu0 %v1475
        %v1477 = vand.u32 %v342, 4294901760
        %v1478 = vsub.f32 %v342, %v1477
        %v1479 = vand.u32 %v1478, 4294901760
        %1480 = vmatpush.xpose.msra.mxu0 %v1479
        %v1481 = vand.u32 %v1322, 4294901760
        %1482 = vmatmul.f32.gmra.mxu0 %v1481
        %v1483 = vpop.f32.mrf.mxu0
        %v1484 = vadd.f32 %v1451, %v1483
        %v1485 = vand.u32 %v1325, 4294901760
        %1486 = vmatmul.f32.gmra.mxu0 %v1485
        %v1487 = vpop.f32.mrf.mxu0
        %v1488 = vadd.f32 %v1457, %v1487
        %1489 = vdwg.mxu0
        %1490 = vmatpush.xpose.msra.mxu0 0.0
        %1491 = vmatpush.xpose.msra.mxu0 0.0
        %1492 = vmatpush.xpose.msra.mxu0 0.0
        %1493 = vmatpush.xpose.msra.mxu0 0.0
        %1494 = vmatpush.xpose.msra.mxu0 0.0
        %1495 = vmatpush.xpose.msra.mxu0 0.0
        %1496 = vmatpush.xpose.msra.mxu0 0.0
        %1497 = vmatpush.xpose.msra.mxu0 0.0
        %1498 = vmatpush.xpose.msra.mxu0 0.0
        %1499 = vmatpush.xpose.msra.mxu0 0.0
        %1500 = vmatpush.xpose.msra.mxu0 0.0
        %1501 = vmatpush.xpose.msra.mxu0 0.0
        %1502 = vmatpush.xpose.msra.mxu0 0.0
        %1503 = vmatpush.xpose.msra.mxu0 0.0
        %v1504 = vand.u32 %v345, 4294901760
        %1505 = vmatpush.xpose.msra.mxu0 %v1504
        %v1506 = vand.u32 %v342, 4294901760
        %1507 = vmatpush.xpose.msra.mxu0 %v1506
        %v1508 = vand.u32 %v1322, 4294901760
        %1509 = vmatmul.f32.gmra.mxu0 %v1508
        %v1510 = vpop.f32.mrf.mxu0
        %v1511 = vadd.f32 %v1484, %v1510
        %v1512 = vand.u32 %v1325, 4294901760
        %1513 = vmatmul.f32.gmra.mxu0 %v1512
        %v1514 = vpop.f32.mrf.mxu0
        %v1515 = vadd.f32 %v1488, %v1514
        %1516 = vdwg.mxu0
        %v1518 = vsel %vm334, %v302, 0
        %v1521 = vsel %vm334, %v303, 0
        %1523 = vmatpush.xpose.msra.mxu0 0.0
        %1524 = vmatpush.xpose.msra.mxu0 0.0
        %1525 = vmatpush.xpose.msra.mxu0 0.0
        %1526 = vmatpush.xpose.msra.mxu0 0.0
        %1527 = vmatpush.xpose.msra.mxu0 0.0
        %1528 = vmatpush.xpose.msra.mxu0 0.0
        %1529 = vmatpush.xpose.msra.mxu0 0.0
        %1530 = vmatpush.xpose.msra.mxu0 0.0
        %1531 = vmatpush.xpose.msra.mxu0 0.0
        %1532 = vmatpush.xpose.msra.mxu0 0.0
        %1533 = vmatpush.xpose.msra.mxu0 0.0
        %1534 = vmatpush.xpose.msra.mxu0 0.0
        %1535 = vmatpush.xpose.msra.mxu0 0.0
        %1536 = vmatpush.xpose.msra.mxu0 0.0
        %v1537 = vand.u32 %v345, 4294901760
        %1538 = vmatpush.xpose.msra.mxu0 %v1537
        %v1539 = vand.u32 %v342, 4294901760
        %1540 = vmatpush.xpose.msra.mxu0 %v1539
        %v1541 = vand.u32 %v1518, 4294901760
        %v1542 = vsub.f32 %v1518, %v1541
        %v1543 = vand.u32 %v1542, 4294901760
        %v1544 = vsub.f32 %v1542, %v1543
        %v1545 = vand.u32 %v1544, 4294901760
        %1546 = vmatmul.f32.gmra.mxu0 %v1545
        %v1547 = vpop.f32.mrf.mxu0
        %v1548 = vadd.f32 0.0, %v1547
        %v1549 = vand.u32 %v1521, 4294901760
        %v1550 = vsub.f32 %v1521, %v1549
        %v1551 = vand.u32 %v1550, 4294901760
        %v1552 = vsub.f32 %v1550, %v1551
        %v1553 = vand.u32 %v1552, 4294901760
        %1554 = vmatmul.f32.gmra.mxu0 %v1553
        %v1555 = vpop.f32.mrf.mxu0
        %v1556 = vadd.f32 0.0, %v1555
        %1557 = vdwg.mxu0
        %1558 = vmatpush.xpose.msra.mxu0 0.0
        %1559 = vmatpush.xpose.msra.mxu0 0.0
        %1560 = vmatpush.xpose.msra.mxu0 0.0
        %1561 = vmatpush.xpose.msra.mxu0 0.0
        %1562 = vmatpush.xpose.msra.mxu0 0.0
        %1563 = vmatpush.xpose.msra.mxu0 0.0
        %1564 = vmatpush.xpose.msra.mxu0 0.0
        %1565 = vmatpush.xpose.msra.mxu0 0.0
        %1566 = vmatpush.xpose.msra.mxu0 0.0
        %1567 = vmatpush.xpose.msra.mxu0 0.0
        %1568 = vmatpush.xpose.msra.mxu0 0.0
        %1569 = vmatpush.xpose.msra.mxu0 0.0
        %1570 = vmatpush.xpose.msra.mxu0 0.0
        %1571 = vmatpush.xpose.msra.mxu0 0.0
        %v1572 = vand.u32 %v345, 4294901760
        %v1573 = vsub.f32 %v345, %v1572
        %v1574 = vand.u32 %v1573, 4294901760
        %v1575 = vsub.f32 %v1573, %v1574
        %v1576 = vand.u32 %v1575, 4294901760
        %1577 = vmatpush.xpose.msra.mxu0 %v1576
        %v1578 = vand.u32 %v342, 4294901760
        %v1579 = vsub.f32 %v342, %v1578
        %v1580 = vand.u32 %v1579, 4294901760
        %v1581 = vsub.f32 %v1579, %v1580
        %v1582 = vand.u32 %v1581, 4294901760
        %1583 = vmatpush.xpose.msra.mxu0 %v1582
        %v1584 = vand.u32 %v1518, 4294901760
        %1585 = vmatmul.f32.gmra.mxu0 %v1584
        %v1586 = vpop.f32.mrf.mxu0
        %v1587 = vadd.f32 %v1548, %v1586
        %v1588 = vand.u32 %v1521, 4294901760
        %1589 = vmatmul.f32.gmra.mxu0 %v1588
        %v1590 = vpop.f32.mrf.mxu0
        %v1591 = vadd.f32 %v1556, %v1590
        %1592 = vdwg.mxu0
        %1593 = vmatpush.xpose.msra.mxu0 0.0
        %1594 = vmatpush.xpose.msra.mxu0 0.0
        %1595 = vmatpush.xpose.msra.mxu0 0.0
        %1596 = vmatpush.xpose.msra.mxu0 0.0
        %1597 = vmatpush.xpose.msra.mxu0 0.0
        %1598 = vmatpush.xpose.msra.mxu0 0.0
        %1599 = vmatpush.xpose.msra.mxu0 0.0
        %1600 = vmatpush.xpose.msra.mxu0 0.0
        %1601 = vmatpush.xpose.msra.mxu0 0.0
        %1602 = vmatpush.xpose.msra.mxu0 0.0
        %1603 = vmatpush.xpose.msra.mxu0 0.0
        %1604 = vmatpush.xpose.msra.mxu0 0.0
        %1605 = vmatpush.xpose.msra.mxu0 0.0
        %1606 = vmatpush.xpose.msra.mxu0 0.0
        %v1607 = vand.u32 %v345, 4294901760
        %v1608 = vsub.f32 %v345, %v1607
        %1609 = vmatpush.xpose.msra.mxu0 %v1608
        %v1610 = vand.u32 %v342, 4294901760
        %v1611 = vsub.f32 %v342, %v1610
        %1612 = vmatpush.xpose.msra.mxu0 %v1611
        %v1613 = vand.u32 %v1518, 4294901760
        %v1614 = vsub.f32 %v1518, %v1613
        %1615 = vmatmul.f32.gmra.mxu0 %v1614
        %v1616 = vpop.f32.mrf.mxu0
        %v1617 = vadd.f32 %v1587, %v1616
        %v1618 = vand.u32 %v1521, 4294901760
        %v1619 = vsub.f32 %v1521, %v1618
        %1620 = vmatmul.f32.gmra.mxu0 %v1619
        %v1621 = vpop.f32.mrf.mxu0
        %v1622 = vadd.f32 %v1591, %v1621
        %1623 = vdwg.mxu0
        %1624 = vmatpush.xpose.msra.mxu0 0.0
        %1625 = vmatpush.xpose.msra.mxu0 0.0
        %1626 = vmatpush.xpose.msra.mxu0 0.0
        %1627 = vmatpush.xpose.msra.mxu0 0.0
        %1628 = vmatpush.xpose.msra.mxu0 0.0
        %1629 = vmatpush.xpose.msra.mxu0 0.0
        %1630 = vmatpush.xpose.msra.mxu0 0.0
        %1631 = vmatpush.xpose.msra.mxu0 0.0
        %1632 = vmatpush.xpose.msra.mxu0 0.0
        %1633 = vmatpush.xpose.msra.mxu0 0.0
        %1634 = vmatpush.xpose.msra.mxu0 0.0
        %1635 = vmatpush.xpose.msra.mxu0 0.0
        %1636 = vmatpush.xpose.msra.mxu0 0.0
        %1637 = vmatpush.xpose.msra.mxu0 0.0
        %v1638 = vand.u32 %v345, 4294901760
        %1639 = vmatpush.xpose.msra.mxu0 %v1638
        %v1640 = vand.u32 %v342, 4294901760
        %1641 = vmatpush.xpose.msra.mxu0 %v1640
        %v1642 = vand.u32 %v1518, 4294901760
        %v1643 = vsub.f32 %v1518, %v1642
        %v1644 = vand.u32 %v1643, 4294901760
        %1645 = vmatmul.f32.gmra.mxu0 %v1644
        %v1646 = vpop.f32.mrf.mxu0
        %v1647 = vadd.f32 %v1617, %v1646
        %v1648 = vand.u32 %v1521, 4294901760
        %v1649 = vsub.f32 %v1521, %v1648
        %v1650 = vand.u32 %v1649, 4294901760
        %1651 = vmatmul.f32.gmra.mxu0 %v1650
        %v1652 = vpop.f32.mrf.mxu0
        %v1653 = vadd.f32 %v1622, %v1652
        %1654 = vdwg.mxu0
        %1655 = vmatpush.xpose.msra.mxu0 0.0
        %1656 = vmatpush.xpose.msra.mxu0 0.0
        %1657 = vmatpush.xpose.msra.mxu0 0.0
        %1658 = vmatpush.xpose.msra.mxu0 0.0
        %1659 = vmatpush.xpose.msra.mxu0 0.0
        %1660 = vmatpush.xpose.msra.mxu0 0.0
        %1661 = vmatpush.xpose.msra.mxu0 0.0
        %1662 = vmatpush.xpose.msra.mxu0 0.0
        %1663 = vmatpush.xpose.msra.mxu0 0.0
        %1664 = vmatpush.xpose.msra.mxu0 0.0
        %1665 = vmatpush.xpose.msra.mxu0 0.0
        %1666 = vmatpush.xpose.msra.mxu0 0.0
        %1667 = vmatpush.xpose.msra.mxu0 0.0
        %1668 = vmatpush.xpose.msra.mxu0 0.0
        %v1669 = vand.u32 %v345, 4294901760
        %v1670 = vsub.f32 %v345, %v1669
        %v1671 = vand.u32 %v1670, 4294901760
        %1672 = vmatpush.xpose.msra.mxu0 %v1671
        %v1673 = vand.u32 %v342, 4294901760
        %v1674 = vsub.f32 %v342, %v1673
        %v1675 = vand.u32 %v1674, 4294901760
        %1676 = vmatpush.xpose.msra.mxu0 %v1675
        %v1677 = vand.u32 %v1518, 4294901760
        %1678 = vmatmul.f32.gmra.mxu0 %v1677
        %v1679 = vpop.f32.mrf.mxu0
        %v1680 = vadd.f32 %v1647, %v1679
        %v1681 = vand.u32 %v1521, 4294901760
        %1682 = vmatmul.f32.gmra.mxu0 %v1681
        %v1683 = vpop.f32.mrf.mxu0
        %v1684 = vadd.f32 %v1653, %v1683
        %1685 = vdwg.mxu0
        %1686 = vmatpush.xpose.msra.mxu0 0.0
        %1687 = vmatpush.xpose.msra.mxu0 0.0
        %1688 = vmatpush.xpose.msra.mxu0 0.0
        %1689 = vmatpush.xpose.msra.mxu0 0.0
        %1690 = vmatpush.xpose.msra.mxu0 0.0
        %1691 = vmatpush.xpose.msra.mxu0 0.0
        %1692 = vmatpush.xpose.msra.mxu0 0.0
        %1693 = vmatpush.xpose.msra.mxu0 0.0
        %1694 = vmatpush.xpose.msra.mxu0 0.0
        %1695 = vmatpush.xpose.msra.mxu0 0.0
        %1696 = vmatpush.xpose.msra.mxu0 0.0
        %1697 = vmatpush.xpose.msra.mxu0 0.0
        %1698 = vmatpush.xpose.msra.mxu0 0.0
        %1699 = vmatpush.xpose.msra.mxu0 0.0
        %v1700 = vand.u32 %v345, 4294901760
        %1701 = vmatpush.xpose.msra.mxu0 %v1700
        %v1702 = vand.u32 %v342, 4294901760
        %1703 = vmatpush.xpose.msra.mxu0 %v1702
        %v1704 = vand.u32 %v1518, 4294901760
        %1705 = vmatmul.f32.gmra.mxu0 %v1704
        %v1706 = vpop.f32.mrf.mxu0
        %v1707 = vadd.f32 %v1680, %v1706
        %v1708 = vand.u32 %v1521, 4294901760
        %1709 = vmatmul.f32.gmra.mxu0 %v1708
        %v1710 = vpop.f32.mrf.mxu0
        %v1711 = vadd.f32 %v1684, %v1710
        %1712 = vdwg.mxu0
        %v1714 = vsel %vm334, %v304, 0
        %v1717 = vsel %vm334, %v305, 0
        %1719 = vmatpush.xpose.msra.mxu0 0.0
        %1720 = vmatpush.xpose.msra.mxu0 0.0
        %1721 = vmatpush.xpose.msra.mxu0 0.0
        %1722 = vmatpush.xpose.msra.mxu0 0.0
        %1723 = vmatpush.xpose.msra.mxu0 0.0
        %1724 = vmatpush.xpose.msra.mxu0 0.0
        %1725 = vmatpush.xpose.msra.mxu0 0.0
        %1726 = vmatpush.xpose.msra.mxu0 0.0
        %1727 = vmatpush.xpose.msra.mxu0 0.0
        %1728 = vmatpush.xpose.msra.mxu0 0.0
        %1729 = vmatpush.xpose.msra.mxu0 0.0
        %1730 = vmatpush.xpose.msra.mxu0 0.0
        %1731 = vmatpush.xpose.msra.mxu0 0.0
        %1732 = vmatpush.xpose.msra.mxu0 0.0
        %v1733 = vand.u32 %v345, 4294901760
        %1734 = vmatpush.xpose.msra.mxu0 %v1733
        %v1735 = vand.u32 %v342, 4294901760
        %1736 = vmatpush.xpose.msra.mxu0 %v1735
        %v1737 = vand.u32 %v1714, 4294901760
        %v1738 = vsub.f32 %v1714, %v1737
        %v1739 = vand.u32 %v1738, 4294901760
        %v1740 = vsub.f32 %v1738, %v1739
        %v1741 = vand.u32 %v1740, 4294901760
        %1742 = vmatmul.f32.gmra.mxu0 %v1741
        %v1743 = vpop.f32.mrf.mxu0
        %v1744 = vadd.f32 0.0, %v1743
        %v1745 = vand.u32 %v1717, 4294901760
        %v1746 = vsub.f32 %v1717, %v1745
        %v1747 = vand.u32 %v1746, 4294901760
        %v1748 = vsub.f32 %v1746, %v1747
        %v1749 = vand.u32 %v1748, 4294901760
        %1750 = vmatmul.f32.gmra.mxu0 %v1749
        %v1751 = vpop.f32.mrf.mxu0
        %v1752 = vadd.f32 0.0, %v1751
        %1753 = vdwg.mxu0
        %1754 = vmatpush.xpose.msra.mxu0 0.0
        %1755 = vmatpush.xpose.msra.mxu0 0.0
        %1756 = vmatpush.xpose.msra.mxu0 0.0
        %1757 = vmatpush.xpose.msra.mxu0 0.0
        %1758 = vmatpush.xpose.msra.mxu0 0.0
        %1759 = vmatpush.xpose.msra.mxu0 0.0
        %1760 = vmatpush.xpose.msra.mxu0 0.0
        %1761 = vmatpush.xpose.msra.mxu0 0.0
        %1762 = vmatpush.xpose.msra.mxu0 0.0
        %1763 = vmatpush.xpose.msra.mxu0 0.0
        %1764 = vmatpush.xpose.msra.mxu0 0.0
        %1765 = vmatpush.xpose.msra.mxu0 0.0
        %1766 = vmatpush.xpose.msra.mxu0 0.0
        %1767 = vmatpush.xpose.msra.mxu0 0.0
        %v1768 = vand.u32 %v345, 4294901760
        %v1769 = vsub.f32 %v345, %v1768
        %v1770 = vand.u32 %v1769, 4294901760
        %v1771 = vsub.f32 %v1769, %v1770
        %v1772 = vand.u32 %v1771, 4294901760
        %1773 = vmatpush.xpose.msra.mxu0 %v1772
        %v1774 = vand.u32 %v342, 4294901760
        %v1775 = vsub.f32 %v342, %v1774
        %v1776 = vand.u32 %v1775, 4294901760
        %v1777 = vsub.f32 %v1775, %v1776
        %v1778 = vand.u32 %v1777, 4294901760
        %1779 = vmatpush.xpose.msra.mxu0 %v1778
        %v1780 = vand.u32 %v1714, 4294901760
        %1781 = vmatmul.f32.gmra.mxu0 %v1780
        %v1782 = vpop.f32.mrf.mxu0
        %v1783 = vadd.f32 %v1744, %v1782
        %v1784 = vand.u32 %v1717, 4294901760
        %1785 = vmatmul.f32.gmra.mxu0 %v1784
        %v1786 = vpop.f32.mrf.mxu0
        %v1787 = vadd.f32 %v1752, %v1786
        %1788 = vdwg.mxu0
        %1789 = vmatpush.xpose.msra.mxu0 0.0
        %1790 = vmatpush.xpose.msra.mxu0 0.0
        %1791 = vmatpush.xpose.msra.mxu0 0.0
        %1792 = vmatpush.xpose.msra.mxu0 0.0
        %1793 = vmatpush.xpose.msra.mxu0 0.0
        %1794 = vmatpush.xpose.msra.mxu0 0.0
        %1795 = vmatpush.xpose.msra.mxu0 0.0
        %1796 = vmatpush.xpose.msra.mxu0 0.0
        %1797 = vmatpush.xpose.msra.mxu0 0.0
        %1798 = vmatpush.xpose.msra.mxu0 0.0
        %1799 = vmatpush.xpose.msra.mxu0 0.0
        %1800 = vmatpush.xpose.msra.mxu0 0.0
        %1801 = vmatpush.xpose.msra.mxu0 0.0
        %1802 = vmatpush.xpose.msra.mxu0 0.0
        %v1803 = vand.u32 %v345, 4294901760
        %v1804 = vsub.f32 %v345, %v1803
        %1805 = vmatpush.xpose.msra.mxu0 %v1804
        %v1806 = vand.u32 %v342, 4294901760
        %v1807 = vsub.f32 %v342, %v1806
        %1808 = vmatpush.xpose.msra.mxu0 %v1807
        %v1809 = vand.u32 %v1714, 4294901760
        %v1810 = vsub.f32 %v1714, %v1809
        %1811 = vmatmul.f32.gmra.mxu0 %v1810
        %v1812 = vpop.f32.mrf.mxu0
        %v1813 = vadd.f32 %v1783, %v1812
        %v1814 = vand.u32 %v1717, 4294901760
        %v1815 = vsub.f32 %v1717, %v1814
        %1816 = vmatmul.f32.gmra.mxu0 %v1815
        %v1817 = vpop.f32.mrf.mxu0
        %v1818 = vadd.f32 %v1787, %v1817
        %1819 = vdwg.mxu0
        %1820 = vmatpush.xpose.msra.mxu0 0.0
        %1821 = vmatpush.xpose.msra.mxu0 0.0
        %1822 = vmatpush.xpose.msra.mxu0 0.0
        %1823 = vmatpush.xpose.msra.mxu0 0.0
        %1824 = vmatpush.xpose.msra.mxu0 0.0
        %1825 = vmatpush.xpose.msra.mxu0 0.0
        %1826 = vmatpush.xpose.msra.mxu0 0.0
        %1827 = vmatpush.xpose.msra.mxu0 0.0
        %1828 = vmatpush.xpose.msra.mxu0 0.0
        %1829 = vmatpush.xpose.msra.mxu0 0.0
        %1830 = vmatpush.xpose.msra.mxu0 0.0
        %1831 = vmatpush.xpose.msra.mxu0 0.0
        %1832 = vmatpush.xpose.msra.mxu0 0.0
        %1833 = vmatpush.xpose.msra.mxu0 0.0
        %v1834 = vand.u32 %v345, 4294901760
        %1835 = vmatpush.xpose.msra.mxu0 %v1834
        %v1836 = vand.u32 %v342, 4294901760
        %1837 = vmatpush.xpose.msra.mxu0 %v1836
        %v1838 = vand.u32 %v1714, 4294901760
        %v1839 = vsub.f32 %v1714, %v1838
        %v1840 = vand.u32 %v1839, 4294901760
        %1841 = vmatmul.f32.gmra.mxu0 %v1840
        %v1842 = vpop.f32.mrf.mxu0
        %v1843 = vadd.f32 %v1813, %v1842
        %v1844 = vand.u32 %v1717, 4294901760
        %v1845 = vsub.f32 %v1717, %v1844
        %v1846 = vand.u32 %v1845, 4294901760
        %1847 = vmatmul.f32.gmra.mxu0 %v1846
        %v1848 = vpop.f32.mrf.mxu0
        %v1849 = vadd.f32 %v1818, %v1848
        %1850 = vdwg.mxu0
        %1851 = vmatpush.xpose.msra.mxu0 0.0
        %1852 = vmatpush.xpose.msra.mxu0 0.0
        %1853 = vmatpush.xpose.msra.mxu0 0.0
        %1854 = vmatpush.xpose.msra.mxu0 0.0
        %1855 = vmatpush.xpose.msra.mxu0 0.0
        %1856 = vmatpush.xpose.msra.mxu0 0.0
        %1857 = vmatpush.xpose.msra.mxu0 0.0
        %1858 = vmatpush.xpose.msra.mxu0 0.0
        %1859 = vmatpush.xpose.msra.mxu0 0.0
        %1860 = vmatpush.xpose.msra.mxu0 0.0
        %1861 = vmatpush.xpose.msra.mxu0 0.0
        %1862 = vmatpush.xpose.msra.mxu0 0.0
        %1863 = vmatpush.xpose.msra.mxu0 0.0
        %1864 = vmatpush.xpose.msra.mxu0 0.0
        %v1865 = vand.u32 %v345, 4294901760
        %v1866 = vsub.f32 %v345, %v1865
        %v1867 = vand.u32 %v1866, 4294901760
        %1868 = vmatpush.xpose.msra.mxu0 %v1867
        %v1869 = vand.u32 %v342, 4294901760
        %v1870 = vsub.f32 %v342, %v1869
        %v1871 = vand.u32 %v1870, 4294901760
        %1872 = vmatpush.xpose.msra.mxu0 %v1871
        %v1873 = vand.u32 %v1714, 4294901760
        %1874 = vmatmul.f32.gmra.mxu0 %v1873
        %v1875 = vpop.f32.mrf.mxu0
        %v1876 = vadd.f32 %v1843, %v1875
        %v1877 = vand.u32 %v1717, 4294901760
        %1878 = vmatmul.f32.gmra.mxu0 %v1877
        %v1879 = vpop.f32.mrf.mxu0
        %v1880 = vadd.f32 %v1849, %v1879
        %1881 = vdwg.mxu0
        %1882 = vmatpush.xpose.msra.mxu0 0.0
        %1883 = vmatpush.xpose.msra.mxu0 0.0
        %1884 = vmatpush.xpose.msra.mxu0 0.0
        %1885 = vmatpush.xpose.msra.mxu0 0.0
        %1886 = vmatpush.xpose.msra.mxu0 0.0
        %1887 = vmatpush.xpose.msra.mxu0 0.0
        %1888 = vmatpush.xpose.msra.mxu0 0.0
        %1889 = vmatpush.xpose.msra.mxu0 0.0
        %1890 = vmatpush.xpose.msra.mxu0 0.0
        %1891 = vmatpush.xpose.msra.mxu0 0.0
        %1892 = vmatpush.xpose.msra.mxu0 0.0
        %1893 = vmatpush.xpose.msra.mxu0 0.0
        %1894 = vmatpush.xpose.msra.mxu0 0.0
        %1895 = vmatpush.xpose.msra.mxu0 0.0
        %v1896 = vand.u32 %v345, 4294901760
        %1897 = vmatpush.xpose.msra.mxu0 %v1896
        %v1898 = vand.u32 %v342, 4294901760
        %1899 = vmatpush.xpose.msra.mxu0 %v1898
        %v1900 = vand.u32 %v1714, 4294901760
        %1901 = vmatmul.f32.gmra.mxu0 %v1900
        %v1902 = vpop.f32.mrf.mxu0
        %v1903 = vadd.f32 %v1876, %v1902
        %v1904 = vand.u32 %v1717, 4294901760
        %1905 = vmatmul.f32.gmra.mxu0 %v1904
        %v1906 = vpop.f32.mrf.mxu0
        %v1907 = vadd.f32 %v1880, %v1906
        %1908 = vdwg.mxu0
        %v1910 = vsel %vm334, %v306, 0
        %v1913 = vsel %vm334, %v307, 0
        %1915 = vmatpush.xpose.msra.mxu0 0.0
        %1916 = vmatpush.xpose.msra.mxu0 0.0
        %1917 = vmatpush.xpose.msra.mxu0 0.0
        %1918 = vmatpush.xpose.msra.mxu0 0.0
        %1919 = vmatpush.xpose.msra.mxu0 0.0
        %1920 = vmatpush.xpose.msra.mxu0 0.0
        %1921 = vmatpush.xpose.msra.mxu0 0.0
        %1922 = vmatpush.xpose.msra.mxu0 0.0
        %1923 = vmatpush.xpose.msra.mxu0 0.0
        %1924 = vmatpush.xpose.msra.mxu0 0.0
        %1925 = vmatpush.xpose.msra.mxu0 0.0
        %1926 = vmatpush.xpose.msra.mxu0 0.0
        %1927 = vmatpush.xpose.msra.mxu0 0.0
        %1928 = vmatpush.xpose.msra.mxu0 0.0
        %v1929 = vand.u32 %v345, 4294901760
        %1930 = vmatpush.xpose.msra.mxu0 %v1929
        %v1931 = vand.u32 %v342, 4294901760
        %1932 = vmatpush.xpose.msra.mxu0 %v1931
        %v1933 = vand.u32 %v1910, 4294901760
        %v1934 = vsub.f32 %v1910, %v1933
        %v1935 = vand.u32 %v1934, 4294901760
        %v1936 = vsub.f32 %v1934, %v1935
        %v1937 = vand.u32 %v1936, 4294901760
        %1938 = vmatmul.f32.gmra.mxu0 %v1937
        %v1939 = vpop.f32.mrf.mxu0
        %v1940 = vadd.f32 0.0, %v1939
        %v1941 = vand.u32 %v1913, 4294901760
        %v1942 = vsub.f32 %v1913, %v1941
        %v1943 = vand.u32 %v1942, 4294901760
        %v1944 = vsub.f32 %v1942, %v1943
        %v1945 = vand.u32 %v1944, 4294901760
        %1946 = vmatmul.f32.gmra.mxu0 %v1945
        %v1947 = vpop.f32.mrf.mxu0
        %v1948 = vadd.f32 0.0, %v1947
        %1949 = vdwg.mxu0
        %1950 = vmatpush.xpose.msra.mxu0 0.0
        %1951 = vmatpush.xpose.msra.mxu0 0.0
        %1952 = vmatpush.xpose.msra.mxu0 0.0
        %1953 = vmatpush.xpose.msra.mxu0 0.0
        %1954 = vmatpush.xpose.msra.mxu0 0.0
        %1955 = vmatpush.xpose.msra.mxu0 0.0
        %1956 = vmatpush.xpose.msra.mxu0 0.0
        %1957 = vmatpush.xpose.msra.mxu0 0.0
        %1958 = vmatpush.xpose.msra.mxu0 0.0
        %1959 = vmatpush.xpose.msra.mxu0 0.0
        %1960 = vmatpush.xpose.msra.mxu0 0.0
        %1961 = vmatpush.xpose.msra.mxu0 0.0
        %1962 = vmatpush.xpose.msra.mxu0 0.0
        %1963 = vmatpush.xpose.msra.mxu0 0.0
        %v1964 = vand.u32 %v345, 4294901760
        %v1965 = vsub.f32 %v345, %v1964
        %v1966 = vand.u32 %v1965, 4294901760
        %v1967 = vsub.f32 %v1965, %v1966
        %v1968 = vand.u32 %v1967, 4294901760
        %1969 = vmatpush.xpose.msra.mxu0 %v1968
        %v1970 = vand.u32 %v342, 4294901760
        %v1971 = vsub.f32 %v342, %v1970
        %v1972 = vand.u32 %v1971, 4294901760
        %v1973 = vsub.f32 %v1971, %v1972
        %v1974 = vand.u32 %v1973, 4294901760
        %1975 = vmatpush.xpose.msra.mxu0 %v1974
        %v1976 = vand.u32 %v1910, 4294901760
        %1977 = vmatmul.f32.gmra.mxu0 %v1976
        %v1978 = vpop.f32.mrf.mxu0
        %v1979 = vadd.f32 %v1940, %v1978
        %v1980 = vand.u32 %v1913, 4294901760
        %1981 = vmatmul.f32.gmra.mxu0 %v1980
        %v1982 = vpop.f32.mrf.mxu0
        %v1983 = vadd.f32 %v1948, %v1982
        %1984 = vdwg.mxu0
        %1985 = vmatpush.xpose.msra.mxu0 0.0
        %1986 = vmatpush.xpose.msra.mxu0 0.0
        %1987 = vmatpush.xpose.msra.mxu0 0.0
        %1988 = vmatpush.xpose.msra.mxu0 0.0
        %1989 = vmatpush.xpose.msra.mxu0 0.0
        %1990 = vmatpush.xpose.msra.mxu0 0.0
        %1991 = vmatpush.xpose.msra.mxu0 0.0
        %1992 = vmatpush.xpose.msra.mxu0 0.0
        %1993 = vmatpush.xpose.msra.mxu0 0.0
        %1994 = vmatpush.xpose.msra.mxu0 0.0
        %1995 = vmatpush.xpose.msra.mxu0 0.0
        %1996 = vmatpush.xpose.msra.mxu0 0.0
        %1997 = vmatpush.xpose.msra.mxu0 0.0
        %1998 = vmatpush.xpose.msra.mxu0 0.0
        %v1999 = vand.u32 %v345, 4294901760
        %v2000 = vsub.f32 %v345, %v1999
        %2001 = vmatpush.xpose.msra.mxu0 %v2000
        %v2002 = vand.u32 %v342, 4294901760
        %v2003 = vsub.f32 %v342, %v2002
        %2004 = vmatpush.xpose.msra.mxu0 %v2003
        %v2005 = vand.u32 %v1910, 4294901760
        %v2006 = vsub.f32 %v1910, %v2005
        %2007 = vmatmul.f32.gmra.mxu0 %v2006
        %v2008 = vpop.f32.mrf.mxu0
        %v2009 = vadd.f32 %v1979, %v2008
        %v2010 = vand.u32 %v1913, 4294901760
        %v2011 = vsub.f32 %v1913, %v2010
        %2012 = vmatmul.f32.gmra.mxu0 %v2011
        %v2013 = vpop.f32.mrf.mxu0
        %v2014 = vadd.f32 %v1983, %v2013
        %2015 = vdwg.mxu0
        %2016 = vmatpush.xpose.msra.mxu0 0.0
        %2017 = vmatpush.xpose.msra.mxu0 0.0
        %2018 = vmatpush.xpose.msra.mxu0 0.0
        %2019 = vmatpush.xpose.msra.mxu0 0.0
        %2020 = vmatpush.xpose.msra.mxu0 0.0
        %2021 = vmatpush.xpose.msra.mxu0 0.0
        %2022 = vmatpush.xpose.msra.mxu0 0.0
        %2023 = vmatpush.xpose.msra.mxu0 0.0
        %2024 = vmatpush.xpose.msra.mxu0 0.0
        %2025 = vmatpush.xpose.msra.mxu0 0.0
        %2026 = vmatpush.xpose.msra.mxu0 0.0
        %2027 = vmatpush.xpose.msra.mxu0 0.0
        %2028 = vmatpush.xpose.msra.mxu0 0.0
        %2029 = vmatpush.xpose.msra.mxu0 0.0
        %v2030 = vand.u32 %v345, 4294901760
        %2031 = vmatpush.xpose.msra.mxu0 %v2030
        %v2032 = vand.u32 %v342, 4294901760
        %2033 = vmatpush.xpose.msra.mxu0 %v2032
        %v2034 = vand.u32 %v1910, 4294901760
        %v2035 = vsub.f32 %v1910, %v2034
        %v2036 = vand.u32 %v2035, 4294901760
        %2037 = vmatmul.f32.gmra.mxu0 %v2036
        %v2038 = vpop.f32.mrf.mxu0
        %v2039 = vadd.f32 %v2009, %v2038
        %v2040 = vand.u32 %v1913, 4294901760
        %v2041 = vsub.f32 %v1913, %v2040
        %v2042 = vand.u32 %v2041, 4294901760
        %2043 = vmatmul.f32.gmra.mxu0 %v2042
        %v2044 = vpop.f32.mrf.mxu0
        %v2045 = vadd.f32 %v2014, %v2044
        %2046 = vdwg.mxu0
        %2047 = vmatpush.xpose.msra.mxu0 0.0
        %2048 = vmatpush.xpose.msra.mxu0 0.0
        %2049 = vmatpush.xpose.msra.mxu0 0.0
        %2050 = vmatpush.xpose.msra.mxu0 0.0
        %2051 = vmatpush.xpose.msra.mxu0 0.0
        %2052 = vmatpush.xpose.msra.mxu0 0.0
        %2053 = vmatpush.xpose.msra.mxu0 0.0
        %2054 = vmatpush.xpose.msra.mxu0 0.0
        %2055 = vmatpush.xpose.msra.mxu0 0.0
        %2056 = vmatpush.xpose.msra.mxu0 0.0
        %2057 = vmatpush.xpose.msra.mxu0 0.0
        %2058 = vmatpush.xpose.msra.mxu0 0.0
        %2059 = vmatpush.xpose.msra.mxu0 0.0
        %2060 = vmatpush.xpose.msra.mxu0 0.0
        %v2061 = vand.u32 %v345, 4294901760
        %v2062 = vsub.f32 %v345, %v2061
        %v2063 = vand.u32 %v2062, 4294901760
        %2064 = vmatpush.xpose.msra.mxu0 %v2063
        %v2065 = vand.u32 %v342, 4294901760
        %v2066 = vsub.f32 %v342, %v2065
        %v2067 = vand.u32 %v2066, 4294901760
        %2068 = vmatpush.xpose.msra.mxu0 %v2067
        %v2069 = vand.u32 %v1910, 4294901760
        %2070 = vmatmul.f32.gmra.mxu0 %v2069
        %v2071 = vpop.f32.mrf.mxu0
        %v2072 = vadd.f32 %v2039, %v2071
        %v2073 = vand.u32 %v1913, 4294901760
        %2074 = vmatmul.f32.gmra.mxu0 %v2073
        %v2075 = vpop.f32.mrf.mxu0
        %v2076 = vadd.f32 %v2045, %v2075
        %2077 = vdwg.mxu0
        %2078 = vmatpush.xpose.msra.mxu0 0.0
        %2079 = vmatpush.xpose.msra.mxu0 0.0
        %2080 = vmatpush.xpose.msra.mxu0 0.0
        %2081 = vmatpush.xpose.msra.mxu0 0.0
        %2082 = vmatpush.xpose.msra.mxu0 0.0
        %2083 = vmatpush.xpose.msra.mxu0 0.0
        %2084 = vmatpush.xpose.msra.mxu0 0.0
        %2085 = vmatpush.xpose.msra.mxu0 0.0
        %2086 = vmatpush.xpose.msra.mxu0 0.0
        %2087 = vmatpush.xpose.msra.mxu0 0.0
        %2088 = vmatpush.xpose.msra.mxu0 0.0
        %2089 = vmatpush.xpose.msra.mxu0 0.0
        %2090 = vmatpush.xpose.msra.mxu0 0.0
        %2091 = vmatpush.xpose.msra.mxu0 0.0
        %v2092 = vand.u32 %v345, 4294901760
        %2093 = vmatpush.xpose.msra.mxu0 %v2092
        %v2094 = vand.u32 %v342, 4294901760
        %2095 = vmatpush.xpose.msra.mxu0 %v2094
        %v2096 = vand.u32 %v1910, 4294901760
        %2097 = vmatmul.f32.gmra.mxu0 %v2096
        %v2098 = vpop.f32.mrf.mxu0
        %v2099 = vadd.f32 %v2072, %v2098
        %v2100 = vand.u32 %v1913, 4294901760
        %2101 = vmatmul.f32.gmra.mxu0 %v2100
        %v2102 = vpop.f32.mrf.mxu0
        %v2103 = vadd.f32 %v2076, %v2102
        %2104 = vdwg.mxu0
        %v2106 = vsel %vm334, %v308, 0
        %v2109 = vsel %vm334, %v309, 0
        %2111 = vmatpush.xpose.msra.mxu0 0.0
        %2112 = vmatpush.xpose.msra.mxu0 0.0
        %2113 = vmatpush.xpose.msra.mxu0 0.0
        %2114 = vmatpush.xpose.msra.mxu0 0.0
        %2115 = vmatpush.xpose.msra.mxu0 0.0
        %2116 = vmatpush.xpose.msra.mxu0 0.0
        %2117 = vmatpush.xpose.msra.mxu0 0.0
        %2118 = vmatpush.xpose.msra.mxu0 0.0
        %2119 = vmatpush.xpose.msra.mxu0 0.0
        %2120 = vmatpush.xpose.msra.mxu0 0.0
        %2121 = vmatpush.xpose.msra.mxu0 0.0
        %2122 = vmatpush.xpose.msra.mxu0 0.0
        %2123 = vmatpush.xpose.msra.mxu0 0.0
        %2124 = vmatpush.xpose.msra.mxu0 0.0
        %v2125 = vand.u32 %v345, 4294901760
        %2126 = vmatpush.xpose.msra.mxu0 %v2125
        %v2127 = vand.u32 %v342, 4294901760
        %2128 = vmatpush.xpose.msra.mxu0 %v2127
        %v2129 = vand.u32 %v2106, 4294901760
        %v2130 = vsub.f32 %v2106, %v2129
        %v2131 = vand.u32 %v2130, 4294901760
        %v2132 = vsub.f32 %v2130, %v2131
        %v2133 = vand.u32 %v2132, 4294901760
        %2134 = vmatmul.f32.gmra.mxu0 %v2133
        %v2135 = vpop.f32.mrf.mxu0
        %v2136 = vadd.f32 0.0, %v2135
        %v2137 = vand.u32 %v2109, 4294901760
        %v2138 = vsub.f32 %v2109, %v2137
        %v2139 = vand.u32 %v2138, 4294901760
        %v2140 = vsub.f32 %v2138, %v2139
        %v2141 = vand.u32 %v2140, 4294901760
        %2142 = vmatmul.f32.gmra.mxu0 %v2141
        %v2143 = vpop.f32.mrf.mxu0
        %v2144 = vadd.f32 0.0, %v2143
        %2145 = vdwg.mxu0
        %2146 = vmatpush.xpose.msra.mxu0 0.0
        %2147 = vmatpush.xpose.msra.mxu0 0.0
        %2148 = vmatpush.xpose.msra.mxu0 0.0
        %2149 = vmatpush.xpose.msra.mxu0 0.0
        %2150 = vmatpush.xpose.msra.mxu0 0.0
        %2151 = vmatpush.xpose.msra.mxu0 0.0
        %2152 = vmatpush.xpose.msra.mxu0 0.0
        %2153 = vmatpush.xpose.msra.mxu0 0.0
        %2154 = vmatpush.xpose.msra.mxu0 0.0
        %2155 = vmatpush.xpose.msra.mxu0 0.0
        %2156 = vmatpush.xpose.msra.mxu0 0.0
        %2157 = vmatpush.xpose.msra.mxu0 0.0
        %2158 = vmatpush.xpose.msra.mxu0 0.0
        %2159 = vmatpush.xpose.msra.mxu0 0.0
        %v2160 = vand.u32 %v345, 4294901760
        %v2161 = vsub.f32 %v345, %v2160
        %v2162 = vand.u32 %v2161, 4294901760
        %v2163 = vsub.f32 %v2161, %v2162
        %v2164 = vand.u32 %v2163, 4294901760
        %2165 = vmatpush.xpose.msra.mxu0 %v2164
        %v2166 = vand.u32 %v342, 4294901760
        %v2167 = vsub.f32 %v342, %v2166
        %v2168 = vand.u32 %v2167, 4294901760
        %v2169 = vsub.f32 %v2167, %v2168
        %v2170 = vand.u32 %v2169, 4294901760
        %2171 = vmatpush.xpose.msra.mxu0 %v2170
        %v2172 = vand.u32 %v2106, 4294901760
        %2173 = vmatmul.f32.gmra.mxu0 %v2172
        %v2174 = vpop.f32.mrf.mxu0
        %v2175 = vadd.f32 %v2136, %v2174
        %v2176 = vand.u32 %v2109, 4294901760
        %2177 = vmatmul.f32.gmra.mxu0 %v2176
        %v2178 = vpop.f32.mrf.mxu0
        %v2179 = vadd.f32 %v2144, %v2178
        %2180 = vdwg.mxu0
        %2181 = vmatpush.xpose.msra.mxu0 0.0
        %2182 = vmatpush.xpose.msra.mxu0 0.0
        %2183 = vmatpush.xpose.msra.mxu0 0.0
        %2184 = vmatpush.xpose.msra.mxu0 0.0
        %2185 = vmatpush.xpose.msra.mxu0 0.0
        %2186 = vmatpush.xpose.msra.mxu0 0.0
        %2187 = vmatpush.xpose.msra.mxu0 0.0
        %2188 = vmatpush.xpose.msra.mxu0 0.0
        %2189 = vmatpush.xpose.msra.mxu0 0.0
        %2190 = vmatpush.xpose.msra.mxu0 0.0
        %2191 = vmatpush.xpose.msra.mxu0 0.0
        %2192 = vmatpush.xpose.msra.mxu0 0.0
        %2193 = vmatpush.xpose.msra.mxu0 0.0
        %2194 = vmatpush.xpose.msra.mxu0 0.0
        %v2195 = vand.u32 %v345, 4294901760
        %v2196 = vsub.f32 %v345, %v2195
        %2197 = vmatpush.xpose.msra.mxu0 %v2196
        %v2198 = vand.u32 %v342, 4294901760
        %v2199 = vsub.f32 %v342, %v2198
        %2200 = vmatpush.xpose.msra.mxu0 %v2199
        %v2201 = vand.u32 %v2106, 4294901760
        %v2202 = vsub.f32 %v2106, %v2201
        %2203 = vmatmul.f32.gmra.mxu0 %v2202
        %v2204 = vpop.f32.mrf.mxu0
        %v2205 = vadd.f32 %v2175, %v2204
        %v2206 = vand.u32 %v2109, 4294901760
        %v2207 = vsub.f32 %v2109, %v2206
        %2208 = vmatmul.f32.gmra.mxu0 %v2207
        %v2209 = vpop.f32.mrf.mxu0
        %v2210 = vadd.f32 %v2179, %v2209
        %2211 = vdwg.mxu0
        %2212 = vmatpush.xpose.msra.mxu0 0.0
        %2213 = vmatpush.xpose.msra.mxu0 0.0
        %2214 = vmatpush.xpose.msra.mxu0 0.0
        %2215 = vmatpush.xpose.msra.mxu0 0.0
        %2216 = vmatpush.xpose.msra.mxu0 0.0
        %2217 = vmatpush.xpose.msra.mxu0 0.0
        %2218 = vmatpush.xpose.msra.mxu0 0.0
        %2219 = vmatpush.xpose.msra.mxu0 0.0
        %2220 = vmatpush.xpose.msra.mxu0 0.0
        %2221 = vmatpush.xpose.msra.mxu0 0.0
        %2222 = vmatpush.xpose.msra.mxu0 0.0
        %2223 = vmatpush.xpose.msra.mxu0 0.0
        %2224 = vmatpush.xpose.msra.mxu0 0.0
        %2225 = vmatpush.xpose.msra.mxu0 0.0
        %v2226 = vand.u32 %v345, 4294901760
        %2227 = vmatpush.xpose.msra.mxu0 %v2226
        %v2228 = vand.u32 %v342, 4294901760
        %2229 = vmatpush.xpose.msra.mxu0 %v2228
        %v2230 = vand.u32 %v2106, 4294901760
        %v2231 = vsub.f32 %v2106, %v2230
        %v2232 = vand.u32 %v2231, 4294901760
        %2233 = vmatmul.f32.gmra.mxu0 %v2232
        %v2234 = vpop.f32.mrf.mxu0
        %v2235 = vadd.f32 %v2205, %v2234
        %v2236 = vand.u32 %v2109, 4294901760
        %v2237 = vsub.f32 %v2109, %v2236
        %v2238 = vand.u32 %v2237, 4294901760
        %2239 = vmatmul.f32.gmra.mxu0 %v2238
        %v2240 = vpop.f32.mrf.mxu0
        %v2241 = vadd.f32 %v2210, %v2240
        %2242 = vdwg.mxu0
        %2243 = vmatpush.xpose.msra.mxu0 0.0
        %2244 = vmatpush.xpose.msra.mxu0 0.0
        %2245 = vmatpush.xpose.msra.mxu0 0.0
        %2246 = vmatpush.xpose.msra.mxu0 0.0
        %2247 = vmatpush.xpose.msra.mxu0 0.0
        %2248 = vmatpush.xpose.msra.mxu0 0.0
        %2249 = vmatpush.xpose.msra.mxu0 0.0
        %2250 = vmatpush.xpose.msra.mxu0 0.0
        %2251 = vmatpush.xpose.msra.mxu0 0.0
        %2252 = vmatpush.xpose.msra.mxu0 0.0
        %2253 = vmatpush.xpose.msra.mxu0 0.0
        %2254 = vmatpush.xpose.msra.mxu0 0.0
        %2255 = vmatpush.xpose.msra.mxu0 0.0
        %2256 = vmatpush.xpose.msra.mxu0 0.0
        %v2257 = vand.u32 %v345, 4294901760
        %v2258 = vsub.f32 %v345, %v2257
        %v2259 = vand.u32 %v2258, 4294901760
        %2260 = vmatpush.xpose.msra.mxu0 %v2259
        %v2261 = vand.u32 %v342, 4294901760
        %v2262 = vsub.f32 %v342, %v2261
        %v2263 = vand.u32 %v2262, 4294901760
        %2264 = vmatpush.xpose.msra.mxu0 %v2263
        %v2265 = vand.u32 %v2106, 4294901760
        %2266 = vmatmul.f32.gmra.mxu0 %v2265
        %v2267 = vpop.f32.mrf.mxu0
        %v2268 = vadd.f32 %v2235, %v2267
        %v2269 = vand.u32 %v2109, 4294901760
        %2270 = vmatmul.f32.gmra.mxu0 %v2269
        %v2271 = vpop.f32.mrf.mxu0
        %v2272 = vadd.f32 %v2241, %v2271
        %2273 = vdwg.mxu0
        %2274 = vmatpush.xpose.msra.mxu0 0.0
        %2275 = vmatpush.xpose.msra.mxu0 0.0
        %2276 = vmatpush.xpose.msra.mxu0 0.0
        %2277 = vmatpush.xpose.msra.mxu0 0.0
        %2278 = vmatpush.xpose.msra.mxu0 0.0
        %2279 = vmatpush.xpose.msra.mxu0 0.0
        %2280 = vmatpush.xpose.msra.mxu0 0.0
        %2281 = vmatpush.xpose.msra.mxu0 0.0
        %2282 = vmatpush.xpose.msra.mxu0 0.0
        %2283 = vmatpush.xpose.msra.mxu0 0.0
        %2284 = vmatpush.xpose.msra.mxu0 0.0
        %2285 = vmatpush.xpose.msra.mxu0 0.0
        %2286 = vmatpush.xpose.msra.mxu0 0.0
        %2287 = vmatpush.xpose.msra.mxu0 0.0
        %v2288 = vand.u32 %v345, 4294901760
        %2289 = vmatpush.xpose.msra.mxu0 %v2288
        %v2290 = vand.u32 %v342, 4294901760
        %2291 = vmatpush.xpose.msra.mxu0 %v2290
        %v2292 = vand.u32 %v2106, 4294901760
        %2293 = vmatmul.f32.gmra.mxu0 %v2292
        %v2294 = vpop.f32.mrf.mxu0
        %v2295 = vadd.f32 %v2268, %v2294
        %v2296 = vand.u32 %v2109, 4294901760
        %2297 = vmatmul.f32.gmra.mxu0 %v2296
        %v2298 = vpop.f32.mrf.mxu0
        %v2299 = vadd.f32 %v2272, %v2298
        %2300 = vdwg.mxu0
        %v2302 = vsel %vm334, %v310, 0
        %v2305 = vsel %vm334, %v311, 0
        %2307 = vmatpush.xpose.msra.mxu0 0.0
        %2308 = vmatpush.xpose.msra.mxu0 0.0
        %2309 = vmatpush.xpose.msra.mxu0 0.0
        %2310 = vmatpush.xpose.msra.mxu0 0.0
        %2311 = vmatpush.xpose.msra.mxu0 0.0
        %2312 = vmatpush.xpose.msra.mxu0 0.0
        %2313 = vmatpush.xpose.msra.mxu0 0.0
        %2314 = vmatpush.xpose.msra.mxu0 0.0
        %2315 = vmatpush.xpose.msra.mxu0 0.0
        %2316 = vmatpush.xpose.msra.mxu0 0.0
        %2317 = vmatpush.xpose.msra.mxu0 0.0
        %2318 = vmatpush.xpose.msra.mxu0 0.0
        %2319 = vmatpush.xpose.msra.mxu0 0.0
        %2320 = vmatpush.xpose.msra.mxu0 0.0
        %v2321 = vand.u32 %v345, 4294901760
        %2322 = vmatpush.xpose.msra.mxu0 %v2321
        %v2323 = vand.u32 %v342, 4294901760
        %2324 = vmatpush.xpose.msra.mxu0 %v2323
        %v2325 = vand.u32 %v2302, 4294901760
        %v2326 = vsub.f32 %v2302, %v2325
        %v2327 = vand.u32 %v2326, 4294901760
        %v2328 = vsub.f32 %v2326, %v2327
        %v2329 = vand.u32 %v2328, 4294901760
        %2330 = vmatmul.f32.gmra.mxu0 %v2329
        %v2331 = vpop.f32.mrf.mxu0
        %v2332 = vadd.f32 0.0, %v2331
        %v2333 = vand.u32 %v2305, 4294901760
        %v2334 = vsub.f32 %v2305, %v2333
        %v2335 = vand.u32 %v2334, 4294901760
        %v2336 = vsub.f32 %v2334, %v2335
        %v2337 = vand.u32 %v2336, 4294901760
        %2338 = vmatmul.f32.gmra.mxu0 %v2337
        %v2339 = vpop.f32.mrf.mxu0
        %v2340 = vadd.f32 0.0, %v2339
        %2341 = vdwg.mxu0
        %2342 = vmatpush.xpose.msra.mxu0 0.0
        %2343 = vmatpush.xpose.msra.mxu0 0.0
        %2344 = vmatpush.xpose.msra.mxu0 0.0
        %2345 = vmatpush.xpose.msra.mxu0 0.0
        %2346 = vmatpush.xpose.msra.mxu0 0.0
        %2347 = vmatpush.xpose.msra.mxu0 0.0
        %2348 = vmatpush.xpose.msra.mxu0 0.0
        %2349 = vmatpush.xpose.msra.mxu0 0.0
        %2350 = vmatpush.xpose.msra.mxu0 0.0
        %2351 = vmatpush.xpose.msra.mxu0 0.0
        %2352 = vmatpush.xpose.msra.mxu0 0.0
        %2353 = vmatpush.xpose.msra.mxu0 0.0
        %2354 = vmatpush.xpose.msra.mxu0 0.0
        %2355 = vmatpush.xpose.msra.mxu0 0.0
        %v2356 = vand.u32 %v345, 4294901760
        %v2357 = vsub.f32 %v345, %v2356
        %v2358 = vand.u32 %v2357, 4294901760
        %v2359 = vsub.f32 %v2357, %v2358
        %v2360 = vand.u32 %v2359, 4294901760
        %2361 = vmatpush.xpose.msra.mxu0 %v2360
        %v2362 = vand.u32 %v342, 4294901760
        %v2363 = vsub.f32 %v342, %v2362
        %v2364 = vand.u32 %v2363, 4294901760
        %v2365 = vsub.f32 %v2363, %v2364
        %v2366 = vand.u32 %v2365, 4294901760
        %2367 = vmatpush.xpose.msra.mxu0 %v2366
        %v2368 = vand.u32 %v2302, 4294901760
        %2369 = vmatmul.f32.gmra.mxu0 %v2368
        %v2370 = vpop.f32.mrf.mxu0
        %v2371 = vadd.f32 %v2332, %v2370
        %v2372 = vand.u32 %v2305, 4294901760
        %2373 = vmatmul.f32.gmra.mxu0 %v2372
        %v2374 = vpop.f32.mrf.mxu0
        %v2375 = vadd.f32 %v2340, %v2374
        %2376 = vdwg.mxu0
        %2377 = vmatpush.xpose.msra.mxu0 0.0
        %2378 = vmatpush.xpose.msra.mxu0 0.0
        %2379 = vmatpush.xpose.msra.mxu0 0.0
        %2380 = vmatpush.xpose.msra.mxu0 0.0
        %2381 = vmatpush.xpose.msra.mxu0 0.0
        %2382 = vmatpush.xpose.msra.mxu0 0.0
        %2383 = vmatpush.xpose.msra.mxu0 0.0
        %2384 = vmatpush.xpose.msra.mxu0 0.0
        %2385 = vmatpush.xpose.msra.mxu0 0.0
        %2386 = vmatpush.xpose.msra.mxu0 0.0
        %2387 = vmatpush.xpose.msra.mxu0 0.0
        %2388 = vmatpush.xpose.msra.mxu0 0.0
        %2389 = vmatpush.xpose.msra.mxu0 0.0
        %2390 = vmatpush.xpose.msra.mxu0 0.0
        %v2391 = vand.u32 %v345, 4294901760
        %v2392 = vsub.f32 %v345, %v2391
        %2393 = vmatpush.xpose.msra.mxu0 %v2392
        %v2394 = vand.u32 %v342, 4294901760
        %v2395 = vsub.f32 %v342, %v2394
        %2396 = vmatpush.xpose.msra.mxu0 %v2395
        %v2397 = vand.u32 %v2302, 4294901760
        %v2398 = vsub.f32 %v2302, %v2397
        %2399 = vmatmul.f32.gmra.mxu0 %v2398
        %v2400 = vpop.f32.mrf.mxu0
        %v2401 = vadd.f32 %v2371, %v2400
        %v2402 = vand.u32 %v2305, 4294901760
        %v2403 = vsub.f32 %v2305, %v2402
        %2404 = vmatmul.f32.gmra.mxu0 %v2403
        %v2405 = vpop.f32.mrf.mxu0
        %v2406 = vadd.f32 %v2375, %v2405
        %2407 = vdwg.mxu0
        %2408 = vmatpush.xpose.msra.mxu0 0.0
        %2409 = vmatpush.xpose.msra.mxu0 0.0
        %2410 = vmatpush.xpose.msra.mxu0 0.0
        %2411 = vmatpush.xpose.msra.mxu0 0.0
        %2412 = vmatpush.xpose.msra.mxu0 0.0
        %2413 = vmatpush.xpose.msra.mxu0 0.0
        %2414 = vmatpush.xpose.msra.mxu0 0.0
        %2415 = vmatpush.xpose.msra.mxu0 0.0
        %2416 = vmatpush.xpose.msra.mxu0 0.0
        %2417 = vmatpush.xpose.msra.mxu0 0.0
        %2418 = vmatpush.xpose.msra.mxu0 0.0
        %2419 = vmatpush.xpose.msra.mxu0 0.0
        %2420 = vmatpush.xpose.msra.mxu0 0.0
        %2421 = vmatpush.xpose.msra.mxu0 0.0
        %v2422 = vand.u32 %v345, 4294901760
        %2423 = vmatpush.xpose.msra.mxu0 %v2422
        %v2424 = vand.u32 %v342, 4294901760
        %2425 = vmatpush.xpose.msra.mxu0 %v2424
        %v2426 = vand.u32 %v2302, 4294901760
        %v2427 = vsub.f32 %v2302, %v2426
        %v2428 = vand.u32 %v2427, 4294901760
        %2429 = vmatmul.f32.gmra.mxu0 %v2428
        %v2430 = vpop.f32.mrf.mxu0
        %v2431 = vadd.f32 %v2401, %v2430
        %v2432 = vand.u32 %v2305, 4294901760
        %v2433 = vsub.f32 %v2305, %v2432
        %v2434 = vand.u32 %v2433, 4294901760
        %2435 = vmatmul.f32.gmra.mxu0 %v2434
        %v2436 = vpop.f32.mrf.mxu0
        %v2437 = vadd.f32 %v2406, %v2436
        %2438 = vdwg.mxu0
        %2439 = vmatpush.xpose.msra.mxu0 0.0
        %2440 = vmatpush.xpose.msra.mxu0 0.0
        %2441 = vmatpush.xpose.msra.mxu0 0.0
        %2442 = vmatpush.xpose.msra.mxu0 0.0
        %2443 = vmatpush.xpose.msra.mxu0 0.0
        %2444 = vmatpush.xpose.msra.mxu0 0.0
        %2445 = vmatpush.xpose.msra.mxu0 0.0
        %2446 = vmatpush.xpose.msra.mxu0 0.0
        %2447 = vmatpush.xpose.msra.mxu0 0.0
        %2448 = vmatpush.xpose.msra.mxu0 0.0
        %2449 = vmatpush.xpose.msra.mxu0 0.0
        %2450 = vmatpush.xpose.msra.mxu0 0.0
        %2451 = vmatpush.xpose.msra.mxu0 0.0
        %2452 = vmatpush.xpose.msra.mxu0 0.0
        %v2453 = vand.u32 %v345, 4294901760
        %v2454 = vsub.f32 %v345, %v2453
        %v2455 = vand.u32 %v2454, 4294901760
        %2456 = vmatpush.xpose.msra.mxu0 %v2455
        %v2457 = vand.u32 %v342, 4294901760
        %v2458 = vsub.f32 %v342, %v2457
        %v2459 = vand.u32 %v2458, 4294901760
        %2460 = vmatpush.xpose.msra.mxu0 %v2459
        %v2461 = vand.u32 %v2302, 4294901760
        %2462 = vmatmul.f32.gmra.mxu0 %v2461
        %v2463 = vpop.f32.mrf.mxu0
        %v2464 = vadd.f32 %v2431, %v2463
        %v2465 = vand.u32 %v2305, 4294901760
        %2466 = vmatmul.f32.gmra.mxu0 %v2465
        %v2467 = vpop.f32.mrf.mxu0
        %v2468 = vadd.f32 %v2437, %v2467
        %2469 = vdwg.mxu0
        %2470 = vmatpush.xpose.msra.mxu0 0.0
        %2471 = vmatpush.xpose.msra.mxu0 0.0
        %2472 = vmatpush.xpose.msra.mxu0 0.0
        %2473 = vmatpush.xpose.msra.mxu0 0.0
        %2474 = vmatpush.xpose.msra.mxu0 0.0
        %2475 = vmatpush.xpose.msra.mxu0 0.0
        %2476 = vmatpush.xpose.msra.mxu0 0.0
        %2477 = vmatpush.xpose.msra.mxu0 0.0
        %2478 = vmatpush.xpose.msra.mxu0 0.0
        %2479 = vmatpush.xpose.msra.mxu0 0.0
        %2480 = vmatpush.xpose.msra.mxu0 0.0
        %2481 = vmatpush.xpose.msra.mxu0 0.0
        %2482 = vmatpush.xpose.msra.mxu0 0.0
        %2483 = vmatpush.xpose.msra.mxu0 0.0
        %v2484 = vand.u32 %v345, 4294901760
        %2485 = vmatpush.xpose.msra.mxu0 %v2484
        %v2486 = vand.u32 %v342, 4294901760
        %2487 = vmatpush.xpose.msra.mxu0 %v2486
        %v2488 = vand.u32 %v2302, 4294901760
        %2489 = vmatmul.f32.gmra.mxu0 %v2488
        %v2490 = vpop.f32.mrf.mxu0
        %v2491 = vadd.f32 %v2464, %v2490
        %v2492 = vand.u32 %v2305, 4294901760
        %2493 = vmatmul.f32.gmra.mxu0 %v2492
        %v2494 = vpop.f32.mrf.mxu0
        %v2495 = vadd.f32 %v2468, %v2494
        %2496 = vdwg.mxu0
        %v2498 = vsel %vm334, %v312, 0
        %v2501 = vsel %vm334, %v313, 0
        %2503 = vmatpush.xpose.msra.mxu0 0.0
        %2504 = vmatpush.xpose.msra.mxu0 0.0
        %2505 = vmatpush.xpose.msra.mxu0 0.0
        %2506 = vmatpush.xpose.msra.mxu0 0.0
        %2507 = vmatpush.xpose.msra.mxu0 0.0
        %2508 = vmatpush.xpose.msra.mxu0 0.0
        %2509 = vmatpush.xpose.msra.mxu0 0.0
        %2510 = vmatpush.xpose.msra.mxu0 0.0
        %2511 = vmatpush.xpose.msra.mxu0 0.0
        %2512 = vmatpush.xpose.msra.mxu0 0.0
        %2513 = vmatpush.xpose.msra.mxu0 0.0
        %2514 = vmatpush.xpose.msra.mxu0 0.0
        %2515 = vmatpush.xpose.msra.mxu0 0.0
        %2516 = vmatpush.xpose.msra.mxu0 0.0
        %v2517 = vand.u32 %v345, 4294901760
        %2518 = vmatpush.xpose.msra.mxu0 %v2517
        %v2519 = vand.u32 %v342, 4294901760
        %2520 = vmatpush.xpose.msra.mxu0 %v2519
        %v2521 = vand.u32 %v2498, 4294901760
        %v2522 = vsub.f32 %v2498, %v2521
        %v2523 = vand.u32 %v2522, 4294901760
        %v2524 = vsub.f32 %v2522, %v2523
        %v2525 = vand.u32 %v2524, 4294901760
        %2526 = vmatmul.f32.gmra.mxu0 %v2525
        %v2527 = vpop.f32.mrf.mxu0
        %v2528 = vadd.f32 0.0, %v2527
        %v2529 = vand.u32 %v2501, 4294901760
        %v2530 = vsub.f32 %v2501, %v2529
        %v2531 = vand.u32 %v2530, 4294901760
        %v2532 = vsub.f32 %v2530, %v2531
        %v2533 = vand.u32 %v2532, 4294901760
        %2534 = vmatmul.f32.gmra.mxu0 %v2533
        %v2535 = vpop.f32.mrf.mxu0
        %v2536 = vadd.f32 0.0, %v2535
        %2537 = vdwg.mxu0
        %2538 = vmatpush.xpose.msra.mxu0 0.0
        %2539 = vmatpush.xpose.msra.mxu0 0.0
        %2540 = vmatpush.xpose.msra.mxu0 0.0
        %2541 = vmatpush.xpose.msra.mxu0 0.0
        %2542 = vmatpush.xpose.msra.mxu0 0.0
        %2543 = vmatpush.xpose.msra.mxu0 0.0
        %2544 = vmatpush.xpose.msra.mxu0 0.0
        %2545 = vmatpush.xpose.msra.mxu0 0.0
        %2546 = vmatpush.xpose.msra.mxu0 0.0
        %2547 = vmatpush.xpose.msra.mxu0 0.0
        %2548 = vmatpush.xpose.msra.mxu0 0.0
        %2549 = vmatpush.xpose.msra.mxu0 0.0
        %2550 = vmatpush.xpose.msra.mxu0 0.0
        %2551 = vmatpush.xpose.msra.mxu0 0.0
        %v2552 = vand.u32 %v345, 4294901760
        %v2553 = vsub.f32 %v345, %v2552
        %v2554 = vand.u32 %v2553, 4294901760
        %v2555 = vsub.f32 %v2553, %v2554
        %v2556 = vand.u32 %v2555, 4294901760
        %2557 = vmatpush.xpose.msra.mxu0 %v2556
        %v2558 = vand.u32 %v342, 4294901760
        %v2559 = vsub.f32 %v342, %v2558
        %v2560 = vand.u32 %v2559, 4294901760
        %v2561 = vsub.f32 %v2559, %v2560
        %v2562 = vand.u32 %v2561, 4294901760
        %2563 = vmatpush.xpose.msra.mxu0 %v2562
        %v2564 = vand.u32 %v2498, 4294901760
        %2565 = vmatmul.f32.gmra.mxu0 %v2564
        %v2566 = vpop.f32.mrf.mxu0
        %v2567 = vadd.f32 %v2528, %v2566
        %v2568 = vand.u32 %v2501, 4294901760
        %2569 = vmatmul.f32.gmra.mxu0 %v2568
        %v2570 = vpop.f32.mrf.mxu0
        %v2571 = vadd.f32 %v2536, %v2570
        %2572 = vdwg.mxu0
        %2573 = vmatpush.xpose.msra.mxu0 0.0
        %2574 = vmatpush.xpose.msra.mxu0 0.0
        %2575 = vmatpush.xpose.msra.mxu0 0.0
        %2576 = vmatpush.xpose.msra.mxu0 0.0
        %2577 = vmatpush.xpose.msra.mxu0 0.0
        %2578 = vmatpush.xpose.msra.mxu0 0.0
        %2579 = vmatpush.xpose.msra.mxu0 0.0
        %2580 = vmatpush.xpose.msra.mxu0 0.0
        %2581 = vmatpush.xpose.msra.mxu0 0.0
        %2582 = vmatpush.xpose.msra.mxu0 0.0
        %2583 = vmatpush.xpose.msra.mxu0 0.0
        %2584 = vmatpush.xpose.msra.mxu0 0.0
        %2585 = vmatpush.xpose.msra.mxu0 0.0
        %2586 = vmatpush.xpose.msra.mxu0 0.0
        %v2587 = vand.u32 %v345, 4294901760
        %v2588 = vsub.f32 %v345, %v2587
        %2589 = vmatpush.xpose.msra.mxu0 %v2588
        %v2590 = vand.u32 %v342, 4294901760
        %v2591 = vsub.f32 %v342, %v2590
        %2592 = vmatpush.xpose.msra.mxu0 %v2591
        %v2593 = vand.u32 %v2498, 4294901760
        %v2594 = vsub.f32 %v2498, %v2593
        %2595 = vmatmul.f32.gmra.mxu0 %v2594
        %v2596 = vpop.f32.mrf.mxu0
        %v2597 = vadd.f32 %v2567, %v2596
        %v2598 = vand.u32 %v2501, 4294901760
        %v2599 = vsub.f32 %v2501, %v2598
        %2600 = vmatmul.f32.gmra.mxu0 %v2599
        %v2601 = vpop.f32.mrf.mxu0
        %v2602 = vadd.f32 %v2571, %v2601
        %2603 = vdwg.mxu0
        %2604 = vmatpush.xpose.msra.mxu0 0.0
        %2605 = vmatpush.xpose.msra.mxu0 0.0
        %2606 = vmatpush.xpose.msra.mxu0 0.0
        %2607 = vmatpush.xpose.msra.mxu0 0.0
        %2608 = vmatpush.xpose.msra.mxu0 0.0
        %2609 = vmatpush.xpose.msra.mxu0 0.0
        %2610 = vmatpush.xpose.msra.mxu0 0.0
        %2611 = vmatpush.xpose.msra.mxu0 0.0
        %2612 = vmatpush.xpose.msra.mxu0 0.0
        %2613 = vmatpush.xpose.msra.mxu0 0.0
        %2614 = vmatpush.xpose.msra.mxu0 0.0
        %2615 = vmatpush.xpose.msra.mxu0 0.0
        %2616 = vmatpush.xpose.msra.mxu0 0.0
        %2617 = vmatpush.xpose.msra.mxu0 0.0
        %v2618 = vand.u32 %v345, 4294901760
        %2619 = vmatpush.xpose.msra.mxu0 %v2618
        %v2620 = vand.u32 %v342, 4294901760
        %2621 = vmatpush.xpose.msra.mxu0 %v2620
        %v2622 = vand.u32 %v2498, 4294901760
        %v2623 = vsub.f32 %v2498, %v2622
        %v2624 = vand.u32 %v2623, 4294901760
        %2625 = vmatmul.f32.gmra.mxu0 %v2624
        %v2626 = vpop.f32.mrf.mxu0
        %v2627 = vadd.f32 %v2597, %v2626
        %v2628 = vand.u32 %v2501, 4294901760
        %v2629 = vsub.f32 %v2501, %v2628
        %v2630 = vand.u32 %v2629, 4294901760
        %2631 = vmatmul.f32.gmra.mxu0 %v2630
        %v2632 = vpop.f32.mrf.mxu0
        %v2633 = vadd.f32 %v2602, %v2632
        %2634 = vdwg.mxu0
        %2635 = vmatpush.xpose.msra.mxu0 0.0
        %2636 = vmatpush.xpose.msra.mxu0 0.0
        %2637 = vmatpush.xpose.msra.mxu0 0.0
        %2638 = vmatpush.xpose.msra.mxu0 0.0
        %2639 = vmatpush.xpose.msra.mxu0 0.0
        %2640 = vmatpush.xpose.msra.mxu0 0.0
        %2641 = vmatpush.xpose.msra.mxu0 0.0
        %2642 = vmatpush.xpose.msra.mxu0 0.0
        %2643 = vmatpush.xpose.msra.mxu0 0.0
        %2644 = vmatpush.xpose.msra.mxu0 0.0
        %2645 = vmatpush.xpose.msra.mxu0 0.0
        %2646 = vmatpush.xpose.msra.mxu0 0.0
        %2647 = vmatpush.xpose.msra.mxu0 0.0
        %2648 = vmatpush.xpose.msra.mxu0 0.0
        %v2649 = vand.u32 %v345, 4294901760
        %v2650 = vsub.f32 %v345, %v2649
        %v2651 = vand.u32 %v2650, 4294901760
        %2652 = vmatpush.xpose.msra.mxu0 %v2651
        %v2653 = vand.u32 %v342, 4294901760
        %v2654 = vsub.f32 %v342, %v2653
        %v2655 = vand.u32 %v2654, 4294901760
        %2656 = vmatpush.xpose.msra.mxu0 %v2655
        %v2657 = vand.u32 %v2498, 4294901760
        %2658 = vmatmul.f32.gmra.mxu0 %v2657
        %v2659 = vpop.f32.mrf.mxu0
        %v2660 = vadd.f32 %v2627, %v2659
        %v2661 = vand.u32 %v2501, 4294901760
        %2662 = vmatmul.f32.gmra.mxu0 %v2661
        %v2663 = vpop.f32.mrf.mxu0
        %v2664 = vadd.f32 %v2633, %v2663
        %2665 = vdwg.mxu0
        %2666 = vmatpush.xpose.msra.mxu0 0.0
        %2667 = vmatpush.xpose.msra.mxu0 0.0
        %2668 = vmatpush.xpose.msra.mxu0 0.0
        %2669 = vmatpush.xpose.msra.mxu0 0.0
        %2670 = vmatpush.xpose.msra.mxu0 0.0
        %2671 = vmatpush.xpose.msra.mxu0 0.0
        %2672 = vmatpush.xpose.msra.mxu0 0.0
        %2673 = vmatpush.xpose.msra.mxu0 0.0
        %2674 = vmatpush.xpose.msra.mxu0 0.0
        %2675 = vmatpush.xpose.msra.mxu0 0.0
        %2676 = vmatpush.xpose.msra.mxu0 0.0
        %2677 = vmatpush.xpose.msra.mxu0 0.0
        %2678 = vmatpush.xpose.msra.mxu0 0.0
        %2679 = vmatpush.xpose.msra.mxu0 0.0
        %v2680 = vand.u32 %v345, 4294901760
        %2681 = vmatpush.xpose.msra.mxu0 %v2680
        %v2682 = vand.u32 %v342, 4294901760
        %2683 = vmatpush.xpose.msra.mxu0 %v2682
        %v2684 = vand.u32 %v2498, 4294901760
        %2685 = vmatmul.f32.gmra.mxu0 %v2684
        %v2686 = vpop.f32.mrf.mxu0
        %v2687 = vadd.f32 %v2660, %v2686
        %v2688 = vand.u32 %v2501, 4294901760
        %2689 = vmatmul.f32.gmra.mxu0 %v2688
        %v2690 = vpop.f32.mrf.mxu0
        %v2691 = vadd.f32 %v2664, %v2690
        %2692 = vdwg.mxu0
        %v2694 = vsel %vm334, %v314, 0
        %v2697 = vsel %vm334, %v315, 0
        %2699 = vmatpush.xpose.msra.mxu0 0.0
        %2700 = vmatpush.xpose.msra.mxu0 0.0
        %2701 = vmatpush.xpose.msra.mxu0 0.0
        %2702 = vmatpush.xpose.msra.mxu0 0.0
        %2703 = vmatpush.xpose.msra.mxu0 0.0
        %2704 = vmatpush.xpose.msra.mxu0 0.0
        %2705 = vmatpush.xpose.msra.mxu0 0.0
        %2706 = vmatpush.xpose.msra.mxu0 0.0
        %2707 = vmatpush.xpose.msra.mxu0 0.0
        %2708 = vmatpush.xpose.msra.mxu0 0.0
        %2709 = vmatpush.xpose.msra.mxu0 0.0
        %2710 = vmatpush.xpose.msra.mxu0 0.0
        %2711 = vmatpush.xpose.msra.mxu0 0.0
        %2712 = vmatpush.xpose.msra.mxu0 0.0
        %v2713 = vand.u32 %v345, 4294901760
        %2714 = vmatpush.xpose.msra.mxu0 %v2713
        %v2715 = vand.u32 %v342, 4294901760
        %2716 = vmatpush.xpose.msra.mxu0 %v2715
        %v2717 = vand.u32 %v2694, 4294901760
        %v2718 = vsub.f32 %v2694, %v2717
        %v2719 = vand.u32 %v2718, 4294901760
        %v2720 = vsub.f32 %v2718, %v2719
        %v2721 = vand.u32 %v2720, 4294901760
        %2722 = vmatmul.f32.gmra.mxu0 %v2721
        %v2723 = vpop.f32.mrf.mxu0
        %v2724 = vadd.f32 0.0, %v2723
        %v2725 = vand.u32 %v2697, 4294901760
        %v2726 = vsub.f32 %v2697, %v2725
        %v2727 = vand.u32 %v2726, 4294901760
        %v2728 = vsub.f32 %v2726, %v2727
        %v2729 = vand.u32 %v2728, 4294901760
        %2730 = vmatmul.f32.gmra.mxu0 %v2729
        %v2731 = vpop.f32.mrf.mxu0
        %v2732 = vadd.f32 0.0, %v2731
        %2733 = vdwg.mxu0
        %2734 = vmatpush.xpose.msra.mxu0 0.0
        %2735 = vmatpush.xpose.msra.mxu0 0.0
        %2736 = vmatpush.xpose.msra.mxu0 0.0
        %2737 = vmatpush.xpose.msra.mxu0 0.0
        %2738 = vmatpush.xpose.msra.mxu0 0.0
        %2739 = vmatpush.xpose.msra.mxu0 0.0
        %2740 = vmatpush.xpose.msra.mxu0 0.0
        %2741 = vmatpush.xpose.msra.mxu0 0.0
        %2742 = vmatpush.xpose.msra.mxu0 0.0
        %2743 = vmatpush.xpose.msra.mxu0 0.0
        %2744 = vmatpush.xpose.msra.mxu0 0.0
        %2745 = vmatpush.xpose.msra.mxu0 0.0
        %2746 = vmatpush.xpose.msra.mxu0 0.0
        %2747 = vmatpush.xpose.msra.mxu0 0.0
        %v2748 = vand.u32 %v345, 4294901760
        %v2749 = vsub.f32 %v345, %v2748
        %v2750 = vand.u32 %v2749, 4294901760
        %v2751 = vsub.f32 %v2749, %v2750
        %v2752 = vand.u32 %v2751, 4294901760
        %2753 = vmatpush.xpose.msra.mxu0 %v2752
        %v2754 = vand.u32 %v342, 4294901760
        %v2755 = vsub.f32 %v342, %v2754
        %v2756 = vand.u32 %v2755, 4294901760
        %v2757 = vsub.f32 %v2755, %v2756
        %v2758 = vand.u32 %v2757, 4294901760
        %2759 = vmatpush.xpose.msra.mxu0 %v2758
        %v2760 = vand.u32 %v2694, 4294901760
        %2761 = vmatmul.f32.gmra.mxu0 %v2760
        %v2762 = vpop.f32.mrf.mxu0
        %v2763 = vadd.f32 %v2724, %v2762
        %v2764 = vand.u32 %v2697, 4294901760
        %2765 = vmatmul.f32.gmra.mxu0 %v2764
        %v2766 = vpop.f32.mrf.mxu0
        %v2767 = vadd.f32 %v2732, %v2766
        %2768 = vdwg.mxu0
        %2769 = vmatpush.xpose.msra.mxu0 0.0
        %2770 = vmatpush.xpose.msra.mxu0 0.0
        %2771 = vmatpush.xpose.msra.mxu0 0.0
        %2772 = vmatpush.xpose.msra.mxu0 0.0
        %2773 = vmatpush.xpose.msra.mxu0 0.0
        %2774 = vmatpush.xpose.msra.mxu0 0.0
        %2775 = vmatpush.xpose.msra.mxu0 0.0
        %2776 = vmatpush.xpose.msra.mxu0 0.0
        %2777 = vmatpush.xpose.msra.mxu0 0.0
        %2778 = vmatpush.xpose.msra.mxu0 0.0
        %2779 = vmatpush.xpose.msra.mxu0 0.0
        %2780 = vmatpush.xpose.msra.mxu0 0.0
        %2781 = vmatpush.xpose.msra.mxu0 0.0
        %2782 = vmatpush.xpose.msra.mxu0 0.0
        %v2783 = vand.u32 %v345, 4294901760
        %v2784 = vsub.f32 %v345, %v2783
        %2785 = vmatpush.xpose.msra.mxu0 %v2784
        %v2786 = vand.u32 %v342, 4294901760
        %v2787 = vsub.f32 %v342, %v2786
        %2788 = vmatpush.xpose.msra.mxu0 %v2787
        %v2789 = vand.u32 %v2694, 4294901760
        %v2790 = vsub.f32 %v2694, %v2789
        %2791 = vmatmul.f32.gmra.mxu0 %v2790
        %v2792 = vpop.f32.mrf.mxu0
        %v2793 = vadd.f32 %v2763, %v2792
        %v2794 = vand.u32 %v2697, 4294901760
        %v2795 = vsub.f32 %v2697, %v2794
        %2796 = vmatmul.f32.gmra.mxu0 %v2795
        %v2797 = vpop.f32.mrf.mxu0
        %v2798 = vadd.f32 %v2767, %v2797
        %2799 = vdwg.mxu0
        %2800 = vmatpush.xpose.msra.mxu0 0.0
        %2801 = vmatpush.xpose.msra.mxu0 0.0
        %2802 = vmatpush.xpose.msra.mxu0 0.0
        %2803 = vmatpush.xpose.msra.mxu0 0.0
        %2804 = vmatpush.xpose.msra.mxu0 0.0
        %2805 = vmatpush.xpose.msra.mxu0 0.0
        %2806 = vmatpush.xpose.msra.mxu0 0.0
        %2807 = vmatpush.xpose.msra.mxu0 0.0
        %2808 = vmatpush.xpose.msra.mxu0 0.0
        %2809 = vmatpush.xpose.msra.mxu0 0.0
        %2810 = vmatpush.xpose.msra.mxu0 0.0
        %2811 = vmatpush.xpose.msra.mxu0 0.0
        %2812 = vmatpush.xpose.msra.mxu0 0.0
        %2813 = vmatpush.xpose.msra.mxu0 0.0
        %v2814 = vand.u32 %v345, 4294901760
        %2815 = vmatpush.xpose.msra.mxu0 %v2814
        %v2816 = vand.u32 %v342, 4294901760
        %2817 = vmatpush.xpose.msra.mxu0 %v2816
        %v2818 = vand.u32 %v2694, 4294901760
        %v2819 = vsub.f32 %v2694, %v2818
        %v2820 = vand.u32 %v2819, 4294901760
        %2821 = vmatmul.f32.gmra.mxu0 %v2820
        %v2822 = vpop.f32.mrf.mxu0
        %v2823 = vadd.f32 %v2793, %v2822
        %v2824 = vand.u32 %v2697, 4294901760
        %v2825 = vsub.f32 %v2697, %v2824
        %v2826 = vand.u32 %v2825, 4294901760
        %2827 = vmatmul.f32.gmra.mxu0 %v2826
        %v2828 = vpop.f32.mrf.mxu0
        %v2829 = vadd.f32 %v2798, %v2828
        %2830 = vdwg.mxu0
        %2831 = vmatpush.xpose.msra.mxu0 0.0
        %2832 = vmatpush.xpose.msra.mxu0 0.0
        %2833 = vmatpush.xpose.msra.mxu0 0.0
        %2834 = vmatpush.xpose.msra.mxu0 0.0
        %2835 = vmatpush.xpose.msra.mxu0 0.0
        %2836 = vmatpush.xpose.msra.mxu0 0.0
        %2837 = vmatpush.xpose.msra.mxu0 0.0
        %2838 = vmatpush.xpose.msra.mxu0 0.0
        %2839 = vmatpush.xpose.msra.mxu0 0.0
        %2840 = vmatpush.xpose.msra.mxu0 0.0
        %2841 = vmatpush.xpose.msra.mxu0 0.0
        %2842 = vmatpush.xpose.msra.mxu0 0.0
        %2843 = vmatpush.xpose.msra.mxu0 0.0
        %2844 = vmatpush.xpose.msra.mxu0 0.0
        %v2845 = vand.u32 %v345, 4294901760
        %v2846 = vsub.f32 %v345, %v2845
        %v2847 = vand.u32 %v2846, 4294901760
        %2848 = vmatpush.xpose.msra.mxu0 %v2847
        %v2849 = vand.u32 %v342, 4294901760
        %v2850 = vsub.f32 %v342, %v2849
        %v2851 = vand.u32 %v2850, 4294901760
        %2852 = vmatpush.xpose.msra.mxu0 %v2851
        %v2853 = vand.u32 %v2694, 4294901760
        %2854 = vmatmul.f32.gmra.mxu0 %v2853
        %v2855 = vpop.f32.mrf.mxu0
        %v2856 = vadd.f32 %v2823, %v2855
        %v2857 = vand.u32 %v2697, 4294901760
        %2858 = vmatmul.f32.gmra.mxu0 %v2857
        %v2859 = vpop.f32.mrf.mxu0
        %v2860 = vadd.f32 %v2829, %v2859
        %2861 = vdwg.mxu0
        %2862 = vmatpush.xpose.msra.mxu0 0.0
        %2863 = vmatpush.xpose.msra.mxu0 0.0
        %2864 = vmatpush.xpose.msra.mxu0 0.0
        %2865 = vmatpush.xpose.msra.mxu0 0.0
        %2866 = vmatpush.xpose.msra.mxu0 0.0
        %2867 = vmatpush.xpose.msra.mxu0 0.0
        %2868 = vmatpush.xpose.msra.mxu0 0.0
        %2869 = vmatpush.xpose.msra.mxu0 0.0
        %2870 = vmatpush.xpose.msra.mxu0 0.0
        %2871 = vmatpush.xpose.msra.mxu0 0.0
        %2872 = vmatpush.xpose.msra.mxu0 0.0
        %2873 = vmatpush.xpose.msra.mxu0 0.0
        %2874 = vmatpush.xpose.msra.mxu0 0.0
        %2875 = vmatpush.xpose.msra.mxu0 0.0
        %v2876 = vand.u32 %v345, 4294901760
        %2877 = vmatpush.xpose.msra.mxu0 %v2876
        %v2878 = vand.u32 %v342, 4294901760
        %2879 = vmatpush.xpose.msra.mxu0 %v2878
        %v2880 = vand.u32 %v2694, 4294901760
        %2881 = vmatmul.f32.gmra.mxu0 %v2880
        %v2882 = vpop.f32.mrf.mxu0
        %v2883 = vadd.f32 %v2856, %v2882
        %v2884 = vand.u32 %v2697, 4294901760
        %2885 = vmatmul.f32.gmra.mxu0 %v2884
        %v2886 = vpop.f32.mrf.mxu0
        %v2887 = vadd.f32 %v2860, %v2886
        %2888 = vdwg.mxu0
        %v2890 = vsel %vm334, %v316, 0
        %v2893 = vsel %vm334, %v317, 0
        %2895 = vmatpush.xpose.msra.mxu0 0.0
        %2896 = vmatpush.xpose.msra.mxu0 0.0
        %2897 = vmatpush.xpose.msra.mxu0 0.0
        %2898 = vmatpush.xpose.msra.mxu0 0.0
        %2899 = vmatpush.xpose.msra.mxu0 0.0
        %2900 = vmatpush.xpose.msra.mxu0 0.0
        %2901 = vmatpush.xpose.msra.mxu0 0.0
        %2902 = vmatpush.xpose.msra.mxu0 0.0
        %2903 = vmatpush.xpose.msra.mxu0 0.0
        %2904 = vmatpush.xpose.msra.mxu0 0.0
        %2905 = vmatpush.xpose.msra.mxu0 0.0
        %2906 = vmatpush.xpose.msra.mxu0 0.0
        %2907 = vmatpush.xpose.msra.mxu0 0.0
        %2908 = vmatpush.xpose.msra.mxu0 0.0
        %v2909 = vand.u32 %v345, 4294901760
        %2910 = vmatpush.xpose.msra.mxu0 %v2909
        %v2911 = vand.u32 %v342, 4294901760
        %2912 = vmatpush.xpose.msra.mxu0 %v2911
        %v2913 = vand.u32 %v2890, 4294901760
        %v2914 = vsub.f32 %v2890, %v2913
        %v2915 = vand.u32 %v2914, 4294901760
        %v2916 = vsub.f32 %v2914, %v2915
        %v2917 = vand.u32 %v2916, 4294901760
        %2918 = vmatmul.f32.gmra.mxu0 %v2917
        %v2919 = vpop.f32.mrf.mxu0
        %v2920 = vadd.f32 0.0, %v2919
        %v2921 = vand.u32 %v2893, 4294901760
        %v2922 = vsub.f32 %v2893, %v2921
        %v2923 = vand.u32 %v2922, 4294901760
        %v2924 = vsub.f32 %v2922, %v2923
        %v2925 = vand.u32 %v2924, 4294901760
        %2926 = vmatmul.f32.gmra.mxu0 %v2925
        %v2927 = vpop.f32.mrf.mxu0
        %v2928 = vadd.f32 0.0, %v2927
        %2929 = vdwg.mxu0
        %2930 = vmatpush.xpose.msra.mxu0 0.0
        %2931 = vmatpush.xpose.msra.mxu0 0.0
        %2932 = vmatpush.xpose.msra.mxu0 0.0
        %2933 = vmatpush.xpose.msra.mxu0 0.0
        %2934 = vmatpush.xpose.msra.mxu0 0.0
        %2935 = vmatpush.xpose.msra.mxu0 0.0
        %2936 = vmatpush.xpose.msra.mxu0 0.0
        %2937 = vmatpush.xpose.msra.mxu0 0.0
        %2938 = vmatpush.xpose.msra.mxu0 0.0
        %2939 = vmatpush.xpose.msra.mxu0 0.0
        %2940 = vmatpush.xpose.msra.mxu0 0.0
        %2941 = vmatpush.xpose.msra.mxu0 0.0
        %2942 = vmatpush.xpose.msra.mxu0 0.0
        %2943 = vmatpush.xpose.msra.mxu0 0.0
        %v2944 = vand.u32 %v345, 4294901760
        %v2945 = vsub.f32 %v345, %v2944
        %v2946 = vand.u32 %v2945, 4294901760
        %v2947 = vsub.f32 %v2945, %v2946
        %v2948 = vand.u32 %v2947, 4294901760
        %2949 = vmatpush.xpose.msra.mxu0 %v2948
        %v2950 = vand.u32 %v342, 4294901760
        %v2951 = vsub.f32 %v342, %v2950
        %v2952 = vand.u32 %v2951, 4294901760
        %v2953 = vsub.f32 %v2951, %v2952
        %v2954 = vand.u32 %v2953, 4294901760
        %2955 = vmatpush.xpose.msra.mxu0 %v2954
        %v2956 = vand.u32 %v2890, 4294901760
        %2957 = vmatmul.f32.gmra.mxu0 %v2956
        %v2958 = vpop.f32.mrf.mxu0
        %v2959 = vadd.f32 %v2920, %v2958
        %v2960 = vand.u32 %v2893, 4294901760
        %2961 = vmatmul.f32.gmra.mxu0 %v2960
        %v2962 = vpop.f32.mrf.mxu0
        %v2963 = vadd.f32 %v2928, %v2962
        %2964 = vdwg.mxu0
        %2965 = vmatpush.xpose.msra.mxu0 0.0
        %2966 = vmatpush.xpose.msra.mxu0 0.0
        %2967 = vmatpush.xpose.msra.mxu0 0.0
        %2968 = vmatpush.xpose.msra.mxu0 0.0
        %2969 = vmatpush.xpose.msra.mxu0 0.0
        %2970 = vmatpush.xpose.msra.mxu0 0.0
        %2971 = vmatpush.xpose.msra.mxu0 0.0
        %2972 = vmatpush.xpose.msra.mxu0 0.0
        %2973 = vmatpush.xpose.msra.mxu0 0.0
        %2974 = vmatpush.xpose.msra.mxu0 0.0
        %2975 = vmatpush.xpose.msra.mxu0 0.0
        %2976 = vmatpush.xpose.msra.mxu0 0.0
        %2977 = vmatpush.xpose.msra.mxu0 0.0
        %2978 = vmatpush.xpose.msra.mxu0 0.0
        %v2979 = vand.u32 %v345, 4294901760
        %v2980 = vsub.f32 %v345, %v2979
        %2981 = vmatpush.xpose.msra.mxu0 %v2980
        %v2982 = vand.u32 %v342, 4294901760
        %v2983 = vsub.f32 %v342, %v2982
        %2984 = vmatpush.xpose.msra.mxu0 %v2983
        %v2985 = vand.u32 %v2890, 4294901760
        %v2986 = vsub.f32 %v2890, %v2985
        %2987 = vmatmul.f32.gmra.mxu0 %v2986
        %v2988 = vpop.f32.mrf.mxu0
        %v2989 = vadd.f32 %v2959, %v2988
        %v2990 = vand.u32 %v2893, 4294901760
        %v2991 = vsub.f32 %v2893, %v2990
        %2992 = vmatmul.f32.gmra.mxu0 %v2991
        %v2993 = vpop.f32.mrf.mxu0
        %v2994 = vadd.f32 %v2963, %v2993
        %2995 = vdwg.mxu0
        %2996 = vmatpush.xpose.msra.mxu0 0.0
        %2997 = vmatpush.xpose.msra.mxu0 0.0
        %2998 = vmatpush.xpose.msra.mxu0 0.0
        %2999 = vmatpush.xpose.msra.mxu0 0.0
        %3000 = vmatpush.xpose.msra.mxu0 0.0
        %3001 = vmatpush.xpose.msra.mxu0 0.0
        %3002 = vmatpush.xpose.msra.mxu0 0.0
        %3003 = vmatpush.xpose.msra.mxu0 0.0
        %3004 = vmatpush.xpose.msra.mxu0 0.0
        %3005 = vmatpush.xpose.msra.mxu0 0.0
        %3006 = vmatpush.xpose.msra.mxu0 0.0
        %3007 = vmatpush.xpose.msra.mxu0 0.0
        %3008 = vmatpush.xpose.msra.mxu0 0.0
        %3009 = vmatpush.xpose.msra.mxu0 0.0
        %v3010 = vand.u32 %v345, 4294901760
        %3011 = vmatpush.xpose.msra.mxu0 %v3010
        %v3012 = vand.u32 %v342, 4294901760
        %3013 = vmatpush.xpose.msra.mxu0 %v3012
        %v3014 = vand.u32 %v2890, 4294901760
        %v3015 = vsub.f32 %v2890, %v3014
        %v3016 = vand.u32 %v3015, 4294901760
        %3017 = vmatmul.f32.gmra.mxu0 %v3016
        %v3018 = vpop.f32.mrf.mxu0
        %v3019 = vadd.f32 %v2989, %v3018
        %v3020 = vand.u32 %v2893, 4294901760
        %v3021 = vsub.f32 %v2893, %v3020
        %v3022 = vand.u32 %v3021, 4294901760
        %3023 = vmatmul.f32.gmra.mxu0 %v3022
        %v3024 = vpop.f32.mrf.mxu0
        %v3025 = vadd.f32 %v2994, %v3024
        %3026 = vdwg.mxu0
        %3027 = vmatpush.xpose.msra.mxu0 0.0
        %3028 = vmatpush.xpose.msra.mxu0 0.0
        %3029 = vmatpush.xpose.msra.mxu0 0.0
        %3030 = vmatpush.xpose.msra.mxu0 0.0
        %3031 = vmatpush.xpose.msra.mxu0 0.0
        %3032 = vmatpush.xpose.msra.mxu0 0.0
        %3033 = vmatpush.xpose.msra.mxu0 0.0
        %3034 = vmatpush.xpose.msra.mxu0 0.0
        %3035 = vmatpush.xpose.msra.mxu0 0.0
        %3036 = vmatpush.xpose.msra.mxu0 0.0
        %3037 = vmatpush.xpose.msra.mxu0 0.0
        %3038 = vmatpush.xpose.msra.mxu0 0.0
        %3039 = vmatpush.xpose.msra.mxu0 0.0
        %3040 = vmatpush.xpose.msra.mxu0 0.0
        %v3041 = vand.u32 %v345, 4294901760
        %v3042 = vsub.f32 %v345, %v3041
        %v3043 = vand.u32 %v3042, 4294901760
        %3044 = vmatpush.xpose.msra.mxu0 %v3043
        %v3045 = vand.u32 %v342, 4294901760
        %v3046 = vsub.f32 %v342, %v3045
        %v3047 = vand.u32 %v3046, 4294901760
        %3048 = vmatpush.xpose.msra.mxu0 %v3047
        %v3049 = vand.u32 %v2890, 4294901760
        %3050 = vmatmul.f32.gmra.mxu0 %v3049
        %v3051 = vpop.f32.mrf.mxu0
        %v3052 = vadd.f32 %v3019, %v3051
        %v3053 = vand.u32 %v2893, 4294901760
        %3054 = vmatmul.f32.gmra.mxu0 %v3053
        %v3055 = vpop.f32.mrf.mxu0
        %v3056 = vadd.f32 %v3025, %v3055
        %3057 = vdwg.mxu0
        %3058 = vmatpush.xpose.msra.mxu0 0.0
        %3059 = vmatpush.xpose.msra.mxu0 0.0
        %3060 = vmatpush.xpose.msra.mxu0 0.0
        %3061 = vmatpush.xpose.msra.mxu0 0.0
        %3062 = vmatpush.xpose.msra.mxu0 0.0
        %3063 = vmatpush.xpose.msra.mxu0 0.0
        %3064 = vmatpush.xpose.msra.mxu0 0.0
        %3065 = vmatpush.xpose.msra.mxu0 0.0
        %3066 = vmatpush.xpose.msra.mxu0 0.0
        %3067 = vmatpush.xpose.msra.mxu0 0.0
        %3068 = vmatpush.xpose.msra.mxu0 0.0
        %3069 = vmatpush.xpose.msra.mxu0 0.0
        %3070 = vmatpush.xpose.msra.mxu0 0.0
        %3071 = vmatpush.xpose.msra.mxu0 0.0
        %v3072 = vand.u32 %v345, 4294901760
        %3073 = vmatpush.xpose.msra.mxu0 %v3072
        %v3074 = vand.u32 %v342, 4294901760
        %3075 = vmatpush.xpose.msra.mxu0 %v3074
        %v3076 = vand.u32 %v2890, 4294901760
        %3077 = vmatmul.f32.gmra.mxu0 %v3076
        %v3078 = vpop.f32.mrf.mxu0
        %v3079 = vadd.f32 %v3052, %v3078
        %v3080 = vand.u32 %v2893, 4294901760
        %3081 = vmatmul.f32.gmra.mxu0 %v3080
        %v3082 = vpop.f32.mrf.mxu0
        %v3083 = vadd.f32 %v3056, %v3082
        %3084 = vdwg.mxu0
        %v3086 = vsel %vm334, %v318, 0
        %v3089 = vsel %vm334, %v319, 0
        %3091 = vmatpush.xpose.msra.mxu0 0.0
        %3092 = vmatpush.xpose.msra.mxu0 0.0
        %3093 = vmatpush.xpose.msra.mxu0 0.0
        %3094 = vmatpush.xpose.msra.mxu0 0.0
        %3095 = vmatpush.xpose.msra.mxu0 0.0
        %3096 = vmatpush.xpose.msra.mxu0 0.0
        %3097 = vmatpush.xpose.msra.mxu0 0.0
        %3098 = vmatpush.xpose.msra.mxu0 0.0
        %3099 = vmatpush.xpose.msra.mxu0 0.0
        %3100 = vmatpush.xpose.msra.mxu0 0.0
        %3101 = vmatpush.xpose.msra.mxu0 0.0
        %3102 = vmatpush.xpose.msra.mxu0 0.0
        %3103 = vmatpush.xpose.msra.mxu0 0.0
        %3104 = vmatpush.xpose.msra.mxu0 0.0
        %v3105 = vand.u32 %v345, 4294901760
        %3106 = vmatpush.xpose.msra.mxu0 %v3105
        %v3107 = vand.u32 %v342, 4294901760
        %3108 = vmatpush.xpose.msra.mxu0 %v3107
        %v3109 = vand.u32 %v3086, 4294901760
        %v3110 = vsub.f32 %v3086, %v3109
        %v3111 = vand.u32 %v3110, 4294901760
        %v3112 = vsub.f32 %v3110, %v3111
        %v3113 = vand.u32 %v3112, 4294901760
        %3114 = vmatmul.f32.gmra.mxu0 %v3113
        %v3115 = vpop.f32.mrf.mxu0
        %v3116 = vadd.f32 0.0, %v3115
        %v3117 = vand.u32 %v3089, 4294901760
        %v3118 = vsub.f32 %v3089, %v3117
        %v3119 = vand.u32 %v3118, 4294901760
        %v3120 = vsub.f32 %v3118, %v3119
        %v3121 = vand.u32 %v3120, 4294901760
        %3122 = vmatmul.f32.gmra.mxu0 %v3121
        %v3123 = vpop.f32.mrf.mxu0
        %v3124 = vadd.f32 0.0, %v3123
        %3125 = vdwg.mxu0
        %3126 = vmatpush.xpose.msra.mxu0 0.0
        %3127 = vmatpush.xpose.msra.mxu0 0.0
        %3128 = vmatpush.xpose.msra.mxu0 0.0
        %3129 = vmatpush.xpose.msra.mxu0 0.0
        %3130 = vmatpush.xpose.msra.mxu0 0.0
        %3131 = vmatpush.xpose.msra.mxu0 0.0
        %3132 = vmatpush.xpose.msra.mxu0 0.0
        %3133 = vmatpush.xpose.msra.mxu0 0.0
        %3134 = vmatpush.xpose.msra.mxu0 0.0
        %3135 = vmatpush.xpose.msra.mxu0 0.0
        %3136 = vmatpush.xpose.msra.mxu0 0.0
        %3137 = vmatpush.xpose.msra.mxu0 0.0
        %3138 = vmatpush.xpose.msra.mxu0 0.0
        %3139 = vmatpush.xpose.msra.mxu0 0.0
        %v3140 = vand.u32 %v345, 4294901760
        %v3141 = vsub.f32 %v345, %v3140
        %v3142 = vand.u32 %v3141, 4294901760
        %v3143 = vsub.f32 %v3141, %v3142
        %v3144 = vand.u32 %v3143, 4294901760
        %3145 = vmatpush.xpose.msra.mxu0 %v3144
        %v3146 = vand.u32 %v342, 4294901760
        %v3147 = vsub.f32 %v342, %v3146
        %v3148 = vand.u32 %v3147, 4294901760
        %v3149 = vsub.f32 %v3147, %v3148
        %v3150 = vand.u32 %v3149, 4294901760
        %3151 = vmatpush.xpose.msra.mxu0 %v3150
        %v3152 = vand.u32 %v3086, 4294901760
        %3153 = vmatmul.f32.gmra.mxu0 %v3152
        %v3154 = vpop.f32.mrf.mxu0
        %v3155 = vadd.f32 %v3116, %v3154
        %v3156 = vand.u32 %v3089, 4294901760
        %3157 = vmatmul.f32.gmra.mxu0 %v3156
        %v3158 = vpop.f32.mrf.mxu0
        %v3159 = vadd.f32 %v3124, %v3158
        %3160 = vdwg.mxu0
        %3161 = vmatpush.xpose.msra.mxu0 0.0
        %3162 = vmatpush.xpose.msra.mxu0 0.0
        %3163 = vmatpush.xpose.msra.mxu0 0.0
        %3164 = vmatpush.xpose.msra.mxu0 0.0
        %3165 = vmatpush.xpose.msra.mxu0 0.0
        %3166 = vmatpush.xpose.msra.mxu0 0.0
        %3167 = vmatpush.xpose.msra.mxu0 0.0
        %3168 = vmatpush.xpose.msra.mxu0 0.0
        %3169 = vmatpush.xpose.msra.mxu0 0.0
        %3170 = vmatpush.xpose.msra.mxu0 0.0
        %3171 = vmatpush.xpose.msra.mxu0 0.0
        %3172 = vmatpush.xpose.msra.mxu0 0.0
        %3173 = vmatpush.xpose.msra.mxu0 0.0
        %3174 = vmatpush.xpose.msra.mxu0 0.0
        %v3175 = vand.u32 %v345, 4294901760
        %v3176 = vsub.f32 %v345, %v3175
        %3177 = vmatpush.xpose.msra.mxu0 %v3176
        %v3178 = vand.u32 %v342, 4294901760
        %v3179 = vsub.f32 %v342, %v3178
        %3180 = vmatpush.xpose.msra.mxu0 %v3179
        %v3181 = vand.u32 %v3086, 4294901760
        %v3182 = vsub.f32 %v3086, %v3181
        %3183 = vmatmul.f32.gmra.mxu0 %v3182
        %v3184 = vpop.f32.mrf.mxu0
        %v3185 = vadd.f32 %v3155, %v3184
        %v3186 = vand.u32 %v3089, 4294901760
        %v3187 = vsub.f32 %v3089, %v3186
        %3188 = vmatmul.f32.gmra.mxu0 %v3187
        %v3189 = vpop.f32.mrf.mxu0
        %v3190 = vadd.f32 %v3159, %v3189
        %3191 = vdwg.mxu0
        %3192 = vmatpush.xpose.msra.mxu0 0.0
        %3193 = vmatpush.xpose.msra.mxu0 0.0
        %3194 = vmatpush.xpose.msra.mxu0 0.0
        %3195 = vmatpush.xpose.msra.mxu0 0.0
        %3196 = vmatpush.xpose.msra.mxu0 0.0
        %3197 = vmatpush.xpose.msra.mxu0 0.0
        %3198 = vmatpush.xpose.msra.mxu0 0.0
        %3199 = vmatpush.xpose.msra.mxu0 0.0
        %3200 = vmatpush.xpose.msra.mxu0 0.0
        %3201 = vmatpush.xpose.msra.mxu0 0.0
        %3202 = vmatpush.xpose.msra.mxu0 0.0
        %3203 = vmatpush.xpose.msra.mxu0 0.0
        %3204 = vmatpush.xpose.msra.mxu0 0.0
        %3205 = vmatpush.xpose.msra.mxu0 0.0
        %v3206 = vand.u32 %v345, 4294901760
        %3207 = vmatpush.xpose.msra.mxu0 %v3206
        %v3208 = vand.u32 %v342, 4294901760
        %3209 = vmatpush.xpose.msra.mxu0 %v3208
        %v3210 = vand.u32 %v3086, 4294901760
        %v3211 = vsub.f32 %v3086, %v3210
        %v3212 = vand.u32 %v3211, 4294901760
        %3213 = vmatmul.f32.gmra.mxu0 %v3212
        %v3214 = vpop.f32.mrf.mxu0
        %v3215 = vadd.f32 %v3185, %v3214
        %v3216 = vand.u32 %v3089, 4294901760
        %v3217 = vsub.f32 %v3089, %v3216
        %v3218 = vand.u32 %v3217, 4294901760
        %3219 = vmatmul.f32.gmra.mxu0 %v3218
        %v3220 = vpop.f32.mrf.mxu0
        %v3221 = vadd.f32 %v3190, %v3220
        %3222 = vdwg.mxu0
        %3223 = vmatpush.xpose.msra.mxu0 0.0
        %3224 = vmatpush.xpose.msra.mxu0 0.0
        %3225 = vmatpush.xpose.msra.mxu0 0.0
        %3226 = vmatpush.xpose.msra.mxu0 0.0
        %3227 = vmatpush.xpose.msra.mxu0 0.0
        %3228 = vmatpush.xpose.msra.mxu0 0.0
        %3229 = vmatpush.xpose.msra.mxu0 0.0
        %3230 = vmatpush.xpose.msra.mxu0 0.0
        %3231 = vmatpush.xpose.msra.mxu0 0.0
        %3232 = vmatpush.xpose.msra.mxu0 0.0
        %3233 = vmatpush.xpose.msra.mxu0 0.0
        %3234 = vmatpush.xpose.msra.mxu0 0.0
        %3235 = vmatpush.xpose.msra.mxu0 0.0
        %3236 = vmatpush.xpose.msra.mxu0 0.0
        %v3237 = vand.u32 %v345, 4294901760
        %v3238 = vsub.f32 %v345, %v3237
        %v3239 = vand.u32 %v3238, 4294901760
        %3240 = vmatpush.xpose.msra.mxu0 %v3239
        %v3241 = vand.u32 %v342, 4294901760
        %v3242 = vsub.f32 %v342, %v3241
        %v3243 = vand.u32 %v3242, 4294901760
        %3244 = vmatpush.xpose.msra.mxu0 %v3243
        %v3245 = vand.u32 %v3086, 4294901760
        %3246 = vmatmul.f32.gmra.mxu0 %v3245
        %v3247 = vpop.f32.mrf.mxu0
        %v3248 = vadd.f32 %v3215, %v3247
        %v3249 = vand.u32 %v3089, 4294901760
        %3250 = vmatmul.f32.gmra.mxu0 %v3249
        %v3251 = vpop.f32.mrf.mxu0
        %v3252 = vadd.f32 %v3221, %v3251
        %3253 = vdwg.mxu0
        %3254 = vmatpush.xpose.msra.mxu0 0.0
        %3255 = vmatpush.xpose.msra.mxu0 0.0
        %3256 = vmatpush.xpose.msra.mxu0 0.0
        %3257 = vmatpush.xpose.msra.mxu0 0.0
        %3258 = vmatpush.xpose.msra.mxu0 0.0
        %3259 = vmatpush.xpose.msra.mxu0 0.0
        %3260 = vmatpush.xpose.msra.mxu0 0.0
        %3261 = vmatpush.xpose.msra.mxu0 0.0
        %3262 = vmatpush.xpose.msra.mxu0 0.0
        %3263 = vmatpush.xpose.msra.mxu0 0.0
        %3264 = vmatpush.xpose.msra.mxu0 0.0
        %3265 = vmatpush.xpose.msra.mxu0 0.0
        %3266 = vmatpush.xpose.msra.mxu0 0.0
        %3267 = vmatpush.xpose.msra.mxu0 0.0
        %v3268 = vand.u32 %v345, 4294901760
        %3269 = vmatpush.xpose.msra.mxu0 %v3268
        %v3270 = vand.u32 %v342, 4294901760
        %3271 = vmatpush.xpose.msra.mxu0 %v3270
        %v3272 = vand.u32 %v3086, 4294901760
        %3273 = vmatmul.f32.gmra.mxu0 %v3272
        %v3274 = vpop.f32.mrf.mxu0
        %v3275 = vadd.f32 %v3248, %v3274
        %v3276 = vand.u32 %v3089, 4294901760
        %3277 = vmatmul.f32.gmra.mxu0 %v3276
        %v3278 = vpop.f32.mrf.mxu0
        %v3279 = vadd.f32 %v3252, %v3278
        %3280 = vdwg.mxu0
        %v3282 = vsel %vm334, %v320, 0
        %v3285 = vsel %vm334, %v321, 0
        %3287 = vmatpush.xpose.msra.mxu0 0.0
        %3288 = vmatpush.xpose.msra.mxu0 0.0
        %3289 = vmatpush.xpose.msra.mxu0 0.0
        %3290 = vmatpush.xpose.msra.mxu0 0.0
        %3291 = vmatpush.xpose.msra.mxu0 0.0
        %3292 = vmatpush.xpose.msra.mxu0 0.0
        %3293 = vmatpush.xpose.msra.mxu0 0.0
        %3294 = vmatpush.xpose.msra.mxu0 0.0
        %3295 = vmatpush.xpose.msra.mxu0 0.0
        %3296 = vmatpush.xpose.msra.mxu0 0.0
        %3297 = vmatpush.xpose.msra.mxu0 0.0
        %3298 = vmatpush.xpose.msra.mxu0 0.0
        %3299 = vmatpush.xpose.msra.mxu0 0.0
        %3300 = vmatpush.xpose.msra.mxu0 0.0
        %v3301 = vand.u32 %v345, 4294901760
        %3302 = vmatpush.xpose.msra.mxu0 %v3301
        %v3303 = vand.u32 %v342, 4294901760
        %3304 = vmatpush.xpose.msra.mxu0 %v3303
        %v3305 = vand.u32 %v3282, 4294901760
        %v3306 = vsub.f32 %v3282, %v3305
        %v3307 = vand.u32 %v3306, 4294901760
        %v3308 = vsub.f32 %v3306, %v3307
        %v3309 = vand.u32 %v3308, 4294901760
        %3310 = vmatmul.f32.gmra.mxu0 %v3309
        %v3311 = vpop.f32.mrf.mxu0
        %v3312 = vadd.f32 0.0, %v3311
        %v3313 = vand.u32 %v3285, 4294901760
        %v3314 = vsub.f32 %v3285, %v3313
        %v3315 = vand.u32 %v3314, 4294901760
        %v3316 = vsub.f32 %v3314, %v3315
        %v3317 = vand.u32 %v3316, 4294901760
        %3318 = vmatmul.f32.gmra.mxu0 %v3317
        %v3319 = vpop.f32.mrf.mxu0
        %v3320 = vadd.f32 0.0, %v3319
        %3321 = vdwg.mxu0
        %3322 = vmatpush.xpose.msra.mxu0 0.0
        %3323 = vmatpush.xpose.msra.mxu0 0.0
        %3324 = vmatpush.xpose.msra.mxu0 0.0
        %3325 = vmatpush.xpose.msra.mxu0 0.0
        %3326 = vmatpush.xpose.msra.mxu0 0.0
        %3327 = vmatpush.xpose.msra.mxu0 0.0
        %3328 = vmatpush.xpose.msra.mxu0 0.0
        %3329 = vmatpush.xpose.msra.mxu0 0.0
        %3330 = vmatpush.xpose.msra.mxu0 0.0
        %3331 = vmatpush.xpose.msra.mxu0 0.0
        %3332 = vmatpush.xpose.msra.mxu0 0.0
        %3333 = vmatpush.xpose.msra.mxu0 0.0
        %3334 = vmatpush.xpose.msra.mxu0 0.0
        %3335 = vmatpush.xpose.msra.mxu0 0.0
        %v3336 = vand.u32 %v345, 4294901760
        %v3337 = vsub.f32 %v345, %v3336
        %v3338 = vand.u32 %v3337, 4294901760
        %v3339 = vsub.f32 %v3337, %v3338
        %v3340 = vand.u32 %v3339, 4294901760
        %3341 = vmatpush.xpose.msra.mxu0 %v3340
        %v3342 = vand.u32 %v342, 4294901760
        %v3343 = vsub.f32 %v342, %v3342
        %v3344 = vand.u32 %v3343, 4294901760
        %v3345 = vsub.f32 %v3343, %v3344
        %v3346 = vand.u32 %v3345, 4294901760
        %3347 = vmatpush.xpose.msra.mxu0 %v3346
        %v3348 = vand.u32 %v3282, 4294901760
        %3349 = vmatmul.f32.gmra.mxu0 %v3348
        %v3350 = vpop.f32.mrf.mxu0
        %v3351 = vadd.f32 %v3312, %v3350
        %v3352 = vand.u32 %v3285, 4294901760
        %3353 = vmatmul.f32.gmra.mxu0 %v3352
        %v3354 = vpop.f32.mrf.mxu0
        %v3355 = vadd.f32 %v3320, %v3354
        %3356 = vdwg.mxu0
        %3357 = vmatpush.xpose.msra.mxu0 0.0
        %3358 = vmatpush.xpose.msra.mxu0 0.0
        %3359 = vmatpush.xpose.msra.mxu0 0.0
        %3360 = vmatpush.xpose.msra.mxu0 0.0
        %3361 = vmatpush.xpose.msra.mxu0 0.0
        %3362 = vmatpush.xpose.msra.mxu0 0.0
        %3363 = vmatpush.xpose.msra.mxu0 0.0
        %3364 = vmatpush.xpose.msra.mxu0 0.0
        %3365 = vmatpush.xpose.msra.mxu0 0.0
        %3366 = vmatpush.xpose.msra.mxu0 0.0
        %3367 = vmatpush.xpose.msra.mxu0 0.0
        %3368 = vmatpush.xpose.msra.mxu0 0.0
        %3369 = vmatpush.xpose.msra.mxu0 0.0
        %3370 = vmatpush.xpose.msra.mxu0 0.0
        %v3371 = vand.u32 %v345, 4294901760
        %v3372 = vsub.f32 %v345, %v3371
        %3373 = vmatpush.xpose.msra.mxu0 %v3372
        %v3374 = vand.u32 %v342, 4294901760
        %v3375 = vsub.f32 %v342, %v3374
        %3376 = vmatpush.xpose.msra.mxu0 %v3375
        %v3377 = vand.u32 %v3282, 4294901760
        %v3378 = vsub.f32 %v3282, %v3377
        %3379 = vmatmul.f32.gmra.mxu0 %v3378
        %v3380 = vpop.f32.mrf.mxu0
        %v3381 = vadd.f32 %v3351, %v3380
        %v3382 = vand.u32 %v3285, 4294901760
        %v3383 = vsub.f32 %v3285, %v3382
        %3384 = vmatmul.f32.gmra.mxu0 %v3383
        %v3385 = vpop.f32.mrf.mxu0
        %v3386 = vadd.f32 %v3355, %v3385
        %3387 = vdwg.mxu0
        %3388 = vmatpush.xpose.msra.mxu0 0.0
        %3389 = vmatpush.xpose.msra.mxu0 0.0
        %3390 = vmatpush.xpose.msra.mxu0 0.0
        %3391 = vmatpush.xpose.msra.mxu0 0.0
        %3392 = vmatpush.xpose.msra.mxu0 0.0
        %3393 = vmatpush.xpose.msra.mxu0 0.0
        %3394 = vmatpush.xpose.msra.mxu0 0.0
        %3395 = vmatpush.xpose.msra.mxu0 0.0
        %3396 = vmatpush.xpose.msra.mxu0 0.0
        %3397 = vmatpush.xpose.msra.mxu0 0.0
        %3398 = vmatpush.xpose.msra.mxu0 0.0
        %3399 = vmatpush.xpose.msra.mxu0 0.0
        %3400 = vmatpush.xpose.msra.mxu0 0.0
        %3401 = vmatpush.xpose.msra.mxu0 0.0
        %v3402 = vand.u32 %v345, 4294901760
        %3403 = vmatpush.xpose.msra.mxu0 %v3402
        %v3404 = vand.u32 %v342, 4294901760
        %3405 = vmatpush.xpose.msra.mxu0 %v3404
        %v3406 = vand.u32 %v3282, 4294901760
        %v3407 = vsub.f32 %v3282, %v3406
        %v3408 = vand.u32 %v3407, 4294901760
        %3409 = vmatmul.f32.gmra.mxu0 %v3408
        %v3410 = vpop.f32.mrf.mxu0
        %v3411 = vadd.f32 %v3381, %v3410
        %v3412 = vand.u32 %v3285, 4294901760
        %v3413 = vsub.f32 %v3285, %v3412
        %v3414 = vand.u32 %v3413, 4294901760
        %3415 = vmatmul.f32.gmra.mxu0 %v3414
        %v3416 = vpop.f32.mrf.mxu0
        %v3417 = vadd.f32 %v3386, %v3416
        %3418 = vdwg.mxu0
        %3419 = vmatpush.xpose.msra.mxu0 0.0
        %3420 = vmatpush.xpose.msra.mxu0 0.0
        %3421 = vmatpush.xpose.msra.mxu0 0.0
        %3422 = vmatpush.xpose.msra.mxu0 0.0
        %3423 = vmatpush.xpose.msra.mxu0 0.0
        %3424 = vmatpush.xpose.msra.mxu0 0.0
        %3425 = vmatpush.xpose.msra.mxu0 0.0
        %3426 = vmatpush.xpose.msra.mxu0 0.0
        %3427 = vmatpush.xpose.msra.mxu0 0.0
        %3428 = vmatpush.xpose.msra.mxu0 0.0
        %3429 = vmatpush.xpose.msra.mxu0 0.0
        %3430 = vmatpush.xpose.msra.mxu0 0.0
        %3431 = vmatpush.xpose.msra.mxu0 0.0
        %3432 = vmatpush.xpose.msra.mxu0 0.0
        %v3433 = vand.u32 %v345, 4294901760
        %v3434 = vsub.f32 %v345, %v3433
        %v3435 = vand.u32 %v3434, 4294901760
        %3436 = vmatpush.xpose.msra.mxu0 %v3435
        %v3437 = vand.u32 %v342, 4294901760
        %v3438 = vsub.f32 %v342, %v3437
        %v3439 = vand.u32 %v3438, 4294901760
        %3440 = vmatpush.xpose.msra.mxu0 %v3439
        %v3441 = vand.u32 %v3282, 4294901760
        %3442 = vmatmul.f32.gmra.mxu0 %v3441
        %v3443 = vpop.f32.mrf.mxu0
        %v3444 = vadd.f32 %v3411, %v3443
        %v3445 = vand.u32 %v3285, 4294901760
        %3446 = vmatmul.f32.gmra.mxu0 %v3445
        %v3447 = vpop.f32.mrf.mxu0
        %v3448 = vadd.f32 %v3417, %v3447
        %3449 = vdwg.mxu0
        %3450 = vmatpush.xpose.msra.mxu0 0.0
        %3451 = vmatpush.xpose.msra.mxu0 0.0
        %3452 = vmatpush.xpose.msra.mxu0 0.0
        %3453 = vmatpush.xpose.msra.mxu0 0.0
        %3454 = vmatpush.xpose.msra.mxu0 0.0
        %3455 = vmatpush.xpose.msra.mxu0 0.0
        %3456 = vmatpush.xpose.msra.mxu0 0.0
        %3457 = vmatpush.xpose.msra.mxu0 0.0
        %3458 = vmatpush.xpose.msra.mxu0 0.0
        %3459 = vmatpush.xpose.msra.mxu0 0.0
        %3460 = vmatpush.xpose.msra.mxu0 0.0
        %3461 = vmatpush.xpose.msra.mxu0 0.0
        %3462 = vmatpush.xpose.msra.mxu0 0.0
        %3463 = vmatpush.xpose.msra.mxu0 0.0
        %v3464 = vand.u32 %v345, 4294901760
        %3465 = vmatpush.xpose.msra.mxu0 %v3464
        %v3466 = vand.u32 %v342, 4294901760
        %3467 = vmatpush.xpose.msra.mxu0 %v3466
        %v3468 = vand.u32 %v3282, 4294901760
        %3469 = vmatmul.f32.gmra.mxu0 %v3468
        %v3470 = vpop.f32.mrf.mxu0
        %v3471 = vadd.f32 %v3444, %v3470
        %v3472 = vand.u32 %v3285, 4294901760
        %3473 = vmatmul.f32.gmra.mxu0 %v3472
        %v3474 = vpop.f32.mrf.mxu0
        %v3475 = vadd.f32 %v3448, %v3474
        %3476 = vdwg.mxu0
        %v3478 = vsel %vm334, %v322, 0
        %v3481 = vsel %vm334, %v323, 0
        %3483 = vmatpush.xpose.msra.mxu0 0.0
        %3484 = vmatpush.xpose.msra.mxu0 0.0
        %3485 = vmatpush.xpose.msra.mxu0 0.0
        %3486 = vmatpush.xpose.msra.mxu0 0.0
        %3487 = vmatpush.xpose.msra.mxu0 0.0
        %3488 = vmatpush.xpose.msra.mxu0 0.0
        %3489 = vmatpush.xpose.msra.mxu0 0.0
        %3490 = vmatpush.xpose.msra.mxu0 0.0
        %3491 = vmatpush.xpose.msra.mxu0 0.0
        %3492 = vmatpush.xpose.msra.mxu0 0.0
        %3493 = vmatpush.xpose.msra.mxu0 0.0
        %3494 = vmatpush.xpose.msra.mxu0 0.0
        %3495 = vmatpush.xpose.msra.mxu0 0.0
        %3496 = vmatpush.xpose.msra.mxu0 0.0
        %v3497 = vand.u32 %v345, 4294901760
        %3498 = vmatpush.xpose.msra.mxu0 %v3497
        %v3499 = vand.u32 %v342, 4294901760
        %3500 = vmatpush.xpose.msra.mxu0 %v3499
        %v3501 = vand.u32 %v3478, 4294901760
        %v3502 = vsub.f32 %v3478, %v3501
        %v3503 = vand.u32 %v3502, 4294901760
        %v3504 = vsub.f32 %v3502, %v3503
        %v3505 = vand.u32 %v3504, 4294901760
        %3506 = vmatmul.f32.gmra.mxu0 %v3505
        %v3507 = vpop.f32.mrf.mxu0
        %v3508 = vadd.f32 0.0, %v3507
        %v3509 = vand.u32 %v3481, 4294901760
        %v3510 = vsub.f32 %v3481, %v3509
        %v3511 = vand.u32 %v3510, 4294901760
        %v3512 = vsub.f32 %v3510, %v3511
        %v3513 = vand.u32 %v3512, 4294901760
        %3514 = vmatmul.f32.gmra.mxu0 %v3513
        %v3515 = vpop.f32.mrf.mxu0
        %v3516 = vadd.f32 0.0, %v3515
        %3517 = vdwg.mxu0
        %3518 = vmatpush.xpose.msra.mxu0 0.0
        %3519 = vmatpush.xpose.msra.mxu0 0.0
        %3520 = vmatpush.xpose.msra.mxu0 0.0
        %3521 = vmatpush.xpose.msra.mxu0 0.0
        %3522 = vmatpush.xpose.msra.mxu0 0.0
        %3523 = vmatpush.xpose.msra.mxu0 0.0
        %3524 = vmatpush.xpose.msra.mxu0 0.0
        %3525 = vmatpush.xpose.msra.mxu0 0.0
        %3526 = vmatpush.xpose.msra.mxu0 0.0
        %3527 = vmatpush.xpose.msra.mxu0 0.0
        %3528 = vmatpush.xpose.msra.mxu0 0.0
        %3529 = vmatpush.xpose.msra.mxu0 0.0
        %3530 = vmatpush.xpose.msra.mxu0 0.0
        %3531 = vmatpush.xpose.msra.mxu0 0.0
        %v3532 = vand.u32 %v345, 4294901760
        %v3533 = vsub.f32 %v345, %v3532
        %v3534 = vand.u32 %v3533, 4294901760
        %v3535 = vsub.f32 %v3533, %v3534
        %v3536 = vand.u32 %v3535, 4294901760
        %3537 = vmatpush.xpose.msra.mxu0 %v3536
        %v3538 = vand.u32 %v342, 4294901760
        %v3539 = vsub.f32 %v342, %v3538
        %v3540 = vand.u32 %v3539, 4294901760
        %v3541 = vsub.f32 %v3539, %v3540
        %v3542 = vand.u32 %v3541, 4294901760
        %3543 = vmatpush.xpose.msra.mxu0 %v3542
        %v3544 = vand.u32 %v3478, 4294901760
        %3545 = vmatmul.f32.gmra.mxu0 %v3544
        %v3546 = vpop.f32.mrf.mxu0
        %v3547 = vadd.f32 %v3508, %v3546
        %v3548 = vand.u32 %v3481, 4294901760
        %3549 = vmatmul.f32.gmra.mxu0 %v3548
        %v3550 = vpop.f32.mrf.mxu0
        %v3551 = vadd.f32 %v3516, %v3550
        %3552 = vdwg.mxu0
        %3553 = vmatpush.xpose.msra.mxu0 0.0
        %3554 = vmatpush.xpose.msra.mxu0 0.0
        %3555 = vmatpush.xpose.msra.mxu0 0.0
        %3556 = vmatpush.xpose.msra.mxu0 0.0
        %3557 = vmatpush.xpose.msra.mxu0 0.0
        %3558 = vmatpush.xpose.msra.mxu0 0.0
        %3559 = vmatpush.xpose.msra.mxu0 0.0
        %3560 = vmatpush.xpose.msra.mxu0 0.0
        %3561 = vmatpush.xpose.msra.mxu0 0.0
        %3562 = vmatpush.xpose.msra.mxu0 0.0
        %3563 = vmatpush.xpose.msra.mxu0 0.0
        %3564 = vmatpush.xpose.msra.mxu0 0.0
        %3565 = vmatpush.xpose.msra.mxu0 0.0
        %3566 = vmatpush.xpose.msra.mxu0 0.0
        %v3567 = vand.u32 %v345, 4294901760
        %v3568 = vsub.f32 %v345, %v3567
        %3569 = vmatpush.xpose.msra.mxu0 %v3568
        %v3570 = vand.u32 %v342, 4294901760
        %v3571 = vsub.f32 %v342, %v3570
        %3572 = vmatpush.xpose.msra.mxu0 %v3571
        %v3573 = vand.u32 %v3478, 4294901760
        %v3574 = vsub.f32 %v3478, %v3573
        %3575 = vmatmul.f32.gmra.mxu0 %v3574
        %v3576 = vpop.f32.mrf.mxu0
        %v3577 = vadd.f32 %v3547, %v3576
        %v3578 = vand.u32 %v3481, 4294901760
        %v3579 = vsub.f32 %v3481, %v3578
        %3580 = vmatmul.f32.gmra.mxu0 %v3579
        %v3581 = vpop.f32.mrf.mxu0
        %v3582 = vadd.f32 %v3551, %v3581
        %3583 = vdwg.mxu0
        %3584 = vmatpush.xpose.msra.mxu0 0.0
        %3585 = vmatpush.xpose.msra.mxu0 0.0
        %3586 = vmatpush.xpose.msra.mxu0 0.0
        %3587 = vmatpush.xpose.msra.mxu0 0.0
        %3588 = vmatpush.xpose.msra.mxu0 0.0
        %3589 = vmatpush.xpose.msra.mxu0 0.0
        %3590 = vmatpush.xpose.msra.mxu0 0.0
        %3591 = vmatpush.xpose.msra.mxu0 0.0
        %3592 = vmatpush.xpose.msra.mxu0 0.0
        %3593 = vmatpush.xpose.msra.mxu0 0.0
        %3594 = vmatpush.xpose.msra.mxu0 0.0
        %3595 = vmatpush.xpose.msra.mxu0 0.0
        %3596 = vmatpush.xpose.msra.mxu0 0.0
        %3597 = vmatpush.xpose.msra.mxu0 0.0
        %v3598 = vand.u32 %v345, 4294901760
        %3599 = vmatpush.xpose.msra.mxu0 %v3598
        %v3600 = vand.u32 %v342, 4294901760
        %3601 = vmatpush.xpose.msra.mxu0 %v3600
        %v3602 = vand.u32 %v3478, 4294901760
        %v3603 = vsub.f32 %v3478, %v3602
        %v3604 = vand.u32 %v3603, 4294901760
        %3605 = vmatmul.f32.gmra.mxu0 %v3604
        %v3606 = vpop.f32.mrf.mxu0
        %v3607 = vadd.f32 %v3577, %v3606
        %v3608 = vand.u32 %v3481, 4294901760
        %v3609 = vsub.f32 %v3481, %v3608
        %v3610 = vand.u32 %v3609, 4294901760
        %3611 = vmatmul.f32.gmra.mxu0 %v3610
        %v3612 = vpop.f32.mrf.mxu0
        %v3613 = vadd.f32 %v3582, %v3612
        %3614 = vdwg.mxu0
        %3615 = vmatpush.xpose.msra.mxu0 0.0
        %3616 = vmatpush.xpose.msra.mxu0 0.0
        %3617 = vmatpush.xpose.msra.mxu0 0.0
        %3618 = vmatpush.xpose.msra.mxu0 0.0
        %3619 = vmatpush.xpose.msra.mxu0 0.0
        %3620 = vmatpush.xpose.msra.mxu0 0.0
        %3621 = vmatpush.xpose.msra.mxu0 0.0
        %3622 = vmatpush.xpose.msra.mxu0 0.0
        %3623 = vmatpush.xpose.msra.mxu0 0.0
        %3624 = vmatpush.xpose.msra.mxu0 0.0
        %3625 = vmatpush.xpose.msra.mxu0 0.0
        %3626 = vmatpush.xpose.msra.mxu0 0.0
        %3627 = vmatpush.xpose.msra.mxu0 0.0
        %3628 = vmatpush.xpose.msra.mxu0 0.0
        %v3629 = vand.u32 %v345, 4294901760
        %v3630 = vsub.f32 %v345, %v3629
        %v3631 = vand.u32 %v3630, 4294901760
        %3632 = vmatpush.xpose.msra.mxu0 %v3631
        %v3633 = vand.u32 %v342, 4294901760
        %v3634 = vsub.f32 %v342, %v3633
        %v3635 = vand.u32 %v3634, 4294901760
        %3636 = vmatpush.xpose.msra.mxu0 %v3635
        %v3637 = vand.u32 %v3478, 4294901760
        %3638 = vmatmul.f32.gmra.mxu0 %v3637
        %v3639 = vpop.f32.mrf.mxu0
        %v3640 = vadd.f32 %v3607, %v3639
        %v3641 = vand.u32 %v3481, 4294901760
        %3642 = vmatmul.f32.gmra.mxu0 %v3641
        %v3643 = vpop.f32.mrf.mxu0
        %v3644 = vadd.f32 %v3613, %v3643
        %3645 = vdwg.mxu0
        %3646 = vmatpush.xpose.msra.mxu0 0.0
        %3647 = vmatpush.xpose.msra.mxu0 0.0
        %3648 = vmatpush.xpose.msra.mxu0 0.0
        %3649 = vmatpush.xpose.msra.mxu0 0.0
        %3650 = vmatpush.xpose.msra.mxu0 0.0
        %3651 = vmatpush.xpose.msra.mxu0 0.0
        %3652 = vmatpush.xpose.msra.mxu0 0.0
        %3653 = vmatpush.xpose.msra.mxu0 0.0
        %3654 = vmatpush.xpose.msra.mxu0 0.0
        %3655 = vmatpush.xpose.msra.mxu0 0.0
        %3656 = vmatpush.xpose.msra.mxu0 0.0
        %3657 = vmatpush.xpose.msra.mxu0 0.0
        %3658 = vmatpush.xpose.msra.mxu0 0.0
        %3659 = vmatpush.xpose.msra.mxu0 0.0
        %v3660 = vand.u32 %v345, 4294901760
        %3661 = vmatpush.xpose.msra.mxu0 %v3660
        %v3662 = vand.u32 %v342, 4294901760
        %3663 = vmatpush.xpose.msra.mxu0 %v3662
        %v3664 = vand.u32 %v3478, 4294901760
        %3665 = vmatmul.f32.gmra.mxu0 %v3664
        %v3666 = vpop.f32.mrf.mxu0
        %v3667 = vadd.f32 %v3640, %v3666
        %v3668 = vand.u32 %v3481, 4294901760
        %3669 = vmatmul.f32.gmra.mxu0 %v3668
        %v3670 = vpop.f32.mrf.mxu0
        %v3671 = vadd.f32 %v3644, %v3670
        %3672 = vdwg.mxu0
        %v3674 = vsel %vm334, %v324, 0
        %v3677 = vsel %vm334, %v325, 0
        %3679 = vmatpush.xpose.msra.mxu0 0.0
        %3680 = vmatpush.xpose.msra.mxu0 0.0
        %3681 = vmatpush.xpose.msra.mxu0 0.0
        %3682 = vmatpush.xpose.msra.mxu0 0.0
        %3683 = vmatpush.xpose.msra.mxu0 0.0
        %3684 = vmatpush.xpose.msra.mxu0 0.0
        %3685 = vmatpush.xpose.msra.mxu0 0.0
        %3686 = vmatpush.xpose.msra.mxu0 0.0
        %3687 = vmatpush.xpose.msra.mxu0 0.0
        %3688 = vmatpush.xpose.msra.mxu0 0.0
        %3689 = vmatpush.xpose.msra.mxu0 0.0
        %3690 = vmatpush.xpose.msra.mxu0 0.0
        %3691 = vmatpush.xpose.msra.mxu0 0.0
        %3692 = vmatpush.xpose.msra.mxu0 0.0
        %v3693 = vand.u32 %v345, 4294901760
        %3694 = vmatpush.xpose.msra.mxu0 %v3693
        %v3695 = vand.u32 %v342, 4294901760
        %3696 = vmatpush.xpose.msra.mxu0 %v3695
        %v3697 = vand.u32 %v3674, 4294901760
        %v3698 = vsub.f32 %v3674, %v3697
        %v3699 = vand.u32 %v3698, 4294901760
        %v3700 = vsub.f32 %v3698, %v3699
        %v3701 = vand.u32 %v3700, 4294901760
        %3702 = vmatmul.f32.gmra.mxu0 %v3701
        %v3703 = vpop.f32.mrf.mxu0
        %v3704 = vadd.f32 0.0, %v3703
        %v3705 = vand.u32 %v3677, 4294901760
        %v3706 = vsub.f32 %v3677, %v3705
        %v3707 = vand.u32 %v3706, 4294901760
        %v3708 = vsub.f32 %v3706, %v3707
        %v3709 = vand.u32 %v3708, 4294901760
        %3710 = vmatmul.f32.gmra.mxu0 %v3709
        %v3711 = vpop.f32.mrf.mxu0
        %v3712 = vadd.f32 0.0, %v3711
        %3713 = vdwg.mxu0
        %3714 = vmatpush.xpose.msra.mxu0 0.0
        %3715 = vmatpush.xpose.msra.mxu0 0.0
        %3716 = vmatpush.xpose.msra.mxu0 0.0
        %3717 = vmatpush.xpose.msra.mxu0 0.0
        %3718 = vmatpush.xpose.msra.mxu0 0.0
        %3719 = vmatpush.xpose.msra.mxu0 0.0
        %3720 = vmatpush.xpose.msra.mxu0 0.0
        %3721 = vmatpush.xpose.msra.mxu0 0.0
        %3722 = vmatpush.xpose.msra.mxu0 0.0
        %3723 = vmatpush.xpose.msra.mxu0 0.0
        %3724 = vmatpush.xpose.msra.mxu0 0.0
        %3725 = vmatpush.xpose.msra.mxu0 0.0
        %3726 = vmatpush.xpose.msra.mxu0 0.0
        %3727 = vmatpush.xpose.msra.mxu0 0.0
        %v3728 = vand.u32 %v345, 4294901760
        %v3729 = vsub.f32 %v345, %v3728
        %v3730 = vand.u32 %v3729, 4294901760
        %v3731 = vsub.f32 %v3729, %v3730
        %v3732 = vand.u32 %v3731, 4294901760
        %3733 = vmatpush.xpose.msra.mxu0 %v3732
        %v3734 = vand.u32 %v342, 4294901760
        %v3735 = vsub.f32 %v342, %v3734
        %v3736 = vand.u32 %v3735, 4294901760
        %v3737 = vsub.f32 %v3735, %v3736
        %v3738 = vand.u32 %v3737, 4294901760
        %3739 = vmatpush.xpose.msra.mxu0 %v3738
        %v3740 = vand.u32 %v3674, 4294901760
        %3741 = vmatmul.f32.gmra.mxu0 %v3740
        %v3742 = vpop.f32.mrf.mxu0
        %v3743 = vadd.f32 %v3704, %v3742
        %v3744 = vand.u32 %v3677, 4294901760
        %3745 = vmatmul.f32.gmra.mxu0 %v3744
        %v3746 = vpop.f32.mrf.mxu0
        %v3747 = vadd.f32 %v3712, %v3746
        %3748 = vdwg.mxu0
        %3749 = vmatpush.xpose.msra.mxu0 0.0
        %3750 = vmatpush.xpose.msra.mxu0 0.0
        %3751 = vmatpush.xpose.msra.mxu0 0.0
        %3752 = vmatpush.xpose.msra.mxu0 0.0
        %3753 = vmatpush.xpose.msra.mxu0 0.0
        %3754 = vmatpush.xpose.msra.mxu0 0.0
        %3755 = vmatpush.xpose.msra.mxu0 0.0
        %3756 = vmatpush.xpose.msra.mxu0 0.0
        %3757 = vmatpush.xpose.msra.mxu0 0.0
        %3758 = vmatpush.xpose.msra.mxu0 0.0
        %3759 = vmatpush.xpose.msra.mxu0 0.0
        %3760 = vmatpush.xpose.msra.mxu0 0.0
        %3761 = vmatpush.xpose.msra.mxu0 0.0
        %3762 = vmatpush.xpose.msra.mxu0 0.0
        %v3763 = vand.u32 %v345, 4294901760
        %v3764 = vsub.f32 %v345, %v3763
        %3765 = vmatpush.xpose.msra.mxu0 %v3764
        %v3766 = vand.u32 %v342, 4294901760
        %v3767 = vsub.f32 %v342, %v3766
        %3768 = vmatpush.xpose.msra.mxu0 %v3767
        %v3769 = vand.u32 %v3674, 4294901760
        %v3770 = vsub.f32 %v3674, %v3769
        %3771 = vmatmul.f32.gmra.mxu0 %v3770
        %v3772 = vpop.f32.mrf.mxu0
        %v3773 = vadd.f32 %v3743, %v3772
        %v3774 = vand.u32 %v3677, 4294901760
        %v3775 = vsub.f32 %v3677, %v3774
        %3776 = vmatmul.f32.gmra.mxu0 %v3775
        %v3777 = vpop.f32.mrf.mxu0
        %v3778 = vadd.f32 %v3747, %v3777
        %3779 = vdwg.mxu0
        %3780 = vmatpush.xpose.msra.mxu0 0.0
        %3781 = vmatpush.xpose.msra.mxu0 0.0
        %3782 = vmatpush.xpose.msra.mxu0 0.0
        %3783 = vmatpush.xpose.msra.mxu0 0.0
        %3784 = vmatpush.xpose.msra.mxu0 0.0
        %3785 = vmatpush.xpose.msra.mxu0 0.0
        %3786 = vmatpush.xpose.msra.mxu0 0.0
        %3787 = vmatpush.xpose.msra.mxu0 0.0
        %3788 = vmatpush.xpose.msra.mxu0 0.0
        %3789 = vmatpush.xpose.msra.mxu0 0.0
        %3790 = vmatpush.xpose.msra.mxu0 0.0
        %3791 = vmatpush.xpose.msra.mxu0 0.0
        %3792 = vmatpush.xpose.msra.mxu0 0.0
        %3793 = vmatpush.xpose.msra.mxu0 0.0
        %v3794 = vand.u32 %v345, 4294901760
        %3795 = vmatpush.xpose.msra.mxu0 %v3794
        %v3796 = vand.u32 %v342, 4294901760
        %3797 = vmatpush.xpose.msra.mxu0 %v3796
        %v3798 = vand.u32 %v3674, 4294901760
        %v3799 = vsub.f32 %v3674, %v3798
        %v3800 = vand.u32 %v3799, 4294901760
        %3801 = vmatmul.f32.gmra.mxu0 %v3800
        %v3802 = vpop.f32.mrf.mxu0
        %v3803 = vadd.f32 %v3773, %v3802
        %v3804 = vand.u32 %v3677, 4294901760
        %v3805 = vsub.f32 %v3677, %v3804
        %v3806 = vand.u32 %v3805, 4294901760
        %3807 = vmatmul.f32.gmra.mxu0 %v3806
        %v3808 = vpop.f32.mrf.mxu0
        %v3809 = vadd.f32 %v3778, %v3808
        %3810 = vdwg.mxu0
        %3811 = vmatpush.xpose.msra.mxu0 0.0
        %3812 = vmatpush.xpose.msra.mxu0 0.0
        %3813 = vmatpush.xpose.msra.mxu0 0.0
        %3814 = vmatpush.xpose.msra.mxu0 0.0
        %3815 = vmatpush.xpose.msra.mxu0 0.0
        %3816 = vmatpush.xpose.msra.mxu0 0.0
        %3817 = vmatpush.xpose.msra.mxu0 0.0
        %3818 = vmatpush.xpose.msra.mxu0 0.0
        %3819 = vmatpush.xpose.msra.mxu0 0.0
        %3820 = vmatpush.xpose.msra.mxu0 0.0
        %3821 = vmatpush.xpose.msra.mxu0 0.0
        %3822 = vmatpush.xpose.msra.mxu0 0.0
        %3823 = vmatpush.xpose.msra.mxu0 0.0
        %3824 = vmatpush.xpose.msra.mxu0 0.0
        %v3825 = vand.u32 %v345, 4294901760
        %v3826 = vsub.f32 %v345, %v3825
        %v3827 = vand.u32 %v3826, 4294901760
        %3828 = vmatpush.xpose.msra.mxu0 %v3827
        %v3829 = vand.u32 %v342, 4294901760
        %v3830 = vsub.f32 %v342, %v3829
        %v3831 = vand.u32 %v3830, 4294901760
        %3832 = vmatpush.xpose.msra.mxu0 %v3831
        %v3833 = vand.u32 %v3674, 4294901760
        %3834 = vmatmul.f32.gmra.mxu0 %v3833
        %v3835 = vpop.f32.mrf.mxu0
        %v3836 = vadd.f32 %v3803, %v3835
        %v3837 = vand.u32 %v3677, 4294901760
        %3838 = vmatmul.f32.gmra.mxu0 %v3837
        %v3839 = vpop.f32.mrf.mxu0
        %v3840 = vadd.f32 %v3809, %v3839
        %3841 = vdwg.mxu0
        %3842 = vmatpush.xpose.msra.mxu0 0.0
        %3843 = vmatpush.xpose.msra.mxu0 0.0
        %3844 = vmatpush.xpose.msra.mxu0 0.0
        %3845 = vmatpush.xpose.msra.mxu0 0.0
        %3846 = vmatpush.xpose.msra.mxu0 0.0
        %3847 = vmatpush.xpose.msra.mxu0 0.0
        %3848 = vmatpush.xpose.msra.mxu0 0.0
        %3849 = vmatpush.xpose.msra.mxu0 0.0
        %3850 = vmatpush.xpose.msra.mxu0 0.0
        %3851 = vmatpush.xpose.msra.mxu0 0.0
        %3852 = vmatpush.xpose.msra.mxu0 0.0
        %3853 = vmatpush.xpose.msra.mxu0 0.0
        %3854 = vmatpush.xpose.msra.mxu0 0.0
        %3855 = vmatpush.xpose.msra.mxu0 0.0
        %v3856 = vand.u32 %v345, 4294901760
        %3857 = vmatpush.xpose.msra.mxu0 %v3856
        %v3858 = vand.u32 %v342, 4294901760
        %3859 = vmatpush.xpose.msra.mxu0 %v3858
        %v3860 = vand.u32 %v3674, 4294901760
        %3861 = vmatmul.f32.gmra.mxu0 %v3860
        %v3862 = vpop.f32.mrf.mxu0
        %v3863 = vadd.f32 %v3836, %v3862
        %v3864 = vand.u32 %v3677, 4294901760
        %3865 = vmatmul.f32.gmra.mxu0 %v3864
        %v3866 = vpop.f32.mrf.mxu0
        %v3867 = vadd.f32 %v3840, %v3866
        %3868 = vdwg.mxu0
        %v3870 = vsel %vm334, %v326, 0
        %v3873 = vsel %vm334, %v327, 0
        %3875 = vmatpush.xpose.msra.mxu0 0.0
        %3876 = vmatpush.xpose.msra.mxu0 0.0
        %3877 = vmatpush.xpose.msra.mxu0 0.0
        %3878 = vmatpush.xpose.msra.mxu0 0.0
        %3879 = vmatpush.xpose.msra.mxu0 0.0
        %3880 = vmatpush.xpose.msra.mxu0 0.0
        %3881 = vmatpush.xpose.msra.mxu0 0.0
        %3882 = vmatpush.xpose.msra.mxu0 0.0
        %3883 = vmatpush.xpose.msra.mxu0 0.0
        %3884 = vmatpush.xpose.msra.mxu0 0.0
        %3885 = vmatpush.xpose.msra.mxu0 0.0
        %3886 = vmatpush.xpose.msra.mxu0 0.0
        %3887 = vmatpush.xpose.msra.mxu0 0.0
        %3888 = vmatpush.xpose.msra.mxu0 0.0
        %v3889 = vand.u32 %v345, 4294901760
        %3890 = vmatpush.xpose.msra.mxu0 %v3889
        %v3891 = vand.u32 %v342, 4294901760
        %3892 = vmatpush.xpose.msra.mxu0 %v3891
        %v3893 = vand.u32 %v3870, 4294901760
        %v3894 = vsub.f32 %v3870, %v3893
        %v3895 = vand.u32 %v3894, 4294901760
        %v3896 = vsub.f32 %v3894, %v3895
        %v3897 = vand.u32 %v3896, 4294901760
        %3898 = vmatmul.f32.gmra.mxu0 %v3897
        %v3899 = vpop.f32.mrf.mxu0
        %v3900 = vadd.f32 0.0, %v3899
        %v3901 = vand.u32 %v3873, 4294901760
        %v3902 = vsub.f32 %v3873, %v3901
        %v3903 = vand.u32 %v3902, 4294901760
        %v3904 = vsub.f32 %v3902, %v3903
        %v3905 = vand.u32 %v3904, 4294901760
        %3906 = vmatmul.f32.gmra.mxu0 %v3905
        %v3907 = vpop.f32.mrf.mxu0
        %v3908 = vadd.f32 0.0, %v3907
        %3909 = vdwg.mxu0
        %3910 = vmatpush.xpose.msra.mxu0 0.0
        %3911 = vmatpush.xpose.msra.mxu0 0.0
        %3912 = vmatpush.xpose.msra.mxu0 0.0
        %3913 = vmatpush.xpose.msra.mxu0 0.0
        %3914 = vmatpush.xpose.msra.mxu0 0.0
        %3915 = vmatpush.xpose.msra.mxu0 0.0
        %3916 = vmatpush.xpose.msra.mxu0 0.0
        %3917 = vmatpush.xpose.msra.mxu0 0.0
        %3918 = vmatpush.xpose.msra.mxu0 0.0
        %3919 = vmatpush.xpose.msra.mxu0 0.0
        %3920 = vmatpush.xpose.msra.mxu0 0.0
        %3921 = vmatpush.xpose.msra.mxu0 0.0
        %3922 = vmatpush.xpose.msra.mxu0 0.0
        %3923 = vmatpush.xpose.msra.mxu0 0.0
        %v3924 = vand.u32 %v345, 4294901760
        %v3925 = vsub.f32 %v345, %v3924
        %v3926 = vand.u32 %v3925, 4294901760
        %v3927 = vsub.f32 %v3925, %v3926
        %v3928 = vand.u32 %v3927, 4294901760
        %3929 = vmatpush.xpose.msra.mxu0 %v3928
        %v3930 = vand.u32 %v342, 4294901760
        %v3931 = vsub.f32 %v342, %v3930
        %v3932 = vand.u32 %v3931, 4294901760
        %v3933 = vsub.f32 %v3931, %v3932
        %v3934 = vand.u32 %v3933, 4294901760
        %3935 = vmatpush.xpose.msra.mxu0 %v3934
        %v3936 = vand.u32 %v3870, 4294901760
        %3937 = vmatmul.f32.gmra.mxu0 %v3936
        %v3938 = vpop.f32.mrf.mxu0
        %v3939 = vadd.f32 %v3900, %v3938
        %v3940 = vand.u32 %v3873, 4294901760
        %3941 = vmatmul.f32.gmra.mxu0 %v3940
        %v3942 = vpop.f32.mrf.mxu0
        %v3943 = vadd.f32 %v3908, %v3942
        %3944 = vdwg.mxu0
        %3945 = vmatpush.xpose.msra.mxu0 0.0
        %3946 = vmatpush.xpose.msra.mxu0 0.0
        %3947 = vmatpush.xpose.msra.mxu0 0.0
        %3948 = vmatpush.xpose.msra.mxu0 0.0
        %3949 = vmatpush.xpose.msra.mxu0 0.0
        %3950 = vmatpush.xpose.msra.mxu0 0.0
        %3951 = vmatpush.xpose.msra.mxu0 0.0
        %3952 = vmatpush.xpose.msra.mxu0 0.0
        %3953 = vmatpush.xpose.msra.mxu0 0.0
        %3954 = vmatpush.xpose.msra.mxu0 0.0
        %3955 = vmatpush.xpose.msra.mxu0 0.0
        %3956 = vmatpush.xpose.msra.mxu0 0.0
        %3957 = vmatpush.xpose.msra.mxu0 0.0
        %3958 = vmatpush.xpose.msra.mxu0 0.0
        %v3959 = vand.u32 %v345, 4294901760
        %v3960 = vsub.f32 %v345, %v3959
        %3961 = vmatpush.xpose.msra.mxu0 %v3960
        %v3962 = vand.u32 %v342, 4294901760
        %v3963 = vsub.f32 %v342, %v3962
        %3964 = vmatpush.xpose.msra.mxu0 %v3963
        %v3965 = vand.u32 %v3870, 4294901760
        %v3966 = vsub.f32 %v3870, %v3965
        %3967 = vmatmul.f32.gmra.mxu0 %v3966
        %v3968 = vpop.f32.mrf.mxu0
        %v3969 = vadd.f32 %v3939, %v3968
        %v3970 = vand.u32 %v3873, 4294901760
        %v3971 = vsub.f32 %v3873, %v3970
        %3972 = vmatmul.f32.gmra.mxu0 %v3971
        %v3973 = vpop.f32.mrf.mxu0
        %v3974 = vadd.f32 %v3943, %v3973
        %3975 = vdwg.mxu0
        %3976 = vmatpush.xpose.msra.mxu0 0.0
        %3977 = vmatpush.xpose.msra.mxu0 0.0
        %3978 = vmatpush.xpose.msra.mxu0 0.0
        %3979 = vmatpush.xpose.msra.mxu0 0.0
        %3980 = vmatpush.xpose.msra.mxu0 0.0
        %3981 = vmatpush.xpose.msra.mxu0 0.0
        %3982 = vmatpush.xpose.msra.mxu0 0.0
        %3983 = vmatpush.xpose.msra.mxu0 0.0
        %3984 = vmatpush.xpose.msra.mxu0 0.0
        %3985 = vmatpush.xpose.msra.mxu0 0.0
        %3986 = vmatpush.xpose.msra.mxu0 0.0
        %3987 = vmatpush.xpose.msra.mxu0 0.0
        %3988 = vmatpush.xpose.msra.mxu0 0.0
        %3989 = vmatpush.xpose.msra.mxu0 0.0
        %v3990 = vand.u32 %v345, 4294901760
        %3991 = vmatpush.xpose.msra.mxu0 %v3990
        %v3992 = vand.u32 %v342, 4294901760
        %3993 = vmatpush.xpose.msra.mxu0 %v3992
        %v3994 = vand.u32 %v3870, 4294901760
        %v3995 = vsub.f32 %v3870, %v3994
        %v3996 = vand.u32 %v3995, 4294901760
        %3997 = vmatmul.f32.gmra.mxu0 %v3996
        %v3998 = vpop.f32.mrf.mxu0
        %v3999 = vadd.f32 %v3969, %v3998
        %v4000 = vand.u32 %v3873, 4294901760
        %v4001 = vsub.f32 %v3873, %v4000
        %v4002 = vand.u32 %v4001, 4294901760
        %4003 = vmatmul.f32.gmra.mxu0 %v4002
        %v4004 = vpop.f32.mrf.mxu0
        %v4005 = vadd.f32 %v3974, %v4004
        %4006 = vdwg.mxu0
        %4007 = vmatpush.xpose.msra.mxu0 0.0
        %4008 = vmatpush.xpose.msra.mxu0 0.0
        %4009 = vmatpush.xpose.msra.mxu0 0.0
        %4010 = vmatpush.xpose.msra.mxu0 0.0
        %4011 = vmatpush.xpose.msra.mxu0 0.0
        %4012 = vmatpush.xpose.msra.mxu0 0.0
        %4013 = vmatpush.xpose.msra.mxu0 0.0
        %4014 = vmatpush.xpose.msra.mxu0 0.0
        %4015 = vmatpush.xpose.msra.mxu0 0.0
        %4016 = vmatpush.xpose.msra.mxu0 0.0
        %4017 = vmatpush.xpose.msra.mxu0 0.0
        %4018 = vmatpush.xpose.msra.mxu0 0.0
        %4019 = vmatpush.xpose.msra.mxu0 0.0
        %4020 = vmatpush.xpose.msra.mxu0 0.0
        %v4021 = vand.u32 %v345, 4294901760
        %v4022 = vsub.f32 %v345, %v4021
        %v4023 = vand.u32 %v4022, 4294901760
        %4024 = vmatpush.xpose.msra.mxu0 %v4023
        %v4025 = vand.u32 %v342, 4294901760
        %v4026 = vsub.f32 %v342, %v4025
        %v4027 = vand.u32 %v4026, 4294901760
        %4028 = vmatpush.xpose.msra.mxu0 %v4027
        %v4029 = vand.u32 %v3870, 4294901760
        %4030 = vmatmul.f32.gmra.mxu0 %v4029
        %v4031 = vpop.f32.mrf.mxu0
        %v4032 = vadd.f32 %v3999, %v4031
        %v4033 = vand.u32 %v3873, 4294901760
        %4034 = vmatmul.f32.gmra.mxu0 %v4033
        %v4035 = vpop.f32.mrf.mxu0
        %v4036 = vadd.f32 %v4005, %v4035
        %4037 = vdwg.mxu0
        %4038 = vmatpush.xpose.msra.mxu0 0.0
        %4039 = vmatpush.xpose.msra.mxu0 0.0
        %4040 = vmatpush.xpose.msra.mxu0 0.0
        %4041 = vmatpush.xpose.msra.mxu0 0.0
        %4042 = vmatpush.xpose.msra.mxu0 0.0
        %4043 = vmatpush.xpose.msra.mxu0 0.0
        %4044 = vmatpush.xpose.msra.mxu0 0.0
        %4045 = vmatpush.xpose.msra.mxu0 0.0
        %4046 = vmatpush.xpose.msra.mxu0 0.0
        %4047 = vmatpush.xpose.msra.mxu0 0.0
        %4048 = vmatpush.xpose.msra.mxu0 0.0
        %4049 = vmatpush.xpose.msra.mxu0 0.0
        %4050 = vmatpush.xpose.msra.mxu0 0.0
        %4051 = vmatpush.xpose.msra.mxu0 0.0
        %v4052 = vand.u32 %v345, 4294901760
        %4053 = vmatpush.xpose.msra.mxu0 %v4052
        %v4054 = vand.u32 %v342, 4294901760
        %4055 = vmatpush.xpose.msra.mxu0 %v4054
        %v4056 = vand.u32 %v3870, 4294901760
        %4057 = vmatmul.f32.gmra.mxu0 %v4056
        %v4058 = vpop.f32.mrf.mxu0
        %v4059 = vadd.f32 %v4032, %v4058
        %v4060 = vand.u32 %v3873, 4294901760
        %4061 = vmatmul.f32.gmra.mxu0 %v4060
        %v4062 = vpop.f32.mrf.mxu0
        %v4063 = vadd.f32 %v4036, %v4062
        %4064 = vdwg.mxu0
        %v4066 = vsel %vm334, %v328, 0
        %v4069 = vsel %vm334, %v329, 0
        %4071 = vmatpush.xpose.msra.mxu0 0.0
        %4072 = vmatpush.xpose.msra.mxu0 0.0
        %4073 = vmatpush.xpose.msra.mxu0 0.0
        %4074 = vmatpush.xpose.msra.mxu0 0.0
        %4075 = vmatpush.xpose.msra.mxu0 0.0
        %4076 = vmatpush.xpose.msra.mxu0 0.0
        %4077 = vmatpush.xpose.msra.mxu0 0.0
        %4078 = vmatpush.xpose.msra.mxu0 0.0
        %4079 = vmatpush.xpose.msra.mxu0 0.0
        %4080 = vmatpush.xpose.msra.mxu0 0.0
        %4081 = vmatpush.xpose.msra.mxu0 0.0
        %4082 = vmatpush.xpose.msra.mxu0 0.0
        %4083 = vmatpush.xpose.msra.mxu0 0.0
        %4084 = vmatpush.xpose.msra.mxu0 0.0
        %v4085 = vand.u32 %v345, 4294901760
        %4086 = vmatpush.xpose.msra.mxu0 %v4085
        %v4087 = vand.u32 %v342, 4294901760
        %4088 = vmatpush.xpose.msra.mxu0 %v4087
        %v4089 = vand.u32 %v4066, 4294901760
        %v4090 = vsub.f32 %v4066, %v4089
        %v4091 = vand.u32 %v4090, 4294901760
        %v4092 = vsub.f32 %v4090, %v4091
        %v4093 = vand.u32 %v4092, 4294901760
        %4094 = vmatmul.f32.gmra.mxu0 %v4093
        %v4095 = vpop.f32.mrf.mxu0
        %v4096 = vadd.f32 0.0, %v4095
        %v4097 = vand.u32 %v4069, 4294901760
        %v4098 = vsub.f32 %v4069, %v4097
        %v4099 = vand.u32 %v4098, 4294901760
        %v4100 = vsub.f32 %v4098, %v4099
        %v4101 = vand.u32 %v4100, 4294901760
        %4102 = vmatmul.f32.gmra.mxu0 %v4101
        %v4103 = vpop.f32.mrf.mxu0
        %v4104 = vadd.f32 0.0, %v4103
        %4105 = vdwg.mxu0
        %4106 = vmatpush.xpose.msra.mxu0 0.0
        %4107 = vmatpush.xpose.msra.mxu0 0.0
        %4108 = vmatpush.xpose.msra.mxu0 0.0
        %4109 = vmatpush.xpose.msra.mxu0 0.0
        %4110 = vmatpush.xpose.msra.mxu0 0.0
        %4111 = vmatpush.xpose.msra.mxu0 0.0
        %4112 = vmatpush.xpose.msra.mxu0 0.0
        %4113 = vmatpush.xpose.msra.mxu0 0.0
        %4114 = vmatpush.xpose.msra.mxu0 0.0
        %4115 = vmatpush.xpose.msra.mxu0 0.0
        %4116 = vmatpush.xpose.msra.mxu0 0.0
        %4117 = vmatpush.xpose.msra.mxu0 0.0
        %4118 = vmatpush.xpose.msra.mxu0 0.0
        %4119 = vmatpush.xpose.msra.mxu0 0.0
        %v4120 = vand.u32 %v345, 4294901760
        %v4121 = vsub.f32 %v345, %v4120
        %v4122 = vand.u32 %v4121, 4294901760
        %v4123 = vsub.f32 %v4121, %v4122
        %v4124 = vand.u32 %v4123, 4294901760
        %4125 = vmatpush.xpose.msra.mxu0 %v4124
        %v4126 = vand.u32 %v342, 4294901760
        %v4127 = vsub.f32 %v342, %v4126
        %v4128 = vand.u32 %v4127, 4294901760
        %v4129 = vsub.f32 %v4127, %v4128
        %v4130 = vand.u32 %v4129, 4294901760
        %4131 = vmatpush.xpose.msra.mxu0 %v4130
        %v4132 = vand.u32 %v4066, 4294901760
        %4133 = vmatmul.f32.gmra.mxu0 %v4132
        %v4134 = vpop.f32.mrf.mxu0
        %v4135 = vadd.f32 %v4096, %v4134
        %v4136 = vand.u32 %v4069, 4294901760
        %4137 = vmatmul.f32.gmra.mxu0 %v4136
        %v4138 = vpop.f32.mrf.mxu0
        %v4139 = vadd.f32 %v4104, %v4138
        %4140 = vdwg.mxu0
        %4141 = vmatpush.xpose.msra.mxu0 0.0
        %4142 = vmatpush.xpose.msra.mxu0 0.0
        %4143 = vmatpush.xpose.msra.mxu0 0.0
        %4144 = vmatpush.xpose.msra.mxu0 0.0
        %4145 = vmatpush.xpose.msra.mxu0 0.0
        %4146 = vmatpush.xpose.msra.mxu0 0.0
        %4147 = vmatpush.xpose.msra.mxu0 0.0
        %4148 = vmatpush.xpose.msra.mxu0 0.0
        %4149 = vmatpush.xpose.msra.mxu0 0.0
        %4150 = vmatpush.xpose.msra.mxu0 0.0
        %4151 = vmatpush.xpose.msra.mxu0 0.0
        %4152 = vmatpush.xpose.msra.mxu0 0.0
        %4153 = vmatpush.xpose.msra.mxu0 0.0
        %4154 = vmatpush.xpose.msra.mxu0 0.0
        %v4155 = vand.u32 %v345, 4294901760
        %v4156 = vsub.f32 %v345, %v4155
        %4157 = vmatpush.xpose.msra.mxu0 %v4156
        %v4158 = vand.u32 %v342, 4294901760
        %v4159 = vsub.f32 %v342, %v4158
        %4160 = vmatpush.xpose.msra.mxu0 %v4159
        %v4161 = vand.u32 %v4066, 4294901760
        %v4162 = vsub.f32 %v4066, %v4161
        %4163 = vmatmul.f32.gmra.mxu0 %v4162
        %v4164 = vpop.f32.mrf.mxu0
        %v4165 = vadd.f32 %v4135, %v4164
        %v4166 = vand.u32 %v4069, 4294901760
        %v4167 = vsub.f32 %v4069, %v4166
        %4168 = vmatmul.f32.gmra.mxu0 %v4167
        %v4169 = vpop.f32.mrf.mxu0
        %v4170 = vadd.f32 %v4139, %v4169
        %4171 = vdwg.mxu0
        %4172 = vmatpush.xpose.msra.mxu0 0.0
        %4173 = vmatpush.xpose.msra.mxu0 0.0
        %4174 = vmatpush.xpose.msra.mxu0 0.0
        %4175 = vmatpush.xpose.msra.mxu0 0.0
        %4176 = vmatpush.xpose.msra.mxu0 0.0
        %4177 = vmatpush.xpose.msra.mxu0 0.0
        %4178 = vmatpush.xpose.msra.mxu0 0.0
        %4179 = vmatpush.xpose.msra.mxu0 0.0
        %4180 = vmatpush.xpose.msra.mxu0 0.0
        %4181 = vmatpush.xpose.msra.mxu0 0.0
        %4182 = vmatpush.xpose.msra.mxu0 0.0
        %4183 = vmatpush.xpose.msra.mxu0 0.0
        %4184 = vmatpush.xpose.msra.mxu0 0.0
        %4185 = vmatpush.xpose.msra.mxu0 0.0
        %v4186 = vand.u32 %v345, 4294901760
        %4187 = vmatpush.xpose.msra.mxu0 %v4186
        %v4188 = vand.u32 %v342, 4294901760
        %4189 = vmatpush.xpose.msra.mxu0 %v4188
        %v4190 = vand.u32 %v4066, 4294901760
        %v4191 = vsub.f32 %v4066, %v4190
        %v4192 = vand.u32 %v4191, 4294901760
        %4193 = vmatmul.f32.gmra.mxu0 %v4192
        %v4194 = vpop.f32.mrf.mxu0
        %v4195 = vadd.f32 %v4165, %v4194
        %v4196 = vand.u32 %v4069, 4294901760
        %v4197 = vsub.f32 %v4069, %v4196
        %v4198 = vand.u32 %v4197, 4294901760
        %4199 = vmatmul.f32.gmra.mxu0 %v4198
        %v4200 = vpop.f32.mrf.mxu0
        %v4201 = vadd.f32 %v4170, %v4200
        %4202 = vdwg.mxu0
        %4203 = vmatpush.xpose.msra.mxu0 0.0
        %4204 = vmatpush.xpose.msra.mxu0 0.0
        %4205 = vmatpush.xpose.msra.mxu0 0.0
        %4206 = vmatpush.xpose.msra.mxu0 0.0
        %4207 = vmatpush.xpose.msra.mxu0 0.0
        %4208 = vmatpush.xpose.msra.mxu0 0.0
        %4209 = vmatpush.xpose.msra.mxu0 0.0
        %4210 = vmatpush.xpose.msra.mxu0 0.0
        %4211 = vmatpush.xpose.msra.mxu0 0.0
        %4212 = vmatpush.xpose.msra.mxu0 0.0
        %4213 = vmatpush.xpose.msra.mxu0 0.0
        %4214 = vmatpush.xpose.msra.mxu0 0.0
        %4215 = vmatpush.xpose.msra.mxu0 0.0
        %4216 = vmatpush.xpose.msra.mxu0 0.0
        %v4217 = vand.u32 %v345, 4294901760
        %v4218 = vsub.f32 %v345, %v4217
        %v4219 = vand.u32 %v4218, 4294901760
        %4220 = vmatpush.xpose.msra.mxu0 %v4219
        %v4221 = vand.u32 %v342, 4294901760
        %v4222 = vsub.f32 %v342, %v4221
        %v4223 = vand.u32 %v4222, 4294901760
        %4224 = vmatpush.xpose.msra.mxu0 %v4223
        %v4225 = vand.u32 %v4066, 4294901760
        %4226 = vmatmul.f32.gmra.mxu0 %v4225
        %v4227 = vpop.f32.mrf.mxu0
        %v4228 = vadd.f32 %v4195, %v4227
        %v4229 = vand.u32 %v4069, 4294901760
        %4230 = vmatmul.f32.gmra.mxu0 %v4229
        %v4231 = vpop.f32.mrf.mxu0
        %v4232 = vadd.f32 %v4201, %v4231
        %4233 = vdwg.mxu0
        %4234 = vmatpush.xpose.msra.mxu0 0.0
        %4235 = vmatpush.xpose.msra.mxu0 0.0
        %4236 = vmatpush.xpose.msra.mxu0 0.0
        %4237 = vmatpush.xpose.msra.mxu0 0.0
        %4238 = vmatpush.xpose.msra.mxu0 0.0
        %4239 = vmatpush.xpose.msra.mxu0 0.0
        %4240 = vmatpush.xpose.msra.mxu0 0.0
        %4241 = vmatpush.xpose.msra.mxu0 0.0
        %4242 = vmatpush.xpose.msra.mxu0 0.0
        %4243 = vmatpush.xpose.msra.mxu0 0.0
        %4244 = vmatpush.xpose.msra.mxu0 0.0
        %4245 = vmatpush.xpose.msra.mxu0 0.0
        %4246 = vmatpush.xpose.msra.mxu0 0.0
        %4247 = vmatpush.xpose.msra.mxu0 0.0
        %v4248 = vand.u32 %v345, 4294901760
        %4249 = vmatpush.xpose.msra.mxu0 %v4248
        %v4250 = vand.u32 %v342, 4294901760
        %4251 = vmatpush.xpose.msra.mxu0 %v4250
        %v4252 = vand.u32 %v4066, 4294901760
        %4253 = vmatmul.f32.gmra.mxu0 %v4252
        %v4254 = vpop.f32.mrf.mxu0
        %v4255 = vadd.f32 %v4228, %v4254
        %v4256 = vand.u32 %v4069, 4294901760
        %4257 = vmatmul.f32.gmra.mxu0 %v4256
        %v4258 = vpop.f32.mrf.mxu0
        %v4259 = vadd.f32 %v4232, %v4258
        %4260 = vdwg.mxu0
        %v4262 = vsel %vm334, %v332, 0
        %v4265 = vsel %vm334, %v333, 0
        %4267 = vmatpush.msra.mxu0 0.0
        %4268 = vmatpush.msra.mxu0 0.0
        %4269 = vmatpush.msra.mxu0 0.0
        %4270 = vmatpush.msra.mxu0 0.0
        %4271 = vmatpush.msra.mxu0 0.0
        %4272 = vmatpush.msra.mxu0 0.0
        %4273 = vmatpush.msra.mxu0 0.0
        %4274 = vmatpush.msra.mxu0 0.0
        %4275 = vmatpush.msra.mxu0 0.0
        %4276 = vmatpush.msra.mxu0 0.0
        %4277 = vmatpush.msra.mxu0 0.0
        %4278 = vmatpush.msra.mxu0 0.0
        %4279 = vmatpush.msra.mxu0 0.0
        %4280 = vmatpush.msra.mxu0 0.0
        %v4281 = vand.u32 %v535, 4294901760
        %4282 = vmatpush.msra.mxu0 %v4281
        %v4283 = vand.u32 %v531, 4294901760
        %4284 = vmatpush.msra.mxu0 %v4283
        %v4285 = vand.u32 %v4262, 4294901760
        %v4286 = vsub.f32 %v4262, %v4285
        %v4287 = vand.u32 %v4286, 4294901760
        %v4288 = vsub.f32 %v4286, %v4287
        %v4289 = vand.u32 %v4288, 4294901760
        %4290 = vmatmul.f32.gmra.mxu0 %v4289
        %v4291 = vpop.f32.mrf.mxu0
        %v4292 = vadd.f32 0.0, %v4291
        %v4293 = vand.u32 %v4265, 4294901760
        %v4294 = vsub.f32 %v4265, %v4293
        %v4295 = vand.u32 %v4294, 4294901760
        %v4296 = vsub.f32 %v4294, %v4295
        %v4297 = vand.u32 %v4296, 4294901760
        %4298 = vmatmul.f32.gmra.mxu0 %v4297
        %v4299 = vpop.f32.mrf.mxu0
        %v4300 = vadd.f32 0.0, %v4299
        %4301 = vdwg.mxu0
        %4302 = vmatpush.msra.mxu0 0.0
        %4303 = vmatpush.msra.mxu0 0.0
        %4304 = vmatpush.msra.mxu0 0.0
        %4305 = vmatpush.msra.mxu0 0.0
        %4306 = vmatpush.msra.mxu0 0.0
        %4307 = vmatpush.msra.mxu0 0.0
        %4308 = vmatpush.msra.mxu0 0.0
        %4309 = vmatpush.msra.mxu0 0.0
        %4310 = vmatpush.msra.mxu0 0.0
        %4311 = vmatpush.msra.mxu0 0.0
        %4312 = vmatpush.msra.mxu0 0.0
        %4313 = vmatpush.msra.mxu0 0.0
        %4314 = vmatpush.msra.mxu0 0.0
        %4315 = vmatpush.msra.mxu0 0.0
        %v4316 = vand.u32 %v535, 4294901760
        %v4317 = vsub.f32 %v535, %v4316
        %v4318 = vand.u32 %v4317, 4294901760
        %v4319 = vsub.f32 %v4317, %v4318
        %v4320 = vand.u32 %v4319, 4294901760
        %4321 = vmatpush.msra.mxu0 %v4320
        %v4322 = vand.u32 %v531, 4294901760
        %v4323 = vsub.f32 %v531, %v4322
        %v4324 = vand.u32 %v4323, 4294901760
        %v4325 = vsub.f32 %v4323, %v4324
        %v4326 = vand.u32 %v4325, 4294901760
        %4327 = vmatpush.msra.mxu0 %v4326
        %v4328 = vand.u32 %v4262, 4294901760
        %4329 = vmatmul.f32.gmra.mxu0 %v4328
        %v4330 = vpop.f32.mrf.mxu0
        %v4331 = vadd.f32 %v4292, %v4330
        %v4332 = vand.u32 %v4265, 4294901760
        %4333 = vmatmul.f32.gmra.mxu0 %v4332
        %v4334 = vpop.f32.mrf.mxu0
        %v4335 = vadd.f32 %v4300, %v4334
        %4336 = vdwg.mxu0
        %4337 = vmatpush.msra.mxu0 0.0
        %4338 = vmatpush.msra.mxu0 0.0
        %4339 = vmatpush.msra.mxu0 0.0
        %4340 = vmatpush.msra.mxu0 0.0
        %4341 = vmatpush.msra.mxu0 0.0
        %4342 = vmatpush.msra.mxu0 0.0
        %4343 = vmatpush.msra.mxu0 0.0
        %4344 = vmatpush.msra.mxu0 0.0
        %4345 = vmatpush.msra.mxu0 0.0
        %4346 = vmatpush.msra.mxu0 0.0
        %4347 = vmatpush.msra.mxu0 0.0
        %4348 = vmatpush.msra.mxu0 0.0
        %4349 = vmatpush.msra.mxu0 0.0
        %4350 = vmatpush.msra.mxu0 0.0
        %v4351 = vand.u32 %v535, 4294901760
        %v4352 = vsub.f32 %v535, %v4351
        %4353 = vmatpush.msra.mxu0 %v4352
        %v4354 = vand.u32 %v531, 4294901760
        %v4355 = vsub.f32 %v531, %v4354
        %4356 = vmatpush.msra.mxu0 %v4355
        %v4357 = vand.u32 %v4262, 4294901760
        %v4358 = vsub.f32 %v4262, %v4357
        %4359 = vmatmul.f32.gmra.mxu0 %v4358
        %v4360 = vpop.f32.mrf.mxu0
        %v4361 = vadd.f32 %v4331, %v4360
        %v4362 = vand.u32 %v4265, 4294901760
        %v4363 = vsub.f32 %v4265, %v4362
        %4364 = vmatmul.f32.gmra.mxu0 %v4363
        %v4365 = vpop.f32.mrf.mxu0
        %v4366 = vadd.f32 %v4335, %v4365
        %4367 = vdwg.mxu0
        %4368 = vmatpush.msra.mxu0 0.0
        %4369 = vmatpush.msra.mxu0 0.0
        %4370 = vmatpush.msra.mxu0 0.0
        %4371 = vmatpush.msra.mxu0 0.0
        %4372 = vmatpush.msra.mxu0 0.0
        %4373 = vmatpush.msra.mxu0 0.0
        %4374 = vmatpush.msra.mxu0 0.0
        %4375 = vmatpush.msra.mxu0 0.0
        %4376 = vmatpush.msra.mxu0 0.0
        %4377 = vmatpush.msra.mxu0 0.0
        %4378 = vmatpush.msra.mxu0 0.0
        %4379 = vmatpush.msra.mxu0 0.0
        %4380 = vmatpush.msra.mxu0 0.0
        %4381 = vmatpush.msra.mxu0 0.0
        %v4382 = vand.u32 %v535, 4294901760
        %4383 = vmatpush.msra.mxu0 %v4382
        %v4384 = vand.u32 %v531, 4294901760
        %4385 = vmatpush.msra.mxu0 %v4384
        %v4386 = vand.u32 %v4262, 4294901760
        %v4387 = vsub.f32 %v4262, %v4386
        %v4388 = vand.u32 %v4387, 4294901760
        %4389 = vmatmul.f32.gmra.mxu0 %v4388
        %v4390 = vpop.f32.mrf.mxu0
        %v4391 = vadd.f32 %v4361, %v4390
        %v4392 = vand.u32 %v4265, 4294901760
        %v4393 = vsub.f32 %v4265, %v4392
        %v4394 = vand.u32 %v4393, 4294901760
        %4395 = vmatmul.f32.gmra.mxu0 %v4394
        %v4396 = vpop.f32.mrf.mxu0
        %v4397 = vadd.f32 %v4366, %v4396
        %4398 = vdwg.mxu0
        %4399 = vmatpush.msra.mxu0 0.0
        %4400 = vmatpush.msra.mxu0 0.0
        %4401 = vmatpush.msra.mxu0 0.0
        %4402 = vmatpush.msra.mxu0 0.0
        %4403 = vmatpush.msra.mxu0 0.0
        %4404 = vmatpush.msra.mxu0 0.0
        %4405 = vmatpush.msra.mxu0 0.0
        %4406 = vmatpush.msra.mxu0 0.0
        %4407 = vmatpush.msra.mxu0 0.0
        %4408 = vmatpush.msra.mxu0 0.0
        %4409 = vmatpush.msra.mxu0 0.0
        %4410 = vmatpush.msra.mxu0 0.0
        %4411 = vmatpush.msra.mxu0 0.0
        %4412 = vmatpush.msra.mxu0 0.0
        %v4413 = vand.u32 %v535, 4294901760
        %v4414 = vsub.f32 %v535, %v4413
        %v4415 = vand.u32 %v4414, 4294901760
        %4416 = vmatpush.msra.mxu0 %v4415
        %v4417 = vand.u32 %v531, 4294901760
        %v4418 = vsub.f32 %v531, %v4417
        %v4419 = vand.u32 %v4418, 4294901760
        %4420 = vmatpush.msra.mxu0 %v4419
        %v4421 = vand.u32 %v4262, 4294901760
        %4422 = vmatmul.f32.gmra.mxu0 %v4421
        %v4423 = vpop.f32.mrf.mxu0
        %v4424 = vadd.f32 %v4391, %v4423
        %v4425 = vand.u32 %v4265, 4294901760
        %4426 = vmatmul.f32.gmra.mxu0 %v4425
        %v4427 = vpop.f32.mrf.mxu0
        %v4428 = vadd.f32 %v4397, %v4427
        %4429 = vdwg.mxu0
        %4430 = vmatpush.msra.mxu0 0.0
        %4431 = vmatpush.msra.mxu0 0.0
        %4432 = vmatpush.msra.mxu0 0.0
        %4433 = vmatpush.msra.mxu0 0.0
        %4434 = vmatpush.msra.mxu0 0.0
        %4435 = vmatpush.msra.mxu0 0.0
        %4436 = vmatpush.msra.mxu0 0.0
        %4437 = vmatpush.msra.mxu0 0.0
        %4438 = vmatpush.msra.mxu0 0.0
        %4439 = vmatpush.msra.mxu0 0.0
        %4440 = vmatpush.msra.mxu0 0.0
        %4441 = vmatpush.msra.mxu0 0.0
        %4442 = vmatpush.msra.mxu0 0.0
        %4443 = vmatpush.msra.mxu0 0.0
        %v4444 = vand.u32 %v535, 4294901760
        %4445 = vmatpush.msra.mxu0 %v4444
        %v4446 = vand.u32 %v531, 4294901760
        %4447 = vmatpush.msra.mxu0 %v4446
        %v4448 = vand.u32 %v4262, 4294901760
        %4449 = vmatmul.f32.gmra.mxu0 %v4448
        %v4450 = vpop.f32.mrf.mxu0
        %v4451 = vadd.f32 %v4424, %v4450
        %v4452 = vand.u32 %v4265, 4294901760
        %4453 = vmatmul.f32.gmra.mxu0 %v4452
        %v4454 = vpop.f32.mrf.mxu0
        %v4455 = vadd.f32 %v4428, %v4454
        %4456 = vdwg.mxu0
        %4457 = vmatpush.msra.mxu0 0.0
        %4458 = vmatpush.msra.mxu0 0.0
        %4459 = vmatpush.msra.mxu0 0.0
        %4460 = vmatpush.msra.mxu0 0.0
        %4461 = vmatpush.msra.mxu0 0.0
        %4462 = vmatpush.msra.mxu0 0.0
        %4463 = vmatpush.msra.mxu0 0.0
        %4464 = vmatpush.msra.mxu0 0.0
        %4465 = vmatpush.msra.mxu0 0.0
        %4466 = vmatpush.msra.mxu0 0.0
        %4467 = vmatpush.msra.mxu0 0.0
        %4468 = vmatpush.msra.mxu0 0.0
        %4469 = vmatpush.msra.mxu0 0.0
        %4470 = vmatpush.msra.mxu0 0.0
        %v4471 = vand.u32 %v731, 4294901760
        %4472 = vmatpush.msra.mxu0 %v4471
        %v4473 = vand.u32 %v727, 4294901760
        %4474 = vmatpush.msra.mxu0 %v4473
        %v4475 = vand.u32 %v4262, 4294901760
        %v4476 = vsub.f32 %v4262, %v4475
        %v4477 = vand.u32 %v4476, 4294901760
        %v4478 = vsub.f32 %v4476, %v4477
        %v4479 = vand.u32 %v4478, 4294901760
        %4480 = vmatmul.f32.gmra.mxu0 %v4479
        %v4481 = vpop.f32.mrf.mxu0
        %v4482 = vadd.f32 0.0, %v4481
        %v4483 = vand.u32 %v4265, 4294901760
        %v4484 = vsub.f32 %v4265, %v4483
        %v4485 = vand.u32 %v4484, 4294901760
        %v4486 = vsub.f32 %v4484, %v4485
        %v4487 = vand.u32 %v4486, 4294901760
        %4488 = vmatmul.f32.gmra.mxu0 %v4487
        %v4489 = vpop.f32.mrf.mxu0
        %v4490 = vadd.f32 0.0, %v4489
        %4491 = vdwg.mxu0
        %4492 = vmatpush.msra.mxu0 0.0
        %4493 = vmatpush.msra.mxu0 0.0
        %4494 = vmatpush.msra.mxu0 0.0
        %4495 = vmatpush.msra.mxu0 0.0
        %4496 = vmatpush.msra.mxu0 0.0
        %4497 = vmatpush.msra.mxu0 0.0
        %4498 = vmatpush.msra.mxu0 0.0
        %4499 = vmatpush.msra.mxu0 0.0
        %4500 = vmatpush.msra.mxu0 0.0
        %4501 = vmatpush.msra.mxu0 0.0
        %4502 = vmatpush.msra.mxu0 0.0
        %4503 = vmatpush.msra.mxu0 0.0
        %4504 = vmatpush.msra.mxu0 0.0
        %4505 = vmatpush.msra.mxu0 0.0
        %v4506 = vand.u32 %v731, 4294901760
        %v4507 = vsub.f32 %v731, %v4506
        %v4508 = vand.u32 %v4507, 4294901760
        %v4509 = vsub.f32 %v4507, %v4508
        %v4510 = vand.u32 %v4509, 4294901760
        %4511 = vmatpush.msra.mxu0 %v4510
        %v4512 = vand.u32 %v727, 4294901760
        %v4513 = vsub.f32 %v727, %v4512
        %v4514 = vand.u32 %v4513, 4294901760
        %v4515 = vsub.f32 %v4513, %v4514
        %v4516 = vand.u32 %v4515, 4294901760
        %4517 = vmatpush.msra.mxu0 %v4516
        %v4518 = vand.u32 %v4262, 4294901760
        %4519 = vmatmul.f32.gmra.mxu0 %v4518
        %v4520 = vpop.f32.mrf.mxu0
        %v4521 = vadd.f32 %v4482, %v4520
        %v4522 = vand.u32 %v4265, 4294901760
        %4523 = vmatmul.f32.gmra.mxu0 %v4522
        %v4524 = vpop.f32.mrf.mxu0
        %v4525 = vadd.f32 %v4490, %v4524
        %4526 = vdwg.mxu0
        %4527 = vmatpush.msra.mxu0 0.0
        %4528 = vmatpush.msra.mxu0 0.0
        %4529 = vmatpush.msra.mxu0 0.0
        %4530 = vmatpush.msra.mxu0 0.0
        %4531 = vmatpush.msra.mxu0 0.0
        %4532 = vmatpush.msra.mxu0 0.0
        %4533 = vmatpush.msra.mxu0 0.0
        %4534 = vmatpush.msra.mxu0 0.0
        %4535 = vmatpush.msra.mxu0 0.0
        %4536 = vmatpush.msra.mxu0 0.0
        %4537 = vmatpush.msra.mxu0 0.0
        %4538 = vmatpush.msra.mxu0 0.0
        %4539 = vmatpush.msra.mxu0 0.0
        %4540 = vmatpush.msra.mxu0 0.0
        %v4541 = vand.u32 %v731, 4294901760
        %v4542 = vsub.f32 %v731, %v4541
        %4543 = vmatpush.msra.mxu0 %v4542
        %v4544 = vand.u32 %v727, 4294901760
        %v4545 = vsub.f32 %v727, %v4544
        %4546 = vmatpush.msra.mxu0 %v4545
        %v4547 = vand.u32 %v4262, 4294901760
        %v4548 = vsub.f32 %v4262, %v4547
        %4549 = vmatmul.f32.gmra.mxu0 %v4548
        %v4550 = vpop.f32.mrf.mxu0
        %v4551 = vadd.f32 %v4521, %v4550
        %v4552 = vand.u32 %v4265, 4294901760
        %v4553 = vsub.f32 %v4265, %v4552
        %4554 = vmatmul.f32.gmra.mxu0 %v4553
        %v4555 = vpop.f32.mrf.mxu0
        %v4556 = vadd.f32 %v4525, %v4555
        %4557 = vdwg.mxu0
        %4558 = vmatpush.msra.mxu0 0.0
        %4559 = vmatpush.msra.mxu0 0.0
        %4560 = vmatpush.msra.mxu0 0.0
        %4561 = vmatpush.msra.mxu0 0.0
        %4562 = vmatpush.msra.mxu0 0.0
        %4563 = vmatpush.msra.mxu0 0.0
        %4564 = vmatpush.msra.mxu0 0.0
        %4565 = vmatpush.msra.mxu0 0.0
        %4566 = vmatpush.msra.mxu0 0.0
        %4567 = vmatpush.msra.mxu0 0.0
        %4568 = vmatpush.msra.mxu0 0.0
        %4569 = vmatpush.msra.mxu0 0.0
        %4570 = vmatpush.msra.mxu0 0.0
        %4571 = vmatpush.msra.mxu0 0.0
        %v4572 = vand.u32 %v731, 4294901760
        %4573 = vmatpush.msra.mxu0 %v4572
        %v4574 = vand.u32 %v727, 4294901760
        %4575 = vmatpush.msra.mxu0 %v4574
        %v4576 = vand.u32 %v4262, 4294901760
        %v4577 = vsub.f32 %v4262, %v4576
        %v4578 = vand.u32 %v4577, 4294901760
        %4579 = vmatmul.f32.gmra.mxu0 %v4578
        %v4580 = vpop.f32.mrf.mxu0
        %v4581 = vadd.f32 %v4551, %v4580
        %v4582 = vand.u32 %v4265, 4294901760
        %v4583 = vsub.f32 %v4265, %v4582
        %v4584 = vand.u32 %v4583, 4294901760
        %4585 = vmatmul.f32.gmra.mxu0 %v4584
        %v4586 = vpop.f32.mrf.mxu0
        %v4587 = vadd.f32 %v4556, %v4586
        %4588 = vdwg.mxu0
        %4589 = vmatpush.msra.mxu0 0.0
        %4590 = vmatpush.msra.mxu0 0.0
        %4591 = vmatpush.msra.mxu0 0.0
        %4592 = vmatpush.msra.mxu0 0.0
        %4593 = vmatpush.msra.mxu0 0.0
        %4594 = vmatpush.msra.mxu0 0.0
        %4595 = vmatpush.msra.mxu0 0.0
        %4596 = vmatpush.msra.mxu0 0.0
        %4597 = vmatpush.msra.mxu0 0.0
        %4598 = vmatpush.msra.mxu0 0.0
        %4599 = vmatpush.msra.mxu0 0.0
        %4600 = vmatpush.msra.mxu0 0.0
        %4601 = vmatpush.msra.mxu0 0.0
        %4602 = vmatpush.msra.mxu0 0.0
        %v4603 = vand.u32 %v731, 4294901760
        %v4604 = vsub.f32 %v731, %v4603
        %v4605 = vand.u32 %v4604, 4294901760
        %4606 = vmatpush.msra.mxu0 %v4605
        %v4607 = vand.u32 %v727, 4294901760
        %v4608 = vsub.f32 %v727, %v4607
        %v4609 = vand.u32 %v4608, 4294901760
        %4610 = vmatpush.msra.mxu0 %v4609
        %v4611 = vand.u32 %v4262, 4294901760
        %4612 = vmatmul.f32.gmra.mxu0 %v4611
        %v4613 = vpop.f32.mrf.mxu0
        %v4614 = vadd.f32 %v4581, %v4613
        %v4615 = vand.u32 %v4265, 4294901760
        %4616 = vmatmul.f32.gmra.mxu0 %v4615
        %v4617 = vpop.f32.mrf.mxu0
        %v4618 = vadd.f32 %v4587, %v4617
        %4619 = vdwg.mxu0
        %4620 = vmatpush.msra.mxu0 0.0
        %4621 = vmatpush.msra.mxu0 0.0
        %4622 = vmatpush.msra.mxu0 0.0
        %4623 = vmatpush.msra.mxu0 0.0
        %4624 = vmatpush.msra.mxu0 0.0
        %4625 = vmatpush.msra.mxu0 0.0
        %4626 = vmatpush.msra.mxu0 0.0
        %4627 = vmatpush.msra.mxu0 0.0
        %4628 = vmatpush.msra.mxu0 0.0
        %4629 = vmatpush.msra.mxu0 0.0
        %4630 = vmatpush.msra.mxu0 0.0
        %4631 = vmatpush.msra.mxu0 0.0
        %4632 = vmatpush.msra.mxu0 0.0
        %4633 = vmatpush.msra.mxu0 0.0
        %v4634 = vand.u32 %v731, 4294901760
        %4635 = vmatpush.msra.mxu0 %v4634
        %v4636 = vand.u32 %v727, 4294901760
        %4637 = vmatpush.msra.mxu0 %v4636
        %v4638 = vand.u32 %v4262, 4294901760
        %4639 = vmatmul.f32.gmra.mxu0 %v4638
        %v4640 = vpop.f32.mrf.mxu0
        %v4641 = vadd.f32 %v4614, %v4640
        %v4642 = vand.u32 %v4265, 4294901760
        %4643 = vmatmul.f32.gmra.mxu0 %v4642
        %v4644 = vpop.f32.mrf.mxu0
        %v4645 = vadd.f32 %v4618, %v4644
        %4646 = vdwg.mxu0
        %4647 = vmatpush.msra.mxu0 0.0
        %4648 = vmatpush.msra.mxu0 0.0
        %4649 = vmatpush.msra.mxu0 0.0
        %4650 = vmatpush.msra.mxu0 0.0
        %4651 = vmatpush.msra.mxu0 0.0
        %4652 = vmatpush.msra.mxu0 0.0
        %4653 = vmatpush.msra.mxu0 0.0
        %4654 = vmatpush.msra.mxu0 0.0
        %4655 = vmatpush.msra.mxu0 0.0
        %4656 = vmatpush.msra.mxu0 0.0
        %4657 = vmatpush.msra.mxu0 0.0
        %4658 = vmatpush.msra.mxu0 0.0
        %4659 = vmatpush.msra.mxu0 0.0
        %4660 = vmatpush.msra.mxu0 0.0
        %v4661 = vand.u32 %v927, 4294901760
        %4662 = vmatpush.msra.mxu0 %v4661
        %v4663 = vand.u32 %v923, 4294901760
        %4664 = vmatpush.msra.mxu0 %v4663
        %v4665 = vand.u32 %v4262, 4294901760
        %v4666 = vsub.f32 %v4262, %v4665
        %v4667 = vand.u32 %v4666, 4294901760
        %v4668 = vsub.f32 %v4666, %v4667
        %v4669 = vand.u32 %v4668, 4294901760
        %4670 = vmatmul.f32.gmra.mxu0 %v4669
        %v4671 = vpop.f32.mrf.mxu0
        %v4672 = vadd.f32 0.0, %v4671
        %v4673 = vand.u32 %v4265, 4294901760
        %v4674 = vsub.f32 %v4265, %v4673
        %v4675 = vand.u32 %v4674, 4294901760
        %v4676 = vsub.f32 %v4674, %v4675
        %v4677 = vand.u32 %v4676, 4294901760
        %4678 = vmatmul.f32.gmra.mxu0 %v4677
        %v4679 = vpop.f32.mrf.mxu0
        %v4680 = vadd.f32 0.0, %v4679
        %4681 = vdwg.mxu0
        %4682 = vmatpush.msra.mxu0 0.0
        %4683 = vmatpush.msra.mxu0 0.0
        %4684 = vmatpush.msra.mxu0 0.0
        %4685 = vmatpush.msra.mxu0 0.0
        %4686 = vmatpush.msra.mxu0 0.0
        %4687 = vmatpush.msra.mxu0 0.0
        %4688 = vmatpush.msra.mxu0 0.0
        %4689 = vmatpush.msra.mxu0 0.0
        %4690 = vmatpush.msra.mxu0 0.0
        %4691 = vmatpush.msra.mxu0 0.0
        %4692 = vmatpush.msra.mxu0 0.0
        %4693 = vmatpush.msra.mxu0 0.0
        %4694 = vmatpush.msra.mxu0 0.0
        %4695 = vmatpush.msra.mxu0 0.0
        %v4696 = vand.u32 %v927, 4294901760
        %v4697 = vsub.f32 %v927, %v4696
        %v4698 = vand.u32 %v4697, 4294901760
        %v4699 = vsub.f32 %v4697, %v4698
        %v4700 = vand.u32 %v4699, 4294901760
        %4701 = vmatpush.msra.mxu0 %v4700
        %v4702 = vand.u32 %v923, 4294901760
        %v4703 = vsub.f32 %v923, %v4702
        %v4704 = vand.u32 %v4703, 4294901760
        %v4705 = vsub.f32 %v4703, %v4704
        %v4706 = vand.u32 %v4705, 4294901760
        %4707 = vmatpush.msra.mxu0 %v4706
        %v4708 = vand.u32 %v4262, 4294901760
        %4709 = vmatmul.f32.gmra.mxu0 %v4708
        %v4710 = vpop.f32.mrf.mxu0
        %v4711 = vadd.f32 %v4672, %v4710
        %v4712 = vand.u32 %v4265, 4294901760
        %4713 = vmatmul.f32.gmra.mxu0 %v4712
        %v4714 = vpop.f32.mrf.mxu0
        %v4715 = vadd.f32 %v4680, %v4714
        %4716 = vdwg.mxu0
        %4717 = vmatpush.msra.mxu0 0.0
        %4718 = vmatpush.msra.mxu0 0.0
        %4719 = vmatpush.msra.mxu0 0.0
        %4720 = vmatpush.msra.mxu0 0.0
        %4721 = vmatpush.msra.mxu0 0.0
        %4722 = vmatpush.msra.mxu0 0.0
        %4723 = vmatpush.msra.mxu0 0.0
        %4724 = vmatpush.msra.mxu0 0.0
        %4725 = vmatpush.msra.mxu0 0.0
        %4726 = vmatpush.msra.mxu0 0.0
        %4727 = vmatpush.msra.mxu0 0.0
        %4728 = vmatpush.msra.mxu0 0.0
        %4729 = vmatpush.msra.mxu0 0.0
        %4730 = vmatpush.msra.mxu0 0.0
        %v4731 = vand.u32 %v927, 4294901760
        %v4732 = vsub.f32 %v927, %v4731
        %4733 = vmatpush.msra.mxu0 %v4732
        %v4734 = vand.u32 %v923, 4294901760
        %v4735 = vsub.f32 %v923, %v4734
        %4736 = vmatpush.msra.mxu0 %v4735
        %v4737 = vand.u32 %v4262, 4294901760
        %v4738 = vsub.f32 %v4262, %v4737
        %4739 = vmatmul.f32.gmra.mxu0 %v4738
        %v4740 = vpop.f32.mrf.mxu0
        %v4741 = vadd.f32 %v4711, %v4740
        %v4742 = vand.u32 %v4265, 4294901760
        %v4743 = vsub.f32 %v4265, %v4742
        %4744 = vmatmul.f32.gmra.mxu0 %v4743
        %v4745 = vpop.f32.mrf.mxu0
        %v4746 = vadd.f32 %v4715, %v4745
        %4747 = vdwg.mxu0
        %4748 = vmatpush.msra.mxu0 0.0
        %4749 = vmatpush.msra.mxu0 0.0
        %4750 = vmatpush.msra.mxu0 0.0
        %4751 = vmatpush.msra.mxu0 0.0
        %4752 = vmatpush.msra.mxu0 0.0
        %4753 = vmatpush.msra.mxu0 0.0
        %4754 = vmatpush.msra.mxu0 0.0
        %4755 = vmatpush.msra.mxu0 0.0
        %4756 = vmatpush.msra.mxu0 0.0
        %4757 = vmatpush.msra.mxu0 0.0
        %4758 = vmatpush.msra.mxu0 0.0
        %4759 = vmatpush.msra.mxu0 0.0
        %4760 = vmatpush.msra.mxu0 0.0
        %4761 = vmatpush.msra.mxu0 0.0
        %v4762 = vand.u32 %v927, 4294901760
        %4763 = vmatpush.msra.mxu0 %v4762
        %v4764 = vand.u32 %v923, 4294901760
        %4765 = vmatpush.msra.mxu0 %v4764
        %v4766 = vand.u32 %v4262, 4294901760
        %v4767 = vsub.f32 %v4262, %v4766
        %v4768 = vand.u32 %v4767, 4294901760
        %4769 = vmatmul.f32.gmra.mxu0 %v4768
        %v4770 = vpop.f32.mrf.mxu0
        %v4771 = vadd.f32 %v4741, %v4770
        %v4772 = vand.u32 %v4265, 4294901760
        %v4773 = vsub.f32 %v4265, %v4772
        %v4774 = vand.u32 %v4773, 4294901760
        %4775 = vmatmul.f32.gmra.mxu0 %v4774
        %v4776 = vpop.f32.mrf.mxu0
        %v4777 = vadd.f32 %v4746, %v4776
        %4778 = vdwg.mxu0
        %4779 = vmatpush.msra.mxu0 0.0
        %4780 = vmatpush.msra.mxu0 0.0
        %4781 = vmatpush.msra.mxu0 0.0
        %4782 = vmatpush.msra.mxu0 0.0
        %4783 = vmatpush.msra.mxu0 0.0
        %4784 = vmatpush.msra.mxu0 0.0
        %4785 = vmatpush.msra.mxu0 0.0
        %4786 = vmatpush.msra.mxu0 0.0
        %4787 = vmatpush.msra.mxu0 0.0
        %4788 = vmatpush.msra.mxu0 0.0
        %4789 = vmatpush.msra.mxu0 0.0
        %4790 = vmatpush.msra.mxu0 0.0
        %4791 = vmatpush.msra.mxu0 0.0
        %4792 = vmatpush.msra.mxu0 0.0
        %v4793 = vand.u32 %v927, 4294901760
        %v4794 = vsub.f32 %v927, %v4793
        %v4795 = vand.u32 %v4794, 4294901760
        %4796 = vmatpush.msra.mxu0 %v4795
        %v4797 = vand.u32 %v923, 4294901760
        %v4798 = vsub.f32 %v923, %v4797
        %v4799 = vand.u32 %v4798, 4294901760
        %4800 = vmatpush.msra.mxu0 %v4799
        %v4801 = vand.u32 %v4262, 4294901760
        %4802 = vmatmul.f32.gmra.mxu0 %v4801
        %v4803 = vpop.f32.mrf.mxu0
        %v4804 = vadd.f32 %v4771, %v4803
        %v4805 = vand.u32 %v4265, 4294901760
        %4806 = vmatmul.f32.gmra.mxu0 %v4805
        %v4807 = vpop.f32.mrf.mxu0
        %v4808 = vadd.f32 %v4777, %v4807
        %4809 = vdwg.mxu0
        %4810 = vmatpush.msra.mxu0 0.0
        %4811 = vmatpush.msra.mxu0 0.0
        %4812 = vmatpush.msra.mxu0 0.0
        %4813 = vmatpush.msra.mxu0 0.0
        %4814 = vmatpush.msra.mxu0 0.0
        %4815 = vmatpush.msra.mxu0 0.0
        %4816 = vmatpush.msra.mxu0 0.0
        %4817 = vmatpush.msra.mxu0 0.0
        %4818 = vmatpush.msra.mxu0 0.0
        %4819 = vmatpush.msra.mxu0 0.0
        %4820 = vmatpush.msra.mxu0 0.0
        %4821 = vmatpush.msra.mxu0 0.0
        %4822 = vmatpush.msra.mxu0 0.0
        %4823 = vmatpush.msra.mxu0 0.0
        %v4824 = vand.u32 %v927, 4294901760
        %4825 = vmatpush.msra.mxu0 %v4824
        %v4826 = vand.u32 %v923, 4294901760
        %4827 = vmatpush.msra.mxu0 %v4826
        %v4828 = vand.u32 %v4262, 4294901760
        %4829 = vmatmul.f32.gmra.mxu0 %v4828
        %v4830 = vpop.f32.mrf.mxu0
        %v4831 = vadd.f32 %v4804, %v4830
        %v4832 = vand.u32 %v4265, 4294901760
        %4833 = vmatmul.f32.gmra.mxu0 %v4832
        %v4834 = vpop.f32.mrf.mxu0
        %v4835 = vadd.f32 %v4808, %v4834
        %4836 = vdwg.mxu0
        %4837 = vmatpush.msra.mxu0 0.0
        %4838 = vmatpush.msra.mxu0 0.0
        %4839 = vmatpush.msra.mxu0 0.0
        %4840 = vmatpush.msra.mxu0 0.0
        %4841 = vmatpush.msra.mxu0 0.0
        %4842 = vmatpush.msra.mxu0 0.0
        %4843 = vmatpush.msra.mxu0 0.0
        %4844 = vmatpush.msra.mxu0 0.0
        %4845 = vmatpush.msra.mxu0 0.0
        %4846 = vmatpush.msra.mxu0 0.0
        %4847 = vmatpush.msra.mxu0 0.0
        %4848 = vmatpush.msra.mxu0 0.0
        %4849 = vmatpush.msra.mxu0 0.0
        %4850 = vmatpush.msra.mxu0 0.0
        %v4851 = vand.u32 %v1123, 4294901760
        %4852 = vmatpush.msra.mxu0 %v4851
        %v4853 = vand.u32 %v1119, 4294901760
        %4854 = vmatpush.msra.mxu0 %v4853
        %v4855 = vand.u32 %v4262, 4294901760
        %v4856 = vsub.f32 %v4262, %v4855
        %v4857 = vand.u32 %v4856, 4294901760
        %v4858 = vsub.f32 %v4856, %v4857
        %v4859 = vand.u32 %v4858, 4294901760
        %4860 = vmatmul.f32.gmra.mxu0 %v4859
        %v4861 = vpop.f32.mrf.mxu0
        %v4862 = vadd.f32 0.0, %v4861
        %v4863 = vand.u32 %v4265, 4294901760
        %v4864 = vsub.f32 %v4265, %v4863
        %v4865 = vand.u32 %v4864, 4294901760
        %v4866 = vsub.f32 %v4864, %v4865
        %v4867 = vand.u32 %v4866, 4294901760
        %4868 = vmatmul.f32.gmra.mxu0 %v4867
        %v4869 = vpop.f32.mrf.mxu0
        %v4870 = vadd.f32 0.0, %v4869
        %4871 = vdwg.mxu0
        %4872 = vmatpush.msra.mxu0 0.0
        %4873 = vmatpush.msra.mxu0 0.0
        %4874 = vmatpush.msra.mxu0 0.0
        %4875 = vmatpush.msra.mxu0 0.0
        %4876 = vmatpush.msra.mxu0 0.0
        %4877 = vmatpush.msra.mxu0 0.0
        %4878 = vmatpush.msra.mxu0 0.0
        %4879 = vmatpush.msra.mxu0 0.0
        %4880 = vmatpush.msra.mxu0 0.0
        %4881 = vmatpush.msra.mxu0 0.0
        %4882 = vmatpush.msra.mxu0 0.0
        %4883 = vmatpush.msra.mxu0 0.0
        %4884 = vmatpush.msra.mxu0 0.0
        %4885 = vmatpush.msra.mxu0 0.0
        %v4886 = vand.u32 %v1123, 4294901760
        %v4887 = vsub.f32 %v1123, %v4886
        %v4888 = vand.u32 %v4887, 4294901760
        %v4889 = vsub.f32 %v4887, %v4888
        %v4890 = vand.u32 %v4889, 4294901760
        %4891 = vmatpush.msra.mxu0 %v4890
        %v4892 = vand.u32 %v1119, 4294901760
        %v4893 = vsub.f32 %v1119, %v4892
        %v4894 = vand.u32 %v4893, 4294901760
        %v4895 = vsub.f32 %v4893, %v4894
        %v4896 = vand.u32 %v4895, 4294901760
        %4897 = vmatpush.msra.mxu0 %v4896
        %v4898 = vand.u32 %v4262, 4294901760
        %4899 = vmatmul.f32.gmra.mxu0 %v4898
        %v4900 = vpop.f32.mrf.mxu0
        %v4901 = vadd.f32 %v4862, %v4900
        %v4902 = vand.u32 %v4265, 4294901760
        %4903 = vmatmul.f32.gmra.mxu0 %v4902
        %v4904 = vpop.f32.mrf.mxu0
        %v4905 = vadd.f32 %v4870, %v4904
        %4906 = vdwg.mxu0
        %4907 = vmatpush.msra.mxu0 0.0
        %4908 = vmatpush.msra.mxu0 0.0
        %4909 = vmatpush.msra.mxu0 0.0
        %4910 = vmatpush.msra.mxu0 0.0
        %4911 = vmatpush.msra.mxu0 0.0
        %4912 = vmatpush.msra.mxu0 0.0
        %4913 = vmatpush.msra.mxu0 0.0
        %4914 = vmatpush.msra.mxu0 0.0
        %4915 = vmatpush.msra.mxu0 0.0
        %4916 = vmatpush.msra.mxu0 0.0
        %4917 = vmatpush.msra.mxu0 0.0
        %4918 = vmatpush.msra.mxu0 0.0
        %4919 = vmatpush.msra.mxu0 0.0
        %4920 = vmatpush.msra.mxu0 0.0
        %v4921 = vand.u32 %v1123, 4294901760
        %v4922 = vsub.f32 %v1123, %v4921
        %4923 = vmatpush.msra.mxu0 %v4922
        %v4924 = vand.u32 %v1119, 4294901760
        %v4925 = vsub.f32 %v1119, %v4924
        %4926 = vmatpush.msra.mxu0 %v4925
        %v4927 = vand.u32 %v4262, 4294901760
        %v4928 = vsub.f32 %v4262, %v4927
        %4929 = vmatmul.f32.gmra.mxu0 %v4928
        %v4930 = vpop.f32.mrf.mxu0
        %v4931 = vadd.f32 %v4901, %v4930
        %v4932 = vand.u32 %v4265, 4294901760
        %v4933 = vsub.f32 %v4265, %v4932
        %4934 = vmatmul.f32.gmra.mxu0 %v4933
        %v4935 = vpop.f32.mrf.mxu0
        %v4936 = vadd.f32 %v4905, %v4935
        %4937 = vdwg.mxu0
        %4938 = vmatpush.msra.mxu0 0.0
        %4939 = vmatpush.msra.mxu0 0.0
        %4940 = vmatpush.msra.mxu0 0.0
        %4941 = vmatpush.msra.mxu0 0.0
        %4942 = vmatpush.msra.mxu0 0.0
        %4943 = vmatpush.msra.mxu0 0.0
        %4944 = vmatpush.msra.mxu0 0.0
        %4945 = vmatpush.msra.mxu0 0.0
        %4946 = vmatpush.msra.mxu0 0.0
        %4947 = vmatpush.msra.mxu0 0.0
        %4948 = vmatpush.msra.mxu0 0.0
        %4949 = vmatpush.msra.mxu0 0.0
        %4950 = vmatpush.msra.mxu0 0.0
        %4951 = vmatpush.msra.mxu0 0.0
        %v4952 = vand.u32 %v1123, 4294901760
        %4953 = vmatpush.msra.mxu0 %v4952
        %v4954 = vand.u32 %v1119, 4294901760
        %4955 = vmatpush.msra.mxu0 %v4954
        %v4956 = vand.u32 %v4262, 4294901760
        %v4957 = vsub.f32 %v4262, %v4956
        %v4958 = vand.u32 %v4957, 4294901760
        %4959 = vmatmul.f32.gmra.mxu0 %v4958
        %v4960 = vpop.f32.mrf.mxu0
        %v4961 = vadd.f32 %v4931, %v4960
        %v4962 = vand.u32 %v4265, 4294901760
        %v4963 = vsub.f32 %v4265, %v4962
        %v4964 = vand.u32 %v4963, 4294901760
        %4965 = vmatmul.f32.gmra.mxu0 %v4964
        %v4966 = vpop.f32.mrf.mxu0
        %v4967 = vadd.f32 %v4936, %v4966
        %4968 = vdwg.mxu0
        %4969 = vmatpush.msra.mxu0 0.0
        %4970 = vmatpush.msra.mxu0 0.0
        %4971 = vmatpush.msra.mxu0 0.0
        %4972 = vmatpush.msra.mxu0 0.0
        %4973 = vmatpush.msra.mxu0 0.0
        %4974 = vmatpush.msra.mxu0 0.0
        %4975 = vmatpush.msra.mxu0 0.0
        %4976 = vmatpush.msra.mxu0 0.0
        %4977 = vmatpush.msra.mxu0 0.0
        %4978 = vmatpush.msra.mxu0 0.0
        %4979 = vmatpush.msra.mxu0 0.0
        %4980 = vmatpush.msra.mxu0 0.0
        %4981 = vmatpush.msra.mxu0 0.0
        %4982 = vmatpush.msra.mxu0 0.0
        %v4983 = vand.u32 %v1123, 4294901760
        %v4984 = vsub.f32 %v1123, %v4983
        %v4985 = vand.u32 %v4984, 4294901760
        %4986 = vmatpush.msra.mxu0 %v4985
        %v4987 = vand.u32 %v1119, 4294901760
        %v4988 = vsub.f32 %v1119, %v4987
        %v4989 = vand.u32 %v4988, 4294901760
        %4990 = vmatpush.msra.mxu0 %v4989
        %v4991 = vand.u32 %v4262, 4294901760
        %4992 = vmatmul.f32.gmra.mxu0 %v4991
        %v4993 = vpop.f32.mrf.mxu0
        %v4994 = vadd.f32 %v4961, %v4993
        %v4995 = vand.u32 %v4265, 4294901760
        %4996 = vmatmul.f32.gmra.mxu0 %v4995
        %v4997 = vpop.f32.mrf.mxu0
        %v4998 = vadd.f32 %v4967, %v4997
        %4999 = vdwg.mxu0
        %5000 = vmatpush.msra.mxu0 0.0
        %5001 = vmatpush.msra.mxu0 0.0
        %5002 = vmatpush.msra.mxu0 0.0
        %5003 = vmatpush.msra.mxu0 0.0
        %5004 = vmatpush.msra.mxu0 0.0
        %5005 = vmatpush.msra.mxu0 0.0
        %5006 = vmatpush.msra.mxu0 0.0
        %5007 = vmatpush.msra.mxu0 0.0
        %5008 = vmatpush.msra.mxu0 0.0
        %5009 = vmatpush.msra.mxu0 0.0
        %5010 = vmatpush.msra.mxu0 0.0
        %5011 = vmatpush.msra.mxu0 0.0
        %5012 = vmatpush.msra.mxu0 0.0
        %5013 = vmatpush.msra.mxu0 0.0
        %v5014 = vand.u32 %v1123, 4294901760
        %5015 = vmatpush.msra.mxu0 %v5014
        %v5016 = vand.u32 %v1119, 4294901760
        %5017 = vmatpush.msra.mxu0 %v5016
        %v5018 = vand.u32 %v4262, 4294901760
        %5019 = vmatmul.f32.gmra.mxu0 %v5018
        %v5020 = vpop.f32.mrf.mxu0
        %v5021 = vadd.f32 %v4994, %v5020
        %v5022 = vand.u32 %v4265, 4294901760
        %5023 = vmatmul.f32.gmra.mxu0 %v5022
        %v5024 = vpop.f32.mrf.mxu0
        %v5025 = vadd.f32 %v4998, %v5024
        %5026 = vdwg.mxu0
        %5027 = vmatpush.msra.mxu0 0.0
        %5028 = vmatpush.msra.mxu0 0.0
        %5029 = vmatpush.msra.mxu0 0.0
        %5030 = vmatpush.msra.mxu0 0.0
        %5031 = vmatpush.msra.mxu0 0.0
        %5032 = vmatpush.msra.mxu0 0.0
        %5033 = vmatpush.msra.mxu0 0.0
        %5034 = vmatpush.msra.mxu0 0.0
        %5035 = vmatpush.msra.mxu0 0.0
        %5036 = vmatpush.msra.mxu0 0.0
        %5037 = vmatpush.msra.mxu0 0.0
        %5038 = vmatpush.msra.mxu0 0.0
        %5039 = vmatpush.msra.mxu0 0.0
        %5040 = vmatpush.msra.mxu0 0.0
        %v5041 = vand.u32 %v1319, 4294901760
        %5042 = vmatpush.msra.mxu0 %v5041
        %v5043 = vand.u32 %v1315, 4294901760
        %5044 = vmatpush.msra.mxu0 %v5043
        %v5045 = vand.u32 %v4262, 4294901760
        %v5046 = vsub.f32 %v4262, %v5045
        %v5047 = vand.u32 %v5046, 4294901760
        %v5048 = vsub.f32 %v5046, %v5047
        %v5049 = vand.u32 %v5048, 4294901760
        %5050 = vmatmul.f32.gmra.mxu0 %v5049
        %v5051 = vpop.f32.mrf.mxu0
        %v5052 = vadd.f32 0.0, %v5051
        %v5053 = vand.u32 %v4265, 4294901760
        %v5054 = vsub.f32 %v4265, %v5053
        %v5055 = vand.u32 %v5054, 4294901760
        %v5056 = vsub.f32 %v5054, %v5055
        %v5057 = vand.u32 %v5056, 4294901760
        %5058 = vmatmul.f32.gmra.mxu0 %v5057
        %v5059 = vpop.f32.mrf.mxu0
        %v5060 = vadd.f32 0.0, %v5059
        %5061 = vdwg.mxu0
        %5062 = vmatpush.msra.mxu0 0.0
        %5063 = vmatpush.msra.mxu0 0.0
        %5064 = vmatpush.msra.mxu0 0.0
        %5065 = vmatpush.msra.mxu0 0.0
        %5066 = vmatpush.msra.mxu0 0.0
        %5067 = vmatpush.msra.mxu0 0.0
        %5068 = vmatpush.msra.mxu0 0.0
        %5069 = vmatpush.msra.mxu0 0.0
        %5070 = vmatpush.msra.mxu0 0.0
        %5071 = vmatpush.msra.mxu0 0.0
        %5072 = vmatpush.msra.mxu0 0.0
        %5073 = vmatpush.msra.mxu0 0.0
        %5074 = vmatpush.msra.mxu0 0.0
        %5075 = vmatpush.msra.mxu0 0.0
        %v5076 = vand.u32 %v1319, 4294901760
        %v5077 = vsub.f32 %v1319, %v5076
        %v5078 = vand.u32 %v5077, 4294901760
        %v5079 = vsub.f32 %v5077, %v5078
        %v5080 = vand.u32 %v5079, 4294901760
        %5081 = vmatpush.msra.mxu0 %v5080
        %v5082 = vand.u32 %v1315, 4294901760
        %v5083 = vsub.f32 %v1315, %v5082
        %v5084 = vand.u32 %v5083, 4294901760
        %v5085 = vsub.f32 %v5083, %v5084
        %v5086 = vand.u32 %v5085, 4294901760
        %5087 = vmatpush.msra.mxu0 %v5086
        %v5088 = vand.u32 %v4262, 4294901760
        %5089 = vmatmul.f32.gmra.mxu0 %v5088
        %v5090 = vpop.f32.mrf.mxu0
        %v5091 = vadd.f32 %v5052, %v5090
        %v5092 = vand.u32 %v4265, 4294901760
        %5093 = vmatmul.f32.gmra.mxu0 %v5092
        %v5094 = vpop.f32.mrf.mxu0
        %v5095 = vadd.f32 %v5060, %v5094
        %5096 = vdwg.mxu0
        %5097 = vmatpush.msra.mxu0 0.0
        %5098 = vmatpush.msra.mxu0 0.0
        %5099 = vmatpush.msra.mxu0 0.0
        %5100 = vmatpush.msra.mxu0 0.0
        %5101 = vmatpush.msra.mxu0 0.0
        %5102 = vmatpush.msra.mxu0 0.0
        %5103 = vmatpush.msra.mxu0 0.0
        %5104 = vmatpush.msra.mxu0 0.0
        %5105 = vmatpush.msra.mxu0 0.0
        %5106 = vmatpush.msra.mxu0 0.0
        %5107 = vmatpush.msra.mxu0 0.0
        %5108 = vmatpush.msra.mxu0 0.0
        %5109 = vmatpush.msra.mxu0 0.0
        %5110 = vmatpush.msra.mxu0 0.0
        %v5111 = vand.u32 %v1319, 4294901760
        %v5112 = vsub.f32 %v1319, %v5111
        %5113 = vmatpush.msra.mxu0 %v5112
        %v5114 = vand.u32 %v1315, 4294901760
        %v5115 = vsub.f32 %v1315, %v5114
        %5116 = vmatpush.msra.mxu0 %v5115
        %v5117 = vand.u32 %v4262, 4294901760
        %v5118 = vsub.f32 %v4262, %v5117
        %5119 = vmatmul.f32.gmra.mxu0 %v5118
        %v5120 = vpop.f32.mrf.mxu0
        %v5121 = vadd.f32 %v5091, %v5120
        %v5122 = vand.u32 %v4265, 4294901760
        %v5123 = vsub.f32 %v4265, %v5122
        %5124 = vmatmul.f32.gmra.mxu0 %v5123
        %v5125 = vpop.f32.mrf.mxu0
        %v5126 = vadd.f32 %v5095, %v5125
        %5127 = vdwg.mxu0
        %5128 = vmatpush.msra.mxu0 0.0
        %5129 = vmatpush.msra.mxu0 0.0
        %5130 = vmatpush.msra.mxu0 0.0
        %5131 = vmatpush.msra.mxu0 0.0
        %5132 = vmatpush.msra.mxu0 0.0
        %5133 = vmatpush.msra.mxu0 0.0
        %5134 = vmatpush.msra.mxu0 0.0
        %5135 = vmatpush.msra.mxu0 0.0
        %5136 = vmatpush.msra.mxu0 0.0
        %5137 = vmatpush.msra.mxu0 0.0
        %5138 = vmatpush.msra.mxu0 0.0
        %5139 = vmatpush.msra.mxu0 0.0
        %5140 = vmatpush.msra.mxu0 0.0
        %5141 = vmatpush.msra.mxu0 0.0
        %v5142 = vand.u32 %v1319, 4294901760
        %5143 = vmatpush.msra.mxu0 %v5142
        %v5144 = vand.u32 %v1315, 4294901760
        %5145 = vmatpush.msra.mxu0 %v5144
        %v5146 = vand.u32 %v4262, 4294901760
        %v5147 = vsub.f32 %v4262, %v5146
        %v5148 = vand.u32 %v5147, 4294901760
        %5149 = vmatmul.f32.gmra.mxu0 %v5148
        %v5150 = vpop.f32.mrf.mxu0
        %v5151 = vadd.f32 %v5121, %v5150
        %v5152 = vand.u32 %v4265, 4294901760
        %v5153 = vsub.f32 %v4265, %v5152
        %v5154 = vand.u32 %v5153, 4294901760
        %5155 = vmatmul.f32.gmra.mxu0 %v5154
        %v5156 = vpop.f32.mrf.mxu0
        %v5157 = vadd.f32 %v5126, %v5156
        %5158 = vdwg.mxu0
        %5159 = vmatpush.msra.mxu0 0.0
        %5160 = vmatpush.msra.mxu0 0.0
        %5161 = vmatpush.msra.mxu0 0.0
        %5162 = vmatpush.msra.mxu0 0.0
        %5163 = vmatpush.msra.mxu0 0.0
        %5164 = vmatpush.msra.mxu0 0.0
        %5165 = vmatpush.msra.mxu0 0.0
        %5166 = vmatpush.msra.mxu0 0.0
        %5167 = vmatpush.msra.mxu0 0.0
        %5168 = vmatpush.msra.mxu0 0.0
        %5169 = vmatpush.msra.mxu0 0.0
        %5170 = vmatpush.msra.mxu0 0.0
        %5171 = vmatpush.msra.mxu0 0.0
        %5172 = vmatpush.msra.mxu0 0.0
        %v5173 = vand.u32 %v1319, 4294901760
        %v5174 = vsub.f32 %v1319, %v5173
        %v5175 = vand.u32 %v5174, 4294901760
        %5176 = vmatpush.msra.mxu0 %v5175
        %v5177 = vand.u32 %v1315, 4294901760
        %v5178 = vsub.f32 %v1315, %v5177
        %v5179 = vand.u32 %v5178, 4294901760
        %5180 = vmatpush.msra.mxu0 %v5179
        %v5181 = vand.u32 %v4262, 4294901760
        %5182 = vmatmul.f32.gmra.mxu0 %v5181
        %v5183 = vpop.f32.mrf.mxu0
        %v5184 = vadd.f32 %v5151, %v5183
        %v5185 = vand.u32 %v4265, 4294901760
        %5186 = vmatmul.f32.gmra.mxu0 %v5185
        %v5187 = vpop.f32.mrf.mxu0
        %v5188 = vadd.f32 %v5157, %v5187
        %5189 = vdwg.mxu0
        %5190 = vmatpush.msra.mxu0 0.0
        %5191 = vmatpush.msra.mxu0 0.0
        %5192 = vmatpush.msra.mxu0 0.0
        %5193 = vmatpush.msra.mxu0 0.0
        %5194 = vmatpush.msra.mxu0 0.0
        %5195 = vmatpush.msra.mxu0 0.0
        %5196 = vmatpush.msra.mxu0 0.0
        %5197 = vmatpush.msra.mxu0 0.0
        %5198 = vmatpush.msra.mxu0 0.0
        %5199 = vmatpush.msra.mxu0 0.0
        %5200 = vmatpush.msra.mxu0 0.0
        %5201 = vmatpush.msra.mxu0 0.0
        %5202 = vmatpush.msra.mxu0 0.0
        %5203 = vmatpush.msra.mxu0 0.0
        %v5204 = vand.u32 %v1319, 4294901760
        %5205 = vmatpush.msra.mxu0 %v5204
        %v5206 = vand.u32 %v1315, 4294901760
        %5207 = vmatpush.msra.mxu0 %v5206
        %v5208 = vand.u32 %v4262, 4294901760
        %5209 = vmatmul.f32.gmra.mxu0 %v5208
        %v5210 = vpop.f32.mrf.mxu0
        %v5211 = vadd.f32 %v5184, %v5210
        %v5212 = vand.u32 %v4265, 4294901760
        %5213 = vmatmul.f32.gmra.mxu0 %v5212
        %v5214 = vpop.f32.mrf.mxu0
        %v5215 = vadd.f32 %v5188, %v5214
        %5216 = vdwg.mxu0
        %5217 = vmatpush.msra.mxu0 0.0
        %5218 = vmatpush.msra.mxu0 0.0
        %5219 = vmatpush.msra.mxu0 0.0
        %5220 = vmatpush.msra.mxu0 0.0
        %5221 = vmatpush.msra.mxu0 0.0
        %5222 = vmatpush.msra.mxu0 0.0
        %5223 = vmatpush.msra.mxu0 0.0
        %5224 = vmatpush.msra.mxu0 0.0
        %5225 = vmatpush.msra.mxu0 0.0
        %5226 = vmatpush.msra.mxu0 0.0
        %5227 = vmatpush.msra.mxu0 0.0
        %5228 = vmatpush.msra.mxu0 0.0
        %5229 = vmatpush.msra.mxu0 0.0
        %5230 = vmatpush.msra.mxu0 0.0
        %v5231 = vand.u32 %v1515, 4294901760
        %5232 = vmatpush.msra.mxu0 %v5231
        %v5233 = vand.u32 %v1511, 4294901760
        %5234 = vmatpush.msra.mxu0 %v5233
        %v5235 = vand.u32 %v4262, 4294901760
        %v5236 = vsub.f32 %v4262, %v5235
        %v5237 = vand.u32 %v5236, 4294901760
        %v5238 = vsub.f32 %v5236, %v5237
        %v5239 = vand.u32 %v5238, 4294901760
        %5240 = vmatmul.f32.gmra.mxu0 %v5239
        %v5241 = vpop.f32.mrf.mxu0
        %v5242 = vadd.f32 0.0, %v5241
        %v5243 = vand.u32 %v4265, 4294901760
        %v5244 = vsub.f32 %v4265, %v5243
        %v5245 = vand.u32 %v5244, 4294901760
        %v5246 = vsub.f32 %v5244, %v5245
        %v5247 = vand.u32 %v5246, 4294901760
        %5248 = vmatmul.f32.gmra.mxu0 %v5247
        %v5249 = vpop.f32.mrf.mxu0
        %v5250 = vadd.f32 0.0, %v5249
        %5251 = vdwg.mxu0
        %5252 = vmatpush.msra.mxu0 0.0
        %5253 = vmatpush.msra.mxu0 0.0
        %5254 = vmatpush.msra.mxu0 0.0
        %5255 = vmatpush.msra.mxu0 0.0
        %5256 = vmatpush.msra.mxu0 0.0
        %5257 = vmatpush.msra.mxu0 0.0
        %5258 = vmatpush.msra.mxu0 0.0
        %5259 = vmatpush.msra.mxu0 0.0
        %5260 = vmatpush.msra.mxu0 0.0
        %5261 = vmatpush.msra.mxu0 0.0
        %5262 = vmatpush.msra.mxu0 0.0
        %5263 = vmatpush.msra.mxu0 0.0
        %5264 = vmatpush.msra.mxu0 0.0
        %5265 = vmatpush.msra.mxu0 0.0
        %v5266 = vand.u32 %v1515, 4294901760
        %v5267 = vsub.f32 %v1515, %v5266
        %v5268 = vand.u32 %v5267, 4294901760
        %v5269 = vsub.f32 %v5267, %v5268
        %v5270 = vand.u32 %v5269, 4294901760
        %5271 = vmatpush.msra.mxu0 %v5270
        %v5272 = vand.u32 %v1511, 4294901760
        %v5273 = vsub.f32 %v1511, %v5272
        %v5274 = vand.u32 %v5273, 4294901760
        %v5275 = vsub.f32 %v5273, %v5274
        %v5276 = vand.u32 %v5275, 4294901760
        %5277 = vmatpush.msra.mxu0 %v5276
        %v5278 = vand.u32 %v4262, 4294901760
        %5279 = vmatmul.f32.gmra.mxu0 %v5278
        %v5280 = vpop.f32.mrf.mxu0
        %v5281 = vadd.f32 %v5242, %v5280
        %v5282 = vand.u32 %v4265, 4294901760
        %5283 = vmatmul.f32.gmra.mxu0 %v5282
        %v5284 = vpop.f32.mrf.mxu0
        %v5285 = vadd.f32 %v5250, %v5284
        %5286 = vdwg.mxu0
        %5287 = vmatpush.msra.mxu0 0.0
        %5288 = vmatpush.msra.mxu0 0.0
        %5289 = vmatpush.msra.mxu0 0.0
        %5290 = vmatpush.msra.mxu0 0.0
        %5291 = vmatpush.msra.mxu0 0.0
        %5292 = vmatpush.msra.mxu0 0.0
        %5293 = vmatpush.msra.mxu0 0.0
        %5294 = vmatpush.msra.mxu0 0.0
        %5295 = vmatpush.msra.mxu0 0.0
        %5296 = vmatpush.msra.mxu0 0.0
        %5297 = vmatpush.msra.mxu0 0.0
        %5298 = vmatpush.msra.mxu0 0.0
        %5299 = vmatpush.msra.mxu0 0.0
        %5300 = vmatpush.msra.mxu0 0.0
        %v5301 = vand.u32 %v1515, 4294901760
        %v5302 = vsub.f32 %v1515, %v5301
        %5303 = vmatpush.msra.mxu0 %v5302
        %v5304 = vand.u32 %v1511, 4294901760
        %v5305 = vsub.f32 %v1511, %v5304
        %5306 = vmatpush.msra.mxu0 %v5305
        %v5307 = vand.u32 %v4262, 4294901760
        %v5308 = vsub.f32 %v4262, %v5307
        %5309 = vmatmul.f32.gmra.mxu0 %v5308
        %v5310 = vpop.f32.mrf.mxu0
        %v5311 = vadd.f32 %v5281, %v5310
        %v5312 = vand.u32 %v4265, 4294901760
        %v5313 = vsub.f32 %v4265, %v5312
        %5314 = vmatmul.f32.gmra.mxu0 %v5313
        %v5315 = vpop.f32.mrf.mxu0
        %v5316 = vadd.f32 %v5285, %v5315
        %5317 = vdwg.mxu0
        %5318 = vmatpush.msra.mxu0 0.0
        %5319 = vmatpush.msra.mxu0 0.0
        %5320 = vmatpush.msra.mxu0 0.0
        %5321 = vmatpush.msra.mxu0 0.0
        %5322 = vmatpush.msra.mxu0 0.0
        %5323 = vmatpush.msra.mxu0 0.0
        %5324 = vmatpush.msra.mxu0 0.0
        %5325 = vmatpush.msra.mxu0 0.0
        %5326 = vmatpush.msra.mxu0 0.0
        %5327 = vmatpush.msra.mxu0 0.0
        %5328 = vmatpush.msra.mxu0 0.0
        %5329 = vmatpush.msra.mxu0 0.0
        %5330 = vmatpush.msra.mxu0 0.0
        %5331 = vmatpush.msra.mxu0 0.0
        %v5332 = vand.u32 %v1515, 4294901760
        %5333 = vmatpush.msra.mxu0 %v5332
        %v5334 = vand.u32 %v1511, 4294901760
        %5335 = vmatpush.msra.mxu0 %v5334
        %v5336 = vand.u32 %v4262, 4294901760
        %v5337 = vsub.f32 %v4262, %v5336
        %v5338 = vand.u32 %v5337, 4294901760
        %5339 = vmatmul.f32.gmra.mxu0 %v5338
        %v5340 = vpop.f32.mrf.mxu0
        %v5341 = vadd.f32 %v5311, %v5340
        %v5342 = vand.u32 %v4265, 4294901760
        %v5343 = vsub.f32 %v4265, %v5342
        %v5344 = vand.u32 %v5343, 4294901760
        %5345 = vmatmul.f32.gmra.mxu0 %v5344
        %v5346 = vpop.f32.mrf.mxu0
        %v5347 = vadd.f32 %v5316, %v5346
        %5348 = vdwg.mxu0
        %5349 = vmatpush.msra.mxu0 0.0
        %5350 = vmatpush.msra.mxu0 0.0
        %5351 = vmatpush.msra.mxu0 0.0
        %5352 = vmatpush.msra.mxu0 0.0
        %5353 = vmatpush.msra.mxu0 0.0
        %5354 = vmatpush.msra.mxu0 0.0
        %5355 = vmatpush.msra.mxu0 0.0
        %5356 = vmatpush.msra.mxu0 0.0
        %5357 = vmatpush.msra.mxu0 0.0
        %5358 = vmatpush.msra.mxu0 0.0
        %5359 = vmatpush.msra.mxu0 0.0
        %5360 = vmatpush.msra.mxu0 0.0
        %5361 = vmatpush.msra.mxu0 0.0
        %5362 = vmatpush.msra.mxu0 0.0
        %v5363 = vand.u32 %v1515, 4294901760
        %v5364 = vsub.f32 %v1515, %v5363
        %v5365 = vand.u32 %v5364, 4294901760
        %5366 = vmatpush.msra.mxu0 %v5365
        %v5367 = vand.u32 %v1511, 4294901760
        %v5368 = vsub.f32 %v1511, %v5367
        %v5369 = vand.u32 %v5368, 4294901760
        %5370 = vmatpush.msra.mxu0 %v5369
        %v5371 = vand.u32 %v4262, 4294901760
        %5372 = vmatmul.f32.gmra.mxu0 %v5371
        %v5373 = vpop.f32.mrf.mxu0
        %v5374 = vadd.f32 %v5341, %v5373
        %v5375 = vand.u32 %v4265, 4294901760
        %5376 = vmatmul.f32.gmra.mxu0 %v5375
        %v5377 = vpop.f32.mrf.mxu0
        %v5378 = vadd.f32 %v5347, %v5377
        %5379 = vdwg.mxu0
        %5380 = vmatpush.msra.mxu0 0.0
        %5381 = vmatpush.msra.mxu0 0.0
        %5382 = vmatpush.msra.mxu0 0.0
        %5383 = vmatpush.msra.mxu0 0.0
        %5384 = vmatpush.msra.mxu0 0.0
        %5385 = vmatpush.msra.mxu0 0.0
        %5386 = vmatpush.msra.mxu0 0.0
        %5387 = vmatpush.msra.mxu0 0.0
        %5388 = vmatpush.msra.mxu0 0.0
        %5389 = vmatpush.msra.mxu0 0.0
        %5390 = vmatpush.msra.mxu0 0.0
        %5391 = vmatpush.msra.mxu0 0.0
        %5392 = vmatpush.msra.mxu0 0.0
        %5393 = vmatpush.msra.mxu0 0.0
        %v5394 = vand.u32 %v1515, 4294901760
        %5395 = vmatpush.msra.mxu0 %v5394
        %v5396 = vand.u32 %v1511, 4294901760
        %5397 = vmatpush.msra.mxu0 %v5396
        %v5398 = vand.u32 %v4262, 4294901760
        %5399 = vmatmul.f32.gmra.mxu0 %v5398
        %v5400 = vpop.f32.mrf.mxu0
        %v5401 = vadd.f32 %v5374, %v5400
        %v5402 = vand.u32 %v4265, 4294901760
        %5403 = vmatmul.f32.gmra.mxu0 %v5402
        %v5404 = vpop.f32.mrf.mxu0
        %v5405 = vadd.f32 %v5378, %v5404
        %5406 = vdwg.mxu0
        %5407 = vmatpush.msra.mxu0 0.0
        %5408 = vmatpush.msra.mxu0 0.0
        %5409 = vmatpush.msra.mxu0 0.0
        %5410 = vmatpush.msra.mxu0 0.0
        %5411 = vmatpush.msra.mxu0 0.0
        %5412 = vmatpush.msra.mxu0 0.0
        %5413 = vmatpush.msra.mxu0 0.0
        %5414 = vmatpush.msra.mxu0 0.0
        %5415 = vmatpush.msra.mxu0 0.0
        %5416 = vmatpush.msra.mxu0 0.0
        %5417 = vmatpush.msra.mxu0 0.0
        %5418 = vmatpush.msra.mxu0 0.0
        %5419 = vmatpush.msra.mxu0 0.0
        %5420 = vmatpush.msra.mxu0 0.0
        %v5421 = vand.u32 %v1711, 4294901760
        %5422 = vmatpush.msra.mxu0 %v5421
        %v5423 = vand.u32 %v1707, 4294901760
        %5424 = vmatpush.msra.mxu0 %v5423
        %v5425 = vand.u32 %v4262, 4294901760
        %v5426 = vsub.f32 %v4262, %v5425
        %v5427 = vand.u32 %v5426, 4294901760
        %v5428 = vsub.f32 %v5426, %v5427
        %v5429 = vand.u32 %v5428, 4294901760
        %5430 = vmatmul.f32.gmra.mxu0 %v5429
        %v5431 = vpop.f32.mrf.mxu0
        %v5432 = vadd.f32 0.0, %v5431
        %v5433 = vand.u32 %v4265, 4294901760
        %v5434 = vsub.f32 %v4265, %v5433
        %v5435 = vand.u32 %v5434, 4294901760
        %v5436 = vsub.f32 %v5434, %v5435
        %v5437 = vand.u32 %v5436, 4294901760
        %5438 = vmatmul.f32.gmra.mxu0 %v5437
        %v5439 = vpop.f32.mrf.mxu0
        %v5440 = vadd.f32 0.0, %v5439
        %5441 = vdwg.mxu0
        %5442 = vmatpush.msra.mxu0 0.0
        %5443 = vmatpush.msra.mxu0 0.0
        %5444 = vmatpush.msra.mxu0 0.0
        %5445 = vmatpush.msra.mxu0 0.0
        %5446 = vmatpush.msra.mxu0 0.0
        %5447 = vmatpush.msra.mxu0 0.0
        %5448 = vmatpush.msra.mxu0 0.0
        %5449 = vmatpush.msra.mxu0 0.0
        %5450 = vmatpush.msra.mxu0 0.0
        %5451 = vmatpush.msra.mxu0 0.0
        %5452 = vmatpush.msra.mxu0 0.0
        %5453 = vmatpush.msra.mxu0 0.0
        %5454 = vmatpush.msra.mxu0 0.0
        %5455 = vmatpush.msra.mxu0 0.0
        %v5456 = vand.u32 %v1711, 4294901760
        %v5457 = vsub.f32 %v1711, %v5456
        %v5458 = vand.u32 %v5457, 4294901760
        %v5459 = vsub.f32 %v5457, %v5458
        %v5460 = vand.u32 %v5459, 4294901760
        %5461 = vmatpush.msra.mxu0 %v5460
        %v5462 = vand.u32 %v1707, 4294901760
        %v5463 = vsub.f32 %v1707, %v5462
        %v5464 = vand.u32 %v5463, 4294901760
        %v5465 = vsub.f32 %v5463, %v5464
        %v5466 = vand.u32 %v5465, 4294901760
        %5467 = vmatpush.msra.mxu0 %v5466
        %v5468 = vand.u32 %v4262, 4294901760
        %5469 = vmatmul.f32.gmra.mxu0 %v5468
        %v5470 = vpop.f32.mrf.mxu0
        %v5471 = vadd.f32 %v5432, %v5470
        %v5472 = vand.u32 %v4265, 4294901760
        %5473 = vmatmul.f32.gmra.mxu0 %v5472
        %v5474 = vpop.f32.mrf.mxu0
        %v5475 = vadd.f32 %v5440, %v5474
        %5476 = vdwg.mxu0
        %5477 = vmatpush.msra.mxu0 0.0
        %5478 = vmatpush.msra.mxu0 0.0
        %5479 = vmatpush.msra.mxu0 0.0
        %5480 = vmatpush.msra.mxu0 0.0
        %5481 = vmatpush.msra.mxu0 0.0
        %5482 = vmatpush.msra.mxu0 0.0
        %5483 = vmatpush.msra.mxu0 0.0
        %5484 = vmatpush.msra.mxu0 0.0
        %5485 = vmatpush.msra.mxu0 0.0
        %5486 = vmatpush.msra.mxu0 0.0
        %5487 = vmatpush.msra.mxu0 0.0
        %5488 = vmatpush.msra.mxu0 0.0
        %5489 = vmatpush.msra.mxu0 0.0
        %5490 = vmatpush.msra.mxu0 0.0
        %v5491 = vand.u32 %v1711, 4294901760
        %v5492 = vsub.f32 %v1711, %v5491
        %5493 = vmatpush.msra.mxu0 %v5492
        %v5494 = vand.u32 %v1707, 4294901760
        %v5495 = vsub.f32 %v1707, %v5494
        %5496 = vmatpush.msra.mxu0 %v5495
        %v5497 = vand.u32 %v4262, 4294901760
        %v5498 = vsub.f32 %v4262, %v5497
        %5499 = vmatmul.f32.gmra.mxu0 %v5498
        %v5500 = vpop.f32.mrf.mxu0
        %v5501 = vadd.f32 %v5471, %v5500
        %v5502 = vand.u32 %v4265, 4294901760
        %v5503 = vsub.f32 %v4265, %v5502
        %5504 = vmatmul.f32.gmra.mxu0 %v5503
        %v5505 = vpop.f32.mrf.mxu0
        %v5506 = vadd.f32 %v5475, %v5505
        %5507 = vdwg.mxu0
        %5508 = vmatpush.msra.mxu0 0.0
        %5509 = vmatpush.msra.mxu0 0.0
        %5510 = vmatpush.msra.mxu0 0.0
        %5511 = vmatpush.msra.mxu0 0.0
        %5512 = vmatpush.msra.mxu0 0.0
        %5513 = vmatpush.msra.mxu0 0.0
        %5514 = vmatpush.msra.mxu0 0.0
        %5515 = vmatpush.msra.mxu0 0.0
        %5516 = vmatpush.msra.mxu0 0.0
        %5517 = vmatpush.msra.mxu0 0.0
        %5518 = vmatpush.msra.mxu0 0.0
        %5519 = vmatpush.msra.mxu0 0.0
        %5520 = vmatpush.msra.mxu0 0.0
        %5521 = vmatpush.msra.mxu0 0.0
        %v5522 = vand.u32 %v1711, 4294901760
        %5523 = vmatpush.msra.mxu0 %v5522
        %v5524 = vand.u32 %v1707, 4294901760
        %5525 = vmatpush.msra.mxu0 %v5524
        %v5526 = vand.u32 %v4262, 4294901760
        %v5527 = vsub.f32 %v4262, %v5526
        %v5528 = vand.u32 %v5527, 4294901760
        %5529 = vmatmul.f32.gmra.mxu0 %v5528
        %v5530 = vpop.f32.mrf.mxu0
        %v5531 = vadd.f32 %v5501, %v5530
        %v5532 = vand.u32 %v4265, 4294901760
        %v5533 = vsub.f32 %v4265, %v5532
        %v5534 = vand.u32 %v5533, 4294901760
        %5535 = vmatmul.f32.gmra.mxu0 %v5534
        %v5536 = vpop.f32.mrf.mxu0
        %v5537 = vadd.f32 %v5506, %v5536
        %5538 = vdwg.mxu0
        %5539 = vmatpush.msra.mxu0 0.0
        %5540 = vmatpush.msra.mxu0 0.0
        %5541 = vmatpush.msra.mxu0 0.0
        %5542 = vmatpush.msra.mxu0 0.0
        %5543 = vmatpush.msra.mxu0 0.0
        %5544 = vmatpush.msra.mxu0 0.0
        %5545 = vmatpush.msra.mxu0 0.0
        %5546 = vmatpush.msra.mxu0 0.0
        %5547 = vmatpush.msra.mxu0 0.0
        %5548 = vmatpush.msra.mxu0 0.0
        %5549 = vmatpush.msra.mxu0 0.0
        %5550 = vmatpush.msra.mxu0 0.0
        %5551 = vmatpush.msra.mxu0 0.0
        %5552 = vmatpush.msra.mxu0 0.0
        %v5553 = vand.u32 %v1711, 4294901760
        %v5554 = vsub.f32 %v1711, %v5553
        %v5555 = vand.u32 %v5554, 4294901760
        %5556 = vmatpush.msra.mxu0 %v5555
        %v5557 = vand.u32 %v1707, 4294901760
        %v5558 = vsub.f32 %v1707, %v5557
        %v5559 = vand.u32 %v5558, 4294901760
        %5560 = vmatpush.msra.mxu0 %v5559
        %v5561 = vand.u32 %v4262, 4294901760
        %5562 = vmatmul.f32.gmra.mxu0 %v5561
        %v5563 = vpop.f32.mrf.mxu0
        %v5564 = vadd.f32 %v5531, %v5563
        %v5565 = vand.u32 %v4265, 4294901760
        %5566 = vmatmul.f32.gmra.mxu0 %v5565
        %v5567 = vpop.f32.mrf.mxu0
        %v5568 = vadd.f32 %v5537, %v5567
        %5569 = vdwg.mxu0
        %5570 = vmatpush.msra.mxu0 0.0
        %5571 = vmatpush.msra.mxu0 0.0
        %5572 = vmatpush.msra.mxu0 0.0
        %5573 = vmatpush.msra.mxu0 0.0
        %5574 = vmatpush.msra.mxu0 0.0
        %5575 = vmatpush.msra.mxu0 0.0
        %5576 = vmatpush.msra.mxu0 0.0
        %5577 = vmatpush.msra.mxu0 0.0
        %5578 = vmatpush.msra.mxu0 0.0
        %5579 = vmatpush.msra.mxu0 0.0
        %5580 = vmatpush.msra.mxu0 0.0
        %5581 = vmatpush.msra.mxu0 0.0
        %5582 = vmatpush.msra.mxu0 0.0
        %5583 = vmatpush.msra.mxu0 0.0
        %v5584 = vand.u32 %v1711, 4294901760
        %5585 = vmatpush.msra.mxu0 %v5584
        %v5586 = vand.u32 %v1707, 4294901760
        %5587 = vmatpush.msra.mxu0 %v5586
        %v5588 = vand.u32 %v4262, 4294901760
        %5589 = vmatmul.f32.gmra.mxu0 %v5588
        %v5590 = vpop.f32.mrf.mxu0
        %v5591 = vadd.f32 %v5564, %v5590
        %v5592 = vand.u32 %v4265, 4294901760
        %5593 = vmatmul.f32.gmra.mxu0 %v5592
        %v5594 = vpop.f32.mrf.mxu0
        %v5595 = vadd.f32 %v5568, %v5594
        %5596 = vdwg.mxu0
        %5597 = vmatpush.msra.mxu0 0.0
        %5598 = vmatpush.msra.mxu0 0.0
        %5599 = vmatpush.msra.mxu0 0.0
        %5600 = vmatpush.msra.mxu0 0.0
        %5601 = vmatpush.msra.mxu0 0.0
        %5602 = vmatpush.msra.mxu0 0.0
        %5603 = vmatpush.msra.mxu0 0.0
        %5604 = vmatpush.msra.mxu0 0.0
        %5605 = vmatpush.msra.mxu0 0.0
        %5606 = vmatpush.msra.mxu0 0.0
        %5607 = vmatpush.msra.mxu0 0.0
        %5608 = vmatpush.msra.mxu0 0.0
        %5609 = vmatpush.msra.mxu0 0.0
        %5610 = vmatpush.msra.mxu0 0.0
        %v5611 = vand.u32 %v1907, 4294901760
        %5612 = vmatpush.msra.mxu0 %v5611
        %v5613 = vand.u32 %v1903, 4294901760
        %5614 = vmatpush.msra.mxu0 %v5613
        %v5615 = vand.u32 %v4262, 4294901760
        %v5616 = vsub.f32 %v4262, %v5615
        %v5617 = vand.u32 %v5616, 4294901760
        %v5618 = vsub.f32 %v5616, %v5617
        %v5619 = vand.u32 %v5618, 4294901760
        %5620 = vmatmul.f32.gmra.mxu0 %v5619
        %v5621 = vpop.f32.mrf.mxu0
        %v5622 = vadd.f32 0.0, %v5621
        %v5623 = vand.u32 %v4265, 4294901760
        %v5624 = vsub.f32 %v4265, %v5623
        %v5625 = vand.u32 %v5624, 4294901760
        %v5626 = vsub.f32 %v5624, %v5625
        %v5627 = vand.u32 %v5626, 4294901760
        %5628 = vmatmul.f32.gmra.mxu0 %v5627
        %v5629 = vpop.f32.mrf.mxu0
        %v5630 = vadd.f32 0.0, %v5629
        %5631 = vdwg.mxu0
        %5632 = vmatpush.msra.mxu0 0.0
        %5633 = vmatpush.msra.mxu0 0.0
        %5634 = vmatpush.msra.mxu0 0.0
        %5635 = vmatpush.msra.mxu0 0.0
        %5636 = vmatpush.msra.mxu0 0.0
        %5637 = vmatpush.msra.mxu0 0.0
        %5638 = vmatpush.msra.mxu0 0.0
        %5639 = vmatpush.msra.mxu0 0.0
        %5640 = vmatpush.msra.mxu0 0.0
        %5641 = vmatpush.msra.mxu0 0.0
        %5642 = vmatpush.msra.mxu0 0.0
        %5643 = vmatpush.msra.mxu0 0.0
        %5644 = vmatpush.msra.mxu0 0.0
        %5645 = vmatpush.msra.mxu0 0.0
        %v5646 = vand.u32 %v1907, 4294901760
        %v5647 = vsub.f32 %v1907, %v5646
        %v5648 = vand.u32 %v5647, 4294901760
        %v5649 = vsub.f32 %v5647, %v5648
        %v5650 = vand.u32 %v5649, 4294901760
        %5651 = vmatpush.msra.mxu0 %v5650
        %v5652 = vand.u32 %v1903, 4294901760
        %v5653 = vsub.f32 %v1903, %v5652
        %v5654 = vand.u32 %v5653, 4294901760
        %v5655 = vsub.f32 %v5653, %v5654
        %v5656 = vand.u32 %v5655, 4294901760
        %5657 = vmatpush.msra.mxu0 %v5656
        %v5658 = vand.u32 %v4262, 4294901760
        %5659 = vmatmul.f32.gmra.mxu0 %v5658
        %v5660 = vpop.f32.mrf.mxu0
        %v5661 = vadd.f32 %v5622, %v5660
        %v5662 = vand.u32 %v4265, 4294901760
        %5663 = vmatmul.f32.gmra.mxu0 %v5662
        %v5664 = vpop.f32.mrf.mxu0
        %v5665 = vadd.f32 %v5630, %v5664
        %5666 = vdwg.mxu0
        %5667 = vmatpush.msra.mxu0 0.0
        %5668 = vmatpush.msra.mxu0 0.0
        %5669 = vmatpush.msra.mxu0 0.0
        %5670 = vmatpush.msra.mxu0 0.0
        %5671 = vmatpush.msra.mxu0 0.0
        %5672 = vmatpush.msra.mxu0 0.0
        %5673 = vmatpush.msra.mxu0 0.0
        %5674 = vmatpush.msra.mxu0 0.0
        %5675 = vmatpush.msra.mxu0 0.0
        %5676 = vmatpush.msra.mxu0 0.0
        %5677 = vmatpush.msra.mxu0 0.0
        %5678 = vmatpush.msra.mxu0 0.0
        %5679 = vmatpush.msra.mxu0 0.0
        %5680 = vmatpush.msra.mxu0 0.0
        %v5681 = vand.u32 %v1907, 4294901760
        %v5682 = vsub.f32 %v1907, %v5681
        %5683 = vmatpush.msra.mxu0 %v5682
        %v5684 = vand.u32 %v1903, 4294901760
        %v5685 = vsub.f32 %v1903, %v5684
        %5686 = vmatpush.msra.mxu0 %v5685
        %v5687 = vand.u32 %v4262, 4294901760
        %v5688 = vsub.f32 %v4262, %v5687
        %5689 = vmatmul.f32.gmra.mxu0 %v5688
        %v5690 = vpop.f32.mrf.mxu0
        %v5691 = vadd.f32 %v5661, %v5690
        %v5692 = vand.u32 %v4265, 4294901760
        %v5693 = vsub.f32 %v4265, %v5692
        %5694 = vmatmul.f32.gmra.mxu0 %v5693
        %v5695 = vpop.f32.mrf.mxu0
        %v5696 = vadd.f32 %v5665, %v5695
        %5697 = vdwg.mxu0
        %5698 = vmatpush.msra.mxu0 0.0
        %5699 = vmatpush.msra.mxu0 0.0
        %5700 = vmatpush.msra.mxu0 0.0
        %5701 = vmatpush.msra.mxu0 0.0
        %5702 = vmatpush.msra.mxu0 0.0
        %5703 = vmatpush.msra.mxu0 0.0
        %5704 = vmatpush.msra.mxu0 0.0
        %5705 = vmatpush.msra.mxu0 0.0
        %5706 = vmatpush.msra.mxu0 0.0
        %5707 = vmatpush.msra.mxu0 0.0
        %5708 = vmatpush.msra.mxu0 0.0
        %5709 = vmatpush.msra.mxu0 0.0
        %5710 = vmatpush.msra.mxu0 0.0
        %5711 = vmatpush.msra.mxu0 0.0
        %v5712 = vand.u32 %v1907, 4294901760
        %5713 = vmatpush.msra.mxu0 %v5712
        %v5714 = vand.u32 %v1903, 4294901760
        %5715 = vmatpush.msra.mxu0 %v5714
        %v5716 = vand.u32 %v4262, 4294901760
        %v5717 = vsub.f32 %v4262, %v5716
        %v5718 = vand.u32 %v5717, 4294901760
        %5719 = vmatmul.f32.gmra.mxu0 %v5718
        %v5720 = vpop.f32.mrf.mxu0
        %v5721 = vadd.f32 %v5691, %v5720
        %v5722 = vand.u32 %v4265, 4294901760
        %v5723 = vsub.f32 %v4265, %v5722
        %v5724 = vand.u32 %v5723, 4294901760
        %5725 = vmatmul.f32.gmra.mxu0 %v5724
        %v5726 = vpop.f32.mrf.mxu0
        %v5727 = vadd.f32 %v5696, %v5726
        %5728 = vdwg.mxu0
        %5729 = vmatpush.msra.mxu0 0.0
        %5730 = vmatpush.msra.mxu0 0.0
        %5731 = vmatpush.msra.mxu0 0.0
        %5732 = vmatpush.msra.mxu0 0.0
        %5733 = vmatpush.msra.mxu0 0.0
        %5734 = vmatpush.msra.mxu0 0.0
        %5735 = vmatpush.msra.mxu0 0.0
        %5736 = vmatpush.msra.mxu0 0.0
        %5737 = vmatpush.msra.mxu0 0.0
        %5738 = vmatpush.msra.mxu0 0.0
        %5739 = vmatpush.msra.mxu0 0.0
        %5740 = vmatpush.msra.mxu0 0.0
        %5741 = vmatpush.msra.mxu0 0.0
        %5742 = vmatpush.msra.mxu0 0.0
        %v5743 = vand.u32 %v1907, 4294901760
        %v5744 = vsub.f32 %v1907, %v5743
        %v5745 = vand.u32 %v5744, 4294901760
        %5746 = vmatpush.msra.mxu0 %v5745
        %v5747 = vand.u32 %v1903, 4294901760
        %v5748 = vsub.f32 %v1903, %v5747
        %v5749 = vand.u32 %v5748, 4294901760
        %5750 = vmatpush.msra.mxu0 %v5749
        %v5751 = vand.u32 %v4262, 4294901760
        %5752 = vmatmul.f32.gmra.mxu0 %v5751
        %v5753 = vpop.f32.mrf.mxu0
        %v5754 = vadd.f32 %v5721, %v5753
        %v5755 = vand.u32 %v4265, 4294901760
        %5756 = vmatmul.f32.gmra.mxu0 %v5755
        %v5757 = vpop.f32.mrf.mxu0
        %v5758 = vadd.f32 %v5727, %v5757
        %5759 = vdwg.mxu0
        %5760 = vmatpush.msra.mxu0 0.0
        %5761 = vmatpush.msra.mxu0 0.0
        %5762 = vmatpush.msra.mxu0 0.0
        %5763 = vmatpush.msra.mxu0 0.0
        %5764 = vmatpush.msra.mxu0 0.0
        %5765 = vmatpush.msra.mxu0 0.0
        %5766 = vmatpush.msra.mxu0 0.0
        %5767 = vmatpush.msra.mxu0 0.0
        %5768 = vmatpush.msra.mxu0 0.0
        %5769 = vmatpush.msra.mxu0 0.0
        %5770 = vmatpush.msra.mxu0 0.0
        %5771 = vmatpush.msra.mxu0 0.0
        %5772 = vmatpush.msra.mxu0 0.0
        %5773 = vmatpush.msra.mxu0 0.0
        %v5774 = vand.u32 %v1907, 4294901760
        %5775 = vmatpush.msra.mxu0 %v5774
        %v5776 = vand.u32 %v1903, 4294901760
        %5777 = vmatpush.msra.mxu0 %v5776
        %v5778 = vand.u32 %v4262, 4294901760
        %5779 = vmatmul.f32.gmra.mxu0 %v5778
        %v5780 = vpop.f32.mrf.mxu0
        %v5781 = vadd.f32 %v5754, %v5780
        %v5782 = vand.u32 %v4265, 4294901760
        %5783 = vmatmul.f32.gmra.mxu0 %v5782
        %v5784 = vpop.f32.mrf.mxu0
        %v5785 = vadd.f32 %v5758, %v5784
        %5786 = vdwg.mxu0
        %5787 = vmatpush.msra.mxu0 0.0
        %5788 = vmatpush.msra.mxu0 0.0
        %5789 = vmatpush.msra.mxu0 0.0
        %5790 = vmatpush.msra.mxu0 0.0
        %5791 = vmatpush.msra.mxu0 0.0
        %5792 = vmatpush.msra.mxu0 0.0
        %5793 = vmatpush.msra.mxu0 0.0
        %5794 = vmatpush.msra.mxu0 0.0
        %5795 = vmatpush.msra.mxu0 0.0
        %5796 = vmatpush.msra.mxu0 0.0
        %5797 = vmatpush.msra.mxu0 0.0
        %5798 = vmatpush.msra.mxu0 0.0
        %5799 = vmatpush.msra.mxu0 0.0
        %5800 = vmatpush.msra.mxu0 0.0
        %v5801 = vand.u32 %v2103, 4294901760
        %5802 = vmatpush.msra.mxu0 %v5801
        %v5803 = vand.u32 %v2099, 4294901760
        %5804 = vmatpush.msra.mxu0 %v5803
        %v5805 = vand.u32 %v4262, 4294901760
        %v5806 = vsub.f32 %v4262, %v5805
        %v5807 = vand.u32 %v5806, 4294901760
        %v5808 = vsub.f32 %v5806, %v5807
        %v5809 = vand.u32 %v5808, 4294901760
        %5810 = vmatmul.f32.gmra.mxu0 %v5809
        %v5811 = vpop.f32.mrf.mxu0
        %v5812 = vadd.f32 0.0, %v5811
        %v5813 = vand.u32 %v4265, 4294901760
        %v5814 = vsub.f32 %v4265, %v5813
        %v5815 = vand.u32 %v5814, 4294901760
        %v5816 = vsub.f32 %v5814, %v5815
        %v5817 = vand.u32 %v5816, 4294901760
        %5818 = vmatmul.f32.gmra.mxu0 %v5817
        %v5819 = vpop.f32.mrf.mxu0
        %v5820 = vadd.f32 0.0, %v5819
        %5821 = vdwg.mxu0
        %5822 = vmatpush.msra.mxu0 0.0
        %5823 = vmatpush.msra.mxu0 0.0
        %5824 = vmatpush.msra.mxu0 0.0
        %5825 = vmatpush.msra.mxu0 0.0
        %5826 = vmatpush.msra.mxu0 0.0
        %5827 = vmatpush.msra.mxu0 0.0
        %5828 = vmatpush.msra.mxu0 0.0
        %5829 = vmatpush.msra.mxu0 0.0
        %5830 = vmatpush.msra.mxu0 0.0
        %5831 = vmatpush.msra.mxu0 0.0
        %5832 = vmatpush.msra.mxu0 0.0
        %5833 = vmatpush.msra.mxu0 0.0
        %5834 = vmatpush.msra.mxu0 0.0
        %5835 = vmatpush.msra.mxu0 0.0
        %v5836 = vand.u32 %v2103, 4294901760
        %v5837 = vsub.f32 %v2103, %v5836
        %v5838 = vand.u32 %v5837, 4294901760
        %v5839 = vsub.f32 %v5837, %v5838
        %v5840 = vand.u32 %v5839, 4294901760
        %5841 = vmatpush.msra.mxu0 %v5840
        %v5842 = vand.u32 %v2099, 4294901760
        %v5843 = vsub.f32 %v2099, %v5842
        %v5844 = vand.u32 %v5843, 4294901760
        %v5845 = vsub.f32 %v5843, %v5844
        %v5846 = vand.u32 %v5845, 4294901760
        %5847 = vmatpush.msra.mxu0 %v5846
        %v5848 = vand.u32 %v4262, 4294901760
        %5849 = vmatmul.f32.gmra.mxu0 %v5848
        %v5850 = vpop.f32.mrf.mxu0
        %v5851 = vadd.f32 %v5812, %v5850
        %v5852 = vand.u32 %v4265, 4294901760
        %5853 = vmatmul.f32.gmra.mxu0 %v5852
        %v5854 = vpop.f32.mrf.mxu0
        %v5855 = vadd.f32 %v5820, %v5854
        %5856 = vdwg.mxu0
        %5857 = vmatpush.msra.mxu0 0.0
        %5858 = vmatpush.msra.mxu0 0.0
        %5859 = vmatpush.msra.mxu0 0.0
        %5860 = vmatpush.msra.mxu0 0.0
        %5861 = vmatpush.msra.mxu0 0.0
        %5862 = vmatpush.msra.mxu0 0.0
        %5863 = vmatpush.msra.mxu0 0.0
        %5864 = vmatpush.msra.mxu0 0.0
        %5865 = vmatpush.msra.mxu0 0.0
        %5866 = vmatpush.msra.mxu0 0.0
        %5867 = vmatpush.msra.mxu0 0.0
        %5868 = vmatpush.msra.mxu0 0.0
        %5869 = vmatpush.msra.mxu0 0.0
        %5870 = vmatpush.msra.mxu0 0.0
        %v5871 = vand.u32 %v2103, 4294901760
        %v5872 = vsub.f32 %v2103, %v5871
        %5873 = vmatpush.msra.mxu0 %v5872
        %v5874 = vand.u32 %v2099, 4294901760
        %v5875 = vsub.f32 %v2099, %v5874
        %5876 = vmatpush.msra.mxu0 %v5875
        %v5877 = vand.u32 %v4262, 4294901760
        %v5878 = vsub.f32 %v4262, %v5877
        %5879 = vmatmul.f32.gmra.mxu0 %v5878
        %v5880 = vpop.f32.mrf.mxu0
        %v5881 = vadd.f32 %v5851, %v5880
        %v5882 = vand.u32 %v4265, 4294901760
        %v5883 = vsub.f32 %v4265, %v5882
        %5884 = vmatmul.f32.gmra.mxu0 %v5883
        %v5885 = vpop.f32.mrf.mxu0
        %v5886 = vadd.f32 %v5855, %v5885
        %5887 = vdwg.mxu0
        %5888 = vmatpush.msra.mxu0 0.0
        %5889 = vmatpush.msra.mxu0 0.0
        %5890 = vmatpush.msra.mxu0 0.0
        %5891 = vmatpush.msra.mxu0 0.0
        %5892 = vmatpush.msra.mxu0 0.0
        %5893 = vmatpush.msra.mxu0 0.0
        %5894 = vmatpush.msra.mxu0 0.0
        %5895 = vmatpush.msra.mxu0 0.0
        %5896 = vmatpush.msra.mxu0 0.0
        %5897 = vmatpush.msra.mxu0 0.0
        %5898 = vmatpush.msra.mxu0 0.0
        %5899 = vmatpush.msra.mxu0 0.0
        %5900 = vmatpush.msra.mxu0 0.0
        %5901 = vmatpush.msra.mxu0 0.0
        %v5902 = vand.u32 %v2103, 4294901760
        %5903 = vmatpush.msra.mxu0 %v5902
        %v5904 = vand.u32 %v2099, 4294901760
        %5905 = vmatpush.msra.mxu0 %v5904
        %v5906 = vand.u32 %v4262, 4294901760
        %v5907 = vsub.f32 %v4262, %v5906
        %v5908 = vand.u32 %v5907, 4294901760
        %5909 = vmatmul.f32.gmra.mxu0 %v5908
        %v5910 = vpop.f32.mrf.mxu0
        %v5911 = vadd.f32 %v5881, %v5910
        %v5912 = vand.u32 %v4265, 4294901760
        %v5913 = vsub.f32 %v4265, %v5912
        %v5914 = vand.u32 %v5913, 4294901760
        %5915 = vmatmul.f32.gmra.mxu0 %v5914
        %v5916 = vpop.f32.mrf.mxu0
        %v5917 = vadd.f32 %v5886, %v5916
        %5918 = vdwg.mxu0
        %5919 = vmatpush.msra.mxu0 0.0
        %5920 = vmatpush.msra.mxu0 0.0
        %5921 = vmatpush.msra.mxu0 0.0
        %5922 = vmatpush.msra.mxu0 0.0
        %5923 = vmatpush.msra.mxu0 0.0
        %5924 = vmatpush.msra.mxu0 0.0
        %5925 = vmatpush.msra.mxu0 0.0
        %5926 = vmatpush.msra.mxu0 0.0
        %5927 = vmatpush.msra.mxu0 0.0
        %5928 = vmatpush.msra.mxu0 0.0
        %5929 = vmatpush.msra.mxu0 0.0
        %5930 = vmatpush.msra.mxu0 0.0
        %5931 = vmatpush.msra.mxu0 0.0
        %5932 = vmatpush.msra.mxu0 0.0
        %v5933 = vand.u32 %v2103, 4294901760
        %v5934 = vsub.f32 %v2103, %v5933
        %v5935 = vand.u32 %v5934, 4294901760
        %5936 = vmatpush.msra.mxu0 %v5935
        %v5937 = vand.u32 %v2099, 4294901760
        %v5938 = vsub.f32 %v2099, %v5937
        %v5939 = vand.u32 %v5938, 4294901760
        %5940 = vmatpush.msra.mxu0 %v5939
        %v5941 = vand.u32 %v4262, 4294901760
        %5942 = vmatmul.f32.gmra.mxu0 %v5941
        %v5943 = vpop.f32.mrf.mxu0
        %v5944 = vadd.f32 %v5911, %v5943
        %v5945 = vand.u32 %v4265, 4294901760
        %5946 = vmatmul.f32.gmra.mxu0 %v5945
        %v5947 = vpop.f32.mrf.mxu0
        %v5948 = vadd.f32 %v5917, %v5947
        %5949 = vdwg.mxu0
        %5950 = vmatpush.msra.mxu0 0.0
        %5951 = vmatpush.msra.mxu0 0.0
        %5952 = vmatpush.msra.mxu0 0.0
        %5953 = vmatpush.msra.mxu0 0.0
        %5954 = vmatpush.msra.mxu0 0.0
        %5955 = vmatpush.msra.mxu0 0.0
        %5956 = vmatpush.msra.mxu0 0.0
        %5957 = vmatpush.msra.mxu0 0.0
        %5958 = vmatpush.msra.mxu0 0.0
        %5959 = vmatpush.msra.mxu0 0.0
        %5960 = vmatpush.msra.mxu0 0.0
        %5961 = vmatpush.msra.mxu0 0.0
        %5962 = vmatpush.msra.mxu0 0.0
        %5963 = vmatpush.msra.mxu0 0.0
        %v5964 = vand.u32 %v2103, 4294901760
        %5965 = vmatpush.msra.mxu0 %v5964
        %v5966 = vand.u32 %v2099, 4294901760
        %5967 = vmatpush.msra.mxu0 %v5966
        %v5968 = vand.u32 %v4262, 4294901760
        %5969 = vmatmul.f32.gmra.mxu0 %v5968
        %v5970 = vpop.f32.mrf.mxu0
        %v5971 = vadd.f32 %v5944, %v5970
        %v5972 = vand.u32 %v4265, 4294901760
        %5973 = vmatmul.f32.gmra.mxu0 %v5972
        %v5974 = vpop.f32.mrf.mxu0
        %v5975 = vadd.f32 %v5948, %v5974
        %5976 = vdwg.mxu0
        %5977 = vmatpush.msra.mxu0 0.0
        %5978 = vmatpush.msra.mxu0 0.0
        %5979 = vmatpush.msra.mxu0 0.0
        %5980 = vmatpush.msra.mxu0 0.0
        %5981 = vmatpush.msra.mxu0 0.0
        %5982 = vmatpush.msra.mxu0 0.0
        %5983 = vmatpush.msra.mxu0 0.0
        %5984 = vmatpush.msra.mxu0 0.0
        %5985 = vmatpush.msra.mxu0 0.0
        %5986 = vmatpush.msra.mxu0 0.0
        %5987 = vmatpush.msra.mxu0 0.0
        %5988 = vmatpush.msra.mxu0 0.0
        %5989 = vmatpush.msra.mxu0 0.0
        %5990 = vmatpush.msra.mxu0 0.0
        %v5991 = vand.u32 %v2299, 4294901760
        %5992 = vmatpush.msra.mxu0 %v5991
        %v5993 = vand.u32 %v2295, 4294901760
        %5994 = vmatpush.msra.mxu0 %v5993
        %v5995 = vand.u32 %v4262, 4294901760
        %v5996 = vsub.f32 %v4262, %v5995
        %v5997 = vand.u32 %v5996, 4294901760
        %v5998 = vsub.f32 %v5996, %v5997
        %v5999 = vand.u32 %v5998, 4294901760
        %6000 = vmatmul.f32.gmra.mxu0 %v5999
        %v6001 = vpop.f32.mrf.mxu0
        %v6002 = vadd.f32 0.0, %v6001
        %v6003 = vand.u32 %v4265, 4294901760
        %v6004 = vsub.f32 %v4265, %v6003
        %v6005 = vand.u32 %v6004, 4294901760
        %v6006 = vsub.f32 %v6004, %v6005
        %v6007 = vand.u32 %v6006, 4294901760
        %6008 = vmatmul.f32.gmra.mxu0 %v6007
        %v6009 = vpop.f32.mrf.mxu0
        %v6010 = vadd.f32 0.0, %v6009
        %6011 = vdwg.mxu0
        %6012 = vmatpush.msra.mxu0 0.0
        %6013 = vmatpush.msra.mxu0 0.0
        %6014 = vmatpush.msra.mxu0 0.0
        %6015 = vmatpush.msra.mxu0 0.0
        %6016 = vmatpush.msra.mxu0 0.0
        %6017 = vmatpush.msra.mxu0 0.0
        %6018 = vmatpush.msra.mxu0 0.0
        %6019 = vmatpush.msra.mxu0 0.0
        %6020 = vmatpush.msra.mxu0 0.0
        %6021 = vmatpush.msra.mxu0 0.0
        %6022 = vmatpush.msra.mxu0 0.0
        %6023 = vmatpush.msra.mxu0 0.0
        %6024 = vmatpush.msra.mxu0 0.0
        %6025 = vmatpush.msra.mxu0 0.0
        %v6026 = vand.u32 %v2299, 4294901760
        %v6027 = vsub.f32 %v2299, %v6026
        %v6028 = vand.u32 %v6027, 4294901760
        %v6029 = vsub.f32 %v6027, %v6028
        %v6030 = vand.u32 %v6029, 4294901760
        %6031 = vmatpush.msra.mxu0 %v6030
        %v6032 = vand.u32 %v2295, 4294901760
        %v6033 = vsub.f32 %v2295, %v6032
        %v6034 = vand.u32 %v6033, 4294901760
        %v6035 = vsub.f32 %v6033, %v6034
        %v6036 = vand.u32 %v6035, 4294901760
        %6037 = vmatpush.msra.mxu0 %v6036
        %v6038 = vand.u32 %v4262, 4294901760
        %6039 = vmatmul.f32.gmra.mxu0 %v6038
        %v6040 = vpop.f32.mrf.mxu0
        %v6041 = vadd.f32 %v6002, %v6040
        %v6042 = vand.u32 %v4265, 4294901760
        %6043 = vmatmul.f32.gmra.mxu0 %v6042
        %v6044 = vpop.f32.mrf.mxu0
        %v6045 = vadd.f32 %v6010, %v6044
        %6046 = vdwg.mxu0
        %6047 = vmatpush.msra.mxu0 0.0
        %6048 = vmatpush.msra.mxu0 0.0
        %6049 = vmatpush.msra.mxu0 0.0
        %6050 = vmatpush.msra.mxu0 0.0
        %6051 = vmatpush.msra.mxu0 0.0
        %6052 = vmatpush.msra.mxu0 0.0
        %6053 = vmatpush.msra.mxu0 0.0
        %6054 = vmatpush.msra.mxu0 0.0
        %6055 = vmatpush.msra.mxu0 0.0
        %6056 = vmatpush.msra.mxu0 0.0
        %6057 = vmatpush.msra.mxu0 0.0
        %6058 = vmatpush.msra.mxu0 0.0
        %6059 = vmatpush.msra.mxu0 0.0
        %6060 = vmatpush.msra.mxu0 0.0
        %v6061 = vand.u32 %v2299, 4294901760
        %v6062 = vsub.f32 %v2299, %v6061
        %6063 = vmatpush.msra.mxu0 %v6062
        %v6064 = vand.u32 %v2295, 4294901760
        %v6065 = vsub.f32 %v2295, %v6064
        %6066 = vmatpush.msra.mxu0 %v6065
        %v6067 = vand.u32 %v4262, 4294901760
        %v6068 = vsub.f32 %v4262, %v6067
        %6069 = vmatmul.f32.gmra.mxu0 %v6068
        %v6070 = vpop.f32.mrf.mxu0
        %v6071 = vadd.f32 %v6041, %v6070
        %v6072 = vand.u32 %v4265, 4294901760
        %v6073 = vsub.f32 %v4265, %v6072
        %6074 = vmatmul.f32.gmra.mxu0 %v6073
        %v6075 = vpop.f32.mrf.mxu0
        %v6076 = vadd.f32 %v6045, %v6075
        %6077 = vdwg.mxu0
        %6078 = vmatpush.msra.mxu0 0.0
        %6079 = vmatpush.msra.mxu0 0.0
        %6080 = vmatpush.msra.mxu0 0.0
        %6081 = vmatpush.msra.mxu0 0.0
        %6082 = vmatpush.msra.mxu0 0.0
        %6083 = vmatpush.msra.mxu0 0.0
        %6084 = vmatpush.msra.mxu0 0.0
        %6085 = vmatpush.msra.mxu0 0.0
        %6086 = vmatpush.msra.mxu0 0.0
        %6087 = vmatpush.msra.mxu0 0.0
        %6088 = vmatpush.msra.mxu0 0.0
        %6089 = vmatpush.msra.mxu0 0.0
        %6090 = vmatpush.msra.mxu0 0.0
        %6091 = vmatpush.msra.mxu0 0.0
        %v6092 = vand.u32 %v2299, 4294901760
        %6093 = vmatpush.msra.mxu0 %v6092
        %v6094 = vand.u32 %v2295, 4294901760
        %6095 = vmatpush.msra.mxu0 %v6094
        %v6096 = vand.u32 %v4262, 4294901760
        %v6097 = vsub.f32 %v4262, %v6096
        %v6098 = vand.u32 %v6097, 4294901760
        %6099 = vmatmul.f32.gmra.mxu0 %v6098
        %v6100 = vpop.f32.mrf.mxu0
        %v6101 = vadd.f32 %v6071, %v6100
        %v6102 = vand.u32 %v4265, 4294901760
        %v6103 = vsub.f32 %v4265, %v6102
        %v6104 = vand.u32 %v6103, 4294901760
        %6105 = vmatmul.f32.gmra.mxu0 %v6104
        %v6106 = vpop.f32.mrf.mxu0
        %v6107 = vadd.f32 %v6076, %v6106
        %6108 = vdwg.mxu0
        %6109 = vmatpush.msra.mxu0 0.0
        %6110 = vmatpush.msra.mxu0 0.0
        %6111 = vmatpush.msra.mxu0 0.0
        %6112 = vmatpush.msra.mxu0 0.0
        %6113 = vmatpush.msra.mxu0 0.0
        %6114 = vmatpush.msra.mxu0 0.0
        %6115 = vmatpush.msra.mxu0 0.0
        %6116 = vmatpush.msra.mxu0 0.0
        %6117 = vmatpush.msra.mxu0 0.0
        %6118 = vmatpush.msra.mxu0 0.0
        %6119 = vmatpush.msra.mxu0 0.0
        %6120 = vmatpush.msra.mxu0 0.0
        %6121 = vmatpush.msra.mxu0 0.0
        %6122 = vmatpush.msra.mxu0 0.0
        %v6123 = vand.u32 %v2299, 4294901760
        %v6124 = vsub.f32 %v2299, %v6123
        %v6125 = vand.u32 %v6124, 4294901760
        %6126 = vmatpush.msra.mxu0 %v6125
        %v6127 = vand.u32 %v2295, 4294901760
        %v6128 = vsub.f32 %v2295, %v6127
        %v6129 = vand.u32 %v6128, 4294901760
        %6130 = vmatpush.msra.mxu0 %v6129
        %v6131 = vand.u32 %v4262, 4294901760
        %6132 = vmatmul.f32.gmra.mxu0 %v6131
        %v6133 = vpop.f32.mrf.mxu0
        %v6134 = vadd.f32 %v6101, %v6133
        %v6135 = vand.u32 %v4265, 4294901760
        %6136 = vmatmul.f32.gmra.mxu0 %v6135
        %v6137 = vpop.f32.mrf.mxu0
        %v6138 = vadd.f32 %v6107, %v6137
        %6139 = vdwg.mxu0
        %6140 = vmatpush.msra.mxu0 0.0
        %6141 = vmatpush.msra.mxu0 0.0
        %6142 = vmatpush.msra.mxu0 0.0
        %6143 = vmatpush.msra.mxu0 0.0
        %6144 = vmatpush.msra.mxu0 0.0
        %6145 = vmatpush.msra.mxu0 0.0
        %6146 = vmatpush.msra.mxu0 0.0
        %6147 = vmatpush.msra.mxu0 0.0
        %6148 = vmatpush.msra.mxu0 0.0
        %6149 = vmatpush.msra.mxu0 0.0
        %6150 = vmatpush.msra.mxu0 0.0
        %6151 = vmatpush.msra.mxu0 0.0
        %6152 = vmatpush.msra.mxu0 0.0
        %6153 = vmatpush.msra.mxu0 0.0
        %v6154 = vand.u32 %v2299, 4294901760
        %6155 = vmatpush.msra.mxu0 %v6154
        %v6156 = vand.u32 %v2295, 4294901760
        %6157 = vmatpush.msra.mxu0 %v6156
        %v6158 = vand.u32 %v4262, 4294901760
        %6159 = vmatmul.f32.gmra.mxu0 %v6158
        %v6160 = vpop.f32.mrf.mxu0
        %v6161 = vadd.f32 %v6134, %v6160
        %v6162 = vand.u32 %v4265, 4294901760
        %6163 = vmatmul.f32.gmra.mxu0 %v6162
        %v6164 = vpop.f32.mrf.mxu0
        %v6165 = vadd.f32 %v6138, %v6164
        %6166 = vdwg.mxu0
        %6167 = vmatpush.msra.mxu0 0.0
        %6168 = vmatpush.msra.mxu0 0.0
        %6169 = vmatpush.msra.mxu0 0.0
        %6170 = vmatpush.msra.mxu0 0.0
        %6171 = vmatpush.msra.mxu0 0.0
        %6172 = vmatpush.msra.mxu0 0.0
        %6173 = vmatpush.msra.mxu0 0.0
        %6174 = vmatpush.msra.mxu0 0.0
        %6175 = vmatpush.msra.mxu0 0.0
        %6176 = vmatpush.msra.mxu0 0.0
        %6177 = vmatpush.msra.mxu0 0.0
        %6178 = vmatpush.msra.mxu0 0.0
        %6179 = vmatpush.msra.mxu0 0.0
        %6180 = vmatpush.msra.mxu0 0.0
        %v6181 = vand.u32 %v2495, 4294901760
        %6182 = vmatpush.msra.mxu0 %v6181
        %v6183 = vand.u32 %v2491, 4294901760
        %6184 = vmatpush.msra.mxu0 %v6183
        %v6185 = vand.u32 %v4262, 4294901760
        %v6186 = vsub.f32 %v4262, %v6185
        %v6187 = vand.u32 %v6186, 4294901760
        %v6188 = vsub.f32 %v6186, %v6187
        %v6189 = vand.u32 %v6188, 4294901760
        %6190 = vmatmul.f32.gmra.mxu0 %v6189
        %v6191 = vpop.f32.mrf.mxu0
        %v6192 = vadd.f32 0.0, %v6191
        %v6193 = vand.u32 %v4265, 4294901760
        %v6194 = vsub.f32 %v4265, %v6193
        %v6195 = vand.u32 %v6194, 4294901760
        %v6196 = vsub.f32 %v6194, %v6195
        %v6197 = vand.u32 %v6196, 4294901760
        %6198 = vmatmul.f32.gmra.mxu0 %v6197
        %v6199 = vpop.f32.mrf.mxu0
        %v6200 = vadd.f32 0.0, %v6199
        %6201 = vdwg.mxu0
        %6202 = vmatpush.msra.mxu0 0.0
        %6203 = vmatpush.msra.mxu0 0.0
        %6204 = vmatpush.msra.mxu0 0.0
        %6205 = vmatpush.msra.mxu0 0.0
        %6206 = vmatpush.msra.mxu0 0.0
        %6207 = vmatpush.msra.mxu0 0.0
        %6208 = vmatpush.msra.mxu0 0.0
        %6209 = vmatpush.msra.mxu0 0.0
        %6210 = vmatpush.msra.mxu0 0.0
        %6211 = vmatpush.msra.mxu0 0.0
        %6212 = vmatpush.msra.mxu0 0.0
        %6213 = vmatpush.msra.mxu0 0.0
        %6214 = vmatpush.msra.mxu0 0.0
        %6215 = vmatpush.msra.mxu0 0.0
        %v6216 = vand.u32 %v2495, 4294901760
        %v6217 = vsub.f32 %v2495, %v6216
        %v6218 = vand.u32 %v6217, 4294901760
        %v6219 = vsub.f32 %v6217, %v6218
        %v6220 = vand.u32 %v6219, 4294901760
        %6221 = vmatpush.msra.mxu0 %v6220
        %v6222 = vand.u32 %v2491, 4294901760
        %v6223 = vsub.f32 %v2491, %v6222
        %v6224 = vand.u32 %v6223, 4294901760
        %v6225 = vsub.f32 %v6223, %v6224
        %v6226 = vand.u32 %v6225, 4294901760
        %6227 = vmatpush.msra.mxu0 %v6226
        %v6228 = vand.u32 %v4262, 4294901760
        %6229 = vmatmul.f32.gmra.mxu0 %v6228
        %v6230 = vpop.f32.mrf.mxu0
        %v6231 = vadd.f32 %v6192, %v6230
        %v6232 = vand.u32 %v4265, 4294901760
        %6233 = vmatmul.f32.gmra.mxu0 %v6232
        %v6234 = vpop.f32.mrf.mxu0
        %v6235 = vadd.f32 %v6200, %v6234
        %6236 = vdwg.mxu0
        %6237 = vmatpush.msra.mxu0 0.0
        %6238 = vmatpush.msra.mxu0 0.0
        %6239 = vmatpush.msra.mxu0 0.0
        %6240 = vmatpush.msra.mxu0 0.0
        %6241 = vmatpush.msra.mxu0 0.0
        %6242 = vmatpush.msra.mxu0 0.0
        %6243 = vmatpush.msra.mxu0 0.0
        %6244 = vmatpush.msra.mxu0 0.0
        %6245 = vmatpush.msra.mxu0 0.0
        %6246 = vmatpush.msra.mxu0 0.0
        %6247 = vmatpush.msra.mxu0 0.0
        %6248 = vmatpush.msra.mxu0 0.0
        %6249 = vmatpush.msra.mxu0 0.0
        %6250 = vmatpush.msra.mxu0 0.0
        %v6251 = vand.u32 %v2495, 4294901760
        %v6252 = vsub.f32 %v2495, %v6251
        %6253 = vmatpush.msra.mxu0 %v6252
        %v6254 = vand.u32 %v2491, 4294901760
        %v6255 = vsub.f32 %v2491, %v6254
        %6256 = vmatpush.msra.mxu0 %v6255
        %v6257 = vand.u32 %v4262, 4294901760
        %v6258 = vsub.f32 %v4262, %v6257
        %6259 = vmatmul.f32.gmra.mxu0 %v6258
        %v6260 = vpop.f32.mrf.mxu0
        %v6261 = vadd.f32 %v6231, %v6260
        %v6262 = vand.u32 %v4265, 4294901760
        %v6263 = vsub.f32 %v4265, %v6262
        %6264 = vmatmul.f32.gmra.mxu0 %v6263
        %v6265 = vpop.f32.mrf.mxu0
        %v6266 = vadd.f32 %v6235, %v6265
        %6267 = vdwg.mxu0
        %6268 = vmatpush.msra.mxu0 0.0
        %6269 = vmatpush.msra.mxu0 0.0
        %6270 = vmatpush.msra.mxu0 0.0
        %6271 = vmatpush.msra.mxu0 0.0
        %6272 = vmatpush.msra.mxu0 0.0
        %6273 = vmatpush.msra.mxu0 0.0
        %6274 = vmatpush.msra.mxu0 0.0
        %6275 = vmatpush.msra.mxu0 0.0
        %6276 = vmatpush.msra.mxu0 0.0
        %6277 = vmatpush.msra.mxu0 0.0
        %6278 = vmatpush.msra.mxu0 0.0
        %6279 = vmatpush.msra.mxu0 0.0
        %6280 = vmatpush.msra.mxu0 0.0
        %6281 = vmatpush.msra.mxu0 0.0
        %v6282 = vand.u32 %v2495, 4294901760
        %6283 = vmatpush.msra.mxu0 %v6282
        %v6284 = vand.u32 %v2491, 4294901760
        %6285 = vmatpush.msra.mxu0 %v6284
        %v6286 = vand.u32 %v4262, 4294901760
        %v6287 = vsub.f32 %v4262, %v6286
        %v6288 = vand.u32 %v6287, 4294901760
        %6289 = vmatmul.f32.gmra.mxu0 %v6288
        %v6290 = vpop.f32.mrf.mxu0
        %v6291 = vadd.f32 %v6261, %v6290
        %v6292 = vand.u32 %v4265, 4294901760
        %v6293 = vsub.f32 %v4265, %v6292
        %v6294 = vand.u32 %v6293, 4294901760
        %6295 = vmatmul.f32.gmra.mxu0 %v6294
        %v6296 = vpop.f32.mrf.mxu0
        %v6297 = vadd.f32 %v6266, %v6296
        %6298 = vdwg.mxu0
        %6299 = vmatpush.msra.mxu0 0.0
        %6300 = vmatpush.msra.mxu0 0.0
        %6301 = vmatpush.msra.mxu0 0.0
        %6302 = vmatpush.msra.mxu0 0.0
        %6303 = vmatpush.msra.mxu0 0.0
        %6304 = vmatpush.msra.mxu0 0.0
        %6305 = vmatpush.msra.mxu0 0.0
        %6306 = vmatpush.msra.mxu0 0.0
        %6307 = vmatpush.msra.mxu0 0.0
        %6308 = vmatpush.msra.mxu0 0.0
        %6309 = vmatpush.msra.mxu0 0.0
        %6310 = vmatpush.msra.mxu0 0.0
        %6311 = vmatpush.msra.mxu0 0.0
        %6312 = vmatpush.msra.mxu0 0.0
        %v6313 = vand.u32 %v2495, 4294901760
        %v6314 = vsub.f32 %v2495, %v6313
        %v6315 = vand.u32 %v6314, 4294901760
        %6316 = vmatpush.msra.mxu0 %v6315
        %v6317 = vand.u32 %v2491, 4294901760
        %v6318 = vsub.f32 %v2491, %v6317
        %v6319 = vand.u32 %v6318, 4294901760
        %6320 = vmatpush.msra.mxu0 %v6319
        %v6321 = vand.u32 %v4262, 4294901760
        %6322 = vmatmul.f32.gmra.mxu0 %v6321
        %v6323 = vpop.f32.mrf.mxu0
        %v6324 = vadd.f32 %v6291, %v6323
        %v6325 = vand.u32 %v4265, 4294901760
        %6326 = vmatmul.f32.gmra.mxu0 %v6325
        %v6327 = vpop.f32.mrf.mxu0
        %v6328 = vadd.f32 %v6297, %v6327
        %6329 = vdwg.mxu0
        %6330 = vmatpush.msra.mxu0 0.0
        %6331 = vmatpush.msra.mxu0 0.0
        %6332 = vmatpush.msra.mxu0 0.0
        %6333 = vmatpush.msra.mxu0 0.0
        %6334 = vmatpush.msra.mxu0 0.0
        %6335 = vmatpush.msra.mxu0 0.0
        %6336 = vmatpush.msra.mxu0 0.0
        %6337 = vmatpush.msra.mxu0 0.0
        %6338 = vmatpush.msra.mxu0 0.0
        %6339 = vmatpush.msra.mxu0 0.0
        %6340 = vmatpush.msra.mxu0 0.0
        %6341 = vmatpush.msra.mxu0 0.0
        %6342 = vmatpush.msra.mxu0 0.0
        %6343 = vmatpush.msra.mxu0 0.0
        %v6344 = vand.u32 %v2495, 4294901760
        %6345 = vmatpush.msra.mxu0 %v6344
        %v6346 = vand.u32 %v2491, 4294901760
        %6347 = vmatpush.msra.mxu0 %v6346
        %v6348 = vand.u32 %v4262, 4294901760
        %6349 = vmatmul.f32.gmra.mxu0 %v6348
        %v6350 = vpop.f32.mrf.mxu0
        %v6351 = vadd.f32 %v6324, %v6350
        %v6352 = vand.u32 %v4265, 4294901760
        %6353 = vmatmul.f32.gmra.mxu0 %v6352
        %v6354 = vpop.f32.mrf.mxu0
        %v6355 = vadd.f32 %v6328, %v6354
        %6356 = vdwg.mxu0
        %6357 = vmatpush.msra.mxu0 0.0
        %6358 = vmatpush.msra.mxu0 0.0
        %6359 = vmatpush.msra.mxu0 0.0
        %6360 = vmatpush.msra.mxu0 0.0
        %6361 = vmatpush.msra.mxu0 0.0
        %6362 = vmatpush.msra.mxu0 0.0
        %6363 = vmatpush.msra.mxu0 0.0
        %6364 = vmatpush.msra.mxu0 0.0
        %6365 = vmatpush.msra.mxu0 0.0
        %6366 = vmatpush.msra.mxu0 0.0
        %6367 = vmatpush.msra.mxu0 0.0
        %6368 = vmatpush.msra.mxu0 0.0
        %6369 = vmatpush.msra.mxu0 0.0
        %6370 = vmatpush.msra.mxu0 0.0
        %v6371 = vand.u32 %v2691, 4294901760
        %6372 = vmatpush.msra.mxu0 %v6371
        %v6373 = vand.u32 %v2687, 4294901760
        %6374 = vmatpush.msra.mxu0 %v6373
        %v6375 = vand.u32 %v4262, 4294901760
        %v6376 = vsub.f32 %v4262, %v6375
        %v6377 = vand.u32 %v6376, 4294901760
        %v6378 = vsub.f32 %v6376, %v6377
        %v6379 = vand.u32 %v6378, 4294901760
        %6380 = vmatmul.f32.gmra.mxu0 %v6379
        %v6381 = vpop.f32.mrf.mxu0
        %v6382 = vadd.f32 0.0, %v6381
        %v6383 = vand.u32 %v4265, 4294901760
        %v6384 = vsub.f32 %v4265, %v6383
        %v6385 = vand.u32 %v6384, 4294901760
        %v6386 = vsub.f32 %v6384, %v6385
        %v6387 = vand.u32 %v6386, 4294901760
        %6388 = vmatmul.f32.gmra.mxu0 %v6387
        %v6389 = vpop.f32.mrf.mxu0
        %v6390 = vadd.f32 0.0, %v6389
        %6391 = vdwg.mxu0
        %6392 = vmatpush.msra.mxu0 0.0
        %6393 = vmatpush.msra.mxu0 0.0
        %6394 = vmatpush.msra.mxu0 0.0
        %6395 = vmatpush.msra.mxu0 0.0
        %6396 = vmatpush.msra.mxu0 0.0
        %6397 = vmatpush.msra.mxu0 0.0
        %6398 = vmatpush.msra.mxu0 0.0
        %6399 = vmatpush.msra.mxu0 0.0
        %6400 = vmatpush.msra.mxu0 0.0
        %6401 = vmatpush.msra.mxu0 0.0
        %6402 = vmatpush.msra.mxu0 0.0
        %6403 = vmatpush.msra.mxu0 0.0
        %6404 = vmatpush.msra.mxu0 0.0
        %6405 = vmatpush.msra.mxu0 0.0
        %v6406 = vand.u32 %v2691, 4294901760
        %v6407 = vsub.f32 %v2691, %v6406
        %v6408 = vand.u32 %v6407, 4294901760
        %v6409 = vsub.f32 %v6407, %v6408
        %v6410 = vand.u32 %v6409, 4294901760
        %6411 = vmatpush.msra.mxu0 %v6410
        %v6412 = vand.u32 %v2687, 4294901760
        %v6413 = vsub.f32 %v2687, %v6412
        %v6414 = vand.u32 %v6413, 4294901760
        %v6415 = vsub.f32 %v6413, %v6414
        %v6416 = vand.u32 %v6415, 4294901760
        %6417 = vmatpush.msra.mxu0 %v6416
        %v6418 = vand.u32 %v4262, 4294901760
        %6419 = vmatmul.f32.gmra.mxu0 %v6418
        %v6420 = vpop.f32.mrf.mxu0
        %v6421 = vadd.f32 %v6382, %v6420
        %v6422 = vand.u32 %v4265, 4294901760
        %6423 = vmatmul.f32.gmra.mxu0 %v6422
        %v6424 = vpop.f32.mrf.mxu0
        %v6425 = vadd.f32 %v6390, %v6424
        %6426 = vdwg.mxu0
        %6427 = vmatpush.msra.mxu0 0.0
        %6428 = vmatpush.msra.mxu0 0.0
        %6429 = vmatpush.msra.mxu0 0.0
        %6430 = vmatpush.msra.mxu0 0.0
        %6431 = vmatpush.msra.mxu0 0.0
        %6432 = vmatpush.msra.mxu0 0.0
        %6433 = vmatpush.msra.mxu0 0.0
        %6434 = vmatpush.msra.mxu0 0.0
        %6435 = vmatpush.msra.mxu0 0.0
        %6436 = vmatpush.msra.mxu0 0.0
        %6437 = vmatpush.msra.mxu0 0.0
        %6438 = vmatpush.msra.mxu0 0.0
        %6439 = vmatpush.msra.mxu0 0.0
        %6440 = vmatpush.msra.mxu0 0.0
        %v6441 = vand.u32 %v2691, 4294901760
        %v6442 = vsub.f32 %v2691, %v6441
        %6443 = vmatpush.msra.mxu0 %v6442
        %v6444 = vand.u32 %v2687, 4294901760
        %v6445 = vsub.f32 %v2687, %v6444
        %6446 = vmatpush.msra.mxu0 %v6445
        %v6447 = vand.u32 %v4262, 4294901760
        %v6448 = vsub.f32 %v4262, %v6447
        %6449 = vmatmul.f32.gmra.mxu0 %v6448
        %v6450 = vpop.f32.mrf.mxu0
        %v6451 = vadd.f32 %v6421, %v6450
        %v6452 = vand.u32 %v4265, 4294901760
        %v6453 = vsub.f32 %v4265, %v6452
        %6454 = vmatmul.f32.gmra.mxu0 %v6453
        %v6455 = vpop.f32.mrf.mxu0
        %v6456 = vadd.f32 %v6425, %v6455
        %6457 = vdwg.mxu0
        %6458 = vmatpush.msra.mxu0 0.0
        %6459 = vmatpush.msra.mxu0 0.0
        %6460 = vmatpush.msra.mxu0 0.0
        %6461 = vmatpush.msra.mxu0 0.0
        %6462 = vmatpush.msra.mxu0 0.0
        %6463 = vmatpush.msra.mxu0 0.0
        %6464 = vmatpush.msra.mxu0 0.0
        %6465 = vmatpush.msra.mxu0 0.0
        %6466 = vmatpush.msra.mxu0 0.0
        %6467 = vmatpush.msra.mxu0 0.0
        %6468 = vmatpush.msra.mxu0 0.0
        %6469 = vmatpush.msra.mxu0 0.0
        %6470 = vmatpush.msra.mxu0 0.0
        %6471 = vmatpush.msra.mxu0 0.0
        %v6472 = vand.u32 %v2691, 4294901760
        %6473 = vmatpush.msra.mxu0 %v6472
        %v6474 = vand.u32 %v2687, 4294901760
        %6475 = vmatpush.msra.mxu0 %v6474
        %v6476 = vand.u32 %v4262, 4294901760
        %v6477 = vsub.f32 %v4262, %v6476
        %v6478 = vand.u32 %v6477, 4294901760
        %6479 = vmatmul.f32.gmra.mxu0 %v6478
        %v6480 = vpop.f32.mrf.mxu0
        %v6481 = vadd.f32 %v6451, %v6480
        %v6482 = vand.u32 %v4265, 4294901760
        %v6483 = vsub.f32 %v4265, %v6482
        %v6484 = vand.u32 %v6483, 4294901760
        %6485 = vmatmul.f32.gmra.mxu0 %v6484
        %v6486 = vpop.f32.mrf.mxu0
        %v6487 = vadd.f32 %v6456, %v6486
        %6488 = vdwg.mxu0
        %6489 = vmatpush.msra.mxu0 0.0
        %6490 = vmatpush.msra.mxu0 0.0
        %6491 = vmatpush.msra.mxu0 0.0
        %6492 = vmatpush.msra.mxu0 0.0
        %6493 = vmatpush.msra.mxu0 0.0
        %6494 = vmatpush.msra.mxu0 0.0
        %6495 = vmatpush.msra.mxu0 0.0
        %6496 = vmatpush.msra.mxu0 0.0
        %6497 = vmatpush.msra.mxu0 0.0
        %6498 = vmatpush.msra.mxu0 0.0
        %6499 = vmatpush.msra.mxu0 0.0
        %6500 = vmatpush.msra.mxu0 0.0
        %6501 = vmatpush.msra.mxu0 0.0
        %6502 = vmatpush.msra.mxu0 0.0
        %v6503 = vand.u32 %v2691, 4294901760
        %v6504 = vsub.f32 %v2691, %v6503
        %v6505 = vand.u32 %v6504, 4294901760
        %6506 = vmatpush.msra.mxu0 %v6505
        %v6507 = vand.u32 %v2687, 4294901760
        %v6508 = vsub.f32 %v2687, %v6507
        %v6509 = vand.u32 %v6508, 4294901760
        %6510 = vmatpush.msra.mxu0 %v6509
        %v6511 = vand.u32 %v4262, 4294901760
        %6512 = vmatmul.f32.gmra.mxu0 %v6511
        %v6513 = vpop.f32.mrf.mxu0
        %v6514 = vadd.f32 %v6481, %v6513
        %v6515 = vand.u32 %v4265, 4294901760
        %6516 = vmatmul.f32.gmra.mxu0 %v6515
        %v6517 = vpop.f32.mrf.mxu0
        %v6518 = vadd.f32 %v6487, %v6517
        %6519 = vdwg.mxu0
        %6520 = vmatpush.msra.mxu0 0.0
        %6521 = vmatpush.msra.mxu0 0.0
        %6522 = vmatpush.msra.mxu0 0.0
        %6523 = vmatpush.msra.mxu0 0.0
        %6524 = vmatpush.msra.mxu0 0.0
        %6525 = vmatpush.msra.mxu0 0.0
        %6526 = vmatpush.msra.mxu0 0.0
        %6527 = vmatpush.msra.mxu0 0.0
        %6528 = vmatpush.msra.mxu0 0.0
        %6529 = vmatpush.msra.mxu0 0.0
        %6530 = vmatpush.msra.mxu0 0.0
        %6531 = vmatpush.msra.mxu0 0.0
        %6532 = vmatpush.msra.mxu0 0.0
        %6533 = vmatpush.msra.mxu0 0.0
        %v6534 = vand.u32 %v2691, 4294901760
        %6535 = vmatpush.msra.mxu0 %v6534
        %v6536 = vand.u32 %v2687, 4294901760
        %6537 = vmatpush.msra.mxu0 %v6536
        %v6538 = vand.u32 %v4262, 4294901760
        %6539 = vmatmul.f32.gmra.mxu0 %v6538
        %v6540 = vpop.f32.mrf.mxu0
        %v6541 = vadd.f32 %v6514, %v6540
        %v6542 = vand.u32 %v4265, 4294901760
        %6543 = vmatmul.f32.gmra.mxu0 %v6542
        %v6544 = vpop.f32.mrf.mxu0
        %v6545 = vadd.f32 %v6518, %v6544
        %6546 = vdwg.mxu0
        %6547 = vmatpush.msra.mxu0 0.0
        %6548 = vmatpush.msra.mxu0 0.0
        %6549 = vmatpush.msra.mxu0 0.0
        %6550 = vmatpush.msra.mxu0 0.0
        %6551 = vmatpush.msra.mxu0 0.0
        %6552 = vmatpush.msra.mxu0 0.0
        %6553 = vmatpush.msra.mxu0 0.0
        %6554 = vmatpush.msra.mxu0 0.0
        %6555 = vmatpush.msra.mxu0 0.0
        %6556 = vmatpush.msra.mxu0 0.0
        %6557 = vmatpush.msra.mxu0 0.0
        %6558 = vmatpush.msra.mxu0 0.0
        %6559 = vmatpush.msra.mxu0 0.0
        %6560 = vmatpush.msra.mxu0 0.0
        %v6561 = vand.u32 %v2887, 4294901760
        %6562 = vmatpush.msra.mxu0 %v6561
        %v6563 = vand.u32 %v2883, 4294901760
        %6564 = vmatpush.msra.mxu0 %v6563
        %v6565 = vand.u32 %v4262, 4294901760
        %v6566 = vsub.f32 %v4262, %v6565
        %v6567 = vand.u32 %v6566, 4294901760
        %v6568 = vsub.f32 %v6566, %v6567
        %v6569 = vand.u32 %v6568, 4294901760
        %6570 = vmatmul.f32.gmra.mxu0 %v6569
        %v6571 = vpop.f32.mrf.mxu0
        %v6572 = vadd.f32 0.0, %v6571
        %v6573 = vand.u32 %v4265, 4294901760
        %v6574 = vsub.f32 %v4265, %v6573
        %v6575 = vand.u32 %v6574, 4294901760
        %v6576 = vsub.f32 %v6574, %v6575
        %v6577 = vand.u32 %v6576, 4294901760
        %6578 = vmatmul.f32.gmra.mxu0 %v6577
        %v6579 = vpop.f32.mrf.mxu0
        %v6580 = vadd.f32 0.0, %v6579
        %6581 = vdwg.mxu0
        %6582 = vmatpush.msra.mxu0 0.0
        %6583 = vmatpush.msra.mxu0 0.0
        %6584 = vmatpush.msra.mxu0 0.0
        %6585 = vmatpush.msra.mxu0 0.0
        %6586 = vmatpush.msra.mxu0 0.0
        %6587 = vmatpush.msra.mxu0 0.0
        %6588 = vmatpush.msra.mxu0 0.0
        %6589 = vmatpush.msra.mxu0 0.0
        %6590 = vmatpush.msra.mxu0 0.0
        %6591 = vmatpush.msra.mxu0 0.0
        %6592 = vmatpush.msra.mxu0 0.0
        %6593 = vmatpush.msra.mxu0 0.0
        %6594 = vmatpush.msra.mxu0 0.0
        %6595 = vmatpush.msra.mxu0 0.0
        %v6596 = vand.u32 %v2887, 4294901760
        %v6597 = vsub.f32 %v2887, %v6596
        %v6598 = vand.u32 %v6597, 4294901760
        %v6599 = vsub.f32 %v6597, %v6598
        %v6600 = vand.u32 %v6599, 4294901760
        %6601 = vmatpush.msra.mxu0 %v6600
        %v6602 = vand.u32 %v2883, 4294901760
        %v6603 = vsub.f32 %v2883, %v6602
        %v6604 = vand.u32 %v6603, 4294901760
        %v6605 = vsub.f32 %v6603, %v6604
        %v6606 = vand.u32 %v6605, 4294901760
        %6607 = vmatpush.msra.mxu0 %v6606
        %v6608 = vand.u32 %v4262, 4294901760
        %6609 = vmatmul.f32.gmra.mxu0 %v6608
        %v6610 = vpop.f32.mrf.mxu0
        %v6611 = vadd.f32 %v6572, %v6610
        %v6612 = vand.u32 %v4265, 4294901760
        %6613 = vmatmul.f32.gmra.mxu0 %v6612
        %v6614 = vpop.f32.mrf.mxu0
        %v6615 = vadd.f32 %v6580, %v6614
        %6616 = vdwg.mxu0
        %6617 = vmatpush.msra.mxu0 0.0
        %6618 = vmatpush.msra.mxu0 0.0
        %6619 = vmatpush.msra.mxu0 0.0
        %6620 = vmatpush.msra.mxu0 0.0
        %6621 = vmatpush.msra.mxu0 0.0
        %6622 = vmatpush.msra.mxu0 0.0
        %6623 = vmatpush.msra.mxu0 0.0
        %6624 = vmatpush.msra.mxu0 0.0
        %6625 = vmatpush.msra.mxu0 0.0
        %6626 = vmatpush.msra.mxu0 0.0
        %6627 = vmatpush.msra.mxu0 0.0
        %6628 = vmatpush.msra.mxu0 0.0
        %6629 = vmatpush.msra.mxu0 0.0
        %6630 = vmatpush.msra.mxu0 0.0
        %v6631 = vand.u32 %v2887, 4294901760
        %v6632 = vsub.f32 %v2887, %v6631
        %6633 = vmatpush.msra.mxu0 %v6632
        %v6634 = vand.u32 %v2883, 4294901760
        %v6635 = vsub.f32 %v2883, %v6634
        %6636 = vmatpush.msra.mxu0 %v6635
        %v6637 = vand.u32 %v4262, 4294901760
        %v6638 = vsub.f32 %v4262, %v6637
        %6639 = vmatmul.f32.gmra.mxu0 %v6638
        %v6640 = vpop.f32.mrf.mxu0
        %v6641 = vadd.f32 %v6611, %v6640
        %v6642 = vand.u32 %v4265, 4294901760
        %v6643 = vsub.f32 %v4265, %v6642
        %6644 = vmatmul.f32.gmra.mxu0 %v6643
        %v6645 = vpop.f32.mrf.mxu0
        %v6646 = vadd.f32 %v6615, %v6645
        %6647 = vdwg.mxu0
        %6648 = vmatpush.msra.mxu0 0.0
        %6649 = vmatpush.msra.mxu0 0.0
        %6650 = vmatpush.msra.mxu0 0.0
        %6651 = vmatpush.msra.mxu0 0.0
        %6652 = vmatpush.msra.mxu0 0.0
        %6653 = vmatpush.msra.mxu0 0.0
        %6654 = vmatpush.msra.mxu0 0.0
        %6655 = vmatpush.msra.mxu0 0.0
        %6656 = vmatpush.msra.mxu0 0.0
        %6657 = vmatpush.msra.mxu0 0.0
        %6658 = vmatpush.msra.mxu0 0.0
        %6659 = vmatpush.msra.mxu0 0.0
        %6660 = vmatpush.msra.mxu0 0.0
        %6661 = vmatpush.msra.mxu0 0.0
        %v6662 = vand.u32 %v2887, 4294901760
        %6663 = vmatpush.msra.mxu0 %v6662
        %v6664 = vand.u32 %v2883, 4294901760
        %6665 = vmatpush.msra.mxu0 %v6664
        %v6666 = vand.u32 %v4262, 4294901760
        %v6667 = vsub.f32 %v4262, %v6666
        %v6668 = vand.u32 %v6667, 4294901760
        %6669 = vmatmul.f32.gmra.mxu0 %v6668
        %v6670 = vpop.f32.mrf.mxu0
        %v6671 = vadd.f32 %v6641, %v6670
        %v6672 = vand.u32 %v4265, 4294901760
        %v6673 = vsub.f32 %v4265, %v6672
        %v6674 = vand.u32 %v6673, 4294901760
        %6675 = vmatmul.f32.gmra.mxu0 %v6674
        %v6676 = vpop.f32.mrf.mxu0
        %v6677 = vadd.f32 %v6646, %v6676
        %6678 = vdwg.mxu0
        %6679 = vmatpush.msra.mxu0 0.0
        %6680 = vmatpush.msra.mxu0 0.0
        %6681 = vmatpush.msra.mxu0 0.0
        %6682 = vmatpush.msra.mxu0 0.0
        %6683 = vmatpush.msra.mxu0 0.0
        %6684 = vmatpush.msra.mxu0 0.0
        %6685 = vmatpush.msra.mxu0 0.0
        %6686 = vmatpush.msra.mxu0 0.0
        %6687 = vmatpush.msra.mxu0 0.0
        %6688 = vmatpush.msra.mxu0 0.0
        %6689 = vmatpush.msra.mxu0 0.0
        %6690 = vmatpush.msra.mxu0 0.0
        %6691 = vmatpush.msra.mxu0 0.0
        %6692 = vmatpush.msra.mxu0 0.0
        %v6693 = vand.u32 %v2887, 4294901760
        %v6694 = vsub.f32 %v2887, %v6693
        %v6695 = vand.u32 %v6694, 4294901760
        %6696 = vmatpush.msra.mxu0 %v6695
        %v6697 = vand.u32 %v2883, 4294901760
        %v6698 = vsub.f32 %v2883, %v6697
        %v6699 = vand.u32 %v6698, 4294901760
        %6700 = vmatpush.msra.mxu0 %v6699
        %v6701 = vand.u32 %v4262, 4294901760
        %6702 = vmatmul.f32.gmra.mxu0 %v6701
        %v6703 = vpop.f32.mrf.mxu0
        %v6704 = vadd.f32 %v6671, %v6703
        %v6705 = vand.u32 %v4265, 4294901760
        %6706 = vmatmul.f32.gmra.mxu0 %v6705
        %v6707 = vpop.f32.mrf.mxu0
        %v6708 = vadd.f32 %v6677, %v6707
        %6709 = vdwg.mxu0
        %6710 = vmatpush.msra.mxu0 0.0
        %6711 = vmatpush.msra.mxu0 0.0
        %6712 = vmatpush.msra.mxu0 0.0
        %6713 = vmatpush.msra.mxu0 0.0
        %6714 = vmatpush.msra.mxu0 0.0
        %6715 = vmatpush.msra.mxu0 0.0
        %6716 = vmatpush.msra.mxu0 0.0
        %6717 = vmatpush.msra.mxu0 0.0
        %6718 = vmatpush.msra.mxu0 0.0
        %6719 = vmatpush.msra.mxu0 0.0
        %6720 = vmatpush.msra.mxu0 0.0
        %6721 = vmatpush.msra.mxu0 0.0
        %6722 = vmatpush.msra.mxu0 0.0
        %6723 = vmatpush.msra.mxu0 0.0
        %v6724 = vand.u32 %v2887, 4294901760
        %6725 = vmatpush.msra.mxu0 %v6724
        %v6726 = vand.u32 %v2883, 4294901760
        %6727 = vmatpush.msra.mxu0 %v6726
        %v6728 = vand.u32 %v4262, 4294901760
        %6729 = vmatmul.f32.gmra.mxu0 %v6728
        %v6730 = vpop.f32.mrf.mxu0
        %v6731 = vadd.f32 %v6704, %v6730
        %v6732 = vand.u32 %v4265, 4294901760
        %6733 = vmatmul.f32.gmra.mxu0 %v6732
        %v6734 = vpop.f32.mrf.mxu0
        %v6735 = vadd.f32 %v6708, %v6734
        %6736 = vdwg.mxu0
        %6737 = vmatpush.msra.mxu0 0.0
        %6738 = vmatpush.msra.mxu0 0.0
        %6739 = vmatpush.msra.mxu0 0.0
        %6740 = vmatpush.msra.mxu0 0.0
        %6741 = vmatpush.msra.mxu0 0.0
        %6742 = vmatpush.msra.mxu0 0.0
        %6743 = vmatpush.msra.mxu0 0.0
        %6744 = vmatpush.msra.mxu0 0.0
        %6745 = vmatpush.msra.mxu0 0.0
        %6746 = vmatpush.msra.mxu0 0.0
        %6747 = vmatpush.msra.mxu0 0.0
        %6748 = vmatpush.msra.mxu0 0.0
        %6749 = vmatpush.msra.mxu0 0.0
        %6750 = vmatpush.msra.mxu0 0.0
        %v6751 = vand.u32 %v3083, 4294901760
        %6752 = vmatpush.msra.mxu0 %v6751
        %v6753 = vand.u32 %v3079, 4294901760
        %6754 = vmatpush.msra.mxu0 %v6753
        %v6755 = vand.u32 %v4262, 4294901760
        %v6756 = vsub.f32 %v4262, %v6755
        %v6757 = vand.u32 %v6756, 4294901760
        %v6758 = vsub.f32 %v6756, %v6757
        %v6759 = vand.u32 %v6758, 4294901760
        %6760 = vmatmul.f32.gmra.mxu0 %v6759
        %v6761 = vpop.f32.mrf.mxu0
        %v6762 = vadd.f32 0.0, %v6761
        %v6763 = vand.u32 %v4265, 4294901760
        %v6764 = vsub.f32 %v4265, %v6763
        %v6765 = vand.u32 %v6764, 4294901760
        %v6766 = vsub.f32 %v6764, %v6765
        %v6767 = vand.u32 %v6766, 4294901760
        %6768 = vmatmul.f32.gmra.mxu0 %v6767
        %v6769 = vpop.f32.mrf.mxu0
        %v6770 = vadd.f32 0.0, %v6769
        %6771 = vdwg.mxu0
        %6772 = vmatpush.msra.mxu0 0.0
        %6773 = vmatpush.msra.mxu0 0.0
        %6774 = vmatpush.msra.mxu0 0.0
        %6775 = vmatpush.msra.mxu0 0.0
        %6776 = vmatpush.msra.mxu0 0.0
        %6777 = vmatpush.msra.mxu0 0.0
        %6778 = vmatpush.msra.mxu0 0.0
        %6779 = vmatpush.msra.mxu0 0.0
        %6780 = vmatpush.msra.mxu0 0.0
        %6781 = vmatpush.msra.mxu0 0.0
        %6782 = vmatpush.msra.mxu0 0.0
        %6783 = vmatpush.msra.mxu0 0.0
        %6784 = vmatpush.msra.mxu0 0.0
        %6785 = vmatpush.msra.mxu0 0.0
        %v6786 = vand.u32 %v3083, 4294901760
        %v6787 = vsub.f32 %v3083, %v6786
        %v6788 = vand.u32 %v6787, 4294901760
        %v6789 = vsub.f32 %v6787, %v6788
        %v6790 = vand.u32 %v6789, 4294901760
        %6791 = vmatpush.msra.mxu0 %v6790
        %v6792 = vand.u32 %v3079, 4294901760
        %v6793 = vsub.f32 %v3079, %v6792
        %v6794 = vand.u32 %v6793, 4294901760
        %v6795 = vsub.f32 %v6793, %v6794
        %v6796 = vand.u32 %v6795, 4294901760
        %6797 = vmatpush.msra.mxu0 %v6796
        %v6798 = vand.u32 %v4262, 4294901760
        %6799 = vmatmul.f32.gmra.mxu0 %v6798
        %v6800 = vpop.f32.mrf.mxu0
        %v6801 = vadd.f32 %v6762, %v6800
        %v6802 = vand.u32 %v4265, 4294901760
        %6803 = vmatmul.f32.gmra.mxu0 %v6802
        %v6804 = vpop.f32.mrf.mxu0
        %v6805 = vadd.f32 %v6770, %v6804
        %6806 = vdwg.mxu0
        %6807 = vmatpush.msra.mxu0 0.0
        %6808 = vmatpush.msra.mxu0 0.0
        %6809 = vmatpush.msra.mxu0 0.0
        %6810 = vmatpush.msra.mxu0 0.0
        %6811 = vmatpush.msra.mxu0 0.0
        %6812 = vmatpush.msra.mxu0 0.0
        %6813 = vmatpush.msra.mxu0 0.0
        %6814 = vmatpush.msra.mxu0 0.0
        %6815 = vmatpush.msra.mxu0 0.0
        %6816 = vmatpush.msra.mxu0 0.0
        %6817 = vmatpush.msra.mxu0 0.0
        %6818 = vmatpush.msra.mxu0 0.0
        %6819 = vmatpush.msra.mxu0 0.0
        %6820 = vmatpush.msra.mxu0 0.0
        %v6821 = vand.u32 %v3083, 4294901760
        %v6822 = vsub.f32 %v3083, %v6821
        %6823 = vmatpush.msra.mxu0 %v6822
        %v6824 = vand.u32 %v3079, 4294901760
        %v6825 = vsub.f32 %v3079, %v6824
        %6826 = vmatpush.msra.mxu0 %v6825
        %v6827 = vand.u32 %v4262, 4294901760
        %v6828 = vsub.f32 %v4262, %v6827
        %6829 = vmatmul.f32.gmra.mxu0 %v6828
        %v6830 = vpop.f32.mrf.mxu0
        %v6831 = vadd.f32 %v6801, %v6830
        %v6832 = vand.u32 %v4265, 4294901760
        %v6833 = vsub.f32 %v4265, %v6832
        %6834 = vmatmul.f32.gmra.mxu0 %v6833
        %v6835 = vpop.f32.mrf.mxu0
        %v6836 = vadd.f32 %v6805, %v6835
        %6837 = vdwg.mxu0
        %6838 = vmatpush.msra.mxu0 0.0
        %6839 = vmatpush.msra.mxu0 0.0
        %6840 = vmatpush.msra.mxu0 0.0
        %6841 = vmatpush.msra.mxu0 0.0
        %6842 = vmatpush.msra.mxu0 0.0
        %6843 = vmatpush.msra.mxu0 0.0
        %6844 = vmatpush.msra.mxu0 0.0
        %6845 = vmatpush.msra.mxu0 0.0
        %6846 = vmatpush.msra.mxu0 0.0
        %6847 = vmatpush.msra.mxu0 0.0
        %6848 = vmatpush.msra.mxu0 0.0
        %6849 = vmatpush.msra.mxu0 0.0
        %6850 = vmatpush.msra.mxu0 0.0
        %6851 = vmatpush.msra.mxu0 0.0
        %v6852 = vand.u32 %v3083, 4294901760
        %6853 = vmatpush.msra.mxu0 %v6852
        %v6854 = vand.u32 %v3079, 4294901760
        %6855 = vmatpush.msra.mxu0 %v6854
        %v6856 = vand.u32 %v4262, 4294901760
        %v6857 = vsub.f32 %v4262, %v6856
        %v6858 = vand.u32 %v6857, 4294901760
        %6859 = vmatmul.f32.gmra.mxu0 %v6858
        %v6860 = vpop.f32.mrf.mxu0
        %v6861 = vadd.f32 %v6831, %v6860
        %v6862 = vand.u32 %v4265, 4294901760
        %v6863 = vsub.f32 %v4265, %v6862
        %v6864 = vand.u32 %v6863, 4294901760
        %6865 = vmatmul.f32.gmra.mxu0 %v6864
        %v6866 = vpop.f32.mrf.mxu0
        %v6867 = vadd.f32 %v6836, %v6866
        %6868 = vdwg.mxu0
        %6869 = vmatpush.msra.mxu0 0.0
        %6870 = vmatpush.msra.mxu0 0.0
        %6871 = vmatpush.msra.mxu0 0.0
        %6872 = vmatpush.msra.mxu0 0.0
        %6873 = vmatpush.msra.mxu0 0.0
        %6874 = vmatpush.msra.mxu0 0.0
        %6875 = vmatpush.msra.mxu0 0.0
        %6876 = vmatpush.msra.mxu0 0.0
        %6877 = vmatpush.msra.mxu0 0.0
        %6878 = vmatpush.msra.mxu0 0.0
        %6879 = vmatpush.msra.mxu0 0.0
        %6880 = vmatpush.msra.mxu0 0.0
        %6881 = vmatpush.msra.mxu0 0.0
        %6882 = vmatpush.msra.mxu0 0.0
        %v6883 = vand.u32 %v3083, 4294901760
        %v6884 = vsub.f32 %v3083, %v6883
        %v6885 = vand.u32 %v6884, 4294901760
        %6886 = vmatpush.msra.mxu0 %v6885
        %v6887 = vand.u32 %v3079, 4294901760
        %v6888 = vsub.f32 %v3079, %v6887
        %v6889 = vand.u32 %v6888, 4294901760
        %6890 = vmatpush.msra.mxu0 %v6889
        %v6891 = vand.u32 %v4262, 4294901760
        %6892 = vmatmul.f32.gmra.mxu0 %v6891
        %v6893 = vpop.f32.mrf.mxu0
        %v6894 = vadd.f32 %v6861, %v6893
        %v6895 = vand.u32 %v4265, 4294901760
        %6896 = vmatmul.f32.gmra.mxu0 %v6895
        %v6897 = vpop.f32.mrf.mxu0
        %v6898 = vadd.f32 %v6867, %v6897
        %6899 = vdwg.mxu0
        %6900 = vmatpush.msra.mxu0 0.0
        %6901 = vmatpush.msra.mxu0 0.0
        %6902 = vmatpush.msra.mxu0 0.0
        %6903 = vmatpush.msra.mxu0 0.0
        %6904 = vmatpush.msra.mxu0 0.0
        %6905 = vmatpush.msra.mxu0 0.0
        %6906 = vmatpush.msra.mxu0 0.0
        %6907 = vmatpush.msra.mxu0 0.0
        %6908 = vmatpush.msra.mxu0 0.0
        %6909 = vmatpush.msra.mxu0 0.0
        %6910 = vmatpush.msra.mxu0 0.0
        %6911 = vmatpush.msra.mxu0 0.0
        %6912 = vmatpush.msra.mxu0 0.0
        %6913 = vmatpush.msra.mxu0 0.0
        %v6914 = vand.u32 %v3083, 4294901760
        %6915 = vmatpush.msra.mxu0 %v6914
        %v6916 = vand.u32 %v3079, 4294901760
        %6917 = vmatpush.msra.mxu0 %v6916
        %v6918 = vand.u32 %v4262, 4294901760
        %6919 = vmatmul.f32.gmra.mxu0 %v6918
        %v6920 = vpop.f32.mrf.mxu0
        %v6921 = vadd.f32 %v6894, %v6920
        %v6922 = vand.u32 %v4265, 4294901760
        %6923 = vmatmul.f32.gmra.mxu0 %v6922
        %v6924 = vpop.f32.mrf.mxu0
        %v6925 = vadd.f32 %v6898, %v6924
        %6926 = vdwg.mxu0
        %6927 = vmatpush.msra.mxu0 0.0
        %6928 = vmatpush.msra.mxu0 0.0
        %6929 = vmatpush.msra.mxu0 0.0
        %6930 = vmatpush.msra.mxu0 0.0
        %6931 = vmatpush.msra.mxu0 0.0
        %6932 = vmatpush.msra.mxu0 0.0
        %6933 = vmatpush.msra.mxu0 0.0
        %6934 = vmatpush.msra.mxu0 0.0
        %6935 = vmatpush.msra.mxu0 0.0
        %6936 = vmatpush.msra.mxu0 0.0
        %6937 = vmatpush.msra.mxu0 0.0
        %6938 = vmatpush.msra.mxu0 0.0
        %6939 = vmatpush.msra.mxu0 0.0
        %6940 = vmatpush.msra.mxu0 0.0
        %v6941 = vand.u32 %v3279, 4294901760
        %6942 = vmatpush.msra.mxu0 %v6941
        %v6943 = vand.u32 %v3275, 4294901760
        %6944 = vmatpush.msra.mxu0 %v6943
        %v6945 = vand.u32 %v4262, 4294901760
        %v6946 = vsub.f32 %v4262, %v6945
        %v6947 = vand.u32 %v6946, 4294901760
        %v6948 = vsub.f32 %v6946, %v6947
        %v6949 = vand.u32 %v6948, 4294901760
        %6950 = vmatmul.f32.gmra.mxu0 %v6949
        %v6951 = vpop.f32.mrf.mxu0
        %v6952 = vadd.f32 0.0, %v6951
        %v6953 = vand.u32 %v4265, 4294901760
        %v6954 = vsub.f32 %v4265, %v6953
        %v6955 = vand.u32 %v6954, 4294901760
        %v6956 = vsub.f32 %v6954, %v6955
        %v6957 = vand.u32 %v6956, 4294901760
        %6958 = vmatmul.f32.gmra.mxu0 %v6957
        %v6959 = vpop.f32.mrf.mxu0
        %v6960 = vadd.f32 0.0, %v6959
        %6961 = vdwg.mxu0
        %6962 = vmatpush.msra.mxu0 0.0
        %6963 = vmatpush.msra.mxu0 0.0
        %6964 = vmatpush.msra.mxu0 0.0
        %6965 = vmatpush.msra.mxu0 0.0
        %6966 = vmatpush.msra.mxu0 0.0
        %6967 = vmatpush.msra.mxu0 0.0
        %6968 = vmatpush.msra.mxu0 0.0
        %6969 = vmatpush.msra.mxu0 0.0
        %6970 = vmatpush.msra.mxu0 0.0
        %6971 = vmatpush.msra.mxu0 0.0
        %6972 = vmatpush.msra.mxu0 0.0
        %6973 = vmatpush.msra.mxu0 0.0
        %6974 = vmatpush.msra.mxu0 0.0
        %6975 = vmatpush.msra.mxu0 0.0
        %v6976 = vand.u32 %v3279, 4294901760
        %v6977 = vsub.f32 %v3279, %v6976
        %v6978 = vand.u32 %v6977, 4294901760
        %v6979 = vsub.f32 %v6977, %v6978
        %v6980 = vand.u32 %v6979, 4294901760
        %6981 = vmatpush.msra.mxu0 %v6980
        %v6982 = vand.u32 %v3275, 4294901760
        %v6983 = vsub.f32 %v3275, %v6982
        %v6984 = vand.u32 %v6983, 4294901760
        %v6985 = vsub.f32 %v6983, %v6984
        %v6986 = vand.u32 %v6985, 4294901760
        %6987 = vmatpush.msra.mxu0 %v6986
        %v6988 = vand.u32 %v4262, 4294901760
        %6989 = vmatmul.f32.gmra.mxu0 %v6988
        %v6990 = vpop.f32.mrf.mxu0
        %v6991 = vadd.f32 %v6952, %v6990
        %v6992 = vand.u32 %v4265, 4294901760
        %6993 = vmatmul.f32.gmra.mxu0 %v6992
        %v6994 = vpop.f32.mrf.mxu0
        %v6995 = vadd.f32 %v6960, %v6994
        %6996 = vdwg.mxu0
        %6997 = vmatpush.msra.mxu0 0.0
        %6998 = vmatpush.msra.mxu0 0.0
        %6999 = vmatpush.msra.mxu0 0.0
        %7000 = vmatpush.msra.mxu0 0.0
        %7001 = vmatpush.msra.mxu0 0.0
        %7002 = vmatpush.msra.mxu0 0.0
        %7003 = vmatpush.msra.mxu0 0.0
        %7004 = vmatpush.msra.mxu0 0.0
        %7005 = vmatpush.msra.mxu0 0.0
        %7006 = vmatpush.msra.mxu0 0.0
        %7007 = vmatpush.msra.mxu0 0.0
        %7008 = vmatpush.msra.mxu0 0.0
        %7009 = vmatpush.msra.mxu0 0.0
        %7010 = vmatpush.msra.mxu0 0.0
        %v7011 = vand.u32 %v3279, 4294901760
        %v7012 = vsub.f32 %v3279, %v7011
        %7013 = vmatpush.msra.mxu0 %v7012
        %v7014 = vand.u32 %v3275, 4294901760
        %v7015 = vsub.f32 %v3275, %v7014
        %7016 = vmatpush.msra.mxu0 %v7015
        %v7017 = vand.u32 %v4262, 4294901760
        %v7018 = vsub.f32 %v4262, %v7017
        %7019 = vmatmul.f32.gmra.mxu0 %v7018
        %v7020 = vpop.f32.mrf.mxu0
        %v7021 = vadd.f32 %v6991, %v7020
        %v7022 = vand.u32 %v4265, 4294901760
        %v7023 = vsub.f32 %v4265, %v7022
        %7024 = vmatmul.f32.gmra.mxu0 %v7023
        %v7025 = vpop.f32.mrf.mxu0
        %v7026 = vadd.f32 %v6995, %v7025
        %7027 = vdwg.mxu0
        %7028 = vmatpush.msra.mxu0 0.0
        %7029 = vmatpush.msra.mxu0 0.0
        %7030 = vmatpush.msra.mxu0 0.0
        %7031 = vmatpush.msra.mxu0 0.0
        %7032 = vmatpush.msra.mxu0 0.0
        %7033 = vmatpush.msra.mxu0 0.0
        %7034 = vmatpush.msra.mxu0 0.0
        %7035 = vmatpush.msra.mxu0 0.0
        %7036 = vmatpush.msra.mxu0 0.0
        %7037 = vmatpush.msra.mxu0 0.0
        %7038 = vmatpush.msra.mxu0 0.0
        %7039 = vmatpush.msra.mxu0 0.0
        %7040 = vmatpush.msra.mxu0 0.0
        %7041 = vmatpush.msra.mxu0 0.0
        %v7042 = vand.u32 %v3279, 4294901760
        %7043 = vmatpush.msra.mxu0 %v7042
        %v7044 = vand.u32 %v3275, 4294901760
        %7045 = vmatpush.msra.mxu0 %v7044
        %v7046 = vand.u32 %v4262, 4294901760
        %v7047 = vsub.f32 %v4262, %v7046
        %v7048 = vand.u32 %v7047, 4294901760
        %7049 = vmatmul.f32.gmra.mxu0 %v7048
        %v7050 = vpop.f32.mrf.mxu0
        %v7051 = vadd.f32 %v7021, %v7050
        %v7052 = vand.u32 %v4265, 4294901760
        %v7053 = vsub.f32 %v4265, %v7052
        %v7054 = vand.u32 %v7053, 4294901760
        %7055 = vmatmul.f32.gmra.mxu0 %v7054
        %v7056 = vpop.f32.mrf.mxu0
        %v7057 = vadd.f32 %v7026, %v7056
        %7058 = vdwg.mxu0
        %7059 = vmatpush.msra.mxu0 0.0
        %7060 = vmatpush.msra.mxu0 0.0
        %7061 = vmatpush.msra.mxu0 0.0
        %7062 = vmatpush.msra.mxu0 0.0
        %7063 = vmatpush.msra.mxu0 0.0
        %7064 = vmatpush.msra.mxu0 0.0
        %7065 = vmatpush.msra.mxu0 0.0
        %7066 = vmatpush.msra.mxu0 0.0
        %7067 = vmatpush.msra.mxu0 0.0
        %7068 = vmatpush.msra.mxu0 0.0
        %7069 = vmatpush.msra.mxu0 0.0
        %7070 = vmatpush.msra.mxu0 0.0
        %7071 = vmatpush.msra.mxu0 0.0
        %7072 = vmatpush.msra.mxu0 0.0
        %v7073 = vand.u32 %v3279, 4294901760
        %v7074 = vsub.f32 %v3279, %v7073
        %v7075 = vand.u32 %v7074, 4294901760
        %7076 = vmatpush.msra.mxu0 %v7075
        %v7077 = vand.u32 %v3275, 4294901760
        %v7078 = vsub.f32 %v3275, %v7077
        %v7079 = vand.u32 %v7078, 4294901760
        %7080 = vmatpush.msra.mxu0 %v7079
        %v7081 = vand.u32 %v4262, 4294901760
        %7082 = vmatmul.f32.gmra.mxu0 %v7081
        %v7083 = vpop.f32.mrf.mxu0
        %v7084 = vadd.f32 %v7051, %v7083
        %v7085 = vand.u32 %v4265, 4294901760
        %7086 = vmatmul.f32.gmra.mxu0 %v7085
        %v7087 = vpop.f32.mrf.mxu0
        %v7088 = vadd.f32 %v7057, %v7087
        %7089 = vdwg.mxu0
        %7090 = vmatpush.msra.mxu0 0.0
        %7091 = vmatpush.msra.mxu0 0.0
        %7092 = vmatpush.msra.mxu0 0.0
        %7093 = vmatpush.msra.mxu0 0.0
        %7094 = vmatpush.msra.mxu0 0.0
        %7095 = vmatpush.msra.mxu0 0.0
        %7096 = vmatpush.msra.mxu0 0.0
        %7097 = vmatpush.msra.mxu0 0.0
        %7098 = vmatpush.msra.mxu0 0.0
        %7099 = vmatpush.msra.mxu0 0.0
        %7100 = vmatpush.msra.mxu0 0.0
        %7101 = vmatpush.msra.mxu0 0.0
        %7102 = vmatpush.msra.mxu0 0.0
        %7103 = vmatpush.msra.mxu0 0.0
        %v7104 = vand.u32 %v3279, 4294901760
        %7105 = vmatpush.msra.mxu0 %v7104
        %v7106 = vand.u32 %v3275, 4294901760
        %7107 = vmatpush.msra.mxu0 %v7106
        %v7108 = vand.u32 %v4262, 4294901760
        %7109 = vmatmul.f32.gmra.mxu0 %v7108
        %v7110 = vpop.f32.mrf.mxu0
        %v7111 = vadd.f32 %v7084, %v7110
        %v7112 = vand.u32 %v4265, 4294901760
        %7113 = vmatmul.f32.gmra.mxu0 %v7112
        %v7114 = vpop.f32.mrf.mxu0
        %v7115 = vadd.f32 %v7088, %v7114
        %7116 = vdwg.mxu0
        %7117 = vmatpush.msra.mxu0 0.0
        %7118 = vmatpush.msra.mxu0 0.0
        %7119 = vmatpush.msra.mxu0 0.0
        %7120 = vmatpush.msra.mxu0 0.0
        %7121 = vmatpush.msra.mxu0 0.0
        %7122 = vmatpush.msra.mxu0 0.0
        %7123 = vmatpush.msra.mxu0 0.0
        %7124 = vmatpush.msra.mxu0 0.0
        %7125 = vmatpush.msra.mxu0 0.0
        %7126 = vmatpush.msra.mxu0 0.0
        %7127 = vmatpush.msra.mxu0 0.0
        %7128 = vmatpush.msra.mxu0 0.0
        %7129 = vmatpush.msra.mxu0 0.0
        %7130 = vmatpush.msra.mxu0 0.0
        %v7131 = vand.u32 %v3475, 4294901760
        %7132 = vmatpush.msra.mxu0 %v7131
        %v7133 = vand.u32 %v3471, 4294901760
        %7134 = vmatpush.msra.mxu0 %v7133
        %v7135 = vand.u32 %v4262, 4294901760
        %v7136 = vsub.f32 %v4262, %v7135
        %v7137 = vand.u32 %v7136, 4294901760
        %v7138 = vsub.f32 %v7136, %v7137
        %v7139 = vand.u32 %v7138, 4294901760
        %7140 = vmatmul.f32.gmra.mxu0 %v7139
        %v7141 = vpop.f32.mrf.mxu0
        %v7142 = vadd.f32 0.0, %v7141
        %v7143 = vand.u32 %v4265, 4294901760
        %v7144 = vsub.f32 %v4265, %v7143
        %v7145 = vand.u32 %v7144, 4294901760
        %v7146 = vsub.f32 %v7144, %v7145
        %v7147 = vand.u32 %v7146, 4294901760
        %7148 = vmatmul.f32.gmra.mxu0 %v7147
        %v7149 = vpop.f32.mrf.mxu0
        %v7150 = vadd.f32 0.0, %v7149
        %7151 = vdwg.mxu0
        %7152 = vmatpush.msra.mxu0 0.0
        %7153 = vmatpush.msra.mxu0 0.0
        %7154 = vmatpush.msra.mxu0 0.0
        %7155 = vmatpush.msra.mxu0 0.0
        %7156 = vmatpush.msra.mxu0 0.0
        %7157 = vmatpush.msra.mxu0 0.0
        %7158 = vmatpush.msra.mxu0 0.0
        %7159 = vmatpush.msra.mxu0 0.0
        %7160 = vmatpush.msra.mxu0 0.0
        %7161 = vmatpush.msra.mxu0 0.0
        %7162 = vmatpush.msra.mxu0 0.0
        %7163 = vmatpush.msra.mxu0 0.0
        %7164 = vmatpush.msra.mxu0 0.0
        %7165 = vmatpush.msra.mxu0 0.0
        %v7166 = vand.u32 %v3475, 4294901760
        %v7167 = vsub.f32 %v3475, %v7166
        %v7168 = vand.u32 %v7167, 4294901760
        %v7169 = vsub.f32 %v7167, %v7168
        %v7170 = vand.u32 %v7169, 4294901760
        %7171 = vmatpush.msra.mxu0 %v7170
        %v7172 = vand.u32 %v3471, 4294901760
        %v7173 = vsub.f32 %v3471, %v7172
        %v7174 = vand.u32 %v7173, 4294901760
        %v7175 = vsub.f32 %v7173, %v7174
        %v7176 = vand.u32 %v7175, 4294901760
        %7177 = vmatpush.msra.mxu0 %v7176
        %v7178 = vand.u32 %v4262, 4294901760
        %7179 = vmatmul.f32.gmra.mxu0 %v7178
        %v7180 = vpop.f32.mrf.mxu0
        %v7181 = vadd.f32 %v7142, %v7180
        %v7182 = vand.u32 %v4265, 4294901760
        %7183 = vmatmul.f32.gmra.mxu0 %v7182
        %v7184 = vpop.f32.mrf.mxu0
        %v7185 = vadd.f32 %v7150, %v7184
        %7186 = vdwg.mxu0
        %7187 = vmatpush.msra.mxu0 0.0
        %7188 = vmatpush.msra.mxu0 0.0
        %7189 = vmatpush.msra.mxu0 0.0
        %7190 = vmatpush.msra.mxu0 0.0
        %7191 = vmatpush.msra.mxu0 0.0
        %7192 = vmatpush.msra.mxu0 0.0
        %7193 = vmatpush.msra.mxu0 0.0
        %7194 = vmatpush.msra.mxu0 0.0
        %7195 = vmatpush.msra.mxu0 0.0
        %7196 = vmatpush.msra.mxu0 0.0
        %7197 = vmatpush.msra.mxu0 0.0
        %7198 = vmatpush.msra.mxu0 0.0
        %7199 = vmatpush.msra.mxu0 0.0
        %7200 = vmatpush.msra.mxu0 0.0
        %v7201 = vand.u32 %v3475, 4294901760
        %v7202 = vsub.f32 %v3475, %v7201
        %7203 = vmatpush.msra.mxu0 %v7202
        %v7204 = vand.u32 %v3471, 4294901760
        %v7205 = vsub.f32 %v3471, %v7204
        %7206 = vmatpush.msra.mxu0 %v7205
        %v7207 = vand.u32 %v4262, 4294901760
        %v7208 = vsub.f32 %v4262, %v7207
        %7209 = vmatmul.f32.gmra.mxu0 %v7208
        %v7210 = vpop.f32.mrf.mxu0
        %v7211 = vadd.f32 %v7181, %v7210
        %v7212 = vand.u32 %v4265, 4294901760
        %v7213 = vsub.f32 %v4265, %v7212
        %7214 = vmatmul.f32.gmra.mxu0 %v7213
        %v7215 = vpop.f32.mrf.mxu0
        %v7216 = vadd.f32 %v7185, %v7215
        %7217 = vdwg.mxu0
        %7218 = vmatpush.msra.mxu0 0.0
        %7219 = vmatpush.msra.mxu0 0.0
        %7220 = vmatpush.msra.mxu0 0.0
        %7221 = vmatpush.msra.mxu0 0.0
        %7222 = vmatpush.msra.mxu0 0.0
        %7223 = vmatpush.msra.mxu0 0.0
        %7224 = vmatpush.msra.mxu0 0.0
        %7225 = vmatpush.msra.mxu0 0.0
        %7226 = vmatpush.msra.mxu0 0.0
        %7227 = vmatpush.msra.mxu0 0.0
        %7228 = vmatpush.msra.mxu0 0.0
        %7229 = vmatpush.msra.mxu0 0.0
        %7230 = vmatpush.msra.mxu0 0.0
        %7231 = vmatpush.msra.mxu0 0.0
        %v7232 = vand.u32 %v3475, 4294901760
        %7233 = vmatpush.msra.mxu0 %v7232
        %v7234 = vand.u32 %v3471, 4294901760
        %7235 = vmatpush.msra.mxu0 %v7234
        %v7236 = vand.u32 %v4262, 4294901760
        %v7237 = vsub.f32 %v4262, %v7236
        %v7238 = vand.u32 %v7237, 4294901760
        %7239 = vmatmul.f32.gmra.mxu0 %v7238
        %v7240 = vpop.f32.mrf.mxu0
        %v7241 = vadd.f32 %v7211, %v7240
        %v7242 = vand.u32 %v4265, 4294901760
        %v7243 = vsub.f32 %v4265, %v7242
        %v7244 = vand.u32 %v7243, 4294901760
        %7245 = vmatmul.f32.gmra.mxu0 %v7244
        %v7246 = vpop.f32.mrf.mxu0
        %v7247 = vadd.f32 %v7216, %v7246
        %7248 = vdwg.mxu0
        %7249 = vmatpush.msra.mxu0 0.0
        %7250 = vmatpush.msra.mxu0 0.0
        %7251 = vmatpush.msra.mxu0 0.0
        %7252 = vmatpush.msra.mxu0 0.0
        %7253 = vmatpush.msra.mxu0 0.0
        %7254 = vmatpush.msra.mxu0 0.0
        %7255 = vmatpush.msra.mxu0 0.0
        %7256 = vmatpush.msra.mxu0 0.0
        %7257 = vmatpush.msra.mxu0 0.0
        %7258 = vmatpush.msra.mxu0 0.0
        %7259 = vmatpush.msra.mxu0 0.0
        %7260 = vmatpush.msra.mxu0 0.0
        %7261 = vmatpush.msra.mxu0 0.0
        %7262 = vmatpush.msra.mxu0 0.0
        %v7263 = vand.u32 %v3475, 4294901760
        %v7264 = vsub.f32 %v3475, %v7263
        %v7265 = vand.u32 %v7264, 4294901760
        %7266 = vmatpush.msra.mxu0 %v7265
        %v7267 = vand.u32 %v3471, 4294901760
        %v7268 = vsub.f32 %v3471, %v7267
        %v7269 = vand.u32 %v7268, 4294901760
        %7270 = vmatpush.msra.mxu0 %v7269
        %v7271 = vand.u32 %v4262, 4294901760
        %7272 = vmatmul.f32.gmra.mxu0 %v7271
        %v7273 = vpop.f32.mrf.mxu0
        %v7274 = vadd.f32 %v7241, %v7273
        %v7275 = vand.u32 %v4265, 4294901760
        %7276 = vmatmul.f32.gmra.mxu0 %v7275
        %v7277 = vpop.f32.mrf.mxu0
        %v7278 = vadd.f32 %v7247, %v7277
        %7279 = vdwg.mxu0
        %7280 = vmatpush.msra.mxu0 0.0
        %7281 = vmatpush.msra.mxu0 0.0
        %7282 = vmatpush.msra.mxu0 0.0
        %7283 = vmatpush.msra.mxu0 0.0
        %7284 = vmatpush.msra.mxu0 0.0
        %7285 = vmatpush.msra.mxu0 0.0
        %7286 = vmatpush.msra.mxu0 0.0
        %7287 = vmatpush.msra.mxu0 0.0
        %7288 = vmatpush.msra.mxu0 0.0
        %7289 = vmatpush.msra.mxu0 0.0
        %7290 = vmatpush.msra.mxu0 0.0
        %7291 = vmatpush.msra.mxu0 0.0
        %7292 = vmatpush.msra.mxu0 0.0
        %7293 = vmatpush.msra.mxu0 0.0
        %v7294 = vand.u32 %v3475, 4294901760
        %7295 = vmatpush.msra.mxu0 %v7294
        %v7296 = vand.u32 %v3471, 4294901760
        %7297 = vmatpush.msra.mxu0 %v7296
        %v7298 = vand.u32 %v4262, 4294901760
        %7299 = vmatmul.f32.gmra.mxu0 %v7298
        %v7300 = vpop.f32.mrf.mxu0
        %v7301 = vadd.f32 %v7274, %v7300
        %v7302 = vand.u32 %v4265, 4294901760
        %7303 = vmatmul.f32.gmra.mxu0 %v7302
        %v7304 = vpop.f32.mrf.mxu0
        %v7305 = vadd.f32 %v7278, %v7304
        %7306 = vdwg.mxu0
        %7307 = vmatpush.msra.mxu0 0.0
        %7308 = vmatpush.msra.mxu0 0.0
        %7309 = vmatpush.msra.mxu0 0.0
        %7310 = vmatpush.msra.mxu0 0.0
        %7311 = vmatpush.msra.mxu0 0.0
        %7312 = vmatpush.msra.mxu0 0.0
        %7313 = vmatpush.msra.mxu0 0.0
        %7314 = vmatpush.msra.mxu0 0.0
        %7315 = vmatpush.msra.mxu0 0.0
        %7316 = vmatpush.msra.mxu0 0.0
        %7317 = vmatpush.msra.mxu0 0.0
        %7318 = vmatpush.msra.mxu0 0.0
        %7319 = vmatpush.msra.mxu0 0.0
        %7320 = vmatpush.msra.mxu0 0.0
        %v7321 = vand.u32 %v3671, 4294901760
        %7322 = vmatpush.msra.mxu0 %v7321
        %v7323 = vand.u32 %v3667, 4294901760
        %7324 = vmatpush.msra.mxu0 %v7323
        %v7325 = vand.u32 %v4262, 4294901760
        %v7326 = vsub.f32 %v4262, %v7325
        %v7327 = vand.u32 %v7326, 4294901760
        %v7328 = vsub.f32 %v7326, %v7327
        %v7329 = vand.u32 %v7328, 4294901760
        %7330 = vmatmul.f32.gmra.mxu0 %v7329
        %v7331 = vpop.f32.mrf.mxu0
        %v7332 = vadd.f32 0.0, %v7331
        %v7333 = vand.u32 %v4265, 4294901760
        %v7334 = vsub.f32 %v4265, %v7333
        %v7335 = vand.u32 %v7334, 4294901760
        %v7336 = vsub.f32 %v7334, %v7335
        %v7337 = vand.u32 %v7336, 4294901760
        %7338 = vmatmul.f32.gmra.mxu0 %v7337
        %v7339 = vpop.f32.mrf.mxu0
        %v7340 = vadd.f32 0.0, %v7339
        %7341 = vdwg.mxu0
        %7342 = vmatpush.msra.mxu0 0.0
        %7343 = vmatpush.msra.mxu0 0.0
        %7344 = vmatpush.msra.mxu0 0.0
        %7345 = vmatpush.msra.mxu0 0.0
        %7346 = vmatpush.msra.mxu0 0.0
        %7347 = vmatpush.msra.mxu0 0.0
        %7348 = vmatpush.msra.mxu0 0.0
        %7349 = vmatpush.msra.mxu0 0.0
        %7350 = vmatpush.msra.mxu0 0.0
        %7351 = vmatpush.msra.mxu0 0.0
        %7352 = vmatpush.msra.mxu0 0.0
        %7353 = vmatpush.msra.mxu0 0.0
        %7354 = vmatpush.msra.mxu0 0.0
        %7355 = vmatpush.msra.mxu0 0.0
        %v7356 = vand.u32 %v3671, 4294901760
        %v7357 = vsub.f32 %v3671, %v7356
        %v7358 = vand.u32 %v7357, 4294901760
        %v7359 = vsub.f32 %v7357, %v7358
        %v7360 = vand.u32 %v7359, 4294901760
        %7361 = vmatpush.msra.mxu0 %v7360
        %v7362 = vand.u32 %v3667, 4294901760
        %v7363 = vsub.f32 %v3667, %v7362
        %v7364 = vand.u32 %v7363, 4294901760
        %v7365 = vsub.f32 %v7363, %v7364
        %v7366 = vand.u32 %v7365, 4294901760
        %7367 = vmatpush.msra.mxu0 %v7366
        %v7368 = vand.u32 %v4262, 4294901760
        %7369 = vmatmul.f32.gmra.mxu0 %v7368
        %v7370 = vpop.f32.mrf.mxu0
        %v7371 = vadd.f32 %v7332, %v7370
        %v7372 = vand.u32 %v4265, 4294901760
        %7373 = vmatmul.f32.gmra.mxu0 %v7372
        %v7374 = vpop.f32.mrf.mxu0
        %v7375 = vadd.f32 %v7340, %v7374
        %7376 = vdwg.mxu0
        %7377 = vmatpush.msra.mxu0 0.0
        %7378 = vmatpush.msra.mxu0 0.0
        %7379 = vmatpush.msra.mxu0 0.0
        %7380 = vmatpush.msra.mxu0 0.0
        %7381 = vmatpush.msra.mxu0 0.0
        %7382 = vmatpush.msra.mxu0 0.0
        %7383 = vmatpush.msra.mxu0 0.0
        %7384 = vmatpush.msra.mxu0 0.0
        %7385 = vmatpush.msra.mxu0 0.0
        %7386 = vmatpush.msra.mxu0 0.0
        %7387 = vmatpush.msra.mxu0 0.0
        %7388 = vmatpush.msra.mxu0 0.0
        %7389 = vmatpush.msra.mxu0 0.0
        %7390 = vmatpush.msra.mxu0 0.0
        %v7391 = vand.u32 %v3671, 4294901760
        %v7392 = vsub.f32 %v3671, %v7391
        %7393 = vmatpush.msra.mxu0 %v7392
        %v7394 = vand.u32 %v3667, 4294901760
        %v7395 = vsub.f32 %v3667, %v7394
        %7396 = vmatpush.msra.mxu0 %v7395
        %v7397 = vand.u32 %v4262, 4294901760
        %v7398 = vsub.f32 %v4262, %v7397
        %7399 = vmatmul.f32.gmra.mxu0 %v7398
        %v7400 = vpop.f32.mrf.mxu0
        %v7401 = vadd.f32 %v7371, %v7400
        %v7402 = vand.u32 %v4265, 4294901760
        %v7403 = vsub.f32 %v4265, %v7402
        %7404 = vmatmul.f32.gmra.mxu0 %v7403
        %v7405 = vpop.f32.mrf.mxu0
        %v7406 = vadd.f32 %v7375, %v7405
        %7407 = vdwg.mxu0
        %7408 = vmatpush.msra.mxu0 0.0
        %7409 = vmatpush.msra.mxu0 0.0
        %7410 = vmatpush.msra.mxu0 0.0
        %7411 = vmatpush.msra.mxu0 0.0
        %7412 = vmatpush.msra.mxu0 0.0
        %7413 = vmatpush.msra.mxu0 0.0
        %7414 = vmatpush.msra.mxu0 0.0
        %7415 = vmatpush.msra.mxu0 0.0
        %7416 = vmatpush.msra.mxu0 0.0
        %7417 = vmatpush.msra.mxu0 0.0
        %7418 = vmatpush.msra.mxu0 0.0
        %7419 = vmatpush.msra.mxu0 0.0
        %7420 = vmatpush.msra.mxu0 0.0
        %7421 = vmatpush.msra.mxu0 0.0
        %v7422 = vand.u32 %v3671, 4294901760
        %7423 = vmatpush.msra.mxu0 %v7422
        %v7424 = vand.u32 %v3667, 4294901760
        %7425 = vmatpush.msra.mxu0 %v7424
        %v7426 = vand.u32 %v4262, 4294901760
        %v7427 = vsub.f32 %v4262, %v7426
        %v7428 = vand.u32 %v7427, 4294901760
        %7429 = vmatmul.f32.gmra.mxu0 %v7428
        %v7430 = vpop.f32.mrf.mxu0
        %v7431 = vadd.f32 %v7401, %v7430
        %v7432 = vand.u32 %v4265, 4294901760
        %v7433 = vsub.f32 %v4265, %v7432
        %v7434 = vand.u32 %v7433, 4294901760
        %7435 = vmatmul.f32.gmra.mxu0 %v7434
        %v7436 = vpop.f32.mrf.mxu0
        %v7437 = vadd.f32 %v7406, %v7436
        %7438 = vdwg.mxu0
        %7439 = vmatpush.msra.mxu0 0.0
        %7440 = vmatpush.msra.mxu0 0.0
        %7441 = vmatpush.msra.mxu0 0.0
        %7442 = vmatpush.msra.mxu0 0.0
        %7443 = vmatpush.msra.mxu0 0.0
        %7444 = vmatpush.msra.mxu0 0.0
        %7445 = vmatpush.msra.mxu0 0.0
        %7446 = vmatpush.msra.mxu0 0.0
        %7447 = vmatpush.msra.mxu0 0.0
        %7448 = vmatpush.msra.mxu0 0.0
        %7449 = vmatpush.msra.mxu0 0.0
        %7450 = vmatpush.msra.mxu0 0.0
        %7451 = vmatpush.msra.mxu0 0.0
        %7452 = vmatpush.msra.mxu0 0.0
        %v7453 = vand.u32 %v3671, 4294901760
        %v7454 = vsub.f32 %v3671, %v7453
        %v7455 = vand.u32 %v7454, 4294901760
        %7456 = vmatpush.msra.mxu0 %v7455
        %v7457 = vand.u32 %v3667, 4294901760
        %v7458 = vsub.f32 %v3667, %v7457
        %v7459 = vand.u32 %v7458, 4294901760
        %7460 = vmatpush.msra.mxu0 %v7459
        %v7461 = vand.u32 %v4262, 4294901760
        %7462 = vmatmul.f32.gmra.mxu0 %v7461
        %v7463 = vpop.f32.mrf.mxu0
        %v7464 = vadd.f32 %v7431, %v7463
        %v7465 = vand.u32 %v4265, 4294901760
        %7466 = vmatmul.f32.gmra.mxu0 %v7465
        %v7467 = vpop.f32.mrf.mxu0
        %v7468 = vadd.f32 %v7437, %v7467
        %7469 = vdwg.mxu0
        %7470 = vmatpush.msra.mxu0 0.0
        %7471 = vmatpush.msra.mxu0 0.0
        %7472 = vmatpush.msra.mxu0 0.0
        %7473 = vmatpush.msra.mxu0 0.0
        %7474 = vmatpush.msra.mxu0 0.0
        %7475 = vmatpush.msra.mxu0 0.0
        %7476 = vmatpush.msra.mxu0 0.0
        %7477 = vmatpush.msra.mxu0 0.0
        %7478 = vmatpush.msra.mxu0 0.0
        %7479 = vmatpush.msra.mxu0 0.0
        %7480 = vmatpush.msra.mxu0 0.0
        %7481 = vmatpush.msra.mxu0 0.0
        %7482 = vmatpush.msra.mxu0 0.0
        %7483 = vmatpush.msra.mxu0 0.0
        %v7484 = vand.u32 %v3671, 4294901760
        %7485 = vmatpush.msra.mxu0 %v7484
        %v7486 = vand.u32 %v3667, 4294901760
        %7487 = vmatpush.msra.mxu0 %v7486
        %v7488 = vand.u32 %v4262, 4294901760
        %7489 = vmatmul.f32.gmra.mxu0 %v7488
        %v7490 = vpop.f32.mrf.mxu0
        %v7491 = vadd.f32 %v7464, %v7490
        %v7492 = vand.u32 %v4265, 4294901760
        %7493 = vmatmul.f32.gmra.mxu0 %v7492
        %v7494 = vpop.f32.mrf.mxu0
        %v7495 = vadd.f32 %v7468, %v7494
        %7496 = vdwg.mxu0
        %7497 = vmatpush.msra.mxu0 0.0
        %7498 = vmatpush.msra.mxu0 0.0
        %7499 = vmatpush.msra.mxu0 0.0
        %7500 = vmatpush.msra.mxu0 0.0
        %7501 = vmatpush.msra.mxu0 0.0
        %7502 = vmatpush.msra.mxu0 0.0
        %7503 = vmatpush.msra.mxu0 0.0
        %7504 = vmatpush.msra.mxu0 0.0
        %7505 = vmatpush.msra.mxu0 0.0
        %7506 = vmatpush.msra.mxu0 0.0
        %7507 = vmatpush.msra.mxu0 0.0
        %7508 = vmatpush.msra.mxu0 0.0
        %7509 = vmatpush.msra.mxu0 0.0
        %7510 = vmatpush.msra.mxu0 0.0
        %v7511 = vand.u32 %v3867, 4294901760
        %7512 = vmatpush.msra.mxu0 %v7511
        %v7513 = vand.u32 %v3863, 4294901760
        %7514 = vmatpush.msra.mxu0 %v7513
        %v7515 = vand.u32 %v4262, 4294901760
        %v7516 = vsub.f32 %v4262, %v7515
        %v7517 = vand.u32 %v7516, 4294901760
        %v7518 = vsub.f32 %v7516, %v7517
        %v7519 = vand.u32 %v7518, 4294901760
        %7520 = vmatmul.f32.gmra.mxu0 %v7519
        %v7521 = vpop.f32.mrf.mxu0
        %v7522 = vadd.f32 0.0, %v7521
        %v7523 = vand.u32 %v4265, 4294901760
        %v7524 = vsub.f32 %v4265, %v7523
        %v7525 = vand.u32 %v7524, 4294901760
        %v7526 = vsub.f32 %v7524, %v7525
        %v7527 = vand.u32 %v7526, 4294901760
        %7528 = vmatmul.f32.gmra.mxu0 %v7527
        %v7529 = vpop.f32.mrf.mxu0
        %v7530 = vadd.f32 0.0, %v7529
        %7531 = vdwg.mxu0
        %7532 = vmatpush.msra.mxu0 0.0
        %7533 = vmatpush.msra.mxu0 0.0
        %7534 = vmatpush.msra.mxu0 0.0
        %7535 = vmatpush.msra.mxu0 0.0
        %7536 = vmatpush.msra.mxu0 0.0
        %7537 = vmatpush.msra.mxu0 0.0
        %7538 = vmatpush.msra.mxu0 0.0
        %7539 = vmatpush.msra.mxu0 0.0
        %7540 = vmatpush.msra.mxu0 0.0
        %7541 = vmatpush.msra.mxu0 0.0
        %7542 = vmatpush.msra.mxu0 0.0
        %7543 = vmatpush.msra.mxu0 0.0
        %7544 = vmatpush.msra.mxu0 0.0
        %7545 = vmatpush.msra.mxu0 0.0
        %v7546 = vand.u32 %v3867, 4294901760
        %v7547 = vsub.f32 %v3867, %v7546
        %v7548 = vand.u32 %v7547, 4294901760
        %v7549 = vsub.f32 %v7547, %v7548
        %v7550 = vand.u32 %v7549, 4294901760
        %7551 = vmatpush.msra.mxu0 %v7550
        %v7552 = vand.u32 %v3863, 4294901760
        %v7553 = vsub.f32 %v3863, %v7552
        %v7554 = vand.u32 %v7553, 4294901760
        %v7555 = vsub.f32 %v7553, %v7554
        %v7556 = vand.u32 %v7555, 4294901760
        %7557 = vmatpush.msra.mxu0 %v7556
        %v7558 = vand.u32 %v4262, 4294901760
        %7559 = vmatmul.f32.gmra.mxu0 %v7558
        %v7560 = vpop.f32.mrf.mxu0
        %v7561 = vadd.f32 %v7522, %v7560
        %v7562 = vand.u32 %v4265, 4294901760
        %7563 = vmatmul.f32.gmra.mxu0 %v7562
        %v7564 = vpop.f32.mrf.mxu0
        %v7565 = vadd.f32 %v7530, %v7564
        %7566 = vdwg.mxu0
        %7567 = vmatpush.msra.mxu0 0.0
        %7568 = vmatpush.msra.mxu0 0.0
        %7569 = vmatpush.msra.mxu0 0.0
        %7570 = vmatpush.msra.mxu0 0.0
        %7571 = vmatpush.msra.mxu0 0.0
        %7572 = vmatpush.msra.mxu0 0.0
        %7573 = vmatpush.msra.mxu0 0.0
        %7574 = vmatpush.msra.mxu0 0.0
        %7575 = vmatpush.msra.mxu0 0.0
        %7576 = vmatpush.msra.mxu0 0.0
        %7577 = vmatpush.msra.mxu0 0.0
        %7578 = vmatpush.msra.mxu0 0.0
        %7579 = vmatpush.msra.mxu0 0.0
        %7580 = vmatpush.msra.mxu0 0.0
        %v7581 = vand.u32 %v3867, 4294901760
        %v7582 = vsub.f32 %v3867, %v7581
        %7583 = vmatpush.msra.mxu0 %v7582
        %v7584 = vand.u32 %v3863, 4294901760
        %v7585 = vsub.f32 %v3863, %v7584
        %7586 = vmatpush.msra.mxu0 %v7585
        %v7587 = vand.u32 %v4262, 4294901760
        %v7588 = vsub.f32 %v4262, %v7587
        %7589 = vmatmul.f32.gmra.mxu0 %v7588
        %v7590 = vpop.f32.mrf.mxu0
        %v7591 = vadd.f32 %v7561, %v7590
        %v7592 = vand.u32 %v4265, 4294901760
        %v7593 = vsub.f32 %v4265, %v7592
        %7594 = vmatmul.f32.gmra.mxu0 %v7593
        %v7595 = vpop.f32.mrf.mxu0
        %v7596 = vadd.f32 %v7565, %v7595
        %7597 = vdwg.mxu0
        %7598 = vmatpush.msra.mxu0 0.0
        %7599 = vmatpush.msra.mxu0 0.0
        %7600 = vmatpush.msra.mxu0 0.0
        %7601 = vmatpush.msra.mxu0 0.0
        %7602 = vmatpush.msra.mxu0 0.0
        %7603 = vmatpush.msra.mxu0 0.0
        %7604 = vmatpush.msra.mxu0 0.0
        %7605 = vmatpush.msra.mxu0 0.0
        %7606 = vmatpush.msra.mxu0 0.0
        %7607 = vmatpush.msra.mxu0 0.0
        %7608 = vmatpush.msra.mxu0 0.0
        %7609 = vmatpush.msra.mxu0 0.0
        %7610 = vmatpush.msra.mxu0 0.0
        %7611 = vmatpush.msra.mxu0 0.0
        %v7612 = vand.u32 %v3867, 4294901760
        %7613 = vmatpush.msra.mxu0 %v7612
        %v7614 = vand.u32 %v3863, 4294901760
        %7615 = vmatpush.msra.mxu0 %v7614
        %v7616 = vand.u32 %v4262, 4294901760
        %v7617 = vsub.f32 %v4262, %v7616
        %v7618 = vand.u32 %v7617, 4294901760
        %7619 = vmatmul.f32.gmra.mxu0 %v7618
        %v7620 = vpop.f32.mrf.mxu0
        %v7621 = vadd.f32 %v7591, %v7620
        %v7622 = vand.u32 %v4265, 4294901760
        %v7623 = vsub.f32 %v4265, %v7622
        %v7624 = vand.u32 %v7623, 4294901760
        %7625 = vmatmul.f32.gmra.mxu0 %v7624
        %v7626 = vpop.f32.mrf.mxu0
        %v7627 = vadd.f32 %v7596, %v7626
        %7628 = vdwg.mxu0
        %7629 = vmatpush.msra.mxu0 0.0
        %7630 = vmatpush.msra.mxu0 0.0
        %7631 = vmatpush.msra.mxu0 0.0
        %7632 = vmatpush.msra.mxu0 0.0
        %7633 = vmatpush.msra.mxu0 0.0
        %7634 = vmatpush.msra.mxu0 0.0
        %7635 = vmatpush.msra.mxu0 0.0
        %7636 = vmatpush.msra.mxu0 0.0
        %7637 = vmatpush.msra.mxu0 0.0
        %7638 = vmatpush.msra.mxu0 0.0
        %7639 = vmatpush.msra.mxu0 0.0
        %7640 = vmatpush.msra.mxu0 0.0
        %7641 = vmatpush.msra.mxu0 0.0
        %7642 = vmatpush.msra.mxu0 0.0
        %v7643 = vand.u32 %v3867, 4294901760
        %v7644 = vsub.f32 %v3867, %v7643
        %v7645 = vand.u32 %v7644, 4294901760
        %7646 = vmatpush.msra.mxu0 %v7645
        %v7647 = vand.u32 %v3863, 4294901760
        %v7648 = vsub.f32 %v3863, %v7647
        %v7649 = vand.u32 %v7648, 4294901760
        %7650 = vmatpush.msra.mxu0 %v7649
        %v7651 = vand.u32 %v4262, 4294901760
        %7652 = vmatmul.f32.gmra.mxu0 %v7651
        %v7653 = vpop.f32.mrf.mxu0
        %v7654 = vadd.f32 %v7621, %v7653
        %v7655 = vand.u32 %v4265, 4294901760
        %7656 = vmatmul.f32.gmra.mxu0 %v7655
        %v7657 = vpop.f32.mrf.mxu0
        %v7658 = vadd.f32 %v7627, %v7657
        %7659 = vdwg.mxu0
        %7660 = vmatpush.msra.mxu0 0.0
        %7661 = vmatpush.msra.mxu0 0.0
        %7662 = vmatpush.msra.mxu0 0.0
        %7663 = vmatpush.msra.mxu0 0.0
        %7664 = vmatpush.msra.mxu0 0.0
        %7665 = vmatpush.msra.mxu0 0.0
        %7666 = vmatpush.msra.mxu0 0.0
        %7667 = vmatpush.msra.mxu0 0.0
        %7668 = vmatpush.msra.mxu0 0.0
        %7669 = vmatpush.msra.mxu0 0.0
        %7670 = vmatpush.msra.mxu0 0.0
        %7671 = vmatpush.msra.mxu0 0.0
        %7672 = vmatpush.msra.mxu0 0.0
        %7673 = vmatpush.msra.mxu0 0.0
        %v7674 = vand.u32 %v3867, 4294901760
        %7675 = vmatpush.msra.mxu0 %v7674
        %v7676 = vand.u32 %v3863, 4294901760
        %7677 = vmatpush.msra.mxu0 %v7676
        %v7678 = vand.u32 %v4262, 4294901760
        %7679 = vmatmul.f32.gmra.mxu0 %v7678
        %v7680 = vpop.f32.mrf.mxu0
        %v7681 = vadd.f32 %v7654, %v7680
        %v7682 = vand.u32 %v4265, 4294901760
        %7683 = vmatmul.f32.gmra.mxu0 %v7682
        %v7684 = vpop.f32.mrf.mxu0
        %v7685 = vadd.f32 %v7658, %v7684
        %7686 = vdwg.mxu0
        %7687 = vmatpush.msra.mxu0 0.0
        %7688 = vmatpush.msra.mxu0 0.0
        %7689 = vmatpush.msra.mxu0 0.0
        %7690 = vmatpush.msra.mxu0 0.0
        %7691 = vmatpush.msra.mxu0 0.0
        %7692 = vmatpush.msra.mxu0 0.0
        %7693 = vmatpush.msra.mxu0 0.0
        %7694 = vmatpush.msra.mxu0 0.0
        %7695 = vmatpush.msra.mxu0 0.0
        %7696 = vmatpush.msra.mxu0 0.0
        %7697 = vmatpush.msra.mxu0 0.0
        %7698 = vmatpush.msra.mxu0 0.0
        %7699 = vmatpush.msra.mxu0 0.0
        %7700 = vmatpush.msra.mxu0 0.0
        %v7701 = vand.u32 %v4063, 4294901760
        %7702 = vmatpush.msra.mxu0 %v7701
        %v7703 = vand.u32 %v4059, 4294901760
        %7704 = vmatpush.msra.mxu0 %v7703
        %v7705 = vand.u32 %v4262, 4294901760
        %v7706 = vsub.f32 %v4262, %v7705
        %v7707 = vand.u32 %v7706, 4294901760
        %v7708 = vsub.f32 %v7706, %v7707
        %v7709 = vand.u32 %v7708, 4294901760
        %7710 = vmatmul.f32.gmra.mxu0 %v7709
        %v7711 = vpop.f32.mrf.mxu0
        %v7712 = vadd.f32 0.0, %v7711
        %v7713 = vand.u32 %v4265, 4294901760
        %v7714 = vsub.f32 %v4265, %v7713
        %v7715 = vand.u32 %v7714, 4294901760
        %v7716 = vsub.f32 %v7714, %v7715
        %v7717 = vand.u32 %v7716, 4294901760
        %7718 = vmatmul.f32.gmra.mxu0 %v7717
        %v7719 = vpop.f32.mrf.mxu0
        %v7720 = vadd.f32 0.0, %v7719
        %7721 = vdwg.mxu0
        %7722 = vmatpush.msra.mxu0 0.0
        %7723 = vmatpush.msra.mxu0 0.0
        %7724 = vmatpush.msra.mxu0 0.0
        %7725 = vmatpush.msra.mxu0 0.0
        %7726 = vmatpush.msra.mxu0 0.0
        %7727 = vmatpush.msra.mxu0 0.0
        %7728 = vmatpush.msra.mxu0 0.0
        %7729 = vmatpush.msra.mxu0 0.0
        %7730 = vmatpush.msra.mxu0 0.0
        %7731 = vmatpush.msra.mxu0 0.0
        %7732 = vmatpush.msra.mxu0 0.0
        %7733 = vmatpush.msra.mxu0 0.0
        %7734 = vmatpush.msra.mxu0 0.0
        %7735 = vmatpush.msra.mxu0 0.0
        %v7736 = vand.u32 %v4063, 4294901760
        %v7737 = vsub.f32 %v4063, %v7736
        %v7738 = vand.u32 %v7737, 4294901760
        %v7739 = vsub.f32 %v7737, %v7738
        %v7740 = vand.u32 %v7739, 4294901760
        %7741 = vmatpush.msra.mxu0 %v7740
        %v7742 = vand.u32 %v4059, 4294901760
        %v7743 = vsub.f32 %v4059, %v7742
        %v7744 = vand.u32 %v7743, 4294901760
        %v7745 = vsub.f32 %v7743, %v7744
        %v7746 = vand.u32 %v7745, 4294901760
        %7747 = vmatpush.msra.mxu0 %v7746
        %v7748 = vand.u32 %v4262, 4294901760
        %7749 = vmatmul.f32.gmra.mxu0 %v7748
        %v7750 = vpop.f32.mrf.mxu0
        %v7751 = vadd.f32 %v7712, %v7750
        %v7752 = vand.u32 %v4265, 4294901760
        %7753 = vmatmul.f32.gmra.mxu0 %v7752
        %v7754 = vpop.f32.mrf.mxu0
        %v7755 = vadd.f32 %v7720, %v7754
        %7756 = vdwg.mxu0
        %7757 = vmatpush.msra.mxu0 0.0
        %7758 = vmatpush.msra.mxu0 0.0
        %7759 = vmatpush.msra.mxu0 0.0
        %7760 = vmatpush.msra.mxu0 0.0
        %7761 = vmatpush.msra.mxu0 0.0
        %7762 = vmatpush.msra.mxu0 0.0
        %7763 = vmatpush.msra.mxu0 0.0
        %7764 = vmatpush.msra.mxu0 0.0
        %7765 = vmatpush.msra.mxu0 0.0
        %7766 = vmatpush.msra.mxu0 0.0
        %7767 = vmatpush.msra.mxu0 0.0
        %7768 = vmatpush.msra.mxu0 0.0
        %7769 = vmatpush.msra.mxu0 0.0
        %7770 = vmatpush.msra.mxu0 0.0
        %v7771 = vand.u32 %v4063, 4294901760
        %v7772 = vsub.f32 %v4063, %v7771
        %7773 = vmatpush.msra.mxu0 %v7772
        %v7774 = vand.u32 %v4059, 4294901760
        %v7775 = vsub.f32 %v4059, %v7774
        %7776 = vmatpush.msra.mxu0 %v7775
        %v7777 = vand.u32 %v4262, 4294901760
        %v7778 = vsub.f32 %v4262, %v7777
        %7779 = vmatmul.f32.gmra.mxu0 %v7778
        %v7780 = vpop.f32.mrf.mxu0
        %v7781 = vadd.f32 %v7751, %v7780
        %v7782 = vand.u32 %v4265, 4294901760
        %v7783 = vsub.f32 %v4265, %v7782
        %7784 = vmatmul.f32.gmra.mxu0 %v7783
        %v7785 = vpop.f32.mrf.mxu0
        %v7786 = vadd.f32 %v7755, %v7785
        %7787 = vdwg.mxu0
        %7788 = vmatpush.msra.mxu0 0.0
        %7789 = vmatpush.msra.mxu0 0.0
        %7790 = vmatpush.msra.mxu0 0.0
        %7791 = vmatpush.msra.mxu0 0.0
        %7792 = vmatpush.msra.mxu0 0.0
        %7793 = vmatpush.msra.mxu0 0.0
        %7794 = vmatpush.msra.mxu0 0.0
        %7795 = vmatpush.msra.mxu0 0.0
        %7796 = vmatpush.msra.mxu0 0.0
        %7797 = vmatpush.msra.mxu0 0.0
        %7798 = vmatpush.msra.mxu0 0.0
        %7799 = vmatpush.msra.mxu0 0.0
        %7800 = vmatpush.msra.mxu0 0.0
        %7801 = vmatpush.msra.mxu0 0.0
        %v7802 = vand.u32 %v4063, 4294901760
        %7803 = vmatpush.msra.mxu0 %v7802
        %v7804 = vand.u32 %v4059, 4294901760
        %7805 = vmatpush.msra.mxu0 %v7804
        %v7806 = vand.u32 %v4262, 4294901760
        %v7807 = vsub.f32 %v4262, %v7806
        %v7808 = vand.u32 %v7807, 4294901760
        %7809 = vmatmul.f32.gmra.mxu0 %v7808
        %v7810 = vpop.f32.mrf.mxu0
        %v7811 = vadd.f32 %v7781, %v7810
        %v7812 = vand.u32 %v4265, 4294901760
        %v7813 = vsub.f32 %v4265, %v7812
        %v7814 = vand.u32 %v7813, 4294901760
        %7815 = vmatmul.f32.gmra.mxu0 %v7814
        %v7816 = vpop.f32.mrf.mxu0
        %v7817 = vadd.f32 %v7786, %v7816
        %7818 = vdwg.mxu0
        %7819 = vmatpush.msra.mxu0 0.0
        %7820 = vmatpush.msra.mxu0 0.0
        %7821 = vmatpush.msra.mxu0 0.0
        %7822 = vmatpush.msra.mxu0 0.0
        %7823 = vmatpush.msra.mxu0 0.0
        %7824 = vmatpush.msra.mxu0 0.0
        %7825 = vmatpush.msra.mxu0 0.0
        %7826 = vmatpush.msra.mxu0 0.0
        %7827 = vmatpush.msra.mxu0 0.0
        %7828 = vmatpush.msra.mxu0 0.0
        %7829 = vmatpush.msra.mxu0 0.0
        %7830 = vmatpush.msra.mxu0 0.0
        %7831 = vmatpush.msra.mxu0 0.0
        %7832 = vmatpush.msra.mxu0 0.0
        %v7833 = vand.u32 %v4063, 4294901760
        %v7834 = vsub.f32 %v4063, %v7833
        %v7835 = vand.u32 %v7834, 4294901760
        %7836 = vmatpush.msra.mxu0 %v7835
        %v7837 = vand.u32 %v4059, 4294901760
        %v7838 = vsub.f32 %v4059, %v7837
        %v7839 = vand.u32 %v7838, 4294901760
        %7840 = vmatpush.msra.mxu0 %v7839
        %v7841 = vand.u32 %v4262, 4294901760
        %7842 = vmatmul.f32.gmra.mxu0 %v7841
        %v7843 = vpop.f32.mrf.mxu0
        %v7844 = vadd.f32 %v7811, %v7843
        %v7845 = vand.u32 %v4265, 4294901760
        %7846 = vmatmul.f32.gmra.mxu0 %v7845
        %v7847 = vpop.f32.mrf.mxu0
        %v7848 = vadd.f32 %v7817, %v7847
        %7849 = vdwg.mxu0
        %7850 = vmatpush.msra.mxu0 0.0
        %7851 = vmatpush.msra.mxu0 0.0
        %7852 = vmatpush.msra.mxu0 0.0
        %7853 = vmatpush.msra.mxu0 0.0
        %7854 = vmatpush.msra.mxu0 0.0
        %7855 = vmatpush.msra.mxu0 0.0
        %7856 = vmatpush.msra.mxu0 0.0
        %7857 = vmatpush.msra.mxu0 0.0
        %7858 = vmatpush.msra.mxu0 0.0
        %7859 = vmatpush.msra.mxu0 0.0
        %7860 = vmatpush.msra.mxu0 0.0
        %7861 = vmatpush.msra.mxu0 0.0
        %7862 = vmatpush.msra.mxu0 0.0
        %7863 = vmatpush.msra.mxu0 0.0
        %v7864 = vand.u32 %v4063, 4294901760
        %7865 = vmatpush.msra.mxu0 %v7864
        %v7866 = vand.u32 %v4059, 4294901760
        %7867 = vmatpush.msra.mxu0 %v7866
        %v7868 = vand.u32 %v4262, 4294901760
        %7869 = vmatmul.f32.gmra.mxu0 %v7868
        %v7870 = vpop.f32.mrf.mxu0
        %v7871 = vadd.f32 %v7844, %v7870
        %v7872 = vand.u32 %v4265, 4294901760
        %7873 = vmatmul.f32.gmra.mxu0 %v7872
        %v7874 = vpop.f32.mrf.mxu0
        %v7875 = vadd.f32 %v7848, %v7874
        %7876 = vdwg.mxu0
        %7877 = vmatpush.msra.mxu0 0.0
        %7878 = vmatpush.msra.mxu0 0.0
        %7879 = vmatpush.msra.mxu0 0.0
        %7880 = vmatpush.msra.mxu0 0.0
        %7881 = vmatpush.msra.mxu0 0.0
        %7882 = vmatpush.msra.mxu0 0.0
        %7883 = vmatpush.msra.mxu0 0.0
        %7884 = vmatpush.msra.mxu0 0.0
        %7885 = vmatpush.msra.mxu0 0.0
        %7886 = vmatpush.msra.mxu0 0.0
        %7887 = vmatpush.msra.mxu0 0.0
        %7888 = vmatpush.msra.mxu0 0.0
        %7889 = vmatpush.msra.mxu0 0.0
        %7890 = vmatpush.msra.mxu0 0.0
        %v7891 = vand.u32 %v4259, 4294901760
        %7892 = vmatpush.msra.mxu0 %v7891
        %v7893 = vand.u32 %v4255, 4294901760
        %7894 = vmatpush.msra.mxu0 %v7893
        %v7895 = vand.u32 %v4262, 4294901760
        %v7896 = vsub.f32 %v4262, %v7895
        %v7897 = vand.u32 %v7896, 4294901760
        %v7898 = vsub.f32 %v7896, %v7897
        %v7899 = vand.u32 %v7898, 4294901760
        %7900 = vmatmul.f32.gmra.mxu0 %v7899
        %v7901 = vpop.f32.mrf.mxu0
        %v7902 = vadd.f32 0.0, %v7901
        %v7903 = vand.u32 %v4265, 4294901760
        %v7904 = vsub.f32 %v4265, %v7903
        %v7905 = vand.u32 %v7904, 4294901760
        %v7906 = vsub.f32 %v7904, %v7905
        %v7907 = vand.u32 %v7906, 4294901760
        %7908 = vmatmul.f32.gmra.mxu0 %v7907
        %v7909 = vpop.f32.mrf.mxu0
        %v7910 = vadd.f32 0.0, %v7909
        %7911 = vdwg.mxu0
        %7912 = vmatpush.msra.mxu0 0.0
        %7913 = vmatpush.msra.mxu0 0.0
        %7914 = vmatpush.msra.mxu0 0.0
        %7915 = vmatpush.msra.mxu0 0.0
        %7916 = vmatpush.msra.mxu0 0.0
        %7917 = vmatpush.msra.mxu0 0.0
        %7918 = vmatpush.msra.mxu0 0.0
        %7919 = vmatpush.msra.mxu0 0.0
        %7920 = vmatpush.msra.mxu0 0.0
        %7921 = vmatpush.msra.mxu0 0.0
        %7922 = vmatpush.msra.mxu0 0.0
        %7923 = vmatpush.msra.mxu0 0.0
        %7924 = vmatpush.msra.mxu0 0.0
        %7925 = vmatpush.msra.mxu0 0.0
        %v7926 = vand.u32 %v4259, 4294901760
        %v7927 = vsub.f32 %v4259, %v7926
        %v7928 = vand.u32 %v7927, 4294901760
        %v7929 = vsub.f32 %v7927, %v7928
        %v7930 = vand.u32 %v7929, 4294901760
        %7931 = vmatpush.msra.mxu0 %v7930
        %v7932 = vand.u32 %v4255, 4294901760
        %v7933 = vsub.f32 %v4255, %v7932
        %v7934 = vand.u32 %v7933, 4294901760
        %v7935 = vsub.f32 %v7933, %v7934
        %v7936 = vand.u32 %v7935, 4294901760
        %7937 = vmatpush.msra.mxu0 %v7936
        %v7938 = vand.u32 %v4262, 4294901760
        %7939 = vmatmul.f32.gmra.mxu0 %v7938
        %v7940 = vpop.f32.mrf.mxu0
        %v7941 = vadd.f32 %v7902, %v7940
        %v7942 = vand.u32 %v4265, 4294901760
        %7943 = vmatmul.f32.gmra.mxu0 %v7942
        %v7944 = vpop.f32.mrf.mxu0
        %v7945 = vadd.f32 %v7910, %v7944
        %7946 = vdwg.mxu0
        %7947 = vmatpush.msra.mxu0 0.0
        %7948 = vmatpush.msra.mxu0 0.0
        %7949 = vmatpush.msra.mxu0 0.0
        %7950 = vmatpush.msra.mxu0 0.0
        %7951 = vmatpush.msra.mxu0 0.0
        %7952 = vmatpush.msra.mxu0 0.0
        %7953 = vmatpush.msra.mxu0 0.0
        %7954 = vmatpush.msra.mxu0 0.0
        %7955 = vmatpush.msra.mxu0 0.0
        %7956 = vmatpush.msra.mxu0 0.0
        %7957 = vmatpush.msra.mxu0 0.0
        %7958 = vmatpush.msra.mxu0 0.0
        %7959 = vmatpush.msra.mxu0 0.0
        %7960 = vmatpush.msra.mxu0 0.0
        %v7961 = vand.u32 %v4259, 4294901760
        %v7962 = vsub.f32 %v4259, %v7961
        %7963 = vmatpush.msra.mxu0 %v7962
        %v7964 = vand.u32 %v4255, 4294901760
        %v7965 = vsub.f32 %v4255, %v7964
        %7966 = vmatpush.msra.mxu0 %v7965
        %v7967 = vand.u32 %v4262, 4294901760
        %v7968 = vsub.f32 %v4262, %v7967
        %7969 = vmatmul.f32.gmra.mxu0 %v7968
        %v7970 = vpop.f32.mrf.mxu0
        %v7971 = vadd.f32 %v7941, %v7970
        %v7972 = vand.u32 %v4265, 4294901760
        %v7973 = vsub.f32 %v4265, %v7972
        %7974 = vmatmul.f32.gmra.mxu0 %v7973
        %v7975 = vpop.f32.mrf.mxu0
        %v7976 = vadd.f32 %v7945, %v7975
        %7977 = vdwg.mxu0
        %7978 = vmatpush.msra.mxu0 0.0
        %7979 = vmatpush.msra.mxu0 0.0
        %7980 = vmatpush.msra.mxu0 0.0
        %7981 = vmatpush.msra.mxu0 0.0
        %7982 = vmatpush.msra.mxu0 0.0
        %7983 = vmatpush.msra.mxu0 0.0
        %7984 = vmatpush.msra.mxu0 0.0
        %7985 = vmatpush.msra.mxu0 0.0
        %7986 = vmatpush.msra.mxu0 0.0
        %7987 = vmatpush.msra.mxu0 0.0
        %7988 = vmatpush.msra.mxu0 0.0
        %7989 = vmatpush.msra.mxu0 0.0
        %7990 = vmatpush.msra.mxu0 0.0
        %7991 = vmatpush.msra.mxu0 0.0
        %v7992 = vand.u32 %v4259, 4294901760
        %7993 = vmatpush.msra.mxu0 %v7992
        %v7994 = vand.u32 %v4255, 4294901760
        %7995 = vmatpush.msra.mxu0 %v7994
        %v7996 = vand.u32 %v4262, 4294901760
        %v7997 = vsub.f32 %v4262, %v7996
        %v7998 = vand.u32 %v7997, 4294901760
        %7999 = vmatmul.f32.gmra.mxu0 %v7998
        %v8000 = vpop.f32.mrf.mxu0
        %v8001 = vadd.f32 %v7971, %v8000
        %v8002 = vand.u32 %v4265, 4294901760
        %v8003 = vsub.f32 %v4265, %v8002
        %v8004 = vand.u32 %v8003, 4294901760
        %8005 = vmatmul.f32.gmra.mxu0 %v8004
        %v8006 = vpop.f32.mrf.mxu0
        %v8007 = vadd.f32 %v7976, %v8006
        %8008 = vdwg.mxu0
        %8009 = vmatpush.msra.mxu0 0.0
        %8010 = vmatpush.msra.mxu0 0.0
        %8011 = vmatpush.msra.mxu0 0.0
        %8012 = vmatpush.msra.mxu0 0.0
        %8013 = vmatpush.msra.mxu0 0.0
        %8014 = vmatpush.msra.mxu0 0.0
        %8015 = vmatpush.msra.mxu0 0.0
        %8016 = vmatpush.msra.mxu0 0.0
        %8017 = vmatpush.msra.mxu0 0.0
        %8018 = vmatpush.msra.mxu0 0.0
        %8019 = vmatpush.msra.mxu0 0.0
        %8020 = vmatpush.msra.mxu0 0.0
        %8021 = vmatpush.msra.mxu0 0.0
        %8022 = vmatpush.msra.mxu0 0.0
        %v8023 = vand.u32 %v4259, 4294901760
        %v8024 = vsub.f32 %v4259, %v8023
        %v8025 = vand.u32 %v8024, 4294901760
        %8026 = vmatpush.msra.mxu0 %v8025
        %v8027 = vand.u32 %v4255, 4294901760
        %v8028 = vsub.f32 %v4255, %v8027
        %v8029 = vand.u32 %v8028, 4294901760
        %8030 = vmatpush.msra.mxu0 %v8029
        %v8031 = vand.u32 %v4262, 4294901760
        %8032 = vmatmul.f32.gmra.mxu0 %v8031
        %v8033 = vpop.f32.mrf.mxu0
        %v8034 = vadd.f32 %v8001, %v8033
        %v8035 = vand.u32 %v4265, 4294901760
        %8036 = vmatmul.f32.gmra.mxu0 %v8035
        %v8037 = vpop.f32.mrf.mxu0
        %v8038 = vadd.f32 %v8007, %v8037
        %8039 = vdwg.mxu0
        %8040 = vmatpush.msra.mxu0 0.0
        %8041 = vmatpush.msra.mxu0 0.0
        %8042 = vmatpush.msra.mxu0 0.0
        %8043 = vmatpush.msra.mxu0 0.0
        %8044 = vmatpush.msra.mxu0 0.0
        %8045 = vmatpush.msra.mxu0 0.0
        %8046 = vmatpush.msra.mxu0 0.0
        %8047 = vmatpush.msra.mxu0 0.0
        %8048 = vmatpush.msra.mxu0 0.0
        %8049 = vmatpush.msra.mxu0 0.0
        %8050 = vmatpush.msra.mxu0 0.0
        %8051 = vmatpush.msra.mxu0 0.0
        %8052 = vmatpush.msra.mxu0 0.0
        %8053 = vmatpush.msra.mxu0 0.0
        %v8054 = vand.u32 %v4259, 4294901760
        %8055 = vmatpush.msra.mxu0 %v8054
        %v8056 = vand.u32 %v4255, 4294901760
        %8057 = vmatpush.msra.mxu0 %v8056
        %v8058 = vand.u32 %v4262, 4294901760
        %8059 = vmatmul.f32.gmra.mxu0 %v8058
        %v8060 = vpop.f32.mrf.mxu0
        %v8061 = vadd.f32 %v8034, %v8060
        %v8062 = vand.u32 %v4265, 4294901760
        %8063 = vmatmul.f32.gmra.mxu0 %v8062
        %v8064 = vpop.f32.mrf.mxu0
        %v8065 = vadd.f32 %v8038, %v8064
        %8066 = vdwg.mxu0
        %v8067 = vmul.f32 %v4451, %v4451
        %v8068 = vmul.f32 %v4455, %v4455
        %v8069 = vmul.f32 %v4641, %v4641
        %v8070 = vmul.f32 %v4645, %v4645
        %v8071 = vmul.f32 %v4831, %v4831
        %v8072 = vmul.f32 %v4835, %v4835
        %v8073 = vmul.f32 %v5021, %v5021
        %v8074 = vmul.f32 %v5025, %v5025
        %v8075 = vmul.f32 %v5211, %v5211
        %v8076 = vmul.f32 %v5215, %v5215
        %v8077 = vmul.f32 %v5401, %v5401
        %v8078 = vmul.f32 %v5405, %v5405
        %v8079 = vmul.f32 %v5591, %v5591
        %v8080 = vmul.f32 %v5595, %v5595
        %v8081 = vmul.f32 %v5781, %v5781
        %v8082 = vmul.f32 %v5785, %v5785
        %v8083 = vmul.f32 %v4451, %v5211
        %v8084 = vmul.f32 %v4455, %v5215
        %v8085 = vmul.f32 %v4641, %v5401
        %v8086 = vmul.f32 %v4645, %v5405
        %v8087 = vmul.f32 %v4831, %v5591
        %v8088 = vmul.f32 %v4835, %v5595
        %v8089 = vmul.f32 %v5021, %v5781
        %v8090 = vmul.f32 %v5025, %v5785
        %v8091 = vsub.f32 %v5971, %v8067
        %v8092 = vsub.f32 %v5975, %v8068
        %v8093 = vsub.f32 %v6161, %v8069
        %v8094 = vsub.f32 %v6165, %v8070
        %v8095 = vsub.f32 %v6351, %v8071
        %v8096 = vsub.f32 %v6355, %v8072
        %v8097 = vsub.f32 %v6541, %v8073
        %v8098 = vsub.f32 %v6545, %v8074
        %v8099 = vsub.f32 %v6731, %v8075
        %v8100 = vsub.f32 %v6735, %v8076
        %v8101 = vsub.f32 %v6921, %v8077
        %v8102 = vsub.f32 %v6925, %v8078
        %v8103 = vsub.f32 %v7111, %v8079
        %v8104 = vsub.f32 %v7115, %v8080
        %v8105 = vsub.f32 %v7301, %v8081
        %v8106 = vsub.f32 %v7305, %v8082
        %v8107 = vsub.f32 %v7491, %v8083
        %v8108 = vsub.f32 %v7495, %v8084
        %v8109 = vsub.f32 %v7681, %v8085
        %v8110 = vsub.f32 %v7685, %v8086
        %v8111 = vsub.f32 %v7871, %v8087
        %v8112 = vsub.f32 %v7875, %v8088
        %v8113 = vsub.f32 %v8061, %v8089
        %v8114 = vsub.f32 %v8065, %v8090
        %v8115 = vmul.f32 %v8083, 2.0
        %v8116 = vmul.f32 %v8084, 2.0
        %v8117 = vmul.f32 %v8085, 2.0
        %v8118 = vmul.f32 %v8086, 2.0
        %v8119 = vmul.f32 %v8087, 2.0
        %v8120 = vmul.f32 %v8088, 2.0
        %v8121 = vmul.f32 %v8089, 2.0
        %v8122 = vmul.f32 %v8090, 2.0
        %v8123 = vadd.f32 %v8115, 0.0001
        %v8124 = vadd.f32 %v8116, 0.0001
        %v8125 = vadd.f32 %v8117, 0.0001
        %v8126 = vadd.f32 %v8118, 0.0001
        %v8127 = vadd.f32 %v8119, 0.0001
        %v8128 = vadd.f32 %v8120, 0.0001
        %v8129 = vadd.f32 %v8121, 0.0001
        %v8130 = vadd.f32 %v8122, 0.0001
        %v8131 = vmul.f32 %v8107, 2.0
        %v8132 = vmul.f32 %v8108, 2.0
        %v8133 = vmul.f32 %v8109, 2.0
        %v8134 = vmul.f32 %v8110, 2.0
        %v8135 = vmul.f32 %v8111, 2.0
        %v8136 = vmul.f32 %v8112, 2.0
        %v8137 = vmul.f32 %v8113, 2.0
        %v8138 = vmul.f32 %v8114, 2.0
        %v8139 = vadd.f32 %v8131, 0.0009
        %v8140 = vadd.f32 %v8132, 0.0009
        %v8141 = vadd.f32 %v8133, 0.0009
        %v8142 = vadd.f32 %v8134, 0.0009
        %v8143 = vadd.f32 %v8135, 0.0009
        %v8144 = vadd.f32 %v8136, 0.0009
        %v8145 = vadd.f32 %v8137, 0.0009
        %v8146 = vadd.f32 %v8138, 0.0009
        %v8147 = vmul.f32 %v8123, %v8139
        %v8148 = vmul.f32 %v8124, %v8140
        %v8149 = vmul.f32 %v8125, %v8141
        %v8150 = vmul.f32 %v8126, %v8142
        %v8151 = vmul.f32 %v8127, %v8143
        %v8152 = vmul.f32 %v8128, %v8144
        %v8153 = vmul.f32 %v8129, %v8145
        %v8154 = vmul.f32 %v8130, %v8146
        %v8155 = vadd.f32 %v8067, %v8075
        %v8156 = vadd.f32 %v8068, %v8076
        %v8157 = vadd.f32 %v8069, %v8077
        %v8158 = vadd.f32 %v8070, %v8078
        %v8159 = vadd.f32 %v8071, %v8079
        %v8160 = vadd.f32 %v8072, %v8080
        %v8161 = vadd.f32 %v8073, %v8081
        %v8162 = vadd.f32 %v8074, %v8082
        %v8163 = vadd.f32 %v8155, 0.0001
        %v8164 = vadd.f32 %v8156, 0.0001
        %v8165 = vadd.f32 %v8157, 0.0001
        %v8166 = vadd.f32 %v8158, 0.0001
        %v8167 = vadd.f32 %v8159, 0.0001
        %v8168 = vadd.f32 %v8160, 0.0001
        %v8169 = vadd.f32 %v8161, 0.0001
        %v8170 = vadd.f32 %v8162, 0.0001
        %v8171 = vadd.f32 %v8091, %v8099
        %v8172 = vadd.f32 %v8092, %v8100
        %v8173 = vadd.f32 %v8093, %v8101
        %v8174 = vadd.f32 %v8094, %v8102
        %v8175 = vadd.f32 %v8095, %v8103
        %v8176 = vadd.f32 %v8096, %v8104
        %v8177 = vadd.f32 %v8097, %v8105
        %v8178 = vadd.f32 %v8098, %v8106
        %v8179 = vadd.f32 %v8171, 0.0009
        %v8180 = vadd.f32 %v8172, 0.0009
        %v8181 = vadd.f32 %v8173, 0.0009
        %v8182 = vadd.f32 %v8174, 0.0009
        %v8183 = vadd.f32 %v8175, 0.0009
        %v8184 = vadd.f32 %v8176, 0.0009
        %v8185 = vadd.f32 %v8177, 0.0009
        %v8186 = vadd.f32 %v8178, 0.0009
        %v8187 = vmul.f32 %v8163, %v8179
        %v8188 = vmul.f32 %v8164, %v8180
        %v8189 = vmul.f32 %v8165, %v8181
        %v8190 = vmul.f32 %v8166, %v8182
        %v8191 = vmul.f32 %v8167, %v8183
        %v8192 = vmul.f32 %v8168, %v8184
        %v8193 = vmul.f32 %v8169, %v8185
        %v8194 = vmul.f32 %v8170, %v8186
        %v8195 = vrcp.pop %v8187
        %v8196 = vmul.f32 %v8187, %v8195
        %v8197 = vsub.f32 1.0, %v8196
        %v8198 = vmul.f32 %v8195, %v8197
        %v8199 = vadd.f32 %v8195, %v8198
        %vm8200 = vweird.f32 %v8187
        %vm8201 = vweird.f32 %v8195
        %vm8202 = vmor %vm8200, %vm8201
        %v8203 = vsel %vm8202, %v8195, %v8199
        %v8204 = vand.u32 2147483647, %v8187
        %vm8205 = vcmp.eq.f32.partialorder %v8204, 8.507059e+37
        %v8206 = vand.u32 %v8187, 2147483648
        %v8207 = vor.u32 1.1754944e-38, %v8206
        %v8208 = vsel %vm8205, %v8207, %v8203
        %v8209 = vmul.f32 %v8147, %v8208
        %v8210 = vrcp.pop %v8188
        %v8211 = vmul.f32 %v8188, %v8210
        %v8212 = vsub.f32 1.0, %v8211
        %v8213 = vmul.f32 %v8210, %v8212
        %v8214 = vadd.f32 %v8210, %v8213
        %vm8215 = vweird.f32 %v8188
        %vm8216 = vweird.f32 %v8210
        %vm8217 = vmor %vm8215, %vm8216
        %v8218 = vsel %vm8217, %v8210, %v8214
        %v8219 = vand.u32 2147483647, %v8188
        %vm8220 = vcmp.eq.f32.partialorder %v8219, 8.507059e+37
        %v8221 = vand.u32 %v8188, 2147483648
        %v8222 = vor.u32 1.1754944e-38, %v8221
        %v8223 = vsel %vm8220, %v8222, %v8218
        %v8224 = vmul.f32 %v8148, %v8223
        %v8225 = vrcp.pop %v8189
        %v8226 = vmul.f32 %v8189, %v8225
        %v8227 = vsub.f32 1.0, %v8226
        %v8228 = vmul.f32 %v8225, %v8227
        %v8229 = vadd.f32 %v8225, %v8228
        %vm8230 = vweird.f32 %v8189
        %vm8231 = vweird.f32 %v8225
        %vm8232 = vmor %vm8230, %vm8231
        %v8233 = vsel %vm8232, %v8225, %v8229
        %v8234 = vand.u32 2147483647, %v8189
        %vm8235 = vcmp.eq.f32.partialorder %v8234, 8.507059e+37
        %v8236 = vand.u32 %v8189, 2147483648
        %v8237 = vor.u32 1.1754944e-38, %v8236
        %v8238 = vsel %vm8235, %v8237, %v8233
        %v8239 = vmul.f32 %v8149, %v8238
        %v8240 = vrcp.pop %v8190
        %v8241 = vmul.f32 %v8190, %v8240
        %v8242 = vsub.f32 1.0, %v8241
        %v8243 = vmul.f32 %v8240, %v8242
        %v8244 = vadd.f32 %v8240, %v8243
        %vm8245 = vweird.f32 %v8190
        %vm8246 = vweird.f32 %v8240
        %vm8247 = vmor %vm8245, %vm8246
        %v8248 = vsel %vm8247, %v8240, %v8244
        %v8249 = vand.u32 2147483647, %v8190
        %vm8250 = vcmp.eq.f32.partialorder %v8249, 8.507059e+37
        %v8251 = vand.u32 %v8190, 2147483648
        %v8252 = vor.u32 1.1754944e-38, %v8251
        %v8253 = vsel %vm8250, %v8252, %v8248
        %v8254 = vmul.f32 %v8150, %v8253
        %v8255 = vrcp.pop %v8191
        %v8256 = vmul.f32 %v8191, %v8255
        %v8257 = vsub.f32 1.0, %v8256
        %v8258 = vmul.f32 %v8255, %v8257
        %v8259 = vadd.f32 %v8255, %v8258
        %vm8260 = vweird.f32 %v8191
        %vm8261 = vweird.f32 %v8255
        %vm8262 = vmor %vm8260, %vm8261
        %v8263 = vsel %vm8262, %v8255, %v8259
        %v8264 = vand.u32 2147483647, %v8191
        %vm8265 = vcmp.eq.f32.partialorder %v8264, 8.507059e+37
        %v8266 = vand.u32 %v8191, 2147483648
        %v8267 = vor.u32 1.1754944e-38, %v8266
        %v8268 = vsel %vm8265, %v8267, %v8263
        %v8269 = vmul.f32 %v8151, %v8268
        %v8270 = vrcp.pop %v8192
        %v8271 = vmul.f32 %v8192, %v8270
        %v8272 = vsub.f32 1.0, %v8271
        %v8273 = vmul.f32 %v8270, %v8272
        %v8274 = vadd.f32 %v8270, %v8273
        %vm8275 = vweird.f32 %v8192
        %vm8276 = vweird.f32 %v8270
        %vm8277 = vmor %vm8275, %vm8276
        %v8278 = vsel %vm8277, %v8270, %v8274
        %v8279 = vand.u32 2147483647, %v8192
        %vm8280 = vcmp.eq.f32.partialorder %v8279, 8.507059e+37
        %v8281 = vand.u32 %v8192, 2147483648
        %v8282 = vor.u32 1.1754944e-38, %v8281
        %v8283 = vsel %vm8280, %v8282, %v8278
        %v8284 = vmul.f32 %v8152, %v8283
        %v8285 = vrcp.pop %v8193
        %v8286 = vmul.f32 %v8193, %v8285
        %v8287 = vsub.f32 1.0, %v8286
        %v8288 = vmul.f32 %v8285, %v8287
        %v8289 = vadd.f32 %v8285, %v8288
        %vm8290 = vweird.f32 %v8193
        %vm8291 = vweird.f32 %v8285
        %vm8292 = vmor %vm8290, %vm8291
        %v8293 = vsel %vm8292, %v8285, %v8289
        %v8294 = vand.u32 2147483647, %v8193
        %vm8295 = vcmp.eq.f32.partialorder %v8294, 8.507059e+37
        %v8296 = vand.u32 %v8193, 2147483648
        %v8297 = vor.u32 1.1754944e-38, %v8296
        %v8298 = vsel %vm8295, %v8297, %v8293
        %v8299 = vmul.f32 %v8153, %v8298
        %v8300 = vrcp.pop %v8194
        %v8301 = vmul.f32 %v8194, %v8300
        %v8302 = vsub.f32 1.0, %v8301
        %v8303 = vmul.f32 %v8300, %v8302
        %v8304 = vadd.f32 %v8300, %v8303
        %vm8305 = vweird.f32 %v8194
        %vm8306 = vweird.f32 %v8300
        %vm8307 = vmor %vm8305, %vm8306
        %v8308 = vsel %vm8307, %v8300, %v8304
        %v8309 = vand.u32 2147483647, %v8194
        %vm8310 = vcmp.eq.f32.partialorder %v8309, 8.507059e+37
        %v8311 = vand.u32 %v8194, 2147483648
        %v8312 = vor.u32 1.1754944e-38, %v8311
        %v8313 = vsel %vm8310, %v8312, %v8308
        %v8314 = vmul.f32 %v8154, %v8313
        %v8315 = vsel %vm334, %v8209, 0.0
        %v8316 = vsel %vm334, %v8224, 0.0
        %v8317 = vadd.f32 %v8315, %v8316
        %v8318 = vsel %vm334, %v8239, 0.0
        %v8319 = vadd.f32 %v8317, %v8318
        %v8320 = vsel %vm334, %v8254, 0.0
        %v8321 = vadd.f32 %v8319, %v8320
        %v8322 = vsel %vm334, %v8269, 0.0
        %v8323 = vadd.f32 %v8321, %v8322
        %v8324 = vsel %vm334, %v8284, 0.0
        %v8325 = vadd.f32 %v8323, %v8324
        %v8326 = vsel %vm334, %v8299, 0.0
        %v8327 = vadd.f32 %v8325, %v8326
        %v8328 = vsel %vm334, %v8314, 0.0
        %v8329 = vadd.f32 %v8327, %v8328
        %8330 = vadd.xlane.f32.xlu0 %v8329
        %v8331 = vpop.xlane.xlu0 %8330
        %v8332 = vrot.slane %v8331, 4
        %v8333 = vadd.f32 %v8331, %v8332
        %v8334 = vrot.slane %v8333, 2
        %v8335 = vadd.f32 %v8333, %v8334
        %v8336 = vrot.slane %v8335, 1
        %v8337 = vadd.f32 %v8335, %v8336
        %s8338 = vtos %v8337
        %v8339 = vstv %s8338
        %vm8340 = vcmask 0
        %8341 = vst.msk [vmem:[%s289] sm:$0x1] %vm8340, %v8339
        %p8342 = scmp.lt.s32.totalorder %s17, 1
        %s8343 = scalar_select %p8342, %s17, 1
        %s8344 = scalar_lea.vmem %s4, %s8343
        // Predicated region
        $region53: #{tpu_custom_call.1} parent=35 // pred_check
          %p8345 = pneg %p129
        $region54: #{tpu_custom_call.1} parent=35 // pred_check_branch
          %8347 = sbr.rel (%p8345) target = $region56
        $region55: #{tpu_custom_call.1} parent=35 // pred_region
          _
        $region56: #{tpu_custom_call.1} parent=35 // pred_fallthru
          _
      $region36: #{tpu_custom_call.1} parent=5 // pred_fallthru
        _
      %p8348 = scmp.le.s32.totalorder 2, %s12
      // Predicated region
      $region57: #{tpu_custom_call.1} parent=5 // pred_check
        %p8349 = pneg %p8348
      $region58: #{tpu_custom_call.1} parent=5 // pred_check_branch
        %8351 = sbr.rel (%p8349) target = $region60
      $region59: #{tpu_custom_call.1} parent=5 // pred_region
        %s8352 = ssub.s32 %s12, 2
        // Predicated region
        $region61: #{tpu_custom_call.1} parent=59 // pred_check
          %p8353 = pneg %p135
        $region62: #{tpu_custom_call.1} parent=59 // pred_check_branch
          %8355 = sbr.rel (%p8353) target = $region64
        $region63: #{tpu_custom_call.1} parent=59 // pred_region
          %p8356 = scmp.lt.s32.totalorder %s18, 1
          %s8357 = scalar_select %p8356, %s18, 1
          %s8358 = scalar_lea.vmem %s4, %s8357
        $region64: #{tpu_custom_call.1} parent=59 // pred_fallthru
          _
      $region60: #{tpu_custom_call.1} parent=5 // pred_fallthru
        _
    $region6: #{tpu_custom_call.1} parent=1 // loop_footer
      %s16 = sadd.s32 1, %s12
    $region7: #{tpu_custom_call.1} parent=1 // loop_footer_branch
      %11 = sbr.rel target = $region3
    $region8: #{tpu_custom_call.1} parent=1 // loop_exit
      _
    %8359 = vsyncpa [#allocation3], 1
    %s8360 = scalar_lea.sflag [#allocation3], 1
    %8361 = vsyncpa %s8360, 1
    %8362 = vsyncpa [#allocation5], 1

</llo_original>
